<compile_context>
chip_gen: v6e
topology: v6e:2x2x1
jax: 0.10.0
libtpu: 0.0.40
codegen_flags: <defaults>
</compile_context>

<pallas_src>
import math
from functools import partial

import jax
import jax.numpy as jnp
from jax.experimental import pallas as pl
from jax.experimental.pallas import tpu as pltpu

# ----------------------------- model constants ------------------------------
CONV1_OUT = 64            # logical resnet.conv1 output channels
C1P = 128                 # conv1 channels padded to lane-dense 128 (64..127 zero)
CONV1_KP = 64             # conv1 im2col K (7*7*1 = 49) zero-padded to 64
STAGE_OUT = 128           # stand-in for backbone.out_channels (2048 in full model)
VOCAB = 256
HID = 128
NHEAD = 2
DHEAD = HID // NHEAD      # 64
MLP_HID = 4 * HID         # 512
SMAX = 16
ATT_SCALE = 1.0 / math.sqrt(DHEAD)
VMEM_LIMIT = 48 * 1024 * 1024     # headroom under v7x's 64 MiB; fine on v5e/v6e

_VMEM = pl.BlockSpec(memory_space=pltpu.MemorySpace.VMEM)
_SMEM = pl.BlockSpec(memory_space=pltpu.MemorySpace.SMEM)
_ANY = pl.BlockSpec(memory_space=pl.ANY)


def _tile(dim, cap, align):
    """Largest tile <= cap that divides `dim` and is `align`-aligned, else full."""
    if dim <= cap:
        return dim
    t = (cap // align) * align
    while t >= align:
        if dim % t == 0:
            return t
        t -= align
    return dim


# ----------------------- fused (LN +) matmul (+ epilogue) --------------------
def _matmul_kernel(*refs, act, has_ln, has_res, nk):
    pos = 0
    a_ref = refs[pos]; pos += 1
    if has_ln:
        g_ref, b_ref = refs[pos], refs[pos + 1]; pos += 2
    w_ref, scale_ref, bias_ref = refs[pos], refs[pos + 1], refs[pos + 2]; pos += 3
    if has_res:
        res_ref = refs[pos]; pos += 1
    o_ref, acc_ref = refs[pos], refs[pos + 1]

    k = pl.program_id(2)

    @pl.when(k == 0)
    def _init():
        acc_ref[...] = jnp.zeros_like(acc_ref)

    a = a_ref[...]
    if has_ln:                                   # LN fused into the matmul prologue
        a = a.astype(jnp.float32)
        mu = jnp.mean(a, axis=-1, keepdims=True)
        var = jnp.mean((a - mu) ** 2, axis=-1, keepdims=True)
        a = (a - mu) * jax.lax.rsqrt(var + 1e-5)
        a = a * g_ref[...] + b_ref[...]
    acc_ref[...] += jnp.dot(a.astype(jnp.bfloat16), w_ref[...],
                            preferred_element_type=jnp.float32)

    @pl.when(k == nk - 1)
    def _finalize():
        out = acc_ref[...] * scale_ref[...] + bias_ref[...]
        if act == "relu":
            out = jnp.maximum(out, 0.0)
        elif act == "gelu":
            out = jax.nn.gelu(out, approximate=True)
        if has_res:
            out = out + res_ref[...]
        o_ref[...] = out.astype(o_ref.dtype)


def pallas_matmul(a, w, scale=None, bias=None, act="none", ln=None, residual=None):
    """o = act(LN?(a) @ w * scale + bias) (+ residual); bf16 MXU, f32 accumulate."""
    M, K = a.shape
    K2, N = w.shape
    assert K == K2
    f32 = jnp.float32
    if scale is None:
        scale = jnp.ones((1, N), f32)
    if bias is None:
        bias = jnp.zeros((1, N), f32)
    has_ln = ln is not None
    has_res = residual is not None

    tm = _tile(M, 256, 8)
    tn = _tile(N, 256, 128)
    tk = K if has_ln else _tile(K, 512, 128)     # LN needs the full feature dim
    gm, gn, gk = M // tm, N // tn, K // tk

    a_in = a.astype(f32) if has_ln else a.astype(jnp.bfloat16)
    w_in = w.astype(jnp.bfloat16)

    inputs = [a_in]
    in_specs = [pl.BlockSpec((tm, tk), lambda i, j, k: (i, k))]
    if has_ln:
        g, b = ln
        inputs += [g.astype(f32), b.astype(f32)]
        in_specs += [pl.BlockSpec((1, tk), lambda i, j, k: (0, k)),
                     pl.BlockSpec((1, tk), lambda i, j, k: (0, k))]
    inputs += [w_in, scale.astype(f32), bias.astype(f32)]
    in_specs += [pl.BlockSpec((tk, tn), lambda i, j, k: (k, j)),
                 pl.BlockSpec((1, tn), lambda i, j, k: (0, j)),
                 pl.BlockSpec((1, tn), lambda i, j, k: (0, j))]
    if has_res:
        inputs += [residual.astype(f32)]
        in_specs += [pl.BlockSpec((tm, tn), lambda i, j, k: (i, j))]

    a_bytes = M * K * (4 if has_ln else 2)
    bytes_accessed = a_bytes + K * N * 2 + M * N * 4 * (2 if has_res else 1)
    cost = pl.CostEstimate(flops=2 * M * N * K, transcendentals=0,
                           bytes_accessed=int(bytes_accessed))

    return pl.pallas_call(
        partial(_matmul_kernel, act=act, has_ln=has_ln, has_res=has_res, nk=gk),
        out_shape=jax.ShapeDtypeStruct((M, N), f32),
        grid_spec=pltpu.PrefetchScalarGridSpec(
            num_scalar_prefetch=0,
            grid=(gm, gn, gk),
            in_specs=in_specs,
            out_specs=pl.BlockSpec((tm, tn), lambda i, j, k: (i, j)),
            scratch_shapes=[pltpu.VMEM((tm, tn), f32)]),
        compiler_params=pltpu.CompilerParams(
            dimension_semantics=("parallel", "parallel", "arbitrary"),
            vmem_limit_bytes=VMEM_LIMIT),
        cost_estimate=cost,
    )(*inputs)


# --------------------------------- maxpool ----------------------------------
def _maxpool_kernel(p_ref, o_ref):
    o_ref[...] = jnp.max(p_ref[...], axis=1)


def pallas_maxpool(patches):
    """patches: [N, KK, C] (window axis in sublanes) -> max over KK -> [N, C]."""
    n, kk, c = patches.shape
    tm = _tile(n, 512, 8)
    return pl.pallas_call(
        _maxpool_kernel,
        out_shape=jax.ShapeDtypeStruct((n, c), jnp.float32),
        grid_spec=pltpu.PrefetchScalarGridSpec(
            num_scalar_prefetch=0,
            grid=(n // tm,),
            in_specs=[pl.BlockSpec((tm, kk, c), lambda i: (i, 0, 0))],
            out_specs=pl.BlockSpec((tm, c), lambda i: (i, 0))),
        compiler_params=pltpu.CompilerParams(
            dimension_semantics=("parallel",),
            vmem_limit_bytes=VMEM_LIMIT),
    )(patches.astype(jnp.float32))


# -------------------- attention (bias built inside the kernel) ---------------
def _attention_kernel(q_ref, k_ref, v_ref, kv_ref, o_ref, *, r_prefix):
    q = q_ref[0]                                   # [H, S, D]  (bf16)
    k = k_ref[0]                                   # [H, KV, D] (bf16)
    v = v_ref[0]
    s = jnp.einsum("hsd,hkd->hsk", q, k,
                   preferred_element_type=jnp.float32) * ATT_SCALE
    S_, KV = s.shape[1], s.shape[2]
    # causal over text keys, image prefix always visible, padded keys masked
    q_pos = jax.lax.broadcasted_iota(jnp.int32, (S_, KV), 0)
    k_pos = jax.lax.broadcasted_iota(jnp.int32, (S_, KV), 1) - r_prefix
    causal_ok = k_pos <= q_pos
    key_ok = kv_ref[0] > 0.5                       # [1, KV]
    allowed = jnp.logical_and(causal_ok, key_ok)
    s = jnp.where(allowed[None], s, -1e30)
    m = jnp.max(s, axis=-1, keepdims=True)
    p = jnp.exp(s - m)
    l = jnp.sum(p, axis=-1, keepdims=True)
    p = p * pl.reciprocal(l, approx=True)
    o = jnp.einsum("hsk,hkd->hsd", p.astype(jnp.bfloat16), v,
                   preferred_element_type=jnp.float32)
    o_ref[0] = o.astype(o_ref.dtype)


def pallas_attention(q4, k4, v4, key_valid, r_prefix):
    """q4:[B,H,S,D] k4,v4:[B,H,KV,D] key_valid:[B,1,KV] -> [B,H,S,D]."""
    # TODO(synk): switch to a flash-style KV-tiled online-softmax kernel for
    # long sequences / many image regions; a single block is right here.
    B, H, S_, D = q4.shape
    KV = k4.shape[2]
    bf16 = jnp.bfloat16
    return pl.pallas_call(
        partial(_attention_kernel, r_prefix=r_prefix),
        out_shape=jax.ShapeDtypeStruct((B, H, S_, D), jnp.float32),
        grid_spec=pltpu.PrefetchScalarGridSpec(
            num_scalar_prefetch=0,
            grid=(B,),
            in_specs=[pl.BlockSpec((1, H, S_, D), lambda b: (b, 0, 0, 0)),
                      pl.BlockSpec((1, H, KV, D), lambda b: (b, 0, 0, 0)),
                      pl.BlockSpec((1, H, KV, D), lambda b: (b, 0, 0, 0)),
                      pl.BlockSpec((1, 1, KV), lambda b: (b, 0, 0))],
            out_specs=pl.BlockSpec((1, H, S_, D), lambda b: (b, 0, 0, 0))),
        compiler_params=pltpu.CompilerParams(
            dimension_semantics=("parallel",),
            vmem_limit_bytes=VMEM_LIMIT),
    )(q4.astype(bf16), k4.astype(bf16), v4.astype(bf16),
      key_valid.astype(jnp.float32))


# ----------------------- token embedding via DMA gather ----------------------
def _embed_kernel(ids_ref, wte_hbm, wpe_ref, o_ref, buf, sem):
    n = o_ref.shape[0]
    copies = []
    for i in range(n):                              # static unrolled DMA gather
        cp = pltpu.make_async_copy(wte_hbm.at[pl.ds(ids_ref[i], 1)],
                                   buf.at[pl.ds(i, 1)], sem.at[i])
        cp.start()
        copies.append(cp)
    for cp in copies:
        cp.wait()
    o_ref[...] = buf[...] + wpe_ref[...]


def pallas_embed(ids_flat, wte, wpe_rows):
    """wte row gather (ids in SMEM, wte in HBM) + positional embedding add."""
    n = ids_flat.shape[0]
    h = wte.shape[1]
    return pl.pallas_call(
        _embed_kernel,
        out_shape=jax.ShapeDtypeStruct((n, h), jnp.float32),
        in_specs=[_SMEM, _ANY, _VMEM],
        out_specs=_VMEM,
        scratch_shapes=[pltpu.VMEM((n, h), jnp.float32),
                        pltpu.SemaphoreType.DMA((n,))],
    )(ids_flat.astype(jnp.int32), wte.astype(jnp.float32),
      wpe_rows.astype(jnp.float32))


# ------------------------ masked cross-entropy (no one-hot) ------------------
def _xent_kernel(logits_ref, labels_ref, mask_ref, o_ref):
    logits = logits_ref[...]
    m = jnp.max(logits, axis=-1, keepdims=True)
    lse = m + jnp.log(jnp.sum(jnp.exp(logits - m), axis=-1, keepdims=True))
    lane = jax.lax.broadcasted_iota(jnp.int32, logits.shape, 1)
    tgt = jnp.sum(jnp.where(lane == labels_ref[...], logits, 0.0),
                  axis=-1, keepdims=True)
    nll = (lse - tgt) * mask_ref[...]
    total = jnp.sum(nll, axis=(0, 1), keepdims=True)
    cnt = jnp.maximum(jnp.sum(mask_ref[...], axis=(0, 1), keepdims=True), 1.0)
    o_ref[...] = jnp.broadcast_to(total / cnt, o_ref.shape)


def pallas_cross_entropy(logits, labels_col, mask_col):
    """logits:[N,V] labels,mask:[N,1] -> lane-padded (1,128) loss."""
    return pl.pallas_call(
        _xent_kernel,
        out_shape=jax.ShapeDtypeStruct((1, 128), jnp.float32),
        in_specs=[_VMEM, _VMEM, _VMEM],
        out_specs=_VMEM,
    )(logits.astype(jnp.float32), labels_col.astype(jnp.int32),
      mask_col.astype(jnp.float32))


# ---------------------------------- glue -------------------------------------
def _im2col(x_nhwc, kh, kw, stride, pad, pad_value=0.0):
    """Return patches [B, oh, ow, kh*kw, C] (taps outer / channels inner)."""
    B, H, W, C = x_nhwc.shape
    xp = jnp.pad(x_nhwc, ((0, 0), (pad, pad), (pad, pad), (0, 0)),
                 constant_values=pad_value)
    oh = (H + 2 * pad - kh) // stride + 1
    ow = (W + 2 * pad - kw) // stride + 1
    cols = []
    for di in range(kh):
        for dj in range(kw):
            cols.append(xp[:, di:di + stride * oh:stride,
                            dj:dj + stride * ow:stride, :])
    patches = jnp.stack(cols, axis=3)                # [B, oh, ow, kh*kw, C]
    return patches, oh, ow


# --------------------------------- backbone ----------------------------------
def backbone_forward(params, images_nchw):
    B = images_nchw.shape[0]
    x = jnp.transpose(images_nchw, (0, 2, 3, 1)).astype(jnp.float32)   # NHWC

    # conv1: 1 -> 64 (padded to 128 lanes), 7x7/s2/p3, bias=False; BN+ReLU fused
    # TODO(synk): fuse im2col into the matmul kernel (strided in-kernel window
    # fetch per spatial tile) to avoid the 49x patch expansion at 224x224.
    patches, oh, ow = _im2col(x, 7, 7, 2, 3, 0.0)            # [B,oh,ow,49,1]
    a = patches.reshape(B * oh * ow, 7 * 7 * 1)
    a = jnp.pad(a, ((0, 0), (0, CONV1_KP - 7 * 7)))          # K 49 -> 64
    y = pallas_matmul(a, params["conv1_w"], scale=params["bn1_scale"],
                      bias=params["bn1_shift"], act="relu")
    y = y.reshape(B, oh, ow, C1P)

    # maxpool 3x3/s2/p1: window axis kept in sublanes, reduced in-kernel
    # TODO(synk): fuse the pool into the conv1 epilogue over spatial tiles.
    ppatch, ph, pw = _im2col(y, 3, 3, 2, 1, -1e30)           # [B,ph,pw,9,C]
    y = pallas_maxpool(ppatch.reshape(B * ph * pw, 9, C1P)).reshape(B, ph, pw, C1P)

    # TODO(synk): ResNet50 layer1-layer4 bottleneck stack (out 2048ch) is
    # replaced by a single strided 3x3 conv stand-in producing STAGE_OUT ch.
    spatch, sh, sw = _im2col(y, 3, 3, 2, 1, 0.0)             # [B,sh,sw,9,C]
    a = spatch.reshape(B * sh * sw, 9 * C1P)
    feats = pallas_matmul(a, params["stage_w"], bias=params["stage_b"],
                          act="relu")
    feats = feats.reshape(B, sh, sw, STAGE_OUT)
    return jnp.transpose(feats, (0, 3, 1, 2))                # NCHW "features"


# ------------------------------- language model ------------------------------
def language_model_forward(params, input_ids, attention_mask, features_nchw):
    B, C, FH, FW = features_nchw.shape
    R = FH * FW                       # number of image "tokens" (prefix)
    S = input_ids.shape[1]

    # image feature tokens -> hidden (pseudo self-attention prefix)
    img = jnp.transpose(features_nchw, (0, 2, 3, 1)).reshape(B * R, C)
    img_h = pallas_matmul(img, params["img_proj_w"], bias=params["img_proj_b"])

    # token + positional embeddings via DMA row gather (no one-hot matmul)
    ids_flat = input_ids.reshape(-1).astype(jnp.int32)
    wpe_rows = jnp.tile(params["wpe"][:S], (B, 1))           # [B*S, HID]
    h2 = pallas_embed(ids_flat, params["wte"], wpe_rows)     # [B*S, HID]

    # fused LN1 + QKV (text) and fused K/V (image prefix) projections
    qkv = pallas_matmul(h2, params["w_qkv"], bias=params["b_qkv"],
                        ln=(params["ln1_g"], params["ln1_b"]))    # [B*S, 3H]
    q_t, k_t, v_t = qkv[:, :HID], qkv[:, HID:2 * HID], qkv[:, 2 * HID:]
    kv_i = pallas_matmul(img_h, params["w_ukv"])                  # [B*R, 2H]
    k_i, v_i = kv_i[:, :HID], kv_i[:, HID:]

    k_all = jnp.concatenate([k_i.reshape(B, R, HID),
                             k_t.reshape(B, S, HID)], axis=1)     # [B, R+S, H]
    v_all = jnp.concatenate([v_i.reshape(B, R, HID),
                             v_t.reshape(B, S, HID)], axis=1)

    def to_heads(x, T):
        return x.reshape(B, T, NHEAD, DHEAD).transpose(0, 2, 1, 3)

    q4 = to_heads(q_t.reshape(B, S, HID), S)
    k4 = to_heads(k_all, R + S)
    v4 = to_heads(v_all, R + S)

    # tiny [B, 1, R+S] key-validity vector; the full bias is built in-kernel
    key_valid = jnp.concatenate(
        [jnp.ones((B, R), jnp.float32), attention_mask.astype(jnp.float32)],
        axis=1).reshape(B, 1, R + S)

    attn = pallas_attention(q4, k4, v4, key_valid, r_prefix=R)    # [B,H,S,D]
    attn2 = attn.transpose(0, 2, 1, 3).reshape(B * S, HID)

    # attention output projection with the residual fused into the epilogue
    h2 = pallas_matmul(attn2, params["wo"], bias=params["bo"], residual=h2)

    # fused LN2 + MLP (gelu), projection with fused residual
    ff = pallas_matmul(h2, params["w_fc"], bias=params["b_fc"], act="gelu",
                       ln=(params["ln2_g"], params["ln2_b"]))
    h2 = pallas_matmul(ff, params["w_proj"], bias=params["b_proj"], residual=h2)

    # fused final LN + LM head; shifted, mask-weighted cross entropy
    logits = pallas_matmul(h2, params["lm_w"], bias=params["lm_b"],
                           ln=(params["lnf_g"], params["lnf_b"]))
    logits = logits.reshape(B, S, VOCAB)

    shift_logits = logits[:, :-1].reshape(B * (S - 1), VOCAB)
    labels = input_ids[:, 1:].reshape(B * (S - 1), 1).astype(jnp.int32)
    loss_mask = attention_mask[:, 1:].reshape(B * (S - 1), 1).astype(jnp.float32)
    loss = pallas_cross_entropy(shift_logits, labels, loss_mask)
    return loss[0, 0]


def report_generation_forward(params, images, input_ids, attention_mask):
    features = backbone_forward(params, images)
    print("Features shape: ", features.shape)
    language_model_loss = language_model_forward(
        params, input_ids, attention_mask, features)
    # self.training == True path: return the language model loss
    return language_model_loss


# ------------------------------- parameter init -------------------------------
def init_params(key):
    ks = iter(jax.random.split(key, 24))
    n = lambda shape, s=0.02: (s * jax.random.normal(next(ks), shape)
                               ).astype(jnp.float32)
    # conv1 weight stored as (K=49 padded to 64, Cout padded to 128);
    # rows >= 49 and cols >= 64 are structurally zero (pure lane/sublane pad).
    conv1_w = jnp.zeros((CONV1_KP, C1P), jnp.float32)
    conv1_w = conv1_w.at[:49, :CONV1_OUT].set(n((49, CONV1_OUT), 0.1))
    params = {
        "conv1_w": conv1_w,
        "bn1_scale": jnp.ones((1, C1P), jnp.float32),
        "bn1_shift": jnp.zeros((1, C1P), jnp.float32),
        "stage_w": n((9 * C1P, STAGE_OUT), 0.05),
        "stage_b": jnp.zeros((1, STAGE_OUT), jnp.float32),
        # language model
        "img_proj_w": n((STAGE_OUT, HID)),
        "img_proj_b": jnp.zeros((1, HID), jnp.float32),
        "wte": n((VOCAB, HID)),
        "wpe": n((SMAX, HID)),
        "ln1_g": jnp.ones((1, HID), jnp.float32),
        "ln1_b": jnp.zeros((1, HID), jnp.float32),
        "w_qkv": n((HID, 3 * HID)),
        "b_qkv": jnp.zeros((1, 3 * HID), jnp.float32),
        "w_ukv": n((HID, 2 * HID)),
        "wo": n((HID, HID)), "bo": jnp.zeros((1, HID), jnp.float32),
        "ln2_g": jnp.ones((1, HID), jnp.float32),
        "ln2_b": jnp.zeros((1, HID), jnp.float32),
        "w_fc": n((HID, MLP_HID)),
        "b_fc": jnp.zeros((1, MLP_HID), jnp.float32),
        "w_proj": n((MLP_HID, HID)),
        "b_proj": jnp.zeros((1, HID), jnp.float32),
        "lnf_g": jnp.ones((1, HID), jnp.float32),
        "lnf_b": jnp.zeros((1, HID), jnp.float32),
        "lm_w": n((HID, VOCAB)),
        "lm_b": jnp.zeros((1, VOCAB), jnp.float32),
    }
    return params


# ----------------------------------- main -------------------------------------
if __name__ == "__main__":
    key = jax.random.PRNGKey(0)
    k_img, k_ids = jax.random.split(key)

    B, S = 2, 8
    images = jax.random.normal(k_img, (B, 1, 16, 16), jnp.float32)      # NCHW
    input_ids = jax.random.randint(k_ids, (B, S), 0, VOCAB, jnp.int32)
    attention_mask = jnp.ones((B, S), jnp.float32).at[1, 6:].set(0.0)

    params = init_params(jax.random.PRNGKey(42))

    fwd = jax.jit(report_generation_forward)
    loss = fwd(params, images, input_ids, attention_mask)
    loss = jax.block_until_ready(loss)
    assert jnp.isfinite(loss), f"non-finite loss: {loss}"
    print("KERNEL_OK")
</pallas_src>

<mosaic_0001>
module attributes {stable_mosaic.version = 11 : i64} {
  func.func @_matmul_kernel(%arg0: i32, %arg1: i32, %arg2: i32, %arg3: memref<128x64xbf16, #tpu.memory_space<vmem>>, %arg4: memref<64x128xbf16, #tpu.memory_space<vmem>>, %arg5: memref<1x128xf32, #tpu.memory_space<vmem>>, %arg6: memref<1x128xf32, #tpu.memory_space<vmem>>, %arg7: memref<128x128xf32, #tpu.memory_space<vmem>>, %arg8: memref<128x128xf32, #tpu.memory_space<vmem>>) attributes {dimension_semantics = [#tpu.dimension_semantics<parallel>, #tpu.dimension_semantics<parallel>, #tpu.dimension_semantics<arbitrary>], iteration_bounds = array<i64: 1, 1, 1>, scalar_prefetch = 0 : i64, scratch_operands = 1 : i64, tpu.core_type = #tpu.core_type<tc>, window_params = [{transform_indices = @transform_0, window_bounds = array<i64: 128, 64>}, {transform_indices = @transform_1, window_bounds = array<i64: 64, 128>}, {transform_indices = @transform_2, window_bounds = array<i64: 1, 128>}, {transform_indices = @transform_3, window_bounds = array<i64: 1, 128>}, {transform_indices = @transform_4, window_bounds = array<i64: 128, 128>}]} {
    %c0_i32 = arith.constant 0 : i32
    %0 = arith.cmpi eq, %arg2, %c0_i32 : i32
    %1 = arith.extui %0 : i1 to i32
    %c0_i32_0 = arith.constant 0 : i32
    %2 = arith.cmpi ne, %1, %c0_i32_0 : i32
    scf.if %2 {
      %cst_10 = arith.constant 0.000000e+00 : f32
      %12 = vector.broadcast %cst_10 : f32 to vector<128x128xf32>
      %c0_11 = arith.constant 0 : index
      %c0_12 = arith.constant 0 : index
      %13 = vector.load %arg8[%c0_11, %c0_12] : memref<128x128xf32, #tpu.memory_space<vmem>>, vector<128x128xf32>
      tpu.vector_store %arg8[%c0_11, %c0_12], %12 {strides = array<i32>} : memref<128x128xf32, #tpu.memory_space<vmem>>, vector<128x128xf32>,
    } else {
    }
    %c0 = arith.constant 0 : index
    %c0_1 = arith.constant 0 : index
    %3 = vector.load %arg3[%c0, %c0_1] : memref<128x64xbf16, #tpu.memory_space<vmem>>, vector<128x64xbf16>
    %c0_2 = arith.constant 0 : index
    %c0_3 = arith.constant 0 : index
    %4 = vector.load %arg8[%c0_2, %c0_3] : memref<128x128xf32, #tpu.memory_space<vmem>>, vector<128x128xf32>
    %c0_4 = arith.constant 0 : index
    %c0_5 = arith.constant 0 : index
    %5 = vector.load %arg4[%c0_4, %c0_5] : memref<64x128xbf16, #tpu.memory_space<vmem>>, vector<64x128xbf16>
    %cst = arith.constant dense<0.000000e+00> : vector<128x128xf32>
    %6 = tpu.matmul %3, %5, %cst {dimension_numbers = #tpu.dot_dimension_numbers<[1], [0], [0], [1], [0, 0, 1, 1], [], []>} : vector<128x64xbf16>, vector<64x128xbf16>, vector<128x128xf32> -> vector<128x128xf32>
    %7 = arith.addf %4, %6 : vector<128x128xf32>
    %c0_6 = arith.constant 0 : index
    %c0_7 = arith.constant 0 : index
    %8 = vector.load %arg8[%c0_6, %c0_7] : memref<128x128xf32, #tpu.memory_space<vmem>>, vector<128x128xf32>
    tpu.vector_store %arg8[%c0_6, %c0_7], %7 {strides = array<i32>} : memref<128x128xf32, #tpu.memory_space<vmem>>, vector<128x128xf32>,
    %c0_i32_8 = arith.constant 0 : i32
    %9 = arith.cmpi eq, %arg2, %c0_i32_8 : i32
    %10 = arith.extui %9 : i1 to i32
    %c0_i32_9 = arith.constant 0 : i32
    %11 = arith.cmpi ne, %10, %c0_i32_9 : i32
    scf.if %11 {
      %c0_10 = arith.constant 0 : index
      %c0_11 = arith.constant 0 : index
      %12 = vector.load %arg8[%c0_10, %c0_11] : memref<128x128xf32, #tpu.memory_space<vmem>>, vector<128x128xf32>
      %c0_12 = arith.constant 0 : index
      %c0_13 = arith.constant 0 : index
      %13 = vector.load %arg5[%c0_12, %c0_13] : memref<1x128xf32, #tpu.memory_space<vmem>>, vector<1x128xf32>
      %14 = vector.broadcast %13 : vector<1x128xf32> to vector<128x128xf32>
      %15 = arith.mulf %12, %14 : vector<128x128xf32>
      %c0_14 = arith.constant 0 : index
      %c0_15 = arith.constant 0 : index
      %16 = vector.load %arg6[%c0_14, %c0_15] : memref<1x128xf32, #tpu.memory_space<vmem>>, vector<1x128xf32>
      %17 = vector.broadcast %16 : vector<1x128xf32> to vector<128x128xf32>
      %18 = arith.addf %15, %17 : vector<128x128xf32>
      %cst_16 = arith.constant 0.000000e+00 : f32
      %19 = vector.broadcast %cst_16 : f32 to vector<128x128xf32>
      %20 = arith.maximumf %18, %19 : vector<128x128xf32>
      %c0_17 = arith.constant 0 : index
      %c0_18 = arith.constant 0 : index
      %21 = vector.load %arg7[%c0_17, %c0_18] : memref<128x128xf32, #tpu.memory_space<vmem>>, vector<128x128xf32>
      tpu.vector_store %arg7[%c0_17, %c0_18], %20 {strides = array<i32>} : memref<128x128xf32, #tpu.memory_space<vmem>>, vector<128x128xf32>,
    } else {
    }
    return
  }
  func.func @transform_0(%arg0: i32, %arg1: i32, %arg2: i32) -> (i32, i32) {
    %c0_i32 = arith.constant 0 : i32
    return %arg0, %arg2 : i32, i32
  }
  func.func @transform_1(%arg0: i32, %arg1: i32, %arg2: i32) -> (i32, i32) {
    %c0_i32 = arith.constant 0 : i32
    return %arg2, %arg1 : i32, i32
  }
  func.func @transform_2(%arg0: i32, %arg1: i32, %arg2: i32) -> (i32, i32) {
    %c0_i32 = arith.constant 0 : i32
    %c0_i32_0 = arith.constant 0 : i32
    return %c0_i32, %arg1 : i32, i32
  }
  func.func @transform_3(%arg0: i32, %arg1: i32, %arg2: i32) -> (i32, i32) {
    %c0_i32 = arith.constant 0 : i32
    %c0_i32_0 = arith.constant 0 : i32
    return %c0_i32, %arg1 : i32, i32
  }
  func.func @transform_4(%arg0: i32, %arg1: i32, %arg2: i32) -> (i32, i32) {
    %c0_i32 = arith.constant 0 : i32
    return %arg0, %arg1 : i32, i32
  }
}

module attributes {stable_mosaic.version = 11 : i64} {
  func.func @_maxpool_kernel(%arg0: i32, %arg1: memref<32x9x128xf32, #tpu.memory_space<vmem>>, %arg2: memref<32x128xf32, #tpu.memory_space<vmem>>) attributes {dimension_semantics = [#tpu.dimension_semantics<parallel>], iteration_bounds = array<i64: 1>, scalar_prefetch = 0 : i64, scratch_operands = 0 : i64, tpu.core_type = #tpu.core_type<tc>, window_params = [{transform_indices = @transform_0, window_bounds = array<i64: 32, 9, 128>}, {transform_indices = @transform_1, window_bounds = array<i64: 32, 128>}]} {
    %c0 = arith.constant 0 : index
    %c0_0 = arith.constant 0 : index
    %c0_1 = arith.constant 0 : index
    %0 = vector.load %arg1[%c0, %c0_0, %c0_1] : memref<32x9x128xf32, #tpu.memory_space<vmem>>, vector<32x9x128xf32>
    %cst = arith.constant dense<0xFF800000> : vector<32x128xf32>
    %1 = vector.multi_reduction <maximumf>, %0, %cst [1] : vector<32x9x128xf32> to vector<32x128xf32>
    %c0_2 = arith.constant 0 : index
    %c0_3 = arith.constant 0 : index
    %2 = vector.load %arg2[%c0_2, %c0_3] : memref<32x128xf32, #tpu.memory_space<vmem>>, vector<32x128xf32>
    tpu.vector_store %arg2[%c0_2, %c0_3], %1 {strides = array<i32>} : memref<32x128xf32, #tpu.memory_space<vmem>>, vector<32x128xf32>,
    return
  }
  func.func @transform_0(%arg0: i32) -> (i32, i32, i32) {
    %c0_i32 = arith.constant 0 : i32
    %c0_i32_0 = arith.constant 0 : i32
    %c0_i32_1 = arith.constant 0 : i32
    return %arg0, %c0_i32, %c0_i32_0 : i32, i32, i32
  }
  func.func @transform_1(%arg0: i32) -> (i32, i32) {
    %c0_i32 = arith.constant 0 : i32
    %c0_i32_0 = arith.constant 0 : i32
    return %arg0, %c0_i32 : i32, i32
  }
}

module attributes {stable_mosaic.version = 11 : i64} {
  func.func @_matmul_kernel(%arg0: i32, %arg1: i32, %arg2: i32, %arg3: memref<8x384xbf16, #tpu.memory_space<vmem>>, %arg4: memref<384x128xbf16, #tpu.memory_space<vmem>>, %arg5: memref<1x128xf32, #tpu.memory_space<vmem>>, %arg6: memref<1x128xf32, #tpu.memory_space<vmem>>, %arg7: memref<8x128xf32, #tpu.memory_space<vmem>>, %arg8: memref<8x128xf32, #tpu.memory_space<vmem>>) attributes {dimension_semantics = [#tpu.dimension_semantics<parallel>, #tpu.dimension_semantics<parallel>, #tpu.dimension_semantics<arbitrary>], iteration_bounds = array<i64: 1, 1, 3>, scalar_prefetch = 0 : i64, scratch_operands = 1 : i64, tpu.core_type = #tpu.core_type<tc>, window_params = [{transform_indices = @transform_0, window_bounds = array<i64: 8, 384>}, {transform_indices = @transform_1, window_bounds = array<i64: 384, 128>}, {transform_indices = @transform_2, window_bounds = array<i64: 1, 128>}, {transform_indices = @transform_3, window_bounds = array<i64: 1, 128>}, {transform_indices = @transform_4, window_bounds = array<i64: 8, 128>}]} {
    %c0_i32 = arith.constant 0 : i32
    %0 = arith.cmpi eq, %arg2, %c0_i32 : i32
    %1 = arith.extui %0 : i1 to i32
    %c0_i32_0 = arith.constant 0 : i32
    %2 = arith.cmpi ne, %1, %c0_i32_0 : i32
    scf.if %2 {
      %cst_9 = arith.constant 0.000000e+00 : f32
      %12 = vector.broadcast %cst_9 : f32 to vector<8x128xf32>
      %c0_10 = arith.constant 0 : index
      %c0_11 = arith.constant 0 : index
      %13 = vector.load %arg8[%c0_10, %c0_11] : memref<8x128xf32, #tpu.memory_space<vmem>>, vector<8x128xf32>
      tpu.vector_store %arg8[%c0_10, %c0_11], %12 {strides = array<i32>} : memref<8x128xf32, #tpu.memory_space<vmem>>, vector<8x128xf32>,
    } else {
    }
    %c0 = arith.constant 0 : index
    %c0_1 = arith.constant 0 : index
    %3 = vector.load %arg3[%c0, %c0_1] : memref<8x384xbf16, #tpu.memory_space<vmem>>, vector<8x384xbf16>
    %c0_2 = arith.constant 0 : index
    %c0_3 = arith.constant 0 : index
    %4 = vector.load %arg8[%c0_2, %c0_3] : memref<8x128xf32, #tpu.memory_space<vmem>>, vector<8x128xf32>
    %c0_4 = arith.constant 0 : index
    %c0_5 = arith.constant 0 : index
    %5 = vector.load %arg4[%c0_4, %c0_5] : memref<384x128xbf16, #tpu.memory_space<vmem>>, vector<384x128xbf16>
    %cst = arith.constant dense<0.000000e+00> : vector<8x128xf32>
    %6 = tpu.matmul %3, %5, %cst {dimension_numbers = #tpu.dot_dimension_numbers<[1], [0], [0], [1], [0, 0, 1, 1], [], []>} : vector<8x384xbf16>, vector<384x128xbf16>, vector<8x128xf32> -> vector<8x128xf32>
    %7 = arith.addf %4, %6 : vector<8x128xf32>
    %c0_6 = arith.constant 0 : index
    %c0_7 = arith.constant 0 : index
    %8 = vector.load %arg8[%c0_6, %c0_7] : memref<8x128xf32, #tpu.memory_space<vmem>>, vector<8x128xf32>
    tpu.vector_store %arg8[%c0_6, %c0_7], %7 {strides = array<i32>} : memref<8x128xf32, #tpu.memory_space<vmem>>, vector<8x128xf32>,
    %c2_i32 = arith.constant 2 : i32
    %9 = arith.cmpi eq, %arg2, %c2_i32 : i32
    %10 = arith.extui %9 : i1 to i32
    %c0_i32_8 = arith.constant 0 : i32
    %11 = arith.cmpi ne, %10, %c0_i32_8 : i32
    scf.if %11 {
      %c0_9 = arith.constant 0 : index
      %c0_10 = arith.constant 0 : index
      %12 = vector.load %arg8[%c0_9, %c0_10] : memref<8x128xf32, #tpu.memory_space<vmem>>, vector<8x128xf32>
      %c0_11 = arith.constant 0 : index
      %c0_12 = arith.constant 0 : index
      %13 = vector.load %arg5[%c0_11, %c0_12] : memref<1x128xf32, #tpu.memory_space<vmem>>, vector<1x128xf32>
      %14 = vector.broadcast %13 : vector<1x128xf32> to vector<8x128xf32>
      %15 = arith.mulf %12, %14 : vector<8x128xf32>
      %c0_13 = arith.constant 0 : index
      %c0_14 = arith.constant 0 : index
      %16 = vector.load %arg6[%c0_13, %c0_14] : memref<1x128xf32, #tpu.memory_space<vmem>>, vector<1x128xf32>
      %17 = vector.broadcast %16 : vector<1x128xf32> to vector<8x128xf32>
      %18 = arith.addf %15, %17 : vector<8x128xf32>
      %cst_15 = arith.constant 0.000000e+00 : f32
      %19 = vector.broadcast %cst_15 : f32 to vector<8x128xf32>
      %20 = arith.maximumf %18, %19 : vector<8x128xf32>
      %c0_16 = arith.constant 0 : index
      %c0_17 = arith.constant 0 : index
      %21 = vector.load %arg7[%c0_16, %c0_17] : memref<8x128xf32, #tpu.memory_space<vmem>>, vector<8x128xf32>
      tpu.vector_store %arg7[%c0_16, %c0_17], %20 {strides = array<i32>} : memref<8x128xf32, #tpu.memory_space<vmem>>, vector<8x128xf32>,
    } else {
    }
    return
  }
  func.func @transform_0(%arg0: i32, %arg1: i32, %arg2: i32) -> (i32, i32) {
    %c0_i32 = arith.constant 0 : i32
    return %arg0, %arg2 : i32, i32
  }
  func.func @transform_1(%arg0: i32, %arg1: i32, %arg2: i32) -> (i32, i32) {
    %c0_i32 = arith.constant 0 : i32
    return %arg2, %arg1 : i32, i32
  }
  func.func @transform_2(%arg0: i32, %arg1: i32, %arg2: i32) -> (i32, i32) {
    %c0_i32 = arith.constant 0 : i32
    %c0_i32_0 = arith.constant 0 : i32
    return %c0_i32, %arg1 : i32, i32
  }
  func.func @transform_3(%arg0: i32, %arg1: i32, %arg2: i32) -> (i32, i32) {
    %c0_i32 = arith.constant 0 : i32
    %c0_i32_0 = arith.constant 0 : i32
    return %c0_i32, %arg1 : i32, i32
  }
  func.func @transform_4(%arg0: i32, %arg1: i32, %arg2: i32) -> (i32, i32) {
    %c0_i32 = arith.constant 0 : i32
    return %arg0, %arg1 : i32, i32
  }
}

module attributes {stable_mosaic.version = 11 : i64} {
  func.func @_matmul_kernel(%arg0: i32, %arg1: i32, %arg2: i32, %arg3: memref<8x128xbf16, #tpu.memory_space<vmem>>, %arg4: memref<128x256xbf16, #tpu.memory_space<vmem>>, %arg5: memref<1x256xf32, #tpu.memory_space<vmem>>, %arg6: memref<1x256xf32, #tpu.memory_space<vmem>>, %arg7: memref<8x256xf32, #tpu.memory_space<vmem>>, %arg8: memref<8x256xf32, #tpu.memory_space<vmem>>) attributes {dimension_semantics = [#tpu.dimension_semantics<parallel>, #tpu.dimension_semantics<parallel>, #tpu.dimension_semantics<arbitrary>], iteration_bounds = array<i64: 1, 1, 1>, scalar_prefetch = 0 : i64, scratch_operands = 1 : i64, tpu.core_type = #tpu.core_type<tc>, window_params = [{transform_indices = @transform_0, window_bounds = array<i64: 8, 128>}, {transform_indices = @transform_1, window_bounds = array<i64: 128, 256>}, {transform_indices = @transform_2, window_bounds = array<i64: 1, 256>}, {transform_indices = @transform_3, window_bounds = array<i64: 1, 256>}, {transform_indices = @transform_4, window_bounds = array<i64: 8, 256>}]} {
    %c0_i32 = arith.constant 0 : i32
    %0 = arith.cmpi eq, %arg2, %c0_i32 : i32
    %1 = arith.extui %0 : i1 to i32
    %c0_i32_0 = arith.constant 0 : i32
    %2 = arith.cmpi ne, %1, %c0_i32_0 : i32
    scf.if %2 {
      %cst_10 = arith.constant 0.000000e+00 : f32
      %12 = vector.broadcast %cst_10 : f32 to vector<8x256xf32>
      %c0_11 = arith.constant 0 : index
      %c0_12 = arith.constant 0 : index
      %13 = vector.load %arg8[%c0_11, %c0_12] : memref<8x256xf32, #tpu.memory_space<vmem>>, vector<8x256xf32>
      tpu.vector_store %arg8[%c0_11, %c0_12], %12 {strides = array<i32>} : memref<8x256xf32, #tpu.memory_space<vmem>>, vector<8x256xf32>,
    } else {
    }
    %c0 = arith.constant 0 : index
    %c0_1 = arith.constant 0 : index
    %3 = vector.load %arg3[%c0, %c0_1] : memref<8x128xbf16, #tpu.memory_space<vmem>>, vector<8x128xbf16>
    %c0_2 = arith.constant 0 : index
    %c0_3 = arith.constant 0 : index
    %4 = vector.load %arg8[%c0_2, %c0_3] : memref<8x256xf32, #tpu.memory_space<vmem>>, vector<8x256xf32>
    %c0_4 = arith.constant 0 : index
    %c0_5 = arith.constant 0 : index
    %5 = vector.load %arg4[%c0_4, %c0_5] : memref<128x256xbf16, #tpu.memory_space<vmem>>, vector<128x256xbf16>
    %cst = arith.constant dense<0.000000e+00> : vector<8x256xf32>
    %6 = tpu.matmul %3, %5, %cst {dimension_numbers = #tpu.dot_dimension_numbers<[1], [0], [0], [1], [0, 0, 1, 1], [], []>} : vector<8x128xbf16>, vector<128x256xbf16>, vector<8x256xf32> -> vector<8x256xf32>
    %7 = arith.addf %4, %6 : vector<8x256xf32>
    %c0_6 = arith.constant 0 : index
    %c0_7 = arith.constant 0 : index
    %8 = vector.load %arg8[%c0_6, %c0_7] : memref<8x256xf32, #tpu.memory_space<vmem>>, vector<8x256xf32>
    tpu.vector_store %arg8[%c0_6, %c0_7], %7 {strides = array<i32>} : memref<8x256xf32, #tpu.memory_space<vmem>>, vector<8x256xf32>,
    %c0_i32_8 = arith.constant 0 : i32
    %9 = arith.cmpi eq, %arg2, %c0_i32_8 : i32
    %10 = arith.extui %9 : i1 to i32
    %c0_i32_9 = arith.constant 0 : i32
    %11 = arith.cmpi ne, %10, %c0_i32_9 : i32
    scf.if %11 {
      %c0_10 = arith.constant 0 : index
      %c0_11 = arith.constant 0 : index
      %12 = vector.load %arg8[%c0_10, %c0_11] : memref<8x256xf32, #tpu.memory_space<vmem>>, vector<8x256xf32>
      %c0_12 = arith.constant 0 : index
      %c0_13 = arith.constant 0 : index
      %13 = vector.load %arg5[%c0_12, %c0_13] : memref<1x256xf32, #tpu.memory_space<vmem>>, vector<1x256xf32>
      %14 = vector.broadcast %13 : vector<1x256xf32> to vector<8x256xf32>
      %15 = arith.mulf %12, %14 : vector<8x256xf32>
      %c0_14 = arith.constant 0 : index
      %c0_15 = arith.constant 0 : index
      %16 = vector.load %arg6[%c0_14, %c0_15] : memref<1x256xf32, #tpu.memory_space<vmem>>, vector<1x256xf32>
      %17 = vector.broadcast %16 : vector<1x256xf32> to vector<8x256xf32>
      %18 = arith.addf %15, %17 : vector<8x256xf32>
      %c0_16 = arith.constant 0 : index
      %c0_17 = arith.constant 0 : index
      %19 = vector.load %arg7[%c0_16, %c0_17] : memref<8x256xf32, #tpu.memory_space<vmem>>, vector<8x256xf32>
      tpu.vector_store %arg7[%c0_16, %c0_17], %18 {strides = array<i32>} : memref<8x256xf32, #tpu.memory_space<vmem>>, vector<8x256xf32>,
    } else {
    }
    return
  }
  func.func @transform_0(%arg0: i32, %arg1: i32, %arg2: i32) -> (i32, i32) {
    %c0_i32 = arith.constant 0 : i32
    return %arg0, %arg2 : i32, i32
  }
  func.func @transform_1(%arg0: i32, %arg1: i32, %arg2: i32) -> (i32, i32) {
    %c0_i32 = arith.constant 0 : i32
    return %arg2, %arg1 : i32, i32
  }
  func.func @transform_2(%arg0: i32, %arg1: i32, %arg2: i32) -> (i32, i32) {
    %c0_i32 = arith.constant 0 : i32
    %c0_i32_0 = arith.constant 0 : i32
    return %c0_i32, %arg1 : i32, i32
  }
  func.func @transform_3(%arg0: i32, %arg1: i32, %arg2: i32) -> (i32, i32) {
    %c0_i32 = arith.constant 0 : i32
    %c0_i32_0 = arith.constant 0 : i32
    return %c0_i32, %arg1 : i32, i32
  }
  func.func @transform_4(%arg0: i32, %arg1: i32, %arg2: i32) -> (i32, i32) {
    %c0_i32 = arith.constant 0 : i32
    return %arg0, %arg1 : i32, i32
  }
}

module attributes {stable_mosaic.version = 11 : i64} {
  func.func @_matmul_kernel(%arg0: i32, %arg1: i32, %arg2: i32, %arg3: memref<8x128xbf16, #tpu.memory_space<vmem>>, %arg4: memref<128x128xbf16, #tpu.memory_space<vmem>>, %arg5: memref<1x128xf32, #tpu.memory_space<vmem>>, %arg6: memref<1x128xf32, #tpu.memory_space<vmem>>, %arg7: memref<8x128xf32, #tpu.memory_space<vmem>>, %arg8: memref<8x128xf32, #tpu.memory_space<vmem>>) attributes {dimension_semantics = [#tpu.dimension_semantics<parallel>, #tpu.dimension_semantics<parallel>, #tpu.dimension_semantics<arbitrary>], iteration_bounds = array<i64: 1, 1, 1>, scalar_prefetch = 0 : i64, scratch_operands = 1 : i64, tpu.core_type = #tpu.core_type<tc>, window_params = [{transform_indices = @transform_0, window_bounds = array<i64: 8, 128>}, {transform_indices = @transform_1, window_bounds = array<i64: 128, 128>}, {transform_indices = @transform_2, window_bounds = array<i64: 1, 128>}, {transform_indices = @transform_3, window_bounds = array<i64: 1, 128>}, {transform_indices = @transform_4, window_bounds = array<i64: 8, 128>}]} {
    %c0_i32 = arith.constant 0 : i32
    %0 = arith.cmpi eq, %arg2, %c0_i32 : i32
    %1 = arith.extui %0 : i1 to i32
    %c0_i32_0 = arith.constant 0 : i32
    %2 = arith.cmpi ne, %1, %c0_i32_0 : i32
    scf.if %2 {
      %cst_10 = arith.constant 0.000000e+00 : f32
      %12 = vector.broadcast %cst_10 : f32 to vector<8x128xf32>
      %c0_11 = arith.constant 0 : index
      %c0_12 = arith.constant 0 : index
      %13 = vector.load %arg8[%c0_11, %c0_12] : memref<8x128xf32, #tpu.memory_space<vmem>>, vector<8x128xf32>
      tpu.vector_store %arg8[%c0_11, %c0_12], %12 {strides = array<i32>} : memref<8x128xf32, #tpu.memory_space<vmem>>, vector<8x128xf32>,
    } else {
    }
    %c0 = arith.constant 0 : index
    %c0_1 = arith.constant 0 : index
    %3 = vector.load %arg3[%c0, %c0_1] : memref<8x128xbf16, #tpu.memory_space<vmem>>, vector<8x128xbf16>
    %c0_2 = arith.constant 0 : index
    %c0_3 = arith.constant 0 : index
    %4 = vector.load %arg8[%c0_2, %c0_3] : memref<8x128xf32, #tpu.memory_space<vmem>>, vector<8x128xf32>
    %c0_4 = arith.constant 0 : index
    %c0_5 = arith.constant 0 : index
    %5 = vector.load %arg4[%c0_4, %c0_5] : memref<128x128xbf16, #tpu.memory_space<vmem>>, vector<128x128xbf16>
    %cst = arith.constant dense<0.000000e+00> : vector<8x128xf32>
    %6 = tpu.matmul %3, %5, %cst {dimension_numbers = #tpu.dot_dimension_numbers<[1], [0], [0], [1], [0, 0, 1, 1], [], []>} : vector<8x128xbf16>, vector<128x128xbf16>, vector<8x128xf32> -> vector<8x128xf32>
    %7 = arith.addf %4, %6 : vector<8x128xf32>
    %c0_6 = arith.constant 0 : index
    %c0_7 = arith.constant 0 : index
    %8 = vector.load %arg8[%c0_6, %c0_7] : memref<8x128xf32, #tpu.memory_space<vmem>>, vector<8x128xf32>
    tpu.vector_store %arg8[%c0_6, %c0_7], %7 {strides = array<i32>} : memref<8x128xf32, #tpu.memory_space<vmem>>, vector<8x128xf32>,
    %c0_i32_8 = arith.constant 0 : i32
    %9 = arith.cmpi eq, %arg2, %c0_i32_8 : i32
    %10 = arith.extui %9 : i1 to i32
    %c0_i32_9 = arith.constant 0 : i32
    %11 = arith.cmpi ne, %10, %c0_i32_9 : i32
    scf.if %11 {
      %c0_10 = arith.constant 0 : index
      %c0_11 = arith.constant 0 : index
      %12 = vector.load %arg8[%c0_10, %c0_11] : memref<8x128xf32, #tpu.memory_space<vmem>>, vector<8x128xf32>
      %c0_12 = arith.constant 0 : index
      %c0_13 = arith.constant 0 : index
      %13 = vector.load %arg5[%c0_12, %c0_13] : memref<1x128xf32, #tpu.memory_space<vmem>>, vector<1x128xf32>
      %14 = vector.broadcast %13 : vector<1x128xf32> to vector<8x128xf32>
      %15 = arith.mulf %12, %14 : vector<8x128xf32>
      %c0_14 = arith.constant 0 : index
      %c0_15 = arith.constant 0 : index
      %16 = vector.load %arg6[%c0_14, %c0_15] : memref<1x128xf32, #tpu.memory_space<vmem>>, vector<1x128xf32>
      %17 = vector.broadcast %16 : vector<1x128xf32> to vector<8x128xf32>
      %18 = arith.addf %15, %17 : vector<8x128xf32>
      %c0_16 = arith.constant 0 : index
      %c0_17 = arith.constant 0 : index
      %19 = vector.load %arg7[%c0_16, %c0_17] : memref<8x128xf32, #tpu.memory_space<vmem>>, vector<8x128xf32>
      tpu.vector_store %arg7[%c0_16, %c0_17], %18 {strides = array<i32>} : memref<8x128xf32, #tpu.memory_space<vmem>>, vector<8x128xf32>,
    } else {
    }
    return
  }
  func.func @transform_0(%arg0: i32, %arg1: i32, %arg2: i32) -> (i32, i32) {
    %c0_i32 = arith.constant 0 : i32
    return %arg0, %arg2 : i32, i32
  }
  func.func @transform_1(%arg0: i32, %arg1: i32, %arg2: i32) -> (i32, i32) {
    %c0_i32 = arith.constant 0 : i32
    return %arg2, %arg1 : i32, i32
  }
  func.func @transform_2(%arg0: i32, %arg1: i32, %arg2: i32) -> (i32, i32) {
    %c0_i32 = arith.constant 0 : i32
    %c0_i32_0 = arith.constant 0 : i32
    return %c0_i32, %arg1 : i32, i32
  }
  func.func @transform_3(%arg0: i32, %arg1: i32, %arg2: i32) -> (i32, i32) {
    %c0_i32 = arith.constant 0 : i32
    %c0_i32_0 = arith.constant 0 : i32
    return %c0_i32, %arg1 : i32, i32
  }
  func.func @transform_4(%arg0: i32, %arg1: i32, %arg2: i32) -> (i32, i32) {
    %c0_i32 = arith.constant 0 : i32
    return %arg0, %arg1 : i32, i32
  }
}

module attributes {stable_mosaic.version = 11 : i64} {
  func.func @_embed_kernel(%arg0: memref<16xi32, #tpu.memory_space<smem>>, %arg1: memref<256x128xf32, #tpu.memory_space<any>>, %arg2: memref<16x128xf32, #tpu.memory_space<vmem>>, %arg3: memref<16x128xf32, #tpu.memory_space<vmem>>, %arg4: memref<16x128xf32, #tpu.memory_space<vmem>>, %arg5: memref<16x!tpu.dma_semaphore, #tpu.memory_space<semaphore_mem>>) attributes {dimension_semantics = [], scalar_prefetch = 0 : i64, scratch_operands = 2 : i64, tpu.core_type = #tpu.core_type<tc>} {
    %c0 = arith.constant 0 : index
    %0 = memref.load %arg0[%c0] : memref<16xi32, #tpu.memory_space<smem>>
    %c0_i32 = arith.constant 0 : i32
    %c0_i32_0 = arith.constant 0 : i32
    %1 = tpu.memref_slice %arg1[%0, %c0_i32_0] : memref<256x128xf32, #tpu.memory_space<any>> -> memref<1x128xf32, #tpu.memory_space<any>>
    %c0_i32_1 = arith.constant 0 : i32
    %c0_i32_2 = arith.constant 0 : i32
    %2 = tpu.memref_slice %arg4[%c0_i32_1, %c0_i32_2] : memref<16x128xf32, #tpu.memory_space<vmem>> -> memref<1x128xf32, #tpu.memory_space<vmem>>
    %3 = tpu.memref_slice %arg5[%c0_i32] : memref<16x!tpu.dma_semaphore, #tpu.memory_space<semaphore_mem>> -> memref<1x!tpu.dma_semaphore, #tpu.memory_space<semaphore_mem>>
    %4 = tpu.memref_squeeze %3 : memref<1x!tpu.dma_semaphore, #tpu.memory_space<semaphore_mem>> -> memref<!tpu.dma_semaphore, #tpu.memory_space<semaphore_mem>>
    tpu.enqueue_dma source(%1 : memref<1x128xf32, #tpu.memory_space<any>>) target(%2 : memref<1x128xf32, #tpu.memory_space<vmem>>) target_semaphore(%4 : memref<!tpu.dma_semaphore, #tpu.memory_space<semaphore_mem>>)
    %c1 = arith.constant 1 : index
    %5 = memref.load %arg0[%c1] : memref<16xi32, #tpu.memory_space<smem>>
    %c1_i32 = arith.constant 1 : i32
    %c0_i32_3 = arith.constant 0 : i32
    %6 = tpu.memref_slice %arg1[%5, %c0_i32_3] : memref<256x128xf32, #tpu.memory_space<any>> -> memref<1x128xf32, #tpu.memory_space<any>>
    %c1_i32_4 = arith.constant 1 : i32
    %c0_i32_5 = arith.constant 0 : i32
    %7 = tpu.memref_slice %arg4[%c1_i32_4, %c0_i32_5] : memref<16x128xf32, #tpu.memory_space<vmem>> -> memref<1x128xf32, #tpu.memory_space<vmem>>
    %8 = tpu.memref_slice %arg5[%c1_i32] : memref<16x!tpu.dma_semaphore, #tpu.memory_space<semaphore_mem>> -> memref<1x!tpu.dma_semaphore, #tpu.memory_space<semaphore_mem>>
    %9 = tpu.memref_squeeze %8 : memref<1x!tpu.dma_semaphore, #tpu.memory_space<semaphore_mem>> -> memref<!tpu.dma_semaphore, #tpu.memory_space<semaphore_mem>>
    tpu.enqueue_dma source(%6 : memref<1x128xf32, #tpu.memory_space<any>>) target(%7 : memref<1x128xf32, #tpu.memory_space<vmem>>) target_semaphore(%9 : memref<!tpu.dma_semaphore, #tpu.memory_space<semaphore_mem>>)
    %c2 = arith.constant 2 : index
    %10 = memref.load %arg0[%c2] : memref<16xi32, #tpu.memory_space<smem>>
    %c2_i32 = arith.constant 2 : i32
    %c0_i32_6 = arith.constant 0 : i32
    %11 = tpu.memref_slice %arg1[%10, %c0_i32_6] : memref<256x128xf32, #tpu.memory_space<any>> -> memref<1x128xf32, #tpu.memory_space<any>>
    %c2_i32_7 = arith.constant 2 : i32
    %c0_i32_8 = arith.constant 0 : i32
    %12 = tpu.memref_slice %arg4[%c2_i32_7, %c0_i32_8] : memref<16x128xf32, #tpu.memory_space<vmem>> -> memref<1x128xf32, #tpu.memory_space<vmem>>
    %13 = tpu.memref_slice %arg5[%c2_i32] : memref<16x!tpu.dma_semaphore, #tpu.memory_space<semaphore_mem>> -> memref<1x!tpu.dma_semaphore, #tpu.memory_space<semaphore_mem>>
    %14 = tpu.memref_squeeze %13 : memref<1x!tpu.dma_semaphore, #tpu.memory_space<semaphore_mem>> -> memref<!tpu.dma_semaphore, #tpu.memory_space<semaphore_mem>>
    tpu.enqueue_dma source(%11 : memref<1x128xf32, #tpu.memory_space<any>>) target(%12 : memref<1x128xf32, #tpu.memory_space<vmem>>) target_semaphore(%14 : memref<!tpu.dma_semaphore, #tpu.memory_space<semaphore_mem>>)
    %c3 = arith.constant 3 : index
    %15 = memref.load %arg0[%c3] : memref<16xi32, #tpu.memory_space<smem>>
    %c3_i32 = arith.constant 3 : i32
    %c0_i32_9 = arith.constant 0 : i32
    %16 = tpu.memref_slice %arg1[%15, %c0_i32_9] : memref<256x128xf32, #tpu.memory_space<any>> -> memref<1x128xf32, #tpu.memory_space<any>>
    %c3_i32_10 = arith.constant 3 : i32
    %c0_i32_11 = arith.constant 0 : i32
    %17 = tpu.memref_slice %arg4[%c3_i32_10, %c0_i32_11] : memref<16x128xf32, #tpu.memory_space<vmem>> -> memref<1x128xf32, #tpu.memory_space<vmem>>
    %18 = tpu.memref_slice %arg5[%c3_i32] : memref<16x!tpu.dma_semaphore, #tpu.memory_space<semaphore_mem>> -> memref<1x!tpu.dma_semaphore, #tpu.memory_space<semaphore_mem>>
    %19 = tpu.memref_squeeze %18 : memref<1x!tpu.dma_semaphore, #tpu.memory_space<semaphore_mem>> -> memref<!tpu.dma_semaphore, #tpu.memory_space<semaphore_mem>>
    tpu.enqueue_dma source(%16 : memref<1x128xf32, #tpu.memory_space<any>>) target(%17 : memref<1x128xf32, #tpu.memory_space<vmem>>) target_semaphore(%19 : memref<!tpu.dma_semaphore, #tpu.memory_space<semaphore_mem>>)
    %c4 = arith.constant 4 : index
    %20 = memref.load %arg0[%c4] : memref<16xi32, #tpu.memory_space<smem>>
    %c4_i32 = arith.constant 4 : i32
    %c0_i32_12 = arith.constant 0 : i32
    %21 = tpu.memref_slice %arg1[%20, %c0_i32_12] : memref<256x128xf32, #tpu.memory_space<any>> -> memref<1x128xf32, #tpu.memory_space<any>>
    %c4_i32_13 = arith.constant 4 : i32
    %c0_i32_14 = arith.constant 0 : i32
    %22 = tpu.memref_slice %arg4[%c4_i32_13, %c0_i32_14] : memref<16x128xf32, #tpu.memory_space<vmem>> -> memref<1x128xf32, #tpu.memory_space<vmem>>
    %23 = tpu.memref_slice %arg5[%c4_i32] : memref<16x!tpu.dma_semaphore, #tpu.memory_space<semaphore_mem>> -> memref<1x!tpu.dma_semaphore, #tpu.memory_space<semaphore_mem>>
    %24 = tpu.memref_squeeze %23 : memref<1x!tpu.dma_semaphore, #tpu.memory_space<semaphore_mem>> -> memref<!tpu.dma_semaphore, #tpu.memory_space<semaphore_mem>>
    tpu.enqueue_dma source(%21 : memref<1x128xf32, #tpu.memory_space<any>>) target(%22 : memref<1x128xf32, #tpu.memory_space<vmem>>) target_semaphore(%24 : memref<!tpu.dma_semaphore, #tpu.memory_space<semaphore_mem>>)
    %c5 = arith.constant 5 : index
    %25 = memref.load %arg0[%c5] : memref<16xi32, #tpu.memory_space<smem>>
    %c5_i32 = arith.constant 5 : i32
    %c0_i32_15 = arith.constant 0 : i32
    %26 = tpu.memref_slice %arg1[%25, %c0_i32_15] : memref<256x128xf32, #tpu.memory_space<any>> -> memref<1x128xf32, #tpu.memory_space<any>>
    %c5_i32_16 = arith.constant 5 : i32
    %c0_i32_17 = arith.constant 0 : i32
    %27 = tpu.memref_slice %arg4[%c5_i32_16, %c0_i32_17] : memref<16x128xf32, #tpu.memory_space<vmem>> -> memref<1x128xf32, #tpu.memory_space<vmem>>
    %28 = tpu.memref_slice %arg5[%c5_i32] : memref<16x!tpu.dma_semaphore, #tpu.memory_space<semaphore_mem>> -> memref<1x!tpu.dma_semaphore, #tpu.memory_space<semaphore_mem>>
    %29 = tpu.memref_squeeze %28 : memref<1x!tpu.dma_semaphore, #tpu.memory_space<semaphore_mem>> -> memref<!tpu.dma_semaphore, #tpu.memory_space<semaphore_mem>>
    tpu.enqueue_dma source(%26 : memref<1x128xf32, #tpu.memory_space<any>>) target(%27 : memref<1x128xf32, #tpu.memory_space<vmem>>) target_semaphore(%29 : memref<!tpu.dma_semaphore, #tpu.memory_space<semaphore_mem>>)
    %c6 = arith.constant 6 : index
    %30 = memref.load %arg0[%c6] : memref<16xi32, #tpu.memory_space<smem>>
    %c6_i32 = arith.constant 6 : i32
    %c0_i32_18 = arith.constant 0 : i32
    %31 = tpu.memref_slice %arg1[%30, %c0_i32_18] : memref<256x128xf32, #tpu.memory_space<any>> -> memref<1x128xf32, #tpu.memory_space<any>>
    %c6_i32_19 = arith.constant 6 : i32
    %c0_i32_20 = arith.constant 0 : i32
    %32 = tpu.memref_slice %arg4[%c6_i32_19, %c0_i32_20] : memref<16x128xf32, #tpu.memory_space<vmem>> -> memref<1x128xf32, #tpu.memory_space<vmem>>
    %33 = tpu.memref_slice %arg5[%c6_i32] : memref<16x!tpu.dma_semaphore, #tpu.memory_space<semaphore_mem>> -> memref<1x!tpu.dma_semaphore, #tpu.memory_space<semaphore_mem>>
    %34 = tpu.memref_squeeze %33 : memref<1x!tpu.dma_semaphore, #tpu.memory_space<semaphore_mem>> -> memref<!tpu.dma_semaphore, #tpu.memory_space<semaphore_mem>>
    tpu.enqueue_dma source(%31 : memref<1x128xf32, #tpu.memory_space<any>>) target(%32 : memref<1x128xf32, #tpu.memory_space<vmem>>) target_semaphore(%34 : memref<!tpu.dma_semaphore, #tpu.memory_space<semaphore_mem>>)
    %c7 = arith.constant 7 : index
    %35 = memref.load %arg0[%c7] : memref<16xi32, #tpu.memory_space<smem>>
    %c7_i32 = arith.constant 7 : i32
    %c0_i32_21 = arith.constant 0 : i32
    %36 = tpu.memref_slice %arg1[%35, %c0_i32_21] : memref<256x128xf32, #tpu.memory_space<any>> -> memref<1x128xf32, #tpu.memory_space<any>>
    %c7_i32_22 = arith.constant 7 : i32
    %c0_i32_23 = arith.constant 0 : i32
    %37 = tpu.memref_slice %arg4[%c7_i32_22, %c0_i32_23] : memref<16x128xf32, #tpu.memory_space<vmem>> -> memref<1x128xf32, #tpu.memory_space<vmem>>
    %38 = tpu.memref_slice %arg5[%c7_i32] : memref<16x!tpu.dma_semaphore, #tpu.memory_space<semaphore_mem>> -> memref<1x!tpu.dma_semaphore, #tpu.memory_space<semaphore_mem>>
    %39 = tpu.memref_squeeze %38 : memref<1x!tpu.dma_semaphore, #tpu.memory_space<semaphore_mem>> -> memref<!tpu.dma_semaphore, #tpu.memory_space<semaphore_mem>>
    tpu.enqueue_dma source(%36 : memref<1x128xf32, #tpu.memory_space<any>>) target(%37 : memref<1x128xf32, #tpu.memory_space<vmem>>) target_semaphore(%39 : memref<!tpu.dma_semaphore, #tpu.memory_space<semaphore_mem>>)
    %c8 = arith.constant 8 : index
    %40 = memref.load %arg0[%c8] : memref<16xi32, #tpu.memory_space<smem>>
    %c8_i32 = arith.constant 8 : i32
    %c0_i32_24 = arith.constant 0 : i32
    %41 = tpu.memref_slice %arg1[%40, %c0_i32_24] : memref<256x128xf32, #tpu.memory_space<any>> -> memref<1x128xf32, #tpu.memory_space<any>>
    %c8_i32_25 = arith.constant 8 : i32
    %c0_i32_26 = arith.constant 0 : i32
    %42 = tpu.memref_slice %arg4[%c8_i32_25, %c0_i32_26] : memref<16x128xf32, #tpu.memory_space<vmem>> -> memref<1x128xf32, #tpu.memory_space<vmem>>
    %43 = tpu.memref_slice %arg5[%c8_i32] : memref<16x!tpu.dma_semaphore, #tpu.memory_space<semaphore_mem>> -> memref<1x!tpu.dma_semaphore, #tpu.memory_space<semaphore_mem>>
    %44 = tpu.memref_squeeze %43 : memref<1x!tpu.dma_semaphore, #tpu.memory_space<semaphore_mem>> -> memref<!tpu.dma_semaphore, #tpu.memory_space<semaphore_mem>>
    tpu.enqueue_dma source(%41 : memref<1x128xf32, #tpu.memory_space<any>>) target(%42 : memref<1x128xf32, #tpu.memory_space<vmem>>) target_semaphore(%44 : memref<!tpu.dma_semaphore, #tpu.memory_space<semaphore_mem>>)
    %c9 = arith.constant 9 : index
    %45 = memref.load %arg0[%c9] : memref<16xi32, #tpu.memory_space<smem>>
    %c9_i32 = arith.constant 9 : i32
    %c0_i32_27 = arith.constant 0 : i32
    %46 = tpu.memref_slice %arg1[%45, %c0_i32_27] : memref<256x128xf32, #tpu.memory_space<any>> -> memref<1x128xf32, #tpu.memory_space<any>>
    %c9_i32_28 = arith.constant 9 : i32
    %c0_i32_29 = arith.constant 0 : i32
    %47 = tpu.memref_slice %arg4[%c9_i32_28, %c0_i32_29] : memref<16x128xf32, #tpu.memory_space<vmem>> -> memref<1x128xf32, #tpu.memory_space<vmem>>
    %48 = tpu.memref_slice %arg5[%c9_i32] : memref<16x!tpu.dma_semaphore, #tpu.memory_space<semaphore_mem>> -> memref<1x!tpu.dma_semaphore, #tpu.memory_space<semaphore_mem>>
    %49 = tpu.memref_squeeze %48 : memref<1x!tpu.dma_semaphore, #tpu.memory_space<semaphore_mem>> -> memref<!tpu.dma_semaphore, #tpu.memory_space<semaphore_mem>>
    tpu.enqueue_dma source(%46 : memref<1x128xf32, #tpu.memory_space<any>>) target(%47 : memref<1x128xf32, #tpu.memory_space<vmem>>) target_semaphore(%49 : memref<!tpu.dma_semaphore, #tpu.memory_space<semaphore_mem>>)
    %c10 = arith.constant 10 : index
    %50 = memref.load %arg0[%c10] : memref<16xi32, #tpu.memory_space<smem>>
    %c10_i32 = arith.constant 10 : i32
    %c0_i32_30 = arith.constant 0 : i32
    %51 = tpu.memref_slice %arg1[%50, %c0_i32_30] : memref<256x128xf32, #tpu.memory_space<any>> -> memref<1x128xf32, #tpu.memory_space<any>>
    %c10_i32_31 = arith.constant 10 : i32
    %c0_i32_32 = arith.constant 0 : i32
    %52 = tpu.memref_slice %arg4[%c10_i32_31, %c0_i32_32] : memref<16x128xf32, #tpu.memory_space<vmem>> -> memref<1x128xf32, #tpu.memory_space<vmem>>
    %53 = tpu.memref_slice %arg5[%c10_i32] : memref<16x!tpu.dma_semaphore, #tpu.memory_space<semaphore_mem>> -> memref<1x!tpu.dma_semaphore, #tpu.memory_space<semaphore_mem>>
    %54 = tpu.memref_squeeze %53 : memref<1x!tpu.dma_semaphore, #tpu.memory_space<semaphore_mem>> -> memref<!tpu.dma_semaphore, #tpu.memory_space<semaphore_mem>>
    tpu.enqueue_dma source(%51 : memref<1x128xf32, #tpu.memory_space<any>>) target(%52 : memref<1x128xf32, #tpu.memory_space<vmem>>) target_semaphore(%54 : memref<!tpu.dma_semaphore, #tpu.memory_space<semaphore_mem>>)
    %c11 = arith.constant 11 : index
    %55 = memref.load %arg0[%c11] : memref<16xi32, #tpu.memory_space<smem>>
    %c11_i32 = arith.constant 11 : i32
    %c0_i32_33 = arith.constant 0 : i32
    %56 = tpu.memref_slice %arg1[%55, %c0_i32_33] : memref<256x128xf32, #tpu.memory_space<any>> -> memref<1x128xf32, #tpu.memory_space<any>>
    %c11_i32_34 = arith.constant 11 : i32
    %c0_i32_35 = arith.constant 0 : i32
    %57 = tpu.memref_slice %arg4[%c11_i32_34, %c0_i32_35] : memref<16x128xf32, #tpu.memory_space<vmem>> -> memref<1x128xf32, #tpu.memory_space<vmem>>
    %58 = tpu.memref_slice %arg5[%c11_i32] : memref<16x!tpu.dma_semaphore, #tpu.memory_space<semaphore_mem>> -> memref<1x!tpu.dma_semaphore, #tpu.memory_space<semaphore_mem>>
    %59 = tpu.memref_squeeze %58 : memref<1x!tpu.dma_semaphore, #tpu.memory_space<semaphore_mem>> -> memref<!tpu.dma_semaphore, #tpu.memory_space<semaphore_mem>>
    tpu.enqueue_dma source(%56 : memref<1x128xf32, #tpu.memory_space<any>>) target(%57 : memref<1x128xf32, #tpu.memory_space<vmem>>) target_semaphore(%59 : memref<!tpu.dma_semaphore, #tpu.memory_space<semaphore_mem>>)
    %c12 = arith.constant 12 : index
    %60 = memref.load %arg0[%c12] : memref<16xi32, #tpu.memory_space<smem>>
    %c12_i32 = arith.constant 12 : i32
    %c0_i32_36 = arith.constant 0 : i32
    %61 = tpu.memref_slice %arg1[%60, %c0_i32_36] : memref<256x128xf32, #tpu.memory_space<any>> -> memref<1x128xf32, #tpu.memory_space<any>>
    %c12_i32_37 = arith.constant 12 : i32
    %c0_i32_38 = arith.constant 0 : i32
    %62 = tpu.memref_slice %arg4[%c12_i32_37, %c0_i32_38] : memref<16x128xf32, #tpu.memory_space<vmem>> -> memref<1x128xf32, #tpu.memory_space<vmem>>
    %63 = tpu.memref_slice %arg5[%c12_i32] : memref<16x!tpu.dma_semaphore, #tpu.memory_space<semaphore_mem>> -> memref<1x!tpu.dma_semaphore, #tpu.memory_space<semaphore_mem>>
    %64 = tpu.memref_squeeze %63 : memref<1x!tpu.dma_semaphore, #tpu.memory_space<semaphore_mem>> -> memref<!tpu.dma_semaphore, #tpu.memory_space<semaphore_mem>>
    tpu.enqueue_dma source(%61 : memref<1x128xf32, #tpu.memory_space<any>>) target(%62 : memref<1x128xf32, #tpu.memory_space<vmem>>) target_semaphore(%64 : memref<!tpu.dma_semaphore, #tpu.memory_space<semaphore_mem>>)
    %c13 = arith.constant 13 : index
    %65 = memref.load %arg0[%c13] : memref<16xi32, #tpu.memory_space<smem>>
    %c13_i32 = arith.constant 13 : i32
    %c0_i32_39 = arith.constant 0 : i32
    %66 = tpu.memref_slice %arg1[%65, %c0_i32_39] : memref<256x128xf32, #tpu.memory_space<any>> -> memref<1x128xf32, #tpu.memory_space<any>>
    %c13_i32_40 = arith.constant 13 : i32
    %c0_i32_41 = arith.constant 0 : i32
    %67 = tpu.memref_slice %arg4[%c13_i32_40, %c0_i32_41] : memref<16x128xf32, #tpu.memory_space<vmem>> -> memref<1x128xf32, #tpu.memory_space<vmem>>
    %68 = tpu.memref_slice %arg5[%c13_i32] : memref<16x!tpu.dma_semaphore, #tpu.memory_space<semaphore_mem>> -> memref<1x!tpu.dma_semaphore, #tpu.memory_space<semaphore_mem>>
    %69 = tpu.memref_squeeze %68 : memref<1x!tpu.dma_semaphore, #tpu.memory_space<semaphore_mem>> -> memref<!tpu.dma_semaphore, #tpu.memory_space<semaphore_mem>>
    tpu.enqueue_dma source(%66 : memref<1x128xf32, #tpu.memory_space<any>>) target(%67 : memref<1x128xf32, #tpu.memory_space<vmem>>) target_semaphore(%69 : memref<!tpu.dma_semaphore, #tpu.memory_space<semaphore_mem>>)
    %c14 = arith.constant 14 : index
    %70 = memref.load %arg0[%c14] : memref<16xi32, #tpu.memory_space<smem>>
    %c14_i32 = arith.constant 14 : i32
    %c0_i32_42 = arith.constant 0 : i32
    %71 = tpu.memref_slice %arg1[%70, %c0_i32_42] : memref<256x128xf32, #tpu.memory_space<any>> -> memref<1x128xf32, #tpu.memory_space<any>>
    %c14_i32_43 = arith.constant 14 : i32
    %c0_i32_44 = arith.constant 0 : i32
    %72 = tpu.memref_slice %arg4[%c14_i32_43, %c0_i32_44] : memref<16x128xf32, #tpu.memory_space<vmem>> -> memref<1x128xf32, #tpu.memory_space<vmem>>
    %73 = tpu.memref_slice %arg5[%c14_i32] : memref<16x!tpu.dma_semaphore, #tpu.memory_space<semaphore_mem>> -> memref<1x!tpu.dma_semaphore, #tpu.memory_space<semaphore_mem>>
    %74 = tpu.memref_squeeze %73 : memref<1x!tpu.dma_semaphore, #tpu.memory_space<semaphore_mem>> -> memref<!tpu.dma_semaphore, #tpu.memory_space<semaphore_mem>>
    tpu.enqueue_dma source(%71 : memref<1x128xf32, #tpu.memory_space<any>>) target(%72 : memref<1x128xf32, #tpu.memory_space<vmem>>) target_semaphore(%74 : memref<!tpu.dma_semaphore, #tpu.memory_space<semaphore_mem>>)
    %c15 = arith.constant 15 : index
    %75 = memref.load %arg0[%c15] : memref<16xi32, #tpu.memory_space<smem>>
    %c15_i32 = arith.constant 15 : i32
    %c0_i32_45 = arith.constant 0 : i32
    %76 = tpu.memref_slice %arg1[%75, %c0_i32_45] : memref<256x128xf32, #tpu.memory_space<any>> -> memref<1x128xf32, #tpu.memory_space<any>>
    %c15_i32_46 = arith.constant 15 : i32
    %c0_i32_47 = arith.constant 0 : i32
    %77 = tpu.memref_slice %arg4[%c15_i32_46, %c0_i32_47] : memref<16x128xf32, #tpu.memory_space<vmem>> -> memref<1x128xf32, #tpu.memory_space<vmem>>
    %78 = tpu.memref_slice %arg5[%c15_i32] : memref<16x!tpu.dma_semaphore, #tpu.memory_space<semaphore_mem>> -> memref<1x!tpu.dma_semaphore, #tpu.memory_space<semaphore_mem>>
    %79 = tpu.memref_squeeze %78 : memref<1x!tpu.dma_semaphore, #tpu.memory_space<semaphore_mem>> -> memref<!tpu.dma_semaphore, #tpu.memory_space<semaphore_mem>>
    tpu.enqueue_dma source(%76 : memref<1x128xf32, #tpu.memory_space<any>>) target(%77 : memref<1x128xf32, #tpu.memory_space<vmem>>) target_semaphore(%79 : memref<!tpu.dma_semaphore, #tpu.memory_space<semaphore_mem>>)
    %c0_i32_48 = arith.constant 0 : i32
    %c0_i32_49 = arith.constant 0 : i32
    %80 = tpu.memref_slice %arg1[%0, %c0_i32_49] : memref<256x128xf32, #tpu.memory_space<any>> -> memref<1x128xf32, #tpu.memory_space<any>>
    %c0_i32_50 = arith.constant 0 : i32
    %c0_i32_51 = arith.constant 0 : i32
    %81 = tpu.memref_slice %arg4[%c0_i32_50, %c0_i32_51] : memref<16x128xf32, #tpu.memory_space<vmem>> -> memref<1x128xf32, #tpu.memory_space<vmem>>
    %82 = tpu.memref_slice %arg5[%c0_i32_48] : memref<16x!tpu.dma_semaphore, #tpu.memory_space<semaphore_mem>> -> memref<1x!tpu.dma_semaphore, #tpu.memory_space<semaphore_mem>>
    %83 = tpu.memref_squeeze %82 : memref<1x!tpu.dma_semaphore, #tpu.memory_space<semaphore_mem>> -> memref<!tpu.dma_semaphore, #tpu.memory_space<semaphore_mem>>
    tpu.wait_dma2 semaphore(%83 : memref<!tpu.dma_semaphore, #tpu.memory_space<semaphore_mem>>) src(%80 : memref<1x128xf32, #tpu.memory_space<any>>) dst(%81 : memref<1x128xf32, #tpu.memory_space<vmem>>)
    %c1_i32_52 = arith.constant 1 : i32
    %c0_i32_53 = arith.constant 0 : i32
    %84 = tpu.memref_slice %arg1[%5, %c0_i32_53] : memref<256x128xf32, #tpu.memory_space<any>> -> memref<1x128xf32, #tpu.memory_space<any>>
    %c1_i32_54 = arith.constant 1 : i32
    %c0_i32_55 = arith.constant 0 : i32
    %85 = tpu.memref_slice %arg4[%c1_i32_54, %c0_i32_55] : memref<16x128xf32, #tpu.memory_space<vmem>> -> memref<1x128xf32, #tpu.memory_space<vmem>>
    %86 = tpu.memref_slice %arg5[%c1_i32_52] : memref<16x!tpu.dma_semaphore, #tpu.memory_space<semaphore_mem>> -> memref<1x!tpu.dma_semaphore, #tpu.memory_space<semaphore_mem>>
    %87 = tpu.memref_squeeze %86 : memref<1x!tpu.dma_semaphore, #tpu.memory_space<semaphore_mem>> -> memref<!tpu.dma_semaphore, #tpu.memory_space<semaphore_mem>>
    tpu.wait_dma2 semaphore(%87 : memref<!tpu.dma_semaphore, #tpu.memory_space<semaphore_mem>>) src(%84 : memref<1x128xf32, #tpu.memory_space<any>>) dst(%85 : memref<1x128xf32, #tpu.memory_space<vmem>>)
    %c2_i32_56 = arith.constant 2 : i32
    %c0_i32_57 = arith.constant 0 : i32
    %88 = tpu.memref_slice %arg1[%10, %c0_i32_57] : memref<256x128xf32, #tpu.memory_space<any>> -> memref<1x128xf32, #tpu.memory_space<any>>
    %c2_i32_58 = arith.constant 2 : i32
    %c0_i32_59 = arith.constant 0 : i32
    %89 = tpu.memref_slice %arg4[%c2_i32_58, %c0_i32_59] : memref<16x128xf32, #tpu.memory_space<vmem>> -> memref<1x128xf32, #tpu.memory_space<vmem>>
    %90 = tpu.memref_slice %arg5[%c2_i32_56] : memref<16x!tpu.dma_semaphore, #tpu.memory_space<semaphore_mem>> -> memref<1x!tpu.dma_semaphore, #tpu.memory_space<semaphore_mem>>
    %91 = tpu.memref_squeeze %90 : memref<1x!tpu.dma_semaphore, #tpu.memory_space<semaphore_mem>> -> memref<!tpu.dma_semaphore, #tpu.memory_space<semaphore_mem>>
    tpu.wait_dma2 semaphore(%91 : memref<!tpu.dma_semaphore, #tpu.memory_space<semaphore_mem>>) src(%88 : memref<1x128xf32, #tpu.memory_space<any>>) dst(%89 : memref<1x128xf32, #tpu.memory_space<vmem>>)
    %c3_i32_60 = arith.constant 3 : i32
    %c0_i32_61 = arith.constant 0 : i32
    %92 = tpu.memref_slice %arg1[%15, %c0_i32_61] : memref<256x128xf32, #tpu.memory_space<any>> -> memref<1x128xf32, #tpu.memory_space<any>>
    %c3_i32_62 = arith.constant 3 : i32
    %c0_i32_63 = arith.constant 0 : i32
    %93 = tpu.memref_slice %arg4[%c3_i32_62, %c0_i32_63] : memref<16x128xf32, #tpu.memory_space<vmem>> -> memref<1x128xf32, #tpu.memory_space<vmem>>
    %94 = tpu.memref_slice %arg5[%c3_i32_60] : memref<16x!tpu.dma_semaphore, #tpu.memory_space<semaphore_mem>> -> memref<1x!tpu.dma_semaphore, #tpu.memory_space<semaphore_mem>>
    %95 = tpu.memref_squeeze %94 : memref<1x!tpu.dma_semaphore, #tpu.memory_space<semaphore_mem>> -> memref<!tpu.dma_semaphore, #tpu.memory_space<semaphore_mem>>
    tpu.wait_dma2 semaphore(%95 : memref<!tpu.dma_semaphore, #tpu.memory_space<semaphore_mem>>) src(%92 : memref<1x128xf32, #tpu.memory_space<any>>) dst(%93 : memref<1x128xf32, #tpu.memory_space<vmem>>)
    %c4_i32_64 = arith.constant 4 : i32
    %c0_i32_65 = arith.constant 0 : i32
    %96 = tpu.memref_slice %arg1[%20, %c0_i32_65] : memref<256x128xf32, #tpu.memory_space<any>> -> memref<1x128xf32, #tpu.memory_space<any>>
    %c4_i32_66 = arith.constant 4 : i32
    %c0_i32_67 = arith.constant 0 : i32
    %97 = tpu.memref_slice %arg4[%c4_i32_66, %c0_i32_67] : memref<16x128xf32, #tpu.memory_space<vmem>> -> memref<1x128xf32, #tpu.memory_space<vmem>>
    %98 = tpu.memref_slice %arg5[%c4_i32_64] : memref<16x!tpu.dma_semaphore, #tpu.memory_space<semaphore_mem>> -> memref<1x!tpu.dma_semaphore, #tpu.memory_space<semaphore_mem>>
    %99 = tpu.memref_squeeze %98 : memref<1x!tpu.dma_semaphore, #tpu.memory_space<semaphore_mem>> -> memref<!tpu.dma_semaphore, #tpu.memory_space<semaphore_mem>>
    tpu.wait_dma2 semaphore(%99 : memref<!tpu.dma_semaphore, #tpu.memory_space<semaphore_mem>>) src(%96 : memref<1x128xf32, #tpu.memory_space<any>>) dst(%97 : memref<1x128xf32, #tpu.memory_space<vmem>>)
    %c5_i32_68 = arith.constant 5 : i32
    %c0_i32_69 = arith.constant 0 : i32
    %100 = tpu.memref_slice %arg1[%25, %c0_i32_69] : memref<256x128xf32, #tpu.memory_space<any>> -> memref<1x128xf32, #tpu.memory_space<any>>
    %c5_i32_70 = arith.constant 5 : i32
    %c0_i32_71 = arith.constant 0 : i32
    %101 = tpu.memref_slice %arg4[%c5_i32_70, %c0_i32_71] : memref<16x128xf32, #tpu.memory_space<vmem>> -> memref<1x128xf32, #tpu.memory_space<vmem>>
    %102 = tpu.memref_slice %arg5[%c5_i32_68] : memref<16x!tpu.dma_semaphore, #tpu.memory_space<semaphore_mem>> -> memref<1x!tpu.dma_semaphore, #tpu.memory_space<semaphore_mem>>
    %103 = tpu.memref_squeeze %102 : memref<1x!tpu.dma_semaphore, #tpu.memory_space<semaphore_mem>> -> memref<!tpu.dma_semaphore, #tpu.memory_space<semaphore_mem>>
    tpu.wait_dma2 semaphore(%103 : memref<!tpu.dma_semaphore, #tpu.memory_space<semaphore_mem>>) src(%100 : memref<1x128xf32, #tpu.memory_space<any>>) dst(%101 : memref<1x128xf32, #tpu.memory_space<vmem>>)
    %c6_i32_72 = arith.constant 6 : i32
    %c0_i32_73 = arith.constant 0 : i32
    %104 = tpu.memref_slice %arg1[%30, %c0_i32_73] : memref<256x128xf32, #tpu.memory_space<any>> -> memref<1x128xf32, #tpu.memory_space<any>>
    %c6_i32_74 = arith.constant 6 : i32
    %c0_i32_75 = arith.constant 0 : i32
    %105 = tpu.memref_slice %arg4[%c6_i32_74, %c0_i32_75] : memref<16x128xf32, #tpu.memory_space<vmem>> -> memref<1x128xf32, #tpu.memory_space<vmem>>
    %106 = tpu.memref_slice %arg5[%c6_i32_72] : memref<16x!tpu.dma_semaphore, #tpu.memory_space<semaphore_mem>> -> memref<1x!tpu.dma_semaphore, #tpu.memory_space<semaphore_mem>>
    %107 = tpu.memref_squeeze %106 : memref<1x!tpu.dma_semaphore, #tpu.memory_space<semaphore_mem>> -> memref<!tpu.dma_semaphore, #tpu.memory_space<semaphore_mem>>
    tpu.wait_dma2 semaphore(%107 : memref<!tpu.dma_semaphore, #tpu.memory_space<semaphore_mem>>) src(%104 : memref<1x128xf32, #tpu.memory_space<any>>) dst(%105 : memref<1x128xf32, #tpu.memory_space<vmem>>)
    %c7_i32_76 = arith.constant 7 : i32
    %c0_i32_77 = arith.constant 0 : i32
    %108 = tpu.memref_slice %arg1[%35, %c0_i32_77] : memref<256x128xf32, #tpu.memory_space<any>> -> memref<1x128xf32, #tpu.memory_space<any>>
    %c7_i32_78 = arith.constant 7 : i32
    %c0_i32_79 = arith.constant 0 : i32
    %109 = tpu.memref_slice %arg4[%c7_i32_78, %c0_i32_79] : memref<16x128xf32, #tpu.memory_space<vmem>> -> memref<1x128xf32, #tpu.memory_space<vmem>>
    %110 = tpu.memref_slice %arg5[%c7_i32_76] : memref<16x!tpu.dma_semaphore, #tpu.memory_space<semaphore_mem>> -> memref<1x!tpu.dma_semaphore, #tpu.memory_space<semaphore_mem>>
    %111 = tpu.memref_squeeze %110 : memref<1x!tpu.dma_semaphore, #tpu.memory_space<semaphore_mem>> -> memref<!tpu.dma_semaphore, #tpu.memory_space<semaphore_mem>>
    tpu.wait_dma2 semaphore(%111 : memref<!tpu.dma_semaphore, #tpu.memory_space<semaphore_mem>>) src(%108 : memref<1x128xf32, #tpu.memory_space<any>>) dst(%109 : memref<1x128xf32, #tpu.memory_space<vmem>>)
    %c8_i32_80 = arith.constant 8 : i32
    %c0_i32_81 = arith.constant 0 : i32
    %112 = tpu.memref_slice %arg1[%40, %c0_i32_81] : memref<256x128xf32, #tpu.memory_space<any>> -> memref<1x128xf32, #tpu.memory_space<any>>
    %c8_i32_82 = arith.constant 8 : i32
    %c0_i32_83 = arith.constant 0 : i32
    %113 = tpu.memref_slice %arg4[%c8_i32_82, %c0_i32_83] : memref<16x128xf32, #tpu.memory_space<vmem>> -> memref<1x128xf32, #tpu.memory_space<vmem>>
    %114 = tpu.memref_slice %arg5[%c8_i32_80] : memref<16x!tpu.dma_semaphore, #tpu.memory_space<semaphore_mem>> -> memref<1x!tpu.dma_semaphore, #tpu.memory_space<semaphore_mem>>
    %115 = tpu.memref_squeeze %114 : memref<1x!tpu.dma_semaphore, #tpu.memory_space<semaphore_mem>> -> memref<!tpu.dma_semaphore, #tpu.memory_space<semaphore_mem>>
    tpu.wait_dma2 semaphore(%115 : memref<!tpu.dma_semaphore, #tpu.memory_space<semaphore_mem>>) src(%112 : memref<1x128xf32, #tpu.memory_space<any>>) dst(%113 : memref<1x128xf32, #tpu.memory_space<vmem>>)
    %c9_i32_84 = arith.constant 9 : i32
    %c0_i32_85 = arith.constant 0 : i32
    %116 = tpu.memref_slice %arg1[%45, %c0_i32_85] : memref<256x128xf32, #tpu.memory_space<any>> -> memref<1x128xf32, #tpu.memory_space<any>>
    %c9_i32_86 = arith.constant 9 : i32
    %c0_i32_87 = arith.constant 0 : i32
    %117 = tpu.memref_slice %arg4[%c9_i32_86, %c0_i32_87] : memref<16x128xf32, #tpu.memory_space<vmem>> -> memref<1x128xf32, #tpu.memory_space<vmem>>
    %118 = tpu.memref_slice %arg5[%c9_i32_84] : memref<16x!tpu.dma_semaphore, #tpu.memory_space<semaphore_mem>> -> memref<1x!tpu.dma_semaphore, #tpu.memory_space<semaphore_mem>>
    %119 = tpu.memref_squeeze %118 : memref<1x!tpu.dma_semaphore, #tpu.memory_space<semaphore_mem>> -> memref<!tpu.dma_semaphore, #tpu.memory_space<semaphore_mem>>
    tpu.wait_dma2 semaphore(%119 : memref<!tpu.dma_semaphore, #tpu.memory_space<semaphore_mem>>) src(%116 : memref<1x128xf32, #tpu.memory_space<any>>) dst(%117 : memref<1x128xf32, #tpu.memory_space<vmem>>)
    %c10_i32_88 = arith.constant 10 : i32
    %c0_i32_89 = arith.constant 0 : i32
    %120 = tpu.memref_slice %arg1[%50, %c0_i32_89] : memref<256x128xf32, #tpu.memory_space<any>> -> memref<1x128xf32, #tpu.memory_space<any>>
    %c10_i32_90 = arith.constant 10 : i32
    %c0_i32_91 = arith.constant 0 : i32
    %121 = tpu.memref_slice %arg4[%c10_i32_90, %c0_i32_91] : memref<16x128xf32, #tpu.memory_space<vmem>> -> memref<1x128xf32, #tpu.memory_space<vmem>>
    %122 = tpu.memref_slice %arg5[%c10_i32_88] : memref<16x!tpu.dma_semaphore, #tpu.memory_space<semaphore_mem>> -> memref<1x!tpu.dma_semaphore, #tpu.memory_space<semaphore_mem>>
    %123 = tpu.memref_squeeze %122 : memref<1x!tpu.dma_semaphore, #tpu.memory_space<semaphore_mem>> -> memref<!tpu.dma_semaphore, #tpu.memory_space<semaphore_mem>>
    tpu.wait_dma2 semaphore(%123 : memref<!tpu.dma_semaphore, #tpu.memory_space<semaphore_mem>>) src(%120 : memref<1x128xf32, #tpu.memory_space<any>>) dst(%121 : memref<1x128xf32, #tpu.memory_space<vmem>>)
    %c11_i32_92 = arith.constant 11 : i32
    %c0_i32_93 = arith.constant 0 : i32
    %124 = tpu.memref_slice %arg1[%55, %c0_i32_93] : memref<256x128xf32, #tpu.memory_space<any>> -> memref<1x128xf32, #tpu.memory_space<any>>
    %c11_i32_94 = arith.constant 11 : i32
    %c0_i32_95 = arith.constant 0 : i32
    %125 = tpu.memref_slice %arg4[%c11_i32_94, %c0_i32_95] : memref<16x128xf32, #tpu.memory_space<vmem>> -> memref<1x128xf32, #tpu.memory_space<vmem>>
    %126 = tpu.memref_slice %arg5[%c11_i32_92] : memref<16x!tpu.dma_semaphore, #tpu.memory_space<semaphore_mem>> -> memref<1x!tpu.dma_semaphore, #tpu.memory_space<semaphore_mem>>
    %127 = tpu.memref_squeeze %126 : memref<1x!tpu.dma_semaphore, #tpu.memory_space<semaphore_mem>> -> memref<!tpu.dma_semaphore, #tpu.memory_space<semaphore_mem>>
    tpu.wait_dma2 semaphore(%127 : memref<!tpu.dma_semaphore, #tpu.memory_space<semaphore_mem>>) src(%124 : memref<1x128xf32, #tpu.memory_space<any>>) dst(%125 : memref<1x128xf32, #tpu.memory_space<vmem>>)
    %c12_i32_96 = arith.constant 12 : i32
    %c0_i32_97 = arith.constant 0 : i32
    %128 = tpu.memref_slice %arg1[%60, %c0_i32_97] : memref<256x128xf32, #tpu.memory_space<any>> -> memref<1x128xf32, #tpu.memory_space<any>>
    %c12_i32_98 = arith.constant 12 : i32
    %c0_i32_99 = arith.constant 0 : i32
    %129 = tpu.memref_slice %arg4[%c12_i32_98, %c0_i32_99] : memref<16x128xf32, #tpu.memory_space<vmem>> -> memref<1x128xf32, #tpu.memory_space<vmem>>
    %130 = tpu.memref_slice %arg5[%c12_i32_96] : memref<16x!tpu.dma_semaphore, #tpu.memory_space<semaphore_mem>> -> memref<1x!tpu.dma_semaphore, #tpu.memory_space<semaphore_mem>>
    %131 = tpu.memref_squeeze %130 : memref<1x!tpu.dma_semaphore, #tpu.memory_space<semaphore_mem>> -> memref<!tpu.dma_semaphore, #tpu.memory_space<semaphore_mem>>
    tpu.wait_dma2 semaphore(%131 : memref<!tpu.dma_semaphore, #tpu.memory_space<semaphore_mem>>) src(%128 : memref<1x128xf32, #tpu.memory_space<any>>) dst(%129 : memref<1x128xf32, #tpu.memory_space<vmem>>)
    %c13_i32_100 = arith.constant 13 : i32
    %c0_i32_101 = arith.constant 0 : i32
    %132 = tpu.memref_slice %arg1[%65, %c0_i32_101] : memref<256x128xf32, #tpu.memory_space<any>> -> memref<1x128xf32, #tpu.memory_space<any>>
    %c13_i32_102 = arith.constant 13 : i32
    %c0_i32_103 = arith.constant 0 : i32
    %133 = tpu.memref_slice %arg4[%c13_i32_102, %c0_i32_103] : memref<16x128xf32, #tpu.memory_space<vmem>> -> memref<1x128xf32, #tpu.memory_space<vmem>>
    %134 = tpu.memref_slice %arg5[%c13_i32_100] : memref<16x!tpu.dma_semaphore, #tpu.memory_space<semaphore_mem>> -> memref<1x!tpu.dma_semaphore, #tpu.memory_space<semaphore_mem>>
    %135 = tpu.memref_squeeze %134 : memref<1x!tpu.dma_semaphore, #tpu.memory_space<semaphore_mem>> -> memref<!tpu.dma_semaphore, #tpu.memory_space<semaphore_mem>>
    tpu.wait_dma2 semaphore(%135 : memref<!tpu.dma_semaphore, #tpu.memory_space<semaphore_mem>>) src(%132 : memref<1x128xf32, #tpu.memory_space<any>>) dst(%133 : memref<1x128xf32, #tpu.memory_space<vmem>>)
    %c14_i32_104 = arith.constant 14 : i32
    %c0_i32_105 = arith.constant 0 : i32
    %136 = tpu.memref_slice %arg1[%70, %c0_i32_105] : memref<256x128xf32, #tpu.memory_space<any>> -> memref<1x128xf32, #tpu.memory_space<any>>
    %c14_i32_106 = arith.constant 14 : i32
    %c0_i32_107 = arith.constant 0 : i32
    %137 = tpu.memref_slice %arg4[%c14_i32_106, %c0_i32_107] : memref<16x128xf32, #tpu.memory_space<vmem>> -> memref<1x128xf32, #tpu.memory_space<vmem>>
    %138 = tpu.memref_slice %arg5[%c14_i32_104] : memref<16x!tpu.dma_semaphore, #tpu.memory_space<semaphore_mem>> -> memref<1x!tpu.dma_semaphore, #tpu.memory_space<semaphore_mem>>
    %139 = tpu.memref_squeeze %138 : memref<1x!tpu.dma_semaphore, #tpu.memory_space<semaphore_mem>> -> memref<!tpu.dma_semaphore, #tpu.memory_space<semaphore_mem>>
    tpu.wait_dma2 semaphore(%139 : memref<!tpu.dma_semaphore, #tpu.memory_space<semaphore_mem>>) src(%136 : memref<1x128xf32, #tpu.memory_space<any>>) dst(%137 : memref<1x128xf32, #tpu.memory_space<vmem>>)
    %c15_i32_108 = arith.constant 15 : i32
    %c0_i32_109 = arith.constant 0 : i32
    %140 = tpu.memref_slice %arg1[%75, %c0_i32_109] : memref<256x128xf32, #tpu.memory_space<any>> -> memref<1x128xf32, #tpu.memory_space<any>>
    %c15_i32_110 = arith.constant 15 : i32
    %c0_i32_111 = arith.constant 0 : i32
    %141 = tpu.memref_slice %arg4[%c15_i32_110, %c0_i32_111] : memref<16x128xf32, #tpu.memory_space<vmem>> -> memref<1x128xf32, #tpu.memory_space<vmem>>
    %142 = tpu.memref_slice %arg5[%c15_i32_108] : memref<16x!tpu.dma_semaphore, #tpu.memory_space<semaphore_mem>> -> memref<1x!tpu.dma_semaphore, #tpu.memory_space<semaphore_mem>>
    %143 = tpu.memref_squeeze %142 : memref<1x!tpu.dma_semaphore, #tpu.memory_space<semaphore_mem>> -> memref<!tpu.dma_semaphore, #tpu.memory_space<semaphore_mem>>
    tpu.wait_dma2 semaphore(%143 : memref<!tpu.dma_semaphore, #tpu.memory_space<semaphore_mem>>) src(%140 : memref<1x128xf32, #tpu.memory_space<any>>) dst(%141 : memref<1x128xf32, #tpu.memory_space<vmem>>)
    %c0_112 = arith.constant 0 : index
    %c0_113 = arith.constant 0 : index
    %144 = vector.load %arg4[%c0_112, %c0_113] : memref<16x128xf32, #tpu.memory_space<vmem>>, vector<16x128xf32>
    %c0_114 = arith.constant 0 : index
    %c0_115 = arith.constant 0 : index
    %145 = vector.load %arg2[%c0_114, %c0_115] : memref<16x128xf32, #tpu.memory_space<vmem>>, vector<16x128xf32>
    %146 = arith.addf %144, %145 : vector<16x128xf32>
    %c0_116 = arith.constant 0 : index
    %c0_117 = arith.constant 0 : index
    %147 = vector.load %arg3[%c0_116, %c0_117] : memref<16x128xf32, #tpu.memory_space<vmem>>, vector<16x128xf32>
    tpu.vector_store %arg3[%c0_116, %c0_117], %146 {strides = array<i32>} : memref<16x128xf32, #tpu.memory_space<vmem>>, vector<16x128xf32>,
    return
  }
}

module attributes {stable_mosaic.version = 11 : i64} {
  func.func @_matmul_kernel(%arg0: i32, %arg1: i32, %arg2: i32, %arg3: memref<16x128xf32, #tpu.memory_space<vmem>>, %arg4: memref<1x128xf32, #tpu.memory_space<vmem>>, %arg5: memref<1x128xf32, #tpu.memory_space<vmem>>, %arg6: memref<128x128xbf16, #tpu.memory_space<vmem>>, %arg7: memref<1x128xf32, #tpu.memory_space<vmem>>, %arg8: memref<1x128xf32, #tpu.memory_space<vmem>>, %arg9: memref<16x128xf32, #tpu.memory_space<vmem>>, %arg10: memref<16x128xf32, #tpu.memory_space<vmem>>) attributes {dimension_semantics = [#tpu.dimension_semantics<parallel>, #tpu.dimension_semantics<parallel>, #tpu.dimension_semantics<arbitrary>], iteration_bounds = array<i64: 1, 3, 1>, scalar_prefetch = 0 : i64, scratch_operands = 1 : i64, tpu.core_type = #tpu.core_type<tc>, window_params = [{transform_indices = @transform_0, window_bounds = array<i64: 16, 128>}, {transform_indices = @transform_1, window_bounds = array<i64: 1, 128>}, {transform_indices = @transform_2, window_bounds = array<i64: 1, 128>}, {transform_indices = @transform_3, window_bounds = array<i64: 128, 128>}, {transform_indices = @transform_4, window_bounds = array<i64: 1, 128>}, {transform_indices = @transform_5, window_bounds = array<i64: 1, 128>}, {transform_indices = @transform_6, window_bounds = array<i64: 16, 128>}]} {
    %c0_i32 = arith.constant 0 : i32
    %0 = arith.cmpi eq, %arg2, %c0_i32 : i32
    %1 = arith.extui %0 : i1 to i32
    %c0_i32_0 = arith.constant 0 : i32
    %2 = arith.cmpi ne, %1, %c0_i32_0 : i32
    scf.if %2 {
      %cst_19 = arith.constant 0.000000e+00 : f32
      %37 = vector.broadcast %cst_19 : f32 to vector<16x128xf32>
      %c0_20 = arith.constant 0 : index
      %c0_21 = arith.constant 0 : index
      %38 = vector.load %arg10[%c0_20, %c0_21] : memref<16x128xf32, #tpu.memory_space<vmem>>, vector<16x128xf32>
      tpu.vector_store %arg10[%c0_20, %c0_21], %37 {strides = array<i32>} : memref<16x128xf32, #tpu.memory_space<vmem>>, vector<16x128xf32>,
    } else {
    }
    %c0 = arith.constant 0 : index
    %c0_1 = arith.constant 0 : index
    %3 = vector.load %arg3[%c0, %c0_1] : memref<16x128xf32, #tpu.memory_space<vmem>>, vector<16x128xf32>
    %cst = arith.constant dense<0.000000e+00> : vector<16xf32>
    %4 = vector.multi_reduction <add>, %3, %cst [1] : vector<16x128xf32> to vector<16xf32>
    %5 = vector.shape_cast %4 : vector<16xf32> to vector<16x1xf32>
    %cst_2 = arith.constant 1.280000e+02 : f32
    %6 = vector.broadcast %cst_2 : f32 to vector<16x1xf32>
    %7 = arith.divf %5, %6 : vector<16x1xf32>
    %8 = vector.broadcast %7 : vector<16x1xf32> to vector<16x128xf32>
    %9 = arith.subf %3, %8 : vector<16x128xf32>
    %10 = arith.mulf %9, %9 : vector<16x128xf32>
    %cst_3 = arith.constant dense<0.000000e+00> : vector<16xf32>
    %11 = vector.multi_reduction <add>, %10, %cst_3 [1] : vector<16x128xf32> to vector<16xf32>
    %12 = vector.shape_cast %11 : vector<16xf32> to vector<16x1xf32>
    %cst_4 = arith.constant 1.280000e+02 : f32
    %13 = vector.broadcast %cst_4 : f32 to vector<16x1xf32>
    %14 = arith.divf %12, %13 : vector<16x1xf32>
    %15 = vector.broadcast %7 : vector<16x1xf32> to vector<16x128xf32>
    %16 = arith.subf %3, %15 : vector<16x128xf32>
    %cst_5 = arith.constant 9.99999974E-6 : f32
    %17 = vector.broadcast %cst_5 : f32 to vector<16x1xf32>
    %18 = arith.addf %14, %17 : vector<16x1xf32>
    %19 = math.rsqrt %18 : vector<16x1xf32>
    %20 = vector.broadcast %19 : vector<16x1xf32> to vector<16x128xf32>
    %21 = arith.mulf %16, %20 : vector<16x128xf32>
    %c0_6 = arith.constant 0 : index
    %c0_7 = arith.constant 0 : index
    %22 = vector.load %arg4[%c0_6, %c0_7] : memref<1x128xf32, #tpu.memory_space<vmem>>, vector<1x128xf32>
    %23 = vector.broadcast %22 : vector<1x128xf32> to vector<16x128xf32>
    %24 = arith.mulf %21, %23 : vector<16x128xf32>
    %c0_8 = arith.constant 0 : index
    %c0_9 = arith.constant 0 : index
    %25 = vector.load %arg5[%c0_8, %c0_9] : memref<1x128xf32, #tpu.memory_space<vmem>>, vector<1x128xf32>
    %26 = vector.broadcast %25 : vector<1x128xf32> to vector<16x128xf32>
    %27 = arith.addf %24, %26 : vector<16x128xf32>
    %c0_10 = arith.constant 0 : index
    %c0_11 = arith.constant 0 : index
    %28 = vector.load %arg10[%c0_10, %c0_11] : memref<16x128xf32, #tpu.memory_space<vmem>>, vector<16x128xf32>
    %29 = arith.truncf %27 : vector<16x128xf32> to vector<16x128xbf16>
    %c0_12 = arith.constant 0 : index
    %c0_13 = arith.constant 0 : index
    %30 = vector.load %arg6[%c0_12, %c0_13] : memref<128x128xbf16, #tpu.memory_space<vmem>>, vector<128x128xbf16>
    %cst_14 = arith.constant dense<0.000000e+00> : vector<16x128xf32>
    %31 = tpu.matmul %29, %30, %cst_14 {dimension_numbers = #tpu.dot_dimension_numbers<[1], [0], [0], [1], [0, 0, 1, 1], [], []>} : vector<16x128xbf16>, vector<128x128xbf16>, vector<16x128xf32> -> vector<16x128xf32>
    %32 = arith.addf %28, %31 : vector<16x128xf32>
    %c0_15 = arith.constant 0 : index
    %c0_16 = arith.constant 0 : index
    %33 = vector.load %arg10[%c0_15, %c0_16] : memref<16x128xf32, #tpu.memory_space<vmem>>, vector<16x128xf32>
    tpu.vector_store %arg10[%c0_15, %c0_16], %32 {strides = array<i32>} : memref<16x128xf32, #tpu.memory_space<vmem>>, vector<16x128xf32>,
    %c0_i32_17 = arith.constant 0 : i32
    %34 = arith.cmpi eq, %arg2, %c0_i32_17 : i32
    %35 = arith.extui %34 : i1 to i32
    %c0_i32_18 = arith.constant 0 : i32
    %36 = arith.cmpi ne, %35, %c0_i32_18 : i32
    scf.if %36 {
      %c0_19 = arith.constant 0 : index
      %c0_20 = arith.constant 0 : index
      %37 = vector.load %arg10[%c0_19, %c0_20] : memref<16x128xf32, #tpu.memory_space<vmem>>, vector<16x128xf32>
      %c0_21 = arith.constant 0 : index
      %c0_22 = arith.constant 0 : index
      %38 = vector.load %arg7[%c0_21, %c0_22] : memref<1x128xf32, #tpu.memory_space<vmem>>, vector<1x128xf32>
      %39 = vector.broadcast %38 : vector<1x128xf32> to vector<16x128xf32>
      %40 = arith.mulf %37, %39 : vector<16x128xf32>
      %c0_23 = arith.constant 0 : index
      %c0_24 = arith.constant 0 : index
      %41 = vector.load %arg8[%c0_23, %c0_24] : memref<1x128xf32, #tpu.memory_space<vmem>>, vector<1x128xf32>
      %42 = vector.broadcast %41 : vector<1x128xf32> to vector<16x128xf32>
      %43 = arith.addf %40, %42 : vector<16x128xf32>
      %c0_25 = arith.constant 0 : index
      %c0_26 = arith.constant 0 : index
      %44 = vector.load %arg9[%c0_25, %c0_26] : memref<16x128xf32, #tpu.memory_space<vmem>>, vector<16x128xf32>
      tpu.vector_store %arg9[%c0_25, %c0_26], %43 {strides = array<i32>} : memref<16x128xf32, #tpu.memory_space<vmem>>, vector<16x128xf32>,
    } else {
    }
    return
  }
  func.func @transform_0(%arg0: i32, %arg1: i32, %arg2: i32) -> (i32, i32) {
    %c0_i32 = arith.constant 0 : i32
    return %arg0, %arg2 : i32, i32
  }
  func.func @transform_1(%arg0: i32, %arg1: i32, %arg2: i32) -> (i32, i32) {
    %c0_i32 = arith.constant 0 : i32
    %c0_i32_0 = arith.constant 0 : i32
    return %c0_i32, %arg2 : i32, i32
  }
  func.func @transform_2(%arg0: i32, %arg1: i32, %arg2: i32) -> (i32, i32) {
    %c0_i32 = arith.constant 0 : i32
    %c0_i32_0 = arith.constant 0 : i32
    return %c0_i32, %arg2 : i32, i32
  }
  func.func @transform_3(%arg0: i32, %arg1: i32, %arg2: i32) -> (i32, i32) {
    %c0_i32 = arith.constant 0 : i32
    return %arg2, %arg1 : i32, i32
  }
  func.func @transform_4(%arg0: i32, %arg1: i32, %arg2: i32) -> (i32, i32) {
    %c0_i32 = arith.constant 0 : i32
    %c0_i32_0 = arith.constant 0 : i32
    return %c0_i32, %arg1 : i32, i32
  }
  func.func @transform_5(%arg0: i32, %arg1: i32, %arg2: i32) -> (i32, i32) {
    %c0_i32 = arith.constant 0 : i32
    %c0_i32_0 = arith.constant 0 : i32
    return %c0_i32, %arg1 : i32, i32
  }
  func.func @transform_6(%arg0: i32, %arg1: i32, %arg2: i32) -> (i32, i32) {
    %c0_i32 = arith.constant 0 : i32
    return %arg0, %arg1 : i32, i32
  }
}

module attributes {stable_mosaic.version = 11 : i64} {
  func.func @_attention_kernel(%arg0: i32, %arg1: memref<1x2x8x64xbf16, #tpu.memory_space<vmem>>, %arg2: memref<1x2x12x64xbf16, #tpu.memory_space<vmem>>, %arg3: memref<1x2x12x64xbf16, #tpu.memory_space<vmem>>, %arg4: memref<1x1x12xf32, #tpu.memory_space<vmem>>, %arg5: memref<1x2x8x64xf32, #tpu.memory_space<vmem>>) attributes {dimension_semantics = [#tpu.dimension_semantics<parallel>], iteration_bounds = array<i64: 2>, scalar_prefetch = 0 : i64, scratch_operands = 0 : i64, tpu.core_type = #tpu.core_type<tc>, window_params = [{transform_indices = @transform_0, window_bounds = array<i64: 1, 2, 8, 64>}, {transform_indices = @transform_1, window_bounds = array<i64: 1, 2, 12, 64>}, {transform_indices = @transform_2, window_bounds = array<i64: 1, 2, 12, 64>}, {transform_indices = @transform_3, window_bounds = array<i64: 1, 1, 12>}, {transform_indices = @transform_4, window_bounds = array<i64: 1, 2, 8, 64>}]} {
    %c0 = arith.constant 0 : index
    %c0_0 = arith.constant 0 : index
    %c0_1 = arith.constant 0 : index
    %c0_2 = arith.constant 0 : index
    %0 = vector.load %arg1[%c0, %c0_0, %c0_1, %c0_2] : memref<1x2x8x64xbf16, #tpu.memory_space<vmem>>, vector<1x2x8x64xbf16>
    %1 = vector.shape_cast %0 : vector<1x2x8x64xbf16> to vector<2x8x64xbf16>
    %c0_3 = arith.constant 0 : index
    %c0_4 = arith.constant 0 : index
    %c0_5 = arith.constant 0 : index
    %c0_6 = arith.constant 0 : index
    %2 = vector.load %arg2[%c0_3, %c0_4, %c0_5, %c0_6] : memref<1x2x12x64xbf16, #tpu.memory_space<vmem>>, vector<1x2x12x64xbf16>
    %3 = vector.shape_cast %2 : vector<1x2x12x64xbf16> to vector<2x12x64xbf16>
    %c0_7 = arith.constant 0 : index
    %c0_8 = arith.constant 0 : index
    %c0_9 = arith.constant 0 : index
    %c0_10 = arith.constant 0 : index
    %4 = vector.load %arg3[%c0_7, %c0_8, %c0_9, %c0_10] : memref<1x2x12x64xbf16, #tpu.memory_space<vmem>>, vector<1x2x12x64xbf16>
    %5 = vector.shape_cast %4 : vector<1x2x12x64xbf16> to vector<2x12x64xbf16>
    "tpu.trace_start"() <{level = 10 : i32, message = "hsd,hkd->hsk"}> : () -> ()
    %cst = arith.constant dense<0.000000e+00> : vector<2x8x12xf32>
    %6 = tpu.matmul %1, %3, %cst {dimension_numbers = #tpu.dot_dimension_numbers<[2], [2], [1], [1], [0, 0, 0, 1, 1, 1], [0], [0]>} : vector<2x8x64xbf16>, vector<2x12x64xbf16>, vector<2x8x12xf32> -> vector<2x8x12xf32>
    "tpu.trace_stop"() : () -> ()
    %cst_11 = arith.constant 1.250000e-01 : f32
    %7 = vector.broadcast %cst_11 : f32 to vector<2x8x12xf32>
    %8 = arith.mulf %6, %7 : vector<2x8x12xf32>
    %9 = tpu.iota {dimensions = array<i32: 0>} : vector<8x12xi32>
    %10 = tpu.iota {dimensions = array<i32: 1>} : vector<8x12xi32>
    %c4_i32 = arith.constant 4 : i32
    %11 = vector.broadcast %c4_i32 : i32 to vector<8x12xi32>
    %12 = arith.subi %10, %11 : vector<8x12xi32>
    %13 = arith.cmpi sle, %12, %9 : vector<8x12xi32>
    %c0_12 = arith.constant 0 : index
    %c0_13 = arith.constant 0 : index
    %c0_14 = arith.constant 0 : index
    %14 = vector.load %arg4[%c0_12, %c0_13, %c0_14] : memref<1x1x12xf32, #tpu.memory_space<vmem>>, vector<1x1x12xf32>
    %15 = vector.shape_cast %14 : vector<1x1x12xf32> to vector<1x12xf32>
    %cst_15 = arith.constant 5.000000e-01 : f32
    %16 = vector.broadcast %cst_15 : f32 to vector<1x12xf32>
    %17 = arith.cmpf ogt, %15, %16 : vector<1x12xf32>
    %18 = vector.broadcast %17 : vector<1x12xi1> to vector<8x12xi1>
    %19 = arith.andi %13, %18 : vector<8x12xi1>
    %20 = vector.shape_cast %19 : vector<8x12xi1> to vector<1x8x12xi1>
    %cst_16 = arith.constant -1.000000e+30 : f32
    %21 = vector.shape_cast %20 : vector<1x8x12xi1> to vector<1x8x12xi1>
    %22 = vector.broadcast %21 : vector<1x8x12xi1> to vector<2x8x12xi1>
    %23 = vector.broadcast %cst_16 : f32 to vector<2x8x12xf32>
    %24 = arith.select %22, %8, %23 : vector<2x8x12xi1>, vector<2x8x12xf32>
    %cst_17 = arith.constant dense<0xFF800000> : vector<2x8xf32>
    %25 = vector.multi_reduction <maximumf>, %24, %cst_17 [2] : vector<2x8x12xf32> to vector<2x8xf32>
    %26 = vector.shape_cast %25 : vector<2x8xf32> to vector<2x8x1xf32>
    %27 = vector.broadcast %26 : vector<2x8x1xf32> to vector<2x8x12xf32>
    %28 = arith.subf %24, %27 : vector<2x8x12xf32>
    %29 = math.exp %28 : vector<2x8x12xf32>
    %cst_18 = arith.constant dense<0.000000e+00> : vector<2x8xf32>
    %30 = vector.multi_reduction <add>, %29, %cst_18 [2] : vector<2x8x12xf32> to vector<2x8xf32>
    %31 = vector.shape_cast %30 : vector<2x8xf32> to vector<2x8x1xf32>
    %32 = tpu.reciprocal %31 {approx = true} : vector<2x8x1xf32> -> vector<2x8x1xf32>
    %33 = vector.broadcast %32 : vector<2x8x1xf32> to vector<2x8x12xf32>
    %34 = arith.mulf %29, %33 : vector<2x8x12xf32>
    %35 = arith.truncf %34 : vector<2x8x12xf32> to vector<2x8x12xbf16>
    "tpu.trace_start"() <{level = 10 : i32, message = "hsk,hkd->hsd"}> : () -> ()
    %cst_19 = arith.constant dense<0.000000e+00> : vector<2x8x64xf32>
    %36 = tpu.matmul %35, %5, %cst_19 {dimension_numbers = #tpu.dot_dimension_numbers<[2], [1], [1], [2], [0, 0, 0, 1, 1, 2], [0], [0]>} : vector<2x8x12xbf16>, vector<2x12x64xbf16>, vector<2x8x64xf32> -> vector<2x8x64xf32>
    "tpu.trace_stop"() : () -> ()
    %c0_20 = arith.constant 0 : index
    %c0_21 = arith.constant 0 : index
    %c0_22 = arith.constant 0 : index
    %c0_23 = arith.constant 0 : index
    %37 = vector.load %arg5[%c0_20, %c0_21, %c0_22, %c0_23] : memref<1x2x8x64xf32, #tpu.memory_space<vmem>>, vector<1x2x8x64xf32>
    %38 = vector.shape_cast %37 : vector<1x2x8x64xf32> to vector<2x8x64xf32>
    %39 = vector.shape_cast %36 : vector<2x8x64xf32> to vector<1x2x8x64xf32>
    tpu.vector_store %arg5[%c0_20, %c0_21, %c0_22, %c0_23], %39 {strides = array<i32>} : memref<1x2x8x64xf32, #tpu.memory_space<vmem>>, vector<1x2x8x64xf32>,
    return
  }
  func.func @transform_0(%arg0: i32) -> (i32, i32, i32, i32) {
    %c0_i32 = arith.constant 0 : i32
    %c0_i32_0 = arith.constant 0 : i32
    %c0_i32_1 = arith.constant 0 : i32
    %c0_i32_2 = arith.constant 0 : i32
    return %arg0, %c0_i32, %c0_i32_0, %c0_i32_1 : i32, i32, i32, i32
  }
  func.func @transform_1(%arg0: i32) -> (i32, i32, i32, i32) {
    %c0_i32 = arith.constant 0 : i32
    %c0_i32_0 = arith.constant 0 : i32
    %c0_i32_1 = arith.constant 0 : i32
    %c0_i32_2 = arith.constant 0 : i32
    return %arg0, %c0_i32, %c0_i32_0, %c0_i32_1 : i32, i32, i32, i32
  }
  func.func @transform_2(%arg0: i32) -> (i32, i32, i32, i32) {
    %c0_i32 = arith.constant 0 : i32
    %c0_i32_0 = arith.constant 0 : i32
    %c0_i32_1 = arith.constant 0 : i32
    %c0_i32_2 = arith.constant 0 : i32
    return %arg0, %c0_i32, %c0_i32_0, %c0_i32_1 : i32, i32, i32, i32
  }
  func.func @transform_3(%arg0: i32) -> (i32, i32, i32) {
    %c0_i32 = arith.constant 0 : i32
    %c0_i32_0 = arith.constant 0 : i32
    %c0_i32_1 = arith.constant 0 : i32
    return %arg0, %c0_i32, %c0_i32_0 : i32, i32, i32
  }
  func.func @transform_4(%arg0: i32) -> (i32, i32, i32, i32) {
    %c0_i32 = arith.constant 0 : i32
    %c0_i32_0 = arith.constant 0 : i32
    %c0_i32_1 = arith.constant 0 : i32
    %c0_i32_2 = arith.constant 0 : i32
    return %arg0, %c0_i32, %c0_i32_0, %c0_i32_1 : i32, i32, i32, i32
  }
}

module attributes {stable_mosaic.version = 11 : i64} {
  func.func @_matmul_kernel(%arg0: i32, %arg1: i32, %arg2: i32, %arg3: memref<16x128xbf16, #tpu.memory_space<vmem>>, %arg4: memref<128x128xbf16, #tpu.memory_space<vmem>>, %arg5: memref<1x128xf32, #tpu.memory_space<vmem>>, %arg6: memref<1x128xf32, #tpu.memory_space<vmem>>, %arg7: memref<16x128xf32, #tpu.memory_space<vmem>>, %arg8: memref<16x128xf32, #tpu.memory_space<vmem>>, %arg9: memref<16x128xf32, #tpu.memory_space<vmem>>) attributes {dimension_semantics = [#tpu.dimension_semantics<parallel>, #tpu.dimension_semantics<parallel>, #tpu.dimension_semantics<arbitrary>], iteration_bounds = array<i64: 1, 1, 1>, scalar_prefetch = 0 : i64, scratch_operands = 1 : i64, tpu.core_type = #tpu.core_type<tc>, window_params = [{transform_indices = @transform_0, window_bounds = array<i64: 16, 128>}, {transform_indices = @transform_1, window_bounds = array<i64: 128, 128>}, {transform_indices = @transform_2, window_bounds = array<i64: 1, 128>}, {transform_indices = @transform_3, window_bounds = array<i64: 1, 128>}, {transform_indices = @transform_4, window_bounds = array<i64: 16, 128>}, {transform_indices = @transform_5, window_bounds = array<i64: 16, 128>}]} {
    %c0_i32 = arith.constant 0 : i32
    %0 = arith.cmpi eq, %arg2, %c0_i32 : i32
    %1 = arith.extui %0 : i1 to i32
    %c0_i32_0 = arith.constant 0 : i32
    %2 = arith.cmpi ne, %1, %c0_i32_0 : i32
    scf.if %2 {
      %cst_10 = arith.constant 0.000000e+00 : f32
      %12 = vector.broadcast %cst_10 : f32 to vector<16x128xf32>
      %c0_11 = arith.constant 0 : index
      %c0_12 = arith.constant 0 : index
      %13 = vector.load %arg9[%c0_11, %c0_12] : memref<16x128xf32, #tpu.memory_space<vmem>>, vector<16x128xf32>
      tpu.vector_store %arg9[%c0_11, %c0_12], %12 {strides = array<i32>} : memref<16x128xf32, #tpu.memory_space<vmem>>, vector<16x128xf32>,
    } else {
    }
    %c0 = arith.constant 0 : index
    %c0_1 = arith.constant 0 : index
    %3 = vector.load %arg3[%c0, %c0_1] : memref<16x128xbf16, #tpu.memory_space<vmem>>, vector<16x128xbf16>
    %c0_2 = arith.constant 0 : index
    %c0_3 = arith.constant 0 : index
    %4 = vector.load %arg9[%c0_2, %c0_3] : memref<16x128xf32, #tpu.memory_space<vmem>>, vector<16x128xf32>
    %c0_4 = arith.constant 0 : index
    %c0_5 = arith.constant 0 : index
    %5 = vector.load %arg4[%c0_4, %c0_5] : memref<128x128xbf16, #tpu.memory_space<vmem>>, vector<128x128xbf16>
    %cst = arith.constant dense<0.000000e+00> : vector<16x128xf32>
    %6 = tpu.matmul %3, %5, %cst {dimension_numbers = #tpu.dot_dimension_numbers<[1], [0], [0], [1], [0, 0, 1, 1], [], []>} : vector<16x128xbf16>, vector<128x128xbf16>, vector<16x128xf32> -> vector<16x128xf32>
    %7 = arith.addf %4, %6 : vector<16x128xf32>
    %c0_6 = arith.constant 0 : index
    %c0_7 = arith.constant 0 : index
    %8 = vector.load %arg9[%c0_6, %c0_7] : memref<16x128xf32, #tpu.memory_space<vmem>>, vector<16x128xf32>
    tpu.vector_store %arg9[%c0_6, %c0_7], %7 {strides = array<i32>} : memref<16x128xf32, #tpu.memory_space<vmem>>, vector<16x128xf32>,
    %c0_i32_8 = arith.constant 0 : i32
    %9 = arith.cmpi eq, %arg2, %c0_i32_8 : i32
    %10 = arith.extui %9 : i1 to i32
    %c0_i32_9 = arith.constant 0 : i32
    %11 = arith.cmpi ne, %10, %c0_i32_9 : i32
    scf.if %11 {
      %c0_10 = arith.constant 0 : index
      %c0_11 = arith.constant 0 : index
      %12 = vector.load %arg9[%c0_10, %c0_11] : memref<16x128xf32, #tpu.memory_space<vmem>>, vector<16x128xf32>
      %c0_12 = arith.constant 0 : index
      %c0_13 = arith.constant 0 : index
      %13 = vector.load %arg5[%c0_12, %c0_13] : memref<1x128xf32, #tpu.memory_space<vmem>>, vector<1x128xf32>
      %14 = vector.broadcast %13 : vector<1x128xf32> to vector<16x128xf32>
      %15 = arith.mulf %12, %14 : vector<16x128xf32>
      %c0_14 = arith.constant 0 : index
      %c0_15 = arith.constant 0 : index
      %16 = vector.load %arg6[%c0_14, %c0_15] : memref<1x128xf32, #tpu.memory_space<vmem>>, vector<1x128xf32>
      %17 = vector.broadcast %16 : vector<1x128xf32> to vector<16x128xf32>
      %18 = arith.addf %15, %17 : vector<16x128xf32>
      %c0_16 = arith.constant 0 : index
      %c0_17 = arith.constant 0 : index
      %19 = vector.load %arg7[%c0_16, %c0_17] : memref<16x128xf32, #tpu.memory_space<vmem>>, vector<16x128xf32>
      %20 = arith.addf %18, %19 : vector<16x128xf32>
      %c0_18 = arith.constant 0 : index
      %c0_19 = arith.constant 0 : index
      %21 = vector.load %arg8[%c0_18, %c0_19] : memref<16x128xf32, #tpu.memory_space<vmem>>, vector<16x128xf32>
      tpu.vector_store %arg8[%c0_18, %c0_19], %20 {strides = array<i32>} : memref<16x128xf32, #tpu.memory_space<vmem>>, vector<16x128xf32>,
    } else {
    }
    return
  }
  func.func @transform_0(%arg0: i32, %arg1: i32, %arg2: i32) -> (i32, i32) {
    %c0_i32 = arith.constant 0 : i32
    return %arg0, %arg2 : i32, i32
  }
  func.func @transform_1(%arg0: i32, %arg1: i32, %arg2: i32) -> (i32, i32) {
    %c0_i32 = arith.constant 0 : i32
    return %arg2, %arg1 : i32, i32
  }
  func.func @transform_2(%arg0: i32, %arg1: i32, %arg2: i32) -> (i32, i32) {
    %c0_i32 = arith.constant 0 : i32
    %c0_i32_0 = arith.constant 0 : i32
    return %c0_i32, %arg1 : i32, i32
  }
  func.func @transform_3(%arg0: i32, %arg1: i32, %arg2: i32) -> (i32, i32) {
    %c0_i32 = arith.constant 0 : i32
    %c0_i32_0 = arith.constant 0 : i32
    return %c0_i32, %arg1 : i32, i32
  }
  func.func @transform_4(%arg0: i32, %arg1: i32, %arg2: i32) -> (i32, i32) {
    %c0_i32 = arith.constant 0 : i32
    return %arg0, %arg1 : i32, i32
  }
  func.func @transform_5(%arg0: i32, %arg1: i32, %arg2: i32) -> (i32, i32) {
    %c0_i32 = arith.constant 0 : i32
    return %arg0, %arg1 : i32, i32
  }
}

module attributes {stable_mosaic.version = 11 : i64} {
  func.func @_matmul_kernel(%arg0: i32, %arg1: i32, %arg2: i32, %arg3: memref<16x128xf32, #tpu.memory_space<vmem>>, %arg4: memref<1x128xf32, #tpu.memory_space<vmem>>, %arg5: memref<1x128xf32, #tpu.memory_space<vmem>>, %arg6: memref<128x256xbf16, #tpu.memory_space<vmem>>, %arg7: memref<1x256xf32, #tpu.memory_space<vmem>>, %arg8: memref<1x256xf32, #tpu.memory_space<vmem>>, %arg9: memref<16x256xf32, #tpu.memory_space<vmem>>, %arg10: memref<16x256xf32, #tpu.memory_space<vmem>>) attributes {dimension_semantics = [#tpu.dimension_semantics<parallel>, #tpu.dimension_semantics<parallel>, #tpu.dimension_semantics<arbitrary>], iteration_bounds = array<i64: 1, 2, 1>, scalar_prefetch = 0 : i64, scratch_operands = 1 : i64, tpu.core_type = #tpu.core_type<tc>, window_params = [{transform_indices = @transform_0, window_bounds = array<i64: 16, 128>}, {transform_indices = @transform_1, window_bounds = array<i64: 1, 128>}, {transform_indices = @transform_2, window_bounds = array<i64: 1, 128>}, {transform_indices = @transform_3, window_bounds = array<i64: 128, 256>}, {transform_indices = @transform_4, window_bounds = array<i64: 1, 256>}, {transform_indices = @transform_5, window_bounds = array<i64: 1, 256>}, {transform_indices = @transform_6, window_bounds = array<i64: 16, 256>}]} {
    %c0_i32 = arith.constant 0 : i32
    %0 = arith.cmpi eq, %arg2, %c0_i32 : i32
    %1 = arith.extui %0 : i1 to i32
    %c0_i32_0 = arith.constant 0 : i32
    %2 = arith.cmpi ne, %1, %c0_i32_0 : i32
    scf.if %2 {
      %cst_19 = arith.constant 0.000000e+00 : f32
      %37 = vector.broadcast %cst_19 : f32 to vector<16x256xf32>
      %c0_20 = arith.constant 0 : index
      %c0_21 = arith.constant 0 : index
      %38 = vector.load %arg10[%c0_20, %c0_21] : memref<16x256xf32, #tpu.memory_space<vmem>>, vector<16x256xf32>
      tpu.vector_store %arg10[%c0_20, %c0_21], %37 {strides = array<i32>} : memref<16x256xf32, #tpu.memory_space<vmem>>, vector<16x256xf32>,
    } else {
    }
    %c0 = arith.constant 0 : index
    %c0_1 = arith.constant 0 : index
    %3 = vector.load %arg3[%c0, %c0_1] : memref<16x128xf32, #tpu.memory_space<vmem>>, vector<16x128xf32>
    %cst = arith.constant dense<0.000000e+00> : vector<16xf32>
    %4 = vector.multi_reduction <add>, %3, %cst [1] : vector<16x128xf32> to vector<16xf32>
    %5 = vector.shape_cast %4 : vector<16xf32> to vector<16x1xf32>
    %cst_2 = arith.constant 1.280000e+02 : f32
    %6 = vector.broadcast %cst_2 : f32 to vector<16x1xf32>
    %7 = arith.divf %5, %6 : vector<16x1xf32>
    %8 = vector.broadcast %7 : vector<16x1xf32> to vector<16x128xf32>
    %9 = arith.subf %3, %8 : vector<16x128xf32>
    %10 = arith.mulf %9, %9 : vector<16x128xf32>
    %cst_3 = arith.constant dense<0.000000e+00> : vector<16xf32>
    %11 = vector.multi_reduction <add>, %10, %cst_3 [1] : vector<16x128xf32> to vector<16xf32>
    %12 = vector.shape_cast %11 : vector<16xf32> to vector<16x1xf32>
    %cst_4 = arith.constant 1.280000e+02 : f32
    %13 = vector.broadcast %cst_4 : f32 to vector<16x1xf32>
    %14 = arith.divf %12, %13 : vector<16x1xf32>
    %15 = vector.broadcast %7 : vector<16x1xf32> to vector<16x128xf32>
    %16 = arith.subf %3, %15 : vector<16x128xf32>
    %cst_5 = arith.constant 9.99999974E-6 : f32
    %17 = vector.broadcast %cst_5 : f32 to vector<16x1xf32>
    %18 = arith.addf %14, %17 : vector<16x1xf32>
    %19 = math.rsqrt %18 : vector<16x1xf32>
    %20 = vector.broadcast %19 : vector<16x1xf32> to vector<16x128xf32>
    %21 = arith.mulf %16, %20 : vector<16x128xf32>
    %c0_6 = arith.constant 0 : index
    %c0_7 = arith.constant 0 : index
    %22 = vector.load %arg4[%c0_6, %c0_7] : memref<1x128xf32, #tpu.memory_space<vmem>>, vector<1x128xf32>
    %23 = vector.broadcast %22 : vector<1x128xf32> to vector<16x128xf32>
    %24 = arith.mulf %21, %23 : vector<16x128xf32>
    %c0_8 = arith.constant 0 : index
    %c0_9 = arith.constant 0 : index
    %25 = vector.load %arg5[%c0_8, %c0_9] : memref<1x128xf32, #tpu.memory_space<vmem>>, vector<1x128xf32>
    %26 = vector.broadcast %25 : vector<1x128xf32> to vector<16x128xf32>
    %27 = arith.addf %24, %26 : vector<16x128xf32>
    %c0_10 = arith.constant 0 : index
    %c0_11 = arith.constant 0 : index
    %28 = vector.load %arg10[%c0_10, %c0_11] : memref<16x256xf32, #tpu.memory_space<vmem>>, vector<16x256xf32>
    %29 = arith.truncf %27 : vector<16x128xf32> to vector<16x128xbf16>
    %c0_12 = arith.constant 0 : index
    %c0_13 = arith.constant 0 : index
    %30 = vector.load %arg6[%c0_12, %c0_13] : memref<128x256xbf16, #tpu.memory_space<vmem>>, vector<128x256xbf16>
    %cst_14 = arith.constant dense<0.000000e+00> : vector<16x256xf32>
    %31 = tpu.matmul %29, %30, %cst_14 {dimension_numbers = #tpu.dot_dimension_numbers<[1], [0], [0], [1], [0, 0, 1, 1], [], []>} : vector<16x128xbf16>, vector<128x256xbf16>, vector<16x256xf32> -> vector<16x256xf32>
    %32 = arith.addf %28, %31 : vector<16x256xf32>
    %c0_15 = arith.constant 0 : index
    %c0_16 = arith.constant 0 : index
    %33 = vector.load %arg10[%c0_15, %c0_16] : memref<16x256xf32, #tpu.memory_space<vmem>>, vector<16x256xf32>
    tpu.vector_store %arg10[%c0_15, %c0_16], %32 {strides = array<i32>} : memref<16x256xf32, #tpu.memory_space<vmem>>, vector<16x256xf32>,
    %c0_i32_17 = arith.constant 0 : i32
    %34 = arith.cmpi eq, %arg2, %c0_i32_17 : i32
    %35 = arith.extui %34 : i1 to i32
    %c0_i32_18 = arith.constant 0 : i32
    %36 = arith.cmpi ne, %35, %c0_i32_18 : i32
    scf.if %36 {
      %c0_19 = arith.constant 0 : index
      %c0_20 = arith.constant 0 : index
      %37 = vector.load %arg10[%c0_19, %c0_20] : memref<16x256xf32, #tpu.memory_space<vmem>>, vector<16x256xf32>
      %c0_21 = arith.constant 0 : index
      %c0_22 = arith.constant 0 : index
      %38 = vector.load %arg7[%c0_21, %c0_22] : memref<1x256xf32, #tpu.memory_space<vmem>>, vector<1x256xf32>
      %39 = vector.broadcast %38 : vector<1x256xf32> to vector<16x256xf32>
      %40 = arith.mulf %37, %39 : vector<16x256xf32>
      %c0_23 = arith.constant 0 : index
      %c0_24 = arith.constant 0 : index
      %41 = vector.load %arg8[%c0_23, %c0_24] : memref<1x256xf32, #tpu.memory_space<vmem>>, vector<1x256xf32>
      %42 = vector.broadcast %41 : vector<1x256xf32> to vector<16x256xf32>
      %43 = arith.addf %40, %42 : vector<16x256xf32>
      %44 = arith.mulf %43, %43 : vector<16x256xf32>
      %45 = arith.mulf %43, %44 : vector<16x256xf32>
      %cst_25 = arith.constant 4.471500e-02 : f32
      %46 = vector.broadcast %cst_25 : f32 to vector<16x256xf32>
      %47 = arith.mulf %46, %45 : vector<16x256xf32>
      %48 = arith.addf %43, %47 : vector<16x256xf32>
      %cst_26 = arith.constant 0.797884583 : f32
      %49 = vector.broadcast %cst_26 : f32 to vector<16x256xf32>
      %50 = arith.mulf %49, %48 : vector<16x256xf32>
      %51 = math.tanh %50 : vector<16x256xf32>
      %cst_27 = arith.constant 1.000000e+00 : f32
      %52 = vector.broadcast %cst_27 : f32 to vector<16x256xf32>
      %53 = arith.addf %52, %51 : vector<16x256xf32>
      %cst_28 = arith.constant 5.000000e-01 : f32
      %54 = vector.broadcast %cst_28 : f32 to vector<16x256xf32>
      %55 = arith.mulf %54, %53 : vector<16x256xf32>
      %56 = arith.mulf %43, %55 : vector<16x256xf32>
      %c0_29 = arith.constant 0 : index
      %c0_30 = arith.constant 0 : index
      %57 = vector.load %arg9[%c0_29, %c0_30] : memref<16x256xf32, #tpu.memory_space<vmem>>, vector<16x256xf32>
      tpu.vector_store %arg9[%c0_29, %c0_30], %56 {strides = array<i32>} : memref<16x256xf32, #tpu.memory_space<vmem>>, vector<16x256xf32>,
    } else {
    }
    return
  }
  func.func @transform_0(%arg0: i32, %arg1: i32, %arg2: i32) -> (i32, i32) {
    %c0_i32 = arith.constant 0 : i32
    return %arg0, %arg2 : i32, i32
  }
  func.func @transform_1(%arg0: i32, %arg1: i32, %arg2: i32) -> (i32, i32) {
    %c0_i32 = arith.constant 0 : i32
    %c0_i32_0 = arith.constant 0 : i32
    return %c0_i32, %arg2 : i32, i32
  }
  func.func @transform_2(%arg0: i32, %arg1: i32, %arg2: i32) -> (i32, i32) {
    %c0_i32 = arith.constant 0 : i32
    %c0_i32_0 = arith.constant 0 : i32
    return %c0_i32, %arg2 : i32, i32
  }
  func.func @transform_3(%arg0: i32, %arg1: i32, %arg2: i32) -> (i32, i32) {
    %c0_i32 = arith.constant 0 : i32
    return %arg2, %arg1 : i32, i32
  }
  func.func @transform_4(%arg0: i32, %arg1: i32, %arg2: i32) -> (i32, i32) {
    %c0_i32 = arith.constant 0 : i32
    %c0_i32_0 = arith.constant 0 : i32
    return %c0_i32, %arg1 : i32, i32
  }
  func.func @transform_5(%arg0: i32, %arg1: i32, %arg2: i32) -> (i32, i32) {
    %c0_i32 = arith.constant 0 : i32
    %c0_i32_0 = arith.constant 0 : i32
    return %c0_i32, %arg1 : i32, i32
  }
  func.func @transform_6(%arg0: i32, %arg1: i32, %arg2: i32) -> (i32, i32) {
    %c0_i32 = arith.constant 0 : i32
    return %arg0, %arg1 : i32, i32
  }
}

module attributes {stable_mosaic.version = 11 : i64} {
  func.func @_matmul_kernel(%arg0: i32, %arg1: i32, %arg2: i32, %arg3: memref<16x512xbf16, #tpu.memory_space<vmem>>, %arg4: memref<512x128xbf16, #tpu.memory_space<vmem>>, %arg5: memref<1x128xf32, #tpu.memory_space<vmem>>, %arg6: memref<1x128xf32, #tpu.memory_space<vmem>>, %arg7: memref<16x128xf32, #tpu.memory_space<vmem>>, %arg8: memref<16x128xf32, #tpu.memory_space<vmem>>, %arg9: memref<16x128xf32, #tpu.memory_space<vmem>>) attributes {dimension_semantics = [#tpu.dimension_semantics<parallel>, #tpu.dimension_semantics<parallel>, #tpu.dimension_semantics<arbitrary>], iteration_bounds = array<i64: 1, 1, 1>, scalar_prefetch = 0 : i64, scratch_operands = 1 : i64, tpu.core_type = #tpu.core_type<tc>, window_params = [{transform_indices = @transform_0, window_bounds = array<i64: 16, 512>}, {transform_indices = @transform_1, window_bounds = array<i64: 512, 128>}, {transform_indices = @transform_2, window_bounds = array<i64: 1, 128>}, {transform_indices = @transform_3, window_bounds = array<i64: 1, 128>}, {transform_indices = @transform_4, window_bounds = array<i64: 16, 128>}, {transform_indices = @transform_5, window_bounds = array<i64: 16, 128>}]} {
    %c0_i32 = arith.constant 0 : i32
    %0 = arith.cmpi eq, %arg2, %c0_i32 : i32
    %1 = arith.extui %0 : i1 to i32
    %c0_i32_0 = arith.constant 0 : i32
    %2 = arith.cmpi ne, %1, %c0_i32_0 : i32
    scf.if %2 {
      %cst_10 = arith.constant 0.000000e+00 : f32
      %12 = vector.broadcast %cst_10 : f32 to vector<16x128xf32>
      %c0_11 = arith.constant 0 : index
      %c0_12 = arith.constant 0 : index
      %13 = vector.load %arg9[%c0_11, %c0_12] : memref<16x128xf32, #tpu.memory_space<vmem>>, vector<16x128xf32>
      tpu.vector_store %arg9[%c0_11, %c0_12], %12 {strides = array<i32>} : memref<16x128xf32, #tpu.memory_space<vmem>>, vector<16x128xf32>,
    } else {
    }
    %c0 = arith.constant 0 : index
    %c0_1 = arith.constant 0 : index
    %3 = vector.load %arg3[%c0, %c0_1] : memref<16x512xbf16, #tpu.memory_space<vmem>>, vector<16x512xbf16>
    %c0_2 = arith.constant 0 : index
    %c0_3 = arith.constant 0 : index
    %4 = vector.load %arg9[%c0_2, %c0_3] : memref<16x128xf32, #tpu.memory_space<vmem>>, vector<16x128xf32>
    %c0_4 = arith.constant 0 : index
    %c0_5 = arith.constant 0 : index
    %5 = vector.load %arg4[%c0_4, %c0_5] : memref<512x128xbf16, #tpu.memory_space<vmem>>, vector<512x128xbf16>
    %cst = arith.constant dense<0.000000e+00> : vector<16x128xf32>
    %6 = tpu.matmul %3, %5, %cst {dimension_numbers = #tpu.dot_dimension_numbers<[1], [0], [0], [1], [0, 0, 1, 1], [], []>} : vector<16x512xbf16>, vector<512x128xbf16>, vector<16x128xf32> -> vector<16x128xf32>
    %7 = arith.addf %4, %6 : vector<16x128xf32>
    %c0_6 = arith.constant 0 : index
    %c0_7 = arith.constant 0 : index
    %8 = vector.load %arg9[%c0_6, %c0_7] : memref<16x128xf32, #tpu.memory_space<vmem>>, vector<16x128xf32>
    tpu.vector_store %arg9[%c0_6, %c0_7], %7 {strides = array<i32>} : memref<16x128xf32, #tpu.memory_space<vmem>>, vector<16x128xf32>,
    %c0_i32_8 = arith.constant 0 : i32
    %9 = arith.cmpi eq, %arg2, %c0_i32_8 : i32
    %10 = arith.extui %9 : i1 to i32
    %c0_i32_9 = arith.constant 0 : i32
    %11 = arith.cmpi ne, %10, %c0_i32_9 : i32
    scf.if %11 {
      %c0_10 = arith.constant 0 : index
      %c0_11 = arith.constant 0 : index
      %12 = vector.load %arg9[%c0_10, %c0_11] : memref<16x128xf32, #tpu.memory_space<vmem>>, vector<16x128xf32>
      %c0_12 = arith.constant 0 : index
      %c0_13 = arith.constant 0 : index
      %13 = vector.load %arg5[%c0_12, %c0_13] : memref<1x128xf32, #tpu.memory_space<vmem>>, vector<1x128xf32>
      %14 = vector.broadcast %13 : vector<1x128xf32> to vector<16x128xf32>
      %15 = arith.mulf %12, %14 : vector<16x128xf32>
      %c0_14 = arith.constant 0 : index
      %c0_15 = arith.constant 0 : index
      %16 = vector.load %arg6[%c0_14, %c0_15] : memref<1x128xf32, #tpu.memory_space<vmem>>, vector<1x128xf32>
      %17 = vector.broadcast %16 : vector<1x128xf32> to vector<16x128xf32>
      %18 = arith.addf %15, %17 : vector<16x128xf32>
      %c0_16 = arith.constant 0 : index
      %c0_17 = arith.constant 0 : index
      %19 = vector.load %arg7[%c0_16, %c0_17] : memref<16x128xf32, #tpu.memory_space<vmem>>, vector<16x128xf32>
      %20 = arith.addf %18, %19 : vector<16x128xf32>
      %c0_18 = arith.constant 0 : index
      %c0_19 = arith.constant 0 : index
      %21 = vector.load %arg8[%c0_18, %c0_19] : memref<16x128xf32, #tpu.memory_space<vmem>>, vector<16x128xf32>
      tpu.vector_store %arg8[%c0_18, %c0_19], %20 {strides = array<i32>} : memref<16x128xf32, #tpu.memory_space<vmem>>, vector<16x128xf32>,
    } else {
    }
    return
  }
  func.func @transform_0(%arg0: i32, %arg1: i32, %arg2: i32) -> (i32, i32) {
    %c0_i32 = arith.constant 0 : i32
    return %arg0, %arg2 : i32, i32
  }
  func.func @transform_1(%arg0: i32, %arg1: i32, %arg2: i32) -> (i32, i32) {
    %c0_i32 = arith.constant 0 : i32
    return %arg2, %arg1 : i32, i32
  }
  func.func @transform_2(%arg0: i32, %arg1: i32, %arg2: i32) -> (i32, i32) {
    %c0_i32 = arith.constant 0 : i32
    %c0_i32_0 = arith.constant 0 : i32
    return %c0_i32, %arg1 : i32, i32
  }
  func.func @transform_3(%arg0: i32, %arg1: i32, %arg2: i32) -> (i32, i32) {
    %c0_i32 = arith.constant 0 : i32
    %c0_i32_0 = arith.constant 0 : i32
    return %c0_i32, %arg1 : i32, i32
  }
  func.func @transform_4(%arg0: i32, %arg1: i32, %arg2: i32) -> (i32, i32) {
    %c0_i32 = arith.constant 0 : i32
    return %arg0, %arg1 : i32, i32
  }
  func.func @transform_5(%arg0: i32, %arg1: i32, %arg2: i32) -> (i32, i32) {
    %c0_i32 = arith.constant 0 : i32
    return %arg0, %arg1 : i32, i32
  }
}

module attributes {stable_mosaic.version = 11 : i64} {
  func.func @_matmul_kernel(%arg0: i32, %arg1: i32, %arg2: i32, %arg3: memref<16x128xf32, #tpu.memory_space<vmem>>, %arg4: memref<1x128xf32, #tpu.memory_space<vmem>>, %arg5: memref<1x128xf32, #tpu.memory_space<vmem>>, %arg6: memref<128x256xbf16, #tpu.memory_space<vmem>>, %arg7: memref<1x256xf32, #tpu.memory_space<vmem>>, %arg8: memref<1x256xf32, #tpu.memory_space<vmem>>, %arg9: memref<16x256xf32, #tpu.memory_space<vmem>>, %arg10: memref<16x256xf32, #tpu.memory_space<vmem>>) attributes {dimension_semantics = [#tpu.dimension_semantics<parallel>, #tpu.dimension_semantics<parallel>, #tpu.dimension_semantics<arbitrary>], iteration_bounds = array<i64: 1, 1, 1>, scalar_prefetch = 0 : i64, scratch_operands = 1 : i64, tpu.core_type = #tpu.core_type<tc>, window_params = [{transform_indices = @transform_0, window_bounds = array<i64: 16, 128>}, {transform_indices = @transform_1, window_bounds = array<i64: 1, 128>}, {transform_indices = @transform_2, window_bounds = array<i64: 1, 128>}, {transform_indices = @transform_3, window_bounds = array<i64: 128, 256>}, {transform_indices = @transform_4, window_bounds = array<i64: 1, 256>}, {transform_indices = @transform_5, window_bounds = array<i64: 1, 256>}, {transform_indices = @transform_6, window_bounds = array<i64: 16, 256>}]} {
    %c0_i32 = arith.constant 0 : i32
    %0 = arith.cmpi eq, %arg2, %c0_i32 : i32
    %1 = arith.extui %0 : i1 to i32
    %c0_i32_0 = arith.constant 0 : i32
    %2 = arith.cmpi ne, %1, %c0_i32_0 : i32
    scf.if %2 {
      %cst_19 = arith.constant 0.000000e+00 : f32
      %37 = vector.broadcast %cst_19 : f32 to vector<16x256xf32>
      %c0_20 = arith.constant 0 : index
      %c0_21 = arith.constant 0 : index
      %38 = vector.load %arg10[%c0_20, %c0_21] : memref<16x256xf32, #tpu.memory_space<vmem>>, vector<16x256xf32>
      tpu.vector_store %arg10[%c0_20, %c0_21], %37 {strides = array<i32>} : memref<16x256xf32, #tpu.memory_space<vmem>>, vector<16x256xf32>,
    } else {
    }
    %c0 = arith.constant 0 : index
    %c0_1 = arith.constant 0 : index
    %3 = vector.load %arg3[%c0, %c0_1] : memref<16x128xf32, #tpu.memory_space<vmem>>, vector<16x128xf32>
    %cst = arith.constant dense<0.000000e+00> : vector<16xf32>
    %4 = vector.multi_reduction <add>, %3, %cst [1] : vector<16x128xf32> to vector<16xf32>
    %5 = vector.shape_cast %4 : vector<16xf32> to vector<16x1xf32>
    %cst_2 = arith.constant 1.280000e+02 : f32
    %6 = vector.broadcast %cst_2 : f32 to vector<16x1xf32>
    %7 = arith.divf %5, %6 : vector<16x1xf32>
    %8 = vector.broadcast %7 : vector<16x1xf32> to vector<16x128xf32>
    %9 = arith.subf %3, %8 : vector<16x128xf32>
    %10 = arith.mulf %9, %9 : vector<16x128xf32>
    %cst_3 = arith.constant dense<0.000000e+00> : vector<16xf32>
    %11 = vector.multi_reduction <add>, %10, %cst_3 [1] : vector<16x128xf32> to vector<16xf32>
    %12 = vector.shape_cast %11 : vector<16xf32> to vector<16x1xf32>
    %cst_4 = arith.constant 1.280000e+02 : f32
    %13 = vector.broadcast %cst_4 : f32 to vector<16x1xf32>
    %14 = arith.divf %12, %13 : vector<16x1xf32>
    %15 = vector.broadcast %7 : vector<16x1xf32> to vector<16x128xf32>
    %16 = arith.subf %3, %15 : vector<16x128xf32>
    %cst_5 = arith.constant 9.99999974E-6 : f32
    %17 = vector.broadcast %cst_5 : f32 to vector<16x1xf32>
    %18 = arith.addf %14, %17 : vector<16x1xf32>
    %19 = math.rsqrt %18 : vector<16x1xf32>
    %20 = vector.broadcast %19 : vector<16x1xf32> to vector<16x128xf32>
    %21 = arith.mulf %16, %20 : vector<16x128xf32>
    %c0_6 = arith.constant 0 : index
    %c0_7 = arith.constant 0 : index
    %22 = vector.load %arg4[%c0_6, %c0_7] : memref<1x128xf32, #tpu.memory_space<vmem>>, vector<1x128xf32>
    %23 = vector.broadcast %22 : vector<1x128xf32> to vector<16x128xf32>
    %24 = arith.mulf %21, %23 : vector<16x128xf32>
    %c0_8 = arith.constant 0 : index
    %c0_9 = arith.constant 0 : index
    %25 = vector.load %arg5[%c0_8, %c0_9] : memref<1x128xf32, #tpu.memory_space<vmem>>, vector<1x128xf32>
    %26 = vector.broadcast %25 : vector<1x128xf32> to vector<16x128xf32>
    %27 = arith.addf %24, %26 : vector<16x128xf32>
    %c0_10 = arith.constant 0 : index
    %c0_11 = arith.constant 0 : index
    %28 = vector.load %arg10[%c0_10, %c0_11] : memref<16x256xf32, #tpu.memory_space<vmem>>, vector<16x256xf32>
    %29 = arith.truncf %27 : vector<16x128xf32> to vector<16x128xbf16>
    %c0_12 = arith.constant 0 : index
    %c0_13 = arith.constant 0 : index
    %30 = vector.load %arg6[%c0_12, %c0_13] : memref<128x256xbf16, #tpu.memory_space<vmem>>, vector<128x256xbf16>
    %cst_14 = arith.constant dense<0.000000e+00> : vector<16x256xf32>
    %31 = tpu.matmul %29, %30, %cst_14 {dimension_numbers = #tpu.dot_dimension_numbers<[1], [0], [0], [1], [0, 0, 1, 1], [], []>} : vector<16x128xbf16>, vector<128x256xbf16>, vector<16x256xf32> -> vector<16x256xf32>
    %32 = arith.addf %28, %31 : vector<16x256xf32>
    %c0_15 = arith.constant 0 : index
    %c0_16 = arith.constant 0 : index
    %33 = vector.load %arg10[%c0_15, %c0_16] : memref<16x256xf32, #tpu.memory_space<vmem>>, vector<16x256xf32>
    tpu.vector_store %arg10[%c0_15, %c0_16], %32 {strides = array<i32>} : memref<16x256xf32, #tpu.memory_space<vmem>>, vector<16x256xf32>,
    %c0_i32_17 = arith.constant 0 : i32
    %34 = arith.cmpi eq, %arg2, %c0_i32_17 : i32
    %35 = arith.extui %34 : i1 to i32
    %c0_i32_18 = arith.constant 0 : i32
    %36 = arith.cmpi ne, %35, %c0_i32_18 : i32
    scf.if %36 {
      %c0_19 = arith.constant 0 : index
      %c0_20 = arith.constant 0 : index
      %37 = vector.load %arg10[%c0_19, %c0_20] : memref<16x256xf32, #tpu.memory_space<vmem>>, vector<16x256xf32>
      %c0_21 = arith.constant 0 : index
      %c0_22 = arith.constant 0 : index
      %38 = vector.load %arg7[%c0_21, %c0_22] : memref<1x256xf32, #tpu.memory_space<vmem>>, vector<1x256xf32>
      %39 = vector.broadcast %38 : vector<1x256xf32> to vector<16x256xf32>
      %40 = arith.mulf %37, %39 : vector<16x256xf32>
      %c0_23 = arith.constant 0 : index
      %c0_24 = arith.constant 0 : index
      %41 = vector.load %arg8[%c0_23, %c0_24] : memref<1x256xf32, #tpu.memory_space<vmem>>, vector<1x256xf32>
      %42 = vector.broadcast %41 : vector<1x256xf32> to vector<16x256xf32>
      %43 = arith.addf %40, %42 : vector<16x256xf32>
      %c0_25 = arith.constant 0 : index
      %c0_26 = arith.constant 0 : index
      %44 = vector.load %arg9[%c0_25, %c0_26] : memref<16x256xf32, #tpu.memory_space<vmem>>, vector<16x256xf32>
      tpu.vector_store %arg9[%c0_25, %c0_26], %43 {strides = array<i32>} : memref<16x256xf32, #tpu.memory_space<vmem>>, vector<16x256xf32>,
    } else {
    }
    return
  }
  func.func @transform_0(%arg0: i32, %arg1: i32, %arg2: i32) -> (i32, i32) {
    %c0_i32 = arith.constant 0 : i32
    return %arg0, %arg2 : i32, i32
  }
  func.func @transform_1(%arg0: i32, %arg1: i32, %arg2: i32) -> (i32, i32) {
    %c0_i32 = arith.constant 0 : i32
    %c0_i32_0 = arith.constant 0 : i32
    return %c0_i32, %arg2 : i32, i32
  }
  func.func @transform_2(%arg0: i32, %arg1: i32, %arg2: i32) -> (i32, i32) {
    %c0_i32 = arith.constant 0 : i32
    %c0_i32_0 = arith.constant 0 : i32
    return %c0_i32, %arg2 : i32, i32
  }
  func.func @transform_3(%arg0: i32, %arg1: i32, %arg2: i32) -> (i32, i32) {
    %c0_i32 = arith.constant 0 : i32
    return %arg2, %arg1 : i32, i32
  }
  func.func @transform_4(%arg0: i32, %arg1: i32, %arg2: i32) -> (i32, i32) {
    %c0_i32 = arith.constant 0 : i32
    %c0_i32_0 = arith.constant 0 : i32
    return %c0_i32, %arg1 : i32, i32
  }
  func.func @transform_5(%arg0: i32, %arg1: i32, %arg2: i32) -> (i32, i32) {
    %c0_i32 = arith.constant 0 : i32
    %c0_i32_0 = arith.constant 0 : i32
    return %c0_i32, %arg1 : i32, i32
  }
  func.func @transform_6(%arg0: i32, %arg1: i32, %arg2: i32) -> (i32, i32) {
    %c0_i32 = arith.constant 0 : i32
    return %arg0, %arg1 : i32, i32
  }
}

module attributes {stable_mosaic.version = 11 : i64} {
  func.func @_xent_kernel(%arg0: memref<14x256xf32, #tpu.memory_space<vmem>>, %arg1: memref<14x1xi32, #tpu.memory_space<vmem>>, %arg2: memref<14x1xf32, #tpu.memory_space<vmem>>, %arg3: memref<1x128xf32, #tpu.memory_space<vmem>>) attributes {dimension_semantics = [], scalar_prefetch = 0 : i64, scratch_operands = 0 : i64, tpu.core_type = #tpu.core_type<tc>} {
    %c0 = arith.constant 0 : index
    %c0_0 = arith.constant 0 : index
    %0 = vector.load %arg0[%c0, %c0_0] : memref<14x256xf32, #tpu.memory_space<vmem>>, vector<14x256xf32>
    %cst = arith.constant dense<0xFF800000> : vector<14xf32>
    %1 = vector.multi_reduction <maximumf>, %0, %cst [1] : vector<14x256xf32> to vector<14xf32>
    %2 = vector.shape_cast %1 : vector<14xf32> to vector<14x1xf32>
    %3 = vector.broadcast %2 : vector<14x1xf32> to vector<14x256xf32>
    %4 = arith.subf %0, %3 : vector<14x256xf32>
    %5 = math.exp %4 : vector<14x256xf32>
    %cst_1 = arith.constant dense<0.000000e+00> : vector<14xf32>
    %6 = vector.multi_reduction <add>, %5, %cst_1 [1] : vector<14x256xf32> to vector<14xf32>
    %7 = vector.shape_cast %6 : vector<14xf32> to vector<14x1xf32>
    %8 = math.log %7 : vector<14x1xf32>
    %9 = arith.addf %2, %8 : vector<14x1xf32>
    %10 = tpu.iota {dimensions = array<i32: 1>} : vector<14x256xi32>
    %c0_2 = arith.constant 0 : index
    %c0_3 = arith.constant 0 : index
    %11 = vector.load %arg1[%c0_2, %c0_3] : memref<14x1xi32, #tpu.memory_space<vmem>>, vector<14x1xi32>
    %12 = vector.broadcast %11 : vector<14x1xi32> to vector<14x256xi32>
    %13 = arith.cmpi eq, %10, %12 : vector<14x256xi32>
    %cst_4 = arith.constant 0.000000e+00 : f32
    %14 = vector.broadcast %cst_4 : f32 to vector<14x256xf32>
    %15 = arith.select %13, %0, %14 : vector<14x256xi1>, vector<14x256xf32>
    %cst_5 = arith.constant dense<0.000000e+00> : vector<14xf32>
    %16 = vector.multi_reduction <add>, %15, %cst_5 [1] : vector<14x256xf32> to vector<14xf32>
    %17 = vector.shape_cast %16 : vector<14xf32> to vector<14x1xf32>
    %18 = arith.subf %9, %17 : vector<14x1xf32>
    %c0_6 = arith.constant 0 : index
    %c0_7 = arith.constant 0 : index
    %19 = vector.load %arg2[%c0_6, %c0_7] : memref<14x1xf32, #tpu.memory_space<vmem>>, vector<14x1xf32>
    %20 = arith.mulf %18, %19 : vector<14x1xf32>
    %21 = vector.shape_cast %20 : vector<14x1xf32> to vector<1x14x1xf32>
    %cst_8 = arith.constant dense<0.000000e+00> : vector<1xf32>
    %22 = vector.multi_reduction <add>, %21, %cst_8 [1, 2] : vector<1x14x1xf32> to vector<1xf32>
    %23 = vector.shape_cast %22 : vector<1xf32> to vector<1x1x1xf32>
    %24 = vector.extract %23[0, 0, 0] : f32 from vector<1x1x1xf32>
    %25 = vector.broadcast %24 : f32 to vector<1x1xf32>
    %c0_9 = arith.constant 0 : index
    %c0_10 = arith.constant 0 : index
    %26 = vector.load %arg2[%c0_9, %c0_10] : memref<14x1xf32, #tpu.memory_space<vmem>>, vector<14x1xf32>
    %27 = vector.shape_cast %26 : vector<14x1xf32> to vector<1x14x1xf32>
    %cst_11 = arith.constant dense<0.000000e+00> : vector<1xf32>
    %28 = vector.multi_reduction <add>, %27, %cst_11 [1, 2] : vector<1x14x1xf32> to vector<1xf32>
    %29 = vector.shape_cast %28 : vector<1xf32> to vector<1x1x1xf32>
    %30 = vector.extract %29[0, 0, 0] : f32 from vector<1x1x1xf32>
    %31 = vector.broadcast %30 : f32 to vector<1x1xf32>
    %cst_12 = arith.constant 1.000000e+00 : f32
    %32 = vector.broadcast %cst_12 : f32 to vector<1x1xf32>
    %33 = arith.maximumf %31, %32 : vector<1x1xf32>
    %34 = arith.divf %25, %33 : vector<1x1xf32>
    %35 = vector.shape_cast %34 : vector<1x1xf32> to vector<1x1xf32>
    %36 = vector.broadcast %35 : vector<1x1xf32> to vector<1x128xf32>
    %c0_13 = arith.constant 0 : index
    %c0_14 = arith.constant 0 : index
    %37 = vector.load %arg3[%c0_13, %c0_14] : memref<1x128xf32, #tpu.memory_space<vmem>>, vector<1x128xf32>
    tpu.vector_store %arg3[%c0_13, %c0_14], %36 {strides = array<i32>} : memref<1x128xf32, #tpu.memory_space<vmem>>, vector<1x128xf32>,
    return
  }
}

</mosaic_0001>

<llo_original>
// kernel: report_generation_forward.14
$region0: #{report_generation_forward.14}
  #allocation0 [shape = 'u32[]', space=smem, size = 0x4, offset = 0x4, fixed_abs, tag = 'smem constant byte address 0x4 - core index']
  #allocation1 [shape = 'u32[144,128]{1,0:T(1,128)}', space=vmem, size = 0x12000, scoped, tag = 'internal scratch']
  %s0 = inlined_call_operand.vmem [shape: f32[32,9,128], index: 0, kind: input, shape index: {}]
  %s1 = inlined_call_operand.vmem [shape: f32[32,128], index: 1, kind: output, shape index: {}]
  %s2 = sld [smem:[#allocation0]]
  $region14: #{report_generation_forward.14} parent=0
    _
  %s4 = ssub.s32 1, %s2
  %s5 = scalar_select 0, %s4, %s2
  // Predicated region
  $region2: #{report_generation_forward.14} parent=0 // pred_check
    _
  $region3: #{report_generation_forward.14} parent=0 // pred_check_branch
    %7 = sbr.rel (0) target = $region5
  $region4: #{report_generation_forward.14} parent=0 // pred_region
    _
  $region5: #{report_generation_forward.14} parent=0 // pred_fallthru
    _
  %v8 = vld [vmem:[%s0] sm:$0xff]
  %v9 = vld [vmem:[%s0 + $0x8] sm:$0x1]
  %v10 = vld [vmem:[%s0 + $0x10] sm:$0xff]
  %v11 = vld [vmem:[%s0 + $0x18] sm:$0x1]
  %v12 = vld [vmem:[%s0 + $0x20] sm:$0xff]
  %v13 = vld [vmem:[%s0 + $0x28] sm:$0x1]
  %v14 = vld [vmem:[%s0 + $0x30] sm:$0xff]
  %v15 = vld [vmem:[%s0 + $0x38] sm:$0x1]
  %v16 = vld [vmem:[%s0 + $0x40] sm:$0xff]
  %v17 = vld [vmem:[%s0 + $0x48] sm:$0x1]
  %v18 = vld [vmem:[%s0 + $0x50] sm:$0xff]
  %v19 = vld [vmem:[%s0 + $0x58] sm:$0x1]
  %v20 = vld [vmem:[%s0 + $0x60] sm:$0xff]
  %v21 = vld [vmem:[%s0 + $0x68] sm:$0x1]
  %v22 = vld [vmem:[%s0 + $0x70] sm:$0xff]
  %v23 = vld [vmem:[%s0 + $0x78] sm:$0x1]
  %v24 = vld [vmem:[%s0 + $0x80] sm:$0xff]
  %v25 = vld [vmem:[%s0 + $0x88] sm:$0x1]
  %v26 = vld [vmem:[%s0 + $0x90] sm:$0xff]
  %v27 = vld [vmem:[%s0 + $0x98] sm:$0x1]
  %v28 = vld [vmem:[%s0 + $0xa0] sm:$0xff]
  %v29 = vld [vmem:[%s0 + $0xa8] sm:$0x1]
  %v30 = vld [vmem:[%s0 + $0xb0] sm:$0xff]
  %v31 = vld [vmem:[%s0 + $0xb8] sm:$0x1]
  %v32 = vld [vmem:[%s0 + $0xc0] sm:$0xff]
  %v33 = vld [vmem:[%s0 + $0xc8] sm:$0x1]
  %v34 = vld [vmem:[%s0 + $0xd0] sm:$0xff]
  %v35 = vld [vmem:[%s0 + $0xd8] sm:$0x1]
  %v36 = vld [vmem:[%s0 + $0xe0] sm:$0xff]
  %v37 = vld [vmem:[%s0 + $0xe8] sm:$0x1]
  %v38 = vld [vmem:[%s0 + $0xf0] sm:$0xff]
  %v39 = vld [vmem:[%s0 + $0xf8] sm:$0x1]
  %v40 = vld [vmem:[%s0 + $0x100] sm:$0xff]
  %v41 = vld [vmem:[%s0 + $0x108] sm:$0x1]
  %v42 = vld [vmem:[%s0 + $0x110] sm:$0xff]
  %v43 = vld [vmem:[%s0 + $0x118] sm:$0x1]
  %v44 = vld [vmem:[%s0 + $0x120] sm:$0xff]
  %v45 = vld [vmem:[%s0 + $0x128] sm:$0x1]
  %v46 = vld [vmem:[%s0 + $0x130] sm:$0xff]
  %v47 = vld [vmem:[%s0 + $0x138] sm:$0x1]
  %v48 = vld [vmem:[%s0 + $0x140] sm:$0xff]
  %v49 = vld [vmem:[%s0 + $0x148] sm:$0x1]
  %v50 = vld [vmem:[%s0 + $0x150] sm:$0xff]
  %v51 = vld [vmem:[%s0 + $0x158] sm:$0x1]
  %v52 = vld [vmem:[%s0 + $0x160] sm:$0xff]
  %v53 = vld [vmem:[%s0 + $0x168] sm:$0x1]
  %v54 = vld [vmem:[%s0 + $0x170] sm:$0xff]
  %v55 = vld [vmem:[%s0 + $0x178] sm:$0x1]
  %v56 = vld [vmem:[%s0 + $0x180] sm:$0xff]
  %v57 = vld [vmem:[%s0 + $0x188] sm:$0x1]
  %v58 = vld [vmem:[%s0 + $0x190] sm:$0xff]
  %v59 = vld [vmem:[%s0 + $0x198] sm:$0x1]
  %v60 = vld [vmem:[%s0 + $0x1a0] sm:$0xff]
  %v61 = vld [vmem:[%s0 + $0x1a8] sm:$0x1]
  %v62 = vld [vmem:[%s0 + $0x1b0] sm:$0xff]
  %v63 = vld [vmem:[%s0 + $0x1b8] sm:$0x1]
  %v64 = vld [vmem:[%s0 + $0x1c0] sm:$0xff]
  %v65 = vld [vmem:[%s0 + $0x1c8] sm:$0x1]
  %v66 = vld [vmem:[%s0 + $0x1d0] sm:$0xff]
  %v67 = vld [vmem:[%s0 + $0x1d8] sm:$0x1]
  %v68 = vld [vmem:[%s0 + $0x1e0] sm:$0xff]
  %v69 = vld [vmem:[%s0 + $0x1e8] sm:$0x1]
  %v70 = vld [vmem:[%s0 + $0x1f0] sm:$0xff]
  %v71 = vld [vmem:[%s0 + $0x1f8] sm:$0x1]
  %vm72 = vcmask 1040384
  %v73 = vsel %vm72, %v9, -inf
  %v74 = vmax.f32 %v8, %v73
  %v75 = vrot.slane %v74, 4
  %v76 = vmax.f32 %v74, %v75
  %v77 = vrot.slane %v76, 2
  %v78 = vmax.f32 %v76, %v77
  %v79 = vrot.slane %v78, 1
  %v80 = vmax.f32 %v78, %v79
  %v81 = vsel %vm72, %v11, -inf
  %v82 = vmax.f32 %v10, %v81
  %v83 = vrot.slane %v82, 4
  %v84 = vmax.f32 %v82, %v83
  %v85 = vrot.slane %v84, 2
  %v86 = vmax.f32 %v84, %v85
  %v87 = vrot.slane %v86, 1
  %v88 = vmax.f32 %v86, %v87
  %v89 = vsel %vm72, %v13, -inf
  %v90 = vmax.f32 %v12, %v89
  %v91 = vrot.slane %v90, 4
  %v92 = vmax.f32 %v90, %v91
  %v93 = vrot.slane %v92, 2
  %v94 = vmax.f32 %v92, %v93
  %v95 = vrot.slane %v94, 1
  %v96 = vmax.f32 %v94, %v95
  %v97 = vsel %vm72, %v15, -inf
  %v98 = vmax.f32 %v14, %v97
  %v99 = vrot.slane %v98, 4
  %v100 = vmax.f32 %v98, %v99
  %v101 = vrot.slane %v100, 2
  %v102 = vmax.f32 %v100, %v101
  %v103 = vrot.slane %v102, 1
  %v104 = vmax.f32 %v102, %v103
  %v105 = vsel %vm72, %v17, -inf
  %v106 = vmax.f32 %v16, %v105
  %v107 = vrot.slane %v106, 4
  %v108 = vmax.f32 %v106, %v107
  %v109 = vrot.slane %v108, 2
  %v110 = vmax.f32 %v108, %v109
  %v111 = vrot.slane %v110, 1
  %v112 = vmax.f32 %v110, %v111
  %v113 = vsel %vm72, %v19, -inf
  %v114 = vmax.f32 %v18, %v113
  %v115 = vrot.slane %v114, 4
  %v116 = vmax.f32 %v114, %v115
  %v117 = vrot.slane %v116, 2
  %v118 = vmax.f32 %v116, %v117
  %v119 = vrot.slane %v118, 1
  %v120 = vmax.f32 %v118, %v119
  %v121 = vsel %vm72, %v21, -inf
  %v122 = vmax.f32 %v20, %v121
  %v123 = vrot.slane %v122, 4
  %v124 = vmax.f32 %v122, %v123
  %v125 = vrot.slane %v124, 2
  %v126 = vmax.f32 %v124, %v125
  %v127 = vrot.slane %v126, 1
  %v128 = vmax.f32 %v126, %v127
  %v129 = vsel %vm72, %v23, -inf
  %v130 = vmax.f32 %v22, %v129
  %v131 = vrot.slane %v130, 4
  %v132 = vmax.f32 %v130, %v131
  %v133 = vrot.slane %v132, 2
  %v134 = vmax.f32 %v132, %v133
  %v135 = vrot.slane %v134, 1
  %v136 = vmax.f32 %v134, %v135
  %v137 = vsel %vm72, %v25, -inf
  %v138 = vmax.f32 %v24, %v137
  %v139 = vrot.slane %v138, 4
  %v140 = vmax.f32 %v138, %v139
  %v141 = vrot.slane %v140, 2
  %v142 = vmax.f32 %v140, %v141
  %v143 = vrot.slane %v142, 1
  %v144 = vmax.f32 %v142, %v143
  %v145 = vsel %vm72, %v27, -inf
  %v146 = vmax.f32 %v26, %v145
  %v147 = vrot.slane %v146, 4
  %v148 = vmax.f32 %v146, %v147
  %v149 = vrot.slane %v148, 2
  %v150 = vmax.f32 %v148, %v149
  %v151 = vrot.slane %v150, 1
  %v152 = vmax.f32 %v150, %v151
  %v153 = vsel %vm72, %v29, -inf
  %v154 = vmax.f32 %v28, %v153
  %v155 = vrot.slane %v154, 4
  %v156 = vmax.f32 %v154, %v155
  %v157 = vrot.slane %v156, 2
  %v158 = vmax.f32 %v156, %v157
  %v159 = vrot.slane %v158, 1
  %v160 = vmax.f32 %v158, %v159
  %v161 = vsel %vm72, %v31, -inf
  %v162 = vmax.f32 %v30, %v161
  %v163 = vrot.slane %v162, 4
  %v164 = vmax.f32 %v162, %v163
  %v165 = vrot.slane %v164, 2
  %v166 = vmax.f32 %v164, %v165
  %v167 = vrot.slane %v166, 1
  %v168 = vmax.f32 %v166, %v167
  %v169 = vsel %vm72, %v33, -inf
  %v170 = vmax.f32 %v32, %v169
  %v171 = vrot.slane %v170, 4
  %v172 = vmax.f32 %v170, %v171
  %v173 = vrot.slane %v172, 2
  %v174 = vmax.f32 %v172, %v173
  %v175 = vrot.slane %v174, 1
  %v176 = vmax.f32 %v174, %v175
  %v177 = vsel %vm72, %v35, -inf
  %v178 = vmax.f32 %v34, %v177
  %v179 = vrot.slane %v178, 4
  %v180 = vmax.f32 %v178, %v179
  %v181 = vrot.slane %v180, 2
  %v182 = vmax.f32 %v180, %v181
  %v183 = vrot.slane %v182, 1
  %v184 = vmax.f32 %v182, %v183
  %v185 = vsel %vm72, %v37, -inf
  %v186 = vmax.f32 %v36, %v185
  %v187 = vrot.slane %v186, 4
  %v188 = vmax.f32 %v186, %v187
  %v189 = vrot.slane %v188, 2
  %v190 = vmax.f32 %v188, %v189
  %v191 = vrot.slane %v190, 1
  %v192 = vmax.f32 %v190, %v191
  %v193 = vsel %vm72, %v39, -inf
  %v194 = vmax.f32 %v38, %v193
  %v195 = vrot.slane %v194, 4
  %v196 = vmax.f32 %v194, %v195
  %v197 = vrot.slane %v196, 2
  %v198 = vmax.f32 %v196, %v197
  %v199 = vrot.slane %v198, 1
  %v200 = vmax.f32 %v198, %v199
  %v201 = vsel %vm72, %v41, -inf
  %v202 = vmax.f32 %v40, %v201
  %v203 = vrot.slane %v202, 4
  %v204 = vmax.f32 %v202, %v203
  %v205 = vrot.slane %v204, 2
  %v206 = vmax.f32 %v204, %v205
  %v207 = vrot.slane %v206, 1
  %v208 = vmax.f32 %v206, %v207
  %v209 = vsel %vm72, %v43, -inf
  %v210 = vmax.f32 %v42, %v209
  %v211 = vrot.slane %v210, 4
  %v212 = vmax.f32 %v210, %v211
  %v213 = vrot.slane %v212, 2
  %v214 = vmax.f32 %v212, %v213
  %v215 = vrot.slane %v214, 1
  %v216 = vmax.f32 %v214, %v215
  %v217 = vsel %vm72, %v45, -inf
  %v218 = vmax.f32 %v44, %v217
  %v219 = vrot.slane %v218, 4
  %v220 = vmax.f32 %v218, %v219
  %v221 = vrot.slane %v220, 2
  %v222 = vmax.f32 %v220, %v221
  %v223 = vrot.slane %v222, 1
  %v224 = vmax.f32 %v222, %v223
  %v225 = vsel %vm72, %v47, -inf
  %v226 = vmax.f32 %v46, %v225
  %v227 = vrot.slane %v226, 4
  %v228 = vmax.f32 %v226, %v227
  %v229 = vrot.slane %v228, 2
  %v230 = vmax.f32 %v228, %v229
  %v231 = vrot.slane %v230, 1
  %v232 = vmax.f32 %v230, %v231
  %v233 = vsel %vm72, %v49, -inf
  %v234 = vmax.f32 %v48, %v233
  %v235 = vrot.slane %v234, 4
  %v236 = vmax.f32 %v234, %v235
  %v237 = vrot.slane %v236, 2
  %v238 = vmax.f32 %v236, %v237
  %v239 = vrot.slane %v238, 1
  %v240 = vmax.f32 %v238, %v239
  %v241 = vsel %vm72, %v51, -inf
  %v242 = vmax.f32 %v50, %v241
  %v243 = vrot.slane %v242, 4
  %v244 = vmax.f32 %v242, %v243
  %v245 = vrot.slane %v244, 2
  %v246 = vmax.f32 %v244, %v245
  %v247 = vrot.slane %v246, 1
  %v248 = vmax.f32 %v246, %v247
  %v249 = vsel %vm72, %v53, -inf
  %v250 = vmax.f32 %v52, %v249
  %v251 = vrot.slane %v250, 4
  %v252 = vmax.f32 %v250, %v251
  %v253 = vrot.slane %v252, 2
  %v254 = vmax.f32 %v252, %v253
  %v255 = vrot.slane %v254, 1
  %v256 = vmax.f32 %v254, %v255
  %v257 = vsel %vm72, %v55, -inf
  %v258 = vmax.f32 %v54, %v257
  %v259 = vrot.slane %v258, 4
  %v260 = vmax.f32 %v258, %v259
  %v261 = vrot.slane %v260, 2
  %v262 = vmax.f32 %v260, %v261
  %v263 = vrot.slane %v262, 1
  %v264 = vmax.f32 %v262, %v263
  %v265 = vsel %vm72, %v57, -inf
  %v266 = vmax.f32 %v56, %v265
  %v267 = vrot.slane %v266, 4
  %v268 = vmax.f32 %v266, %v267
  %v269 = vrot.slane %v268, 2
  %v270 = vmax.f32 %v268, %v269
  %v271 = vrot.slane %v270, 1
  %v272 = vmax.f32 %v270, %v271
  %v273 = vsel %vm72, %v59, -inf
  %v274 = vmax.f32 %v58, %v273
  %v275 = vrot.slane %v274, 4
  %v276 = vmax.f32 %v274, %v275
  %v277 = vrot.slane %v276, 2
  %v278 = vmax.f32 %v276, %v277
  %v279 = vrot.slane %v278, 1
  %v280 = vmax.f32 %v278, %v279
  %v281 = vsel %vm72, %v61, -inf
  %v282 = vmax.f32 %v60, %v281
  %v283 = vrot.slane %v282, 4
  %v284 = vmax.f32 %v282, %v283
  %v285 = vrot.slane %v284, 2
  %v286 = vmax.f32 %v284, %v285
  %v287 = vrot.slane %v286, 1
  %v288 = vmax.f32 %v286, %v287
  %v289 = vsel %vm72, %v63, -inf
  %v290 = vmax.f32 %v62, %v289
  %v291 = vrot.slane %v290, 4
  %v292 = vmax.f32 %v290, %v291
  %v293 = vrot.slane %v292, 2
  %v294 = vmax.f32 %v292, %v293
  %v295 = vrot.slane %v294, 1
  %v296 = vmax.f32 %v294, %v295
  %v297 = vsel %vm72, %v65, -inf
  %v298 = vmax.f32 %v64, %v297
  %v299 = vrot.slane %v298, 4
  %v300 = vmax.f32 %v298, %v299
  %v301 = vrot.slane %v300, 2
  %v302 = vmax.f32 %v300, %v301
  %v303 = vrot.slane %v302, 1
  %v304 = vmax.f32 %v302, %v303
  %v305 = vsel %vm72, %v67, -inf
  %v306 = vmax.f32 %v66, %v305
  %v307 = vrot.slane %v306, 4
  %v308 = vmax.f32 %v306, %v307
  %v309 = vrot.slane %v308, 2
  %v310 = vmax.f32 %v308, %v309
  %v311 = vrot.slane %v310, 1
  %v312 = vmax.f32 %v310, %v311
  %v313 = vsel %vm72, %v69, -inf
  %v314 = vmax.f32 %v68, %v313
  %v315 = vrot.slane %v314, 4
  %v316 = vmax.f32 %v314, %v315
  %v317 = vrot.slane %v316, 2
  %v318 = vmax.f32 %v316, %v317
  %v319 = vrot.slane %v318, 1
  %v320 = vmax.f32 %v318, %v319
  %v321 = vsel %vm72, %v71, -inf
  %v322 = vmax.f32 %v70, %v321
  %v323 = vrot.slane %v322, 4
  %v324 = vmax.f32 %v322, %v323
  %v325 = vrot.slane %v324, 2
  %v326 = vmax.f32 %v324, %v325
  %v327 = vrot.slane %v326, 1
  %v328 = vmax.f32 %v326, %v327
  %vm361 = vcmask 1041409
  %v362 = vsel %vm361, %v88, %v80
  %vm363 = vcmask 1042434
  %v364 = vsel %vm363, %v96, %v362
  %vm365 = vcmask 1043459
  %v366 = vsel %vm365, %v104, %v364
  %vm367 = vcmask 1044484
  %v368 = vsel %vm367, %v112, %v366
  %vm369 = vcmask 1045509
  %v370 = vsel %vm369, %v120, %v368
  %vm371 = vcmask 1046534
  %v372 = vsel %vm371, %v128, %v370
  %vm373 = vcmask 1047559
  %v374 = vsel %vm373, %v136, %v372
  %v375 = vsel %vm361, %v152, %v144
  %v376 = vsel %vm363, %v160, %v375
  %v377 = vsel %vm365, %v168, %v376
  %v378 = vsel %vm367, %v176, %v377
  %v379 = vsel %vm369, %v184, %v378
  %v380 = vsel %vm371, %v192, %v379
  %v381 = vsel %vm373, %v200, %v380
  %v382 = vsel %vm361, %v216, %v208
  %v383 = vsel %vm363, %v224, %v382
  %v384 = vsel %vm365, %v232, %v383
  %v385 = vsel %vm367, %v240, %v384
  %v386 = vsel %vm369, %v248, %v385
  %v387 = vsel %vm371, %v256, %v386
  %v388 = vsel %vm373, %v264, %v387
  %v389 = vsel %vm361, %v280, %v272
  %v390 = vsel %vm363, %v288, %v389
  %v391 = vsel %vm365, %v296, %v390
  %v392 = vsel %vm367, %v304, %v391
  %v393 = vsel %vm369, %v312, %v392
  %v394 = vsel %vm371, %v320, %v393
  %v395 = vsel %vm373, %v328, %v394
  %400 = vst [vmem:[%s1] sm:$0xff] %v374
  %401 = vst [vmem:[%s1 + $0x8] sm:$0xff] %v381
  %402 = vst [vmem:[%s1 + $0x10] sm:$0xff] %v388
  %403 = vst [vmem:[%s1 + $0x18] sm:$0xff] %v395
  // Predicated region
  $region6: #{report_generation_forward.14} parent=0 // pred_check
    _
  $region7: #{report_generation_forward.14} parent=0 // pred_check_branch
    %405 = sbr.rel (0) target = $region9
  $region8: #{report_generation_forward.14} parent=0 // pred_region
    _
  $region9: #{report_generation_forward.14} parent=0 // pred_fallthru
    _
  // Predicated region
  $region10: #{report_generation_forward.14} parent=0 // pred_check
    _
  $region11: #{report_generation_forward.14} parent=0 // pred_check_branch
    %407 = sbr.rel (0) target = $region13
  $region12: #{report_generation_forward.14} parent=0 // pred_region
    _
  $region13: #{report_generation_forward.14} parent=0 // pred_fallthru
    _

// kernel: report_generation_forward.13
$region0: #{report_generation_forward.13}
  #allocation0 [shape = 'u32[]', space=smem, size = 0x4, offset = 0x4, fixed_abs, tag = 'smem constant byte address 0x4 - core index']
  #allocation1 [shape = 'u32[144,128]{1,0:T(1,128)}', space=vmem, size = 0x12000, scoped, tag = 'internal scratch']
  #allocation2 [shape = 'f32[128,128]{1,0:T(8,128)}', space=vmem, size = 0x10000, scoped, tag = 'scratch operand']
  %s0 = inlined_call_operand.vmem [shape: bf16[128,64], index: 0, kind: input, shape index: {}]
  %s1 = inlined_call_operand.vmem [shape: bf16[64,128], index: 1, kind: input, shape index: {}]
  %s2 = inlined_call_operand.vmem [shape: f32[1,128], index: 2, kind: input, shape index: {}]
  %s3 = inlined_call_operand.vmem [shape: f32[1,128], index: 3, kind: input, shape index: {}]
  %s4 = inlined_call_operand.vmem [shape: f32[128,128], index: 4, kind: output, shape index: {}]
  %s5 = sld [smem:[#allocation0]]
  $region34: #{report_generation_forward.13} parent=0
    _
  %s7 = ssub.s32 1, %s5
  %s8 = scalar_select 0, %s7, %s5
  // Predicated region
  $region2: #{report_generation_forward.13} parent=0 // pred_check
    _
  $region3: #{report_generation_forward.13} parent=0 // pred_check_branch
    %10 = sbr.rel (0) target = $region5
  $region4: #{report_generation_forward.13} parent=0 // pred_region
    _
  $region5: #{report_generation_forward.13} parent=0 // pred_fallthru
    _
  // Predicated region
  $region6: #{report_generation_forward.13} parent=0 // pred_check
    _
  $region7: #{report_generation_forward.13} parent=0 // pred_check_branch
    %12 = sbr.rel (0) target = $region9
  $region8: #{report_generation_forward.13} parent=0 // pred_region
    _
  $region9: #{report_generation_forward.13} parent=0 // pred_fallthru
    _
  // Predicated region
  $region10: #{report_generation_forward.13} parent=0 // pred_check
    _
  $region11: #{report_generation_forward.13} parent=0 // pred_check_branch
    %14 = sbr.rel (0) target = $region13
  $region12: #{report_generation_forward.13} parent=0 // pred_region
    _
  $region13: #{report_generation_forward.13} parent=0 // pred_fallthru
    _
  // Predicated region
  $region14: #{report_generation_forward.13} parent=0 // pred_check
    _
  $region15: #{report_generation_forward.13} parent=0 // pred_check_branch
    %16 = sbr.rel (0) target = $region17
  $region16: #{report_generation_forward.13} parent=0 // pred_region
    _
  $region17: #{report_generation_forward.13} parent=0 // pred_fallthru
    _
  %p18 = scmp.eq.s32.totalorder 0, 0
  // Predicated region
  $region18: #{report_generation_forward.13} parent=0 // pred_check
    %p19 = pneg %p18
  $region19: #{report_generation_forward.13} parent=0 // pred_check_branch
    %21 = sbr.rel (%p19) target = $region21
  $region20: #{report_generation_forward.13} parent=0 // pred_region
    %22 = vst [vmem:[#allocation2] sm:$0xff] 0.0
    %23 = vst [vmem:[#allocation2 + $0x8] sm:$0xff] 0.0
    %24 = vst [vmem:[#allocation2 + $0x10] sm:$0xff] 0.0
    %25 = vst [vmem:[#allocation2 + $0x18] sm:$0xff] 0.0
    %26 = vst [vmem:[#allocation2 + $0x20] sm:$0xff] 0.0
    %27 = vst [vmem:[#allocation2 + $0x28] sm:$0xff] 0.0
    %28 = vst [vmem:[#allocation2 + $0x30] sm:$0xff] 0.0
    %29 = vst [vmem:[#allocation2 + $0x38] sm:$0xff] 0.0
    %30 = vst [vmem:[#allocation2 + $0x40] sm:$0xff] 0.0
    %31 = vst [vmem:[#allocation2 + $0x48] sm:$0xff] 0.0
    %32 = vst [vmem:[#allocation2 + $0x50] sm:$0xff] 0.0
    %33 = vst [vmem:[#allocation2 + $0x58] sm:$0xff] 0.0
    %34 = vst [vmem:[#allocation2 + $0x60] sm:$0xff] 0.0
    %35 = vst [vmem:[#allocation2 + $0x68] sm:$0xff] 0.0
    %36 = vst [vmem:[#allocation2 + $0x70] sm:$0xff] 0.0
    %37 = vst [vmem:[#allocation2 + $0x78] sm:$0xff] 0.0
  $region21: #{report_generation_forward.13} parent=0 // pred_fallthru
    _
  %v38 = vld [vmem:[%s0] sm:$0xf]
  %v39 = vld [vmem:[%s0 + $0x4] sm:$0xf]
  %v40 = vld [vmem:[%s0 + $0x8] sm:$0xf]
  %v41 = vld [vmem:[%s0 + $0xc] sm:$0xf]
  %v42 = vld [vmem:[%s0 + $0x10] sm:$0xf]
  %v43 = vld [vmem:[%s0 + $0x14] sm:$0xf]
  %v44 = vld [vmem:[%s0 + $0x18] sm:$0xf]
  %v45 = vld [vmem:[%s0 + $0x1c] sm:$0xf]
  %v46 = vld [vmem:[%s0 + $0x20] sm:$0xf]
  %v47 = vld [vmem:[%s0 + $0x24] sm:$0xf]
  %v48 = vld [vmem:[%s0 + $0x28] sm:$0xf]
  %v49 = vld [vmem:[%s0 + $0x2c] sm:$0xf]
  %v50 = vld [vmem:[%s0 + $0x30] sm:$0xf]
  %v51 = vld [vmem:[%s0 + $0x34] sm:$0xf]
  %v52 = vld [vmem:[%s0 + $0x38] sm:$0xf]
  %v53 = vld [vmem:[%s0 + $0x3c] sm:$0xf]
  %v54 = vld [vmem:[#allocation2] sm:$0xff]
  %v55 = vld [vmem:[#allocation2 + $0x8] sm:$0xff]
  %v56 = vld [vmem:[#allocation2 + $0x10] sm:$0xff]
  %v57 = vld [vmem:[#allocation2 + $0x18] sm:$0xff]
  %v58 = vld [vmem:[#allocation2 + $0x20] sm:$0xff]
  %v59 = vld [vmem:[#allocation2 + $0x28] sm:$0xff]
  %v60 = vld [vmem:[#allocation2 + $0x30] sm:$0xff]
  %v61 = vld [vmem:[#allocation2 + $0x38] sm:$0xff]
  %v62 = vld [vmem:[#allocation2 + $0x40] sm:$0xff]
  %v63 = vld [vmem:[#allocation2 + $0x48] sm:$0xff]
  %v64 = vld [vmem:[#allocation2 + $0x50] sm:$0xff]
  %v65 = vld [vmem:[#allocation2 + $0x58] sm:$0xff]
  %v66 = vld [vmem:[#allocation2 + $0x60] sm:$0xff]
  %v67 = vld [vmem:[#allocation2 + $0x68] sm:$0xff]
  %v68 = vld [vmem:[#allocation2 + $0x70] sm:$0xff]
  %v69 = vld [vmem:[#allocation2 + $0x78] sm:$0xff]
  %v70 = vld [vmem:[%s1] sm:$0xf]
  %v71 = vld [vmem:[%s1 + $0x4] sm:$0xf]
  %v72 = vld [vmem:[%s1 + $0x8] sm:$0xf]
  %v73 = vld [vmem:[%s1 + $0xc] sm:$0xf]
  %v74 = vld [vmem:[%s1 + $0x10] sm:$0xf]
  %v75 = vld [vmem:[%s1 + $0x14] sm:$0xf]
  %v76 = vld [vmem:[%s1 + $0x18] sm:$0xf]
  %v77 = vld [vmem:[%s1 + $0x1c] sm:$0xf]
  %v94 = vunpack.c.l.b16 %v38
  %v95 = vunpack.c.l.b16 %v39
  %v96 = vunpack.c.l.b16 %v40
  %v97 = vunpack.c.l.b16 %v41
  %v98 = vunpack.c.l.b16 %v42
  %v99 = vunpack.c.l.b16 %v43
  %v100 = vunpack.c.l.b16 %v44
  %v101 = vunpack.c.l.b16 %v45
  %v102 = vunpack.c.l.b16 %v46
  %v103 = vunpack.c.l.b16 %v47
  %v104 = vunpack.c.l.b16 %v48
  %v105 = vunpack.c.l.b16 %v49
  %v106 = vunpack.c.l.b16 %v50
  %v107 = vunpack.c.l.b16 %v51
  %v108 = vunpack.c.l.b16 %v52
  %v109 = vunpack.c.l.b16 %v53
  %v110 = vpack.c.b16 %v95, %v94
  %v111 = vpack.c.b16 %v97, %v96
  %v112 = vpack.c.b16 %v99, %v98
  %v113 = vpack.c.b16 %v101, %v100
  %v114 = vpack.c.b16 %v103, %v102
  %v115 = vpack.c.b16 %v105, %v104
  %v116 = vpack.c.b16 %v107, %v106
  %v117 = vpack.c.b16 %v109, %v108
  %v126 = vunpack.c.l.b16 %v70
  %v127 = vunpack.c.l.b16 %v71
  %v128 = vunpack.c.l.b16 %v72
  %v129 = vunpack.c.l.b16 %v73
  %v130 = vunpack.c.l.b16 %v74
  %v131 = vunpack.c.l.b16 %v75
  %v132 = vunpack.c.l.b16 %v76
  %v133 = vunpack.c.l.b16 %v77
  %v134 = vpack.c.b16 %v127, %v126
  %v135 = vpack.c.b16 %v129, %v128
  %v136 = vpack.c.b16 %v131, %v130
  %v137 = vpack.c.b16 %v133, %v132
  %vm142 = vcmask 523264
  %v144 = vsel %vm142, %v110, 0
  %v147 = vsel %vm142, %v111, 0
  %v150 = vsel %vm142, %v112, 0
  %v153 = vsel %vm142, %v113, 0
  %v156 = vsel %vm142, %v114, 0
  %v159 = vsel %vm142, %v115, 0
  %v162 = vsel %vm142, %v116, 0
  %v165 = vsel %vm142, %v117, 0
  %167 = vmatprep.subr.bf16.mxu0 0
  %168 = vmatpush1.bf16.msra.mxu0 0
  %169 = vmatprep.subr.bf16.mxu0 0
  %170 = vmatpush1.bf16.msra.mxu0 0
  %171 = vmatprep.subr.bf16.mxu0 0
  %172 = vmatpush1.bf16.msra.mxu0 0
  %173 = vmatprep.subr.bf16.mxu0 0
  %174 = vmatpush1.bf16.msra.mxu0 0
  %175 = vmatprep.subr.bf16.mxu0 0
  %176 = vmatpush1.bf16.msra.mxu0 %v137
  %177 = vmatprep.subr.bf16.mxu0 0
  %178 = vmatpush1.bf16.msra.mxu0 %v136
  %179 = vmatprep.subr.bf16.mxu0 0
  %180 = vmatpush1.bf16.msra.mxu0 %v135
  %181 = vmatprep.subr.bf16.mxu0 0
  %182 = vmatpush1.bf16.msra.mxu0 %v134
  %183 = vmatprep.subr.bf16.mxu0 0
  %184 = vmatpush2.bf16.msra.mxu0 0
  %185 = vmatprep.subr.bf16.mxu0 0
  %186 = vmatpush2.bf16.msra.mxu0 0
  %187 = vmatprep.subr.bf16.mxu0 0
  %188 = vmatpush2.bf16.msra.mxu0 0
  %189 = vmatprep.subr.bf16.mxu0 0
  %190 = vmatpush2.bf16.msra.mxu0 0
  %191 = vmatprep.subr.bf16.mxu0 0
  %192 = vmatpush2.bf16.msra.mxu0 0
  %193 = vmatprep.subr.bf16.mxu0 0
  %194 = vmatpush2.bf16.msra.mxu0 0
  %195 = vmatprep.subr.bf16.mxu0 0
  %196 = vmatpush2.bf16.msra.mxu0 0
  %197 = vmatprep.subr.bf16.mxu0 0
  %198 = vmatpush2.bf16.msra.mxu0 0
  %199 = vmatprep.mubr.bf16.mxu0 0
  %200 = vmatmul.mubr.bf16.gmra.mxu0 %v144
  %v201 = vpop.f32.mrf.mxu0
  %v202 = vadd.f32 0.0, %v201
  %v203 = vpop.f32.mrf.mxu0
  %v204 = vpop.f32.mrf.mxu0
  %v205 = vadd.f32 0.0, %v204
  %v206 = vpop.f32.mrf.mxu0
  %207 = vmatprep.mubr.bf16.mxu0 0
  %208 = vmatmul.mubr.bf16.gmra.mxu0 %v147
  %v209 = vpop.f32.mrf.mxu0
  %v210 = vadd.f32 0.0, %v209
  %v211 = vpop.f32.mrf.mxu0
  %v212 = vpop.f32.mrf.mxu0
  %v213 = vadd.f32 0.0, %v212
  %v214 = vpop.f32.mrf.mxu0
  %215 = vmatprep.mubr.bf16.mxu0 0
  %216 = vmatmul.mubr.bf16.gmra.mxu0 %v150
  %v217 = vpop.f32.mrf.mxu0
  %v218 = vadd.f32 0.0, %v217
  %v219 = vpop.f32.mrf.mxu0
  %v220 = vpop.f32.mrf.mxu0
  %v221 = vadd.f32 0.0, %v220
  %v222 = vpop.f32.mrf.mxu0
  %223 = vmatprep.mubr.bf16.mxu0 0
  %224 = vmatmul.mubr.bf16.gmra.mxu0 %v153
  %v225 = vpop.f32.mrf.mxu0
  %v226 = vadd.f32 0.0, %v225
  %v227 = vpop.f32.mrf.mxu0
  %v228 = vpop.f32.mrf.mxu0
  %v229 = vadd.f32 0.0, %v228
  %v230 = vpop.f32.mrf.mxu0
  %231 = vmatprep.mubr.bf16.mxu0 0
  %232 = vmatmul.mubr.bf16.gmra.mxu0 %v156
  %v233 = vpop.f32.mrf.mxu0
  %v234 = vadd.f32 0.0, %v233
  %v235 = vpop.f32.mrf.mxu0
  %v236 = vpop.f32.mrf.mxu0
  %v237 = vadd.f32 0.0, %v236
  %v238 = vpop.f32.mrf.mxu0
  %239 = vmatprep.mubr.bf16.mxu0 0
  %240 = vmatmul.mubr.bf16.gmra.mxu0 %v159
  %v241 = vpop.f32.mrf.mxu0
  %v242 = vadd.f32 0.0, %v241
  %v243 = vpop.f32.mrf.mxu0
  %v244 = vpop.f32.mrf.mxu0
  %v245 = vadd.f32 0.0, %v244
  %v246 = vpop.f32.mrf.mxu0
  %247 = vmatprep.mubr.bf16.mxu0 0
  %248 = vmatmul.mubr.bf16.gmra.mxu0 %v162
  %v249 = vpop.f32.mrf.mxu0
  %v250 = vadd.f32 0.0, %v249
  %v251 = vpop.f32.mrf.mxu0
  %v252 = vpop.f32.mrf.mxu0
  %v253 = vadd.f32 0.0, %v252
  %v254 = vpop.f32.mrf.mxu0
  %255 = vmatprep.mubr.bf16.mxu0 0
  %256 = vmatmul.mubr.bf16.gmra.mxu0 %v165
  %v257 = vpop.f32.mrf.mxu0
  %v258 = vadd.f32 0.0, %v257
  %v259 = vpop.f32.mrf.mxu0
  %v260 = vpop.f32.mrf.mxu0
  %v261 = vadd.f32 0.0, %v260
  %v262 = vpop.f32.mrf.mxu0
  %263 = vdwg.mxu0
  %v264 = vadd.f32 %v54, %v202
  %v265 = vadd.f32 %v55, %v205
  %v266 = vadd.f32 %v56, %v210
  %v267 = vadd.f32 %v57, %v213
  %v268 = vadd.f32 %v58, %v218
  %v269 = vadd.f32 %v59, %v221
  %v270 = vadd.f32 %v60, %v226
  %v271 = vadd.f32 %v61, %v229
  %v272 = vadd.f32 %v62, %v234
  %v273 = vadd.f32 %v63, %v237
  %v274 = vadd.f32 %v64, %v242
  %v275 = vadd.f32 %v65, %v245
  %v276 = vadd.f32 %v66, %v250
  %v277 = vadd.f32 %v67, %v253
  %v278 = vadd.f32 %v68, %v258
  %v279 = vadd.f32 %v69, %v261
  %280 = vst [vmem:[#allocation2] sm:$0xff] %v264
  %281 = vst [vmem:[#allocation2 + $0x8] sm:$0xff] %v265
  %282 = vst [vmem:[#allocation2 + $0x10] sm:$0xff] %v266
  %283 = vst [vmem:[#allocation2 + $0x18] sm:$0xff] %v267
  %284 = vst [vmem:[#allocation2 + $0x20] sm:$0xff] %v268
  %285 = vst [vmem:[#allocation2 + $0x28] sm:$0xff] %v269
  %286 = vst [vmem:[#allocation2 + $0x30] sm:$0xff] %v270
  %287 = vst [vmem:[#allocation2 + $0x38] sm:$0xff] %v271
  %288 = vst [vmem:[#allocation2 + $0x40] sm:$0xff] %v272
  %289 = vst [vmem:[#allocation2 + $0x48] sm:$0xff] %v273
  %290 = vst [vmem:[#allocation2 + $0x50] sm:$0xff] %v274
  %291 = vst [vmem:[#allocation2 + $0x58] sm:$0xff] %v275
  %292 = vst [vmem:[#allocation2 + $0x60] sm:$0xff] %v276
  %293 = vst [vmem:[#allocation2 + $0x68] sm:$0xff] %v277
  %294 = vst [vmem:[#allocation2 + $0x70] sm:$0xff] %v278
  %295 = vst [vmem:[#allocation2 + $0x78] sm:$0xff] %v279
  // Predicated region
  $region22: #{report_generation_forward.13} parent=0 // pred_check
    %p296 = pneg %p18
  $region23: #{report_generation_forward.13} parent=0 // pred_check_branch
    %298 = sbr.rel (%p296) target = $region25
  $region24: #{report_generation_forward.13} parent=0 // pred_region
    %v299 = vld [vmem:[#allocation2] sm:$0xff]
    %v300 = vld [vmem:[#allocation2 + $0x8] sm:$0xff]
    %v301 = vld [vmem:[#allocation2 + $0x10] sm:$0xff]
    %v302 = vld [vmem:[#allocation2 + $0x18] sm:$0xff]
    %v303 = vld [vmem:[#allocation2 + $0x20] sm:$0xff]
    %v304 = vld [vmem:[#allocation2 + $0x28] sm:$0xff]
    %v305 = vld [vmem:[#allocation2 + $0x30] sm:$0xff]
    %v306 = vld [vmem:[#allocation2 + $0x38] sm:$0xff]
    %v307 = vld [vmem:[#allocation2 + $0x40] sm:$0xff]
    %v308 = vld [vmem:[#allocation2 + $0x48] sm:$0xff]
    %v309 = vld [vmem:[#allocation2 + $0x50] sm:$0xff]
    %v310 = vld [vmem:[#allocation2 + $0x58] sm:$0xff]
    %v311 = vld [vmem:[#allocation2 + $0x60] sm:$0xff]
    %v312 = vld [vmem:[#allocation2 + $0x68] sm:$0xff]
    %v313 = vld [vmem:[#allocation2 + $0x70] sm:$0xff]
    %v314 = vld [vmem:[#allocation2 + $0x78] sm:$0xff]
    %v315 = vld [vmem:[%s2] sm:$0x1]
    %v317 = vlaneseq
    %v318 = vshrl.u32 %v317, 7
    %v319 = vsub.s32 0, %v318
    %v320 = vrot.slane %v315, %v319
    %v322 = vmul.f32 %v299, %v320
    %v323 = vmul.f32 %v300, %v320
    %v324 = vmul.f32 %v301, %v320
    %v325 = vmul.f32 %v302, %v320
    %v326 = vmul.f32 %v303, %v320
    %v327 = vmul.f32 %v304, %v320
    %v328 = vmul.f32 %v305, %v320
    %v329 = vmul.f32 %v306, %v320
    %v330 = vmul.f32 %v307, %v320
    %v331 = vmul.f32 %v308, %v320
    %v332 = vmul.f32 %v309, %v320
    %v333 = vmul.f32 %v310, %v320
    %v334 = vmul.f32 %v311, %v320
    %v335 = vmul.f32 %v312, %v320
    %v336 = vmul.f32 %v313, %v320
    %v337 = vmul.f32 %v314, %v320
    %v338 = vld [vmem:[%s3] sm:$0x1]
    %v340 = vlaneseq
    %v341 = vshrl.u32 %v340, 7
    %v342 = vsub.s32 0, %v341
    %v343 = vrot.slane %v338, %v342
    %v345 = vadd.f32 %v322, %v343
    %v346 = vadd.f32 %v323, %v343
    %v347 = vadd.f32 %v324, %v343
    %v348 = vadd.f32 %v325, %v343
    %v349 = vadd.f32 %v326, %v343
    %v350 = vadd.f32 %v327, %v343
    %v351 = vadd.f32 %v328, %v343
    %v352 = vadd.f32 %v329, %v343
    %v353 = vadd.f32 %v330, %v343
    %v354 = vadd.f32 %v331, %v343
    %v355 = vadd.f32 %v332, %v343
    %v356 = vadd.f32 %v333, %v343
    %v357 = vadd.f32 %v334, %v343
    %v358 = vadd.f32 %v335, %v343
    %v359 = vadd.f32 %v336, %v343
    %v360 = vadd.f32 %v337, %v343
    %v361 = vmax.f32 %v345, 0.0
    %v362 = vmax.f32 %v346, 0.0
    %v363 = vmax.f32 %v347, 0.0
    %v364 = vmax.f32 %v348, 0.0
    %v365 = vmax.f32 %v349, 0.0
    %v366 = vmax.f32 %v350, 0.0
    %v367 = vmax.f32 %v351, 0.0
    %v368 = vmax.f32 %v352, 0.0
    %v369 = vmax.f32 %v353, 0.0
    %v370 = vmax.f32 %v354, 0.0
    %v371 = vmax.f32 %v355, 0.0
    %v372 = vmax.f32 %v356, 0.0
    %v373 = vmax.f32 %v357, 0.0
    %v374 = vmax.f32 %v358, 0.0
    %v375 = vmax.f32 %v359, 0.0
    %v376 = vmax.f32 %v360, 0.0
    %377 = vst [vmem:[%s4] sm:$0xff] %v361
    %378 = vst [vmem:[%s4 + $0x8] sm:$0xff] %v362
    %379 = vst [vmem:[%s4 + $0x10] sm:$0xff] %v363
    %380 = vst [vmem:[%s4 + $0x18] sm:$0xff] %v364
    %381 = vst [vmem:[%s4 + $0x20] sm:$0xff] %v365
    %382 = vst [vmem:[%s4 + $0x28] sm:$0xff] %v366
    %383 = vst [vmem:[%s4 + $0x30] sm:$0xff] %v367
    %384 = vst [vmem:[%s4 + $0x38] sm:$0xff] %v368
    %385 = vst [vmem:[%s4 + $0x40] sm:$0xff] %v369
    %386 = vst [vmem:[%s4 + $0x48] sm:$0xff] %v370
    %387 = vst [vmem:[%s4 + $0x50] sm:$0xff] %v371
    %388 = vst [vmem:[%s4 + $0x58] sm:$0xff] %v372
    %389 = vst [vmem:[%s4 + $0x60] sm:$0xff] %v373
    %390 = vst [vmem:[%s4 + $0x68] sm:$0xff] %v374
    %391 = vst [vmem:[%s4 + $0x70] sm:$0xff] %v375
    %392 = vst [vmem:[%s4 + $0x78] sm:$0xff] %v376
  $region25: #{report_generation_forward.13} parent=0 // pred_fallthru
    _
  // Predicated region
  $region26: #{report_generation_forward.13} parent=0 // pred_check
    _
  $region27: #{report_generation_forward.13} parent=0 // pred_check_branch
    %394 = sbr.rel (0) target = $region29
  $region28: #{report_generation_forward.13} parent=0 // pred_region
    _
  $region29: #{report_generation_forward.13} parent=0 // pred_fallthru
    _
  // Predicated region
  $region30: #{report_generation_forward.13} parent=0 // pred_check
    _
  $region31: #{report_generation_forward.13} parent=0 // pred_check_branch
    %396 = sbr.rel (0) target = $region33
  $region32: #{report_generation_forward.13} parent=0 // pred_region
    _
  $region33: #{report_generation_forward.13} parent=0 // pred_fallthru
    _

// kernel: report_generation_forward.15
$region0: #{report_generation_forward.15}
  #allocation0 [shape = 'u32[]', space=smem, size = 0x4, offset = 0x4, fixed_abs, tag = 'smem constant byte address 0x4 - core index']
  #allocation1 [shape = 'u32[144,128]{1,0:T(1,128)}', space=vmem, size = 0x12000, scoped, tag = 'internal scratch']
  #allocation2 [shape = 'f32[8,128]{1,0:T(8,128)}', space=vmem, size = 0x1000, scoped, tag = 'scratch operand']
  %s0 = inlined_call_operand.vmem [shape: bf16[8,1152], index: 0, kind: input, shape index: {}]
  %s1 = inlined_call_operand.vmem [shape: bf16[1152,128], index: 1, kind: input, shape index: {}]
  %s2 = inlined_call_operand.vmem [shape: f32[1,128], index: 2, kind: input, shape index: {}]
  %s3 = inlined_call_operand.vmem [shape: f32[1,128], index: 3, kind: input, shape index: {}]
  %s4 = inlined_call_operand.vmem [shape: f32[8,128], index: 4, kind: output, shape index: {}]
  %s5 = sld [smem:[#allocation0]]
  $region57: #{report_generation_forward.15} parent=0
    _
  %s7 = ssub.s32 1, %s5
  %s8 = scalar_select 0, %s7, %s5
  loop: start=0, step=1, limit=5
  $region2: #{report_generation_forward.15} parent=0 // loop_pre_header
    _
  $region3: #{report_generation_forward.15} parent=0 // loop_header
    %s10 = sphi 0, %s14
    %p11 = scmp.ge.s32.totalorder %s10, 5
    %s17 = sphi 0, %s36
    %s18 = sphi 0, %s32
    %s19 = sphi 0, %s28
    %s20 = sphi 0, %s17
    %s21 = sphi 0, %s18
    %s22 = sphi 0, %s19
    %s23 = sphi 0, %s20
    %s24 = sphi 0, %s21
    %s25 = sphi 0, %s22
    %s41 = sphi 0, %s43
    %s44 = sphi 0, %s41
    %s45 = sphi 0, %s44
    %s61 = sphi 0, %s45
    %s69 = sphi 0, %s71
    %s72 = sphi 0, %s69
    %s73 = sphi 0, %s72
    %s89 = sphi 0, %s73
    %s95 = sphi 0, %s97
    %s98 = sphi 0, %s95
    %s99 = sphi 0, %s98
    %s115 = sphi 0, %s99
    %s121 = sphi 0, %s123
    %s124 = sphi 0, %s121
    %s125 = sphi 0, %s124
    %s141 = sphi 0, %s125
    %s149 = sphi 0, %s151
    %s152 = sphi 0, %s149
    %s153 = sphi 0, %s152
    %s169 = sphi 0, %s153
  $region4: #{report_generation_forward.15} parent=0 // loop_header_branch
    %13 = sbr.rel (%p11) target = $region8
  $region5: #{report_generation_forward.15} parent=0 // loop_body
    %s15 = ssub.s32 %s10, 1
    %s16 = ssub.s32 %s10, 2
    %s26 = sadd.s32 1, %s19
    %p27 = scmp.ge.s32.totalorder %s26, 3
    %s28 = scalar_select %p27, 0, %s26
    %s29 = sadd.s32 1, %s18
    %s30 = scalar_select %p27, %s29, %s18
    %p31 = scmp.ge.s32.totalorder %s30, 1
    %s32 = scalar_select %p31, 0, %s30
    %s33 = sadd.s32 1, %s17
    %s34 = scalar_select %p31, %s33, %s17
    %p35 = scmp.ge.s32.totalorder %s34, 1
    %s36 = scalar_select %p35, 0, %s34
    %s37 = ssub.s32 %s17, %s36
    %s38 = ssub.s32 %s19, %s28
    %s39 = sor.u32 %s37, %s38
    %p40 = scmp.eq.s32.totalorder %s39, 0
    %s42 = sadd.s32 %s41, 1
    %s43 = scalar_select %p40, %s41, %s42
    %p46 = pneg %p40
    %p47 = scmp.eq.s32.totalorder %s10, 2
    %p48 = por %p46, %p47
    %p49 = scmp.ne.s32.totalorder %s41, %s44
    %p50 = scmp.eq.s32.totalorder %s10, 0
    %p51 = por %p49, %p50
    %p52 = scmp.ne.s32.totalorder %s41, %s44
    %p53 = scmp.eq.s32.totalorder %s15, 2
    %p54 = por %p52, %p53
    %p55 = scmp.ne.s32.totalorder %s44, %s45
    %p56 = scmp.eq.s32.totalorder %s15, 0
    %p57 = por %p55, %p56
    %p58 = scmp.ne.s32.totalorder %s44, %s45
    %p59 = scmp.eq.s32.totalorder %s16, 2
    %p60 = por %p58, %p59
    %p62 = scmp.ne.s32.totalorder %s45, %s61
    %p63 = scmp.eq.s32.totalorder %s16, 0
    %p64 = por %p62, %p63
    %s65 = ssub.s32 %s19, %s28
    %s66 = ssub.s32 %s18, %s32
    %s67 = sor.u32 %s65, %s66
    %p68 = scmp.eq.s32.totalorder %s67, 0
    %s70 = sadd.s32 %s69, 1
    %s71 = scalar_select %p68, %s69, %s70
    %p74 = pneg %p68
    %p75 = scmp.eq.s32.totalorder %s10, 2
    %p76 = por %p74, %p75
    %p77 = scmp.ne.s32.totalorder %s69, %s72
    %p78 = scmp.eq.s32.totalorder %s10, 0
    %p79 = por %p77, %p78
    %p80 = scmp.ne.s32.totalorder %s69, %s72
    %p81 = scmp.eq.s32.totalorder %s15, 2
    %p82 = por %p80, %p81
    %p83 = scmp.ne.s32.totalorder %s72, %s73
    %p84 = scmp.eq.s32.totalorder %s15, 0
    %p85 = por %p83, %p84
    %p86 = scmp.ne.s32.totalorder %s72, %s73
    %p87 = scmp.eq.s32.totalorder %s16, 2
    %p88 = por %p86, %p87
    %p90 = scmp.ne.s32.totalorder %s73, %s89
    %p91 = scmp.eq.s32.totalorder %s16, 0
    %p92 = por %p90, %p91
    %s93 = ssub.s32 %s18, %s32
    %p94 = scmp.eq.s32.totalorder %s93, 0
    %s96 = sadd.s32 %s95, 1
    %s97 = scalar_select %p94, %s95, %s96
    %p100 = pneg %p94
    %p101 = scmp.eq.s32.totalorder %s10, 2
    %p102 = por %p100, %p101
    %p103 = scmp.ne.s32.totalorder %s95, %s98
    %p104 = scmp.eq.s32.totalorder %s10, 0
    %p105 = por %p103, %p104
    %p106 = scmp.ne.s32.totalorder %s95, %s98
    %p107 = scmp.eq.s32.totalorder %s15, 2
    %p108 = por %p106, %p107
    %p109 = scmp.ne.s32.totalorder %s98, %s99
    %p110 = scmp.eq.s32.totalorder %s15, 0
    %p111 = por %p109, %p110
    %p112 = scmp.ne.s32.totalorder %s98, %s99
    %p113 = scmp.eq.s32.totalorder %s16, 2
    %p114 = por %p112, %p113
    %p116 = scmp.ne.s32.totalorder %s99, %s115
    %p117 = scmp.eq.s32.totalorder %s16, 0
    %p118 = por %p116, %p117
    %s119 = ssub.s32 %s18, %s32
    %p120 = scmp.eq.s32.totalorder %s119, 0
    %s122 = sadd.s32 %s121, 1
    %s123 = scalar_select %p120, %s121, %s122
    %p126 = pneg %p120
    %p127 = scmp.eq.s32.totalorder %s10, 2
    %p128 = por %p126, %p127
    %p129 = scmp.ne.s32.totalorder %s121, %s124
    %p130 = scmp.eq.s32.totalorder %s10, 0
    %p131 = por %p129, %p130
    %p132 = scmp.ne.s32.totalorder %s121, %s124
    %p133 = scmp.eq.s32.totalorder %s15, 2
    %p134 = por %p132, %p133
    %p135 = scmp.ne.s32.totalorder %s124, %s125
    %p136 = scmp.eq.s32.totalorder %s15, 0
    %p137 = por %p135, %p136
    %p138 = scmp.ne.s32.totalorder %s124, %s125
    %p139 = scmp.eq.s32.totalorder %s16, 2
    %p140 = por %p138, %p139
    %p142 = scmp.ne.s32.totalorder %s125, %s141
    %p143 = scmp.eq.s32.totalorder %s16, 0
    %p144 = por %p142, %p143
    %s145 = ssub.s32 %s17, %s36
    %s146 = ssub.s32 %s18, %s32
    %s147 = sor.u32 %s145, %s146
    %p148 = scmp.eq.s32.totalorder %s147, 0
    %s150 = sadd.s32 %s149, 1
    %s151 = scalar_select %p148, %s149, %s150
    %p154 = pneg %p148
    %p155 = scmp.eq.s32.totalorder %s10, 2
    %p156 = por %p154, %p155
    %p157 = scmp.ne.s32.totalorder %s149, %s152
    %p158 = scmp.eq.s32.totalorder %s10, 0
    %p159 = por %p157, %p158
    %p160 = scmp.ne.s32.totalorder %s149, %s152
    %p161 = scmp.eq.s32.totalorder %s15, 2
    %p162 = por %p160, %p161
    %p163 = scmp.ne.s32.totalorder %s152, %s153
    %p164 = scmp.eq.s32.totalorder %s15, 0
    %p165 = por %p163, %p164
    %p166 = scmp.ne.s32.totalorder %s152, %s153
    %p167 = scmp.eq.s32.totalorder %s16, 2
    %p168 = por %p166, %p167
    %p170 = scmp.ne.s32.totalorder %s153, %s169
    %p171 = scmp.eq.s32.totalorder %s16, 0
    %p172 = por %p170, %p171
    %p173 = scmp.le.s32.totalorder 1, %s10
    %p174 = scmp.lt.s32.totalorder %s10, 4
    %p175 = pnand %p173, %p174
    %p176 = pneg %p175
    // Predicated region
    $region9: #{report_generation_forward.15} parent=5 // pred_check
      _
    $region10: #{report_generation_forward.15} parent=5 // pred_check_branch
      %178 = sbr.rel (%p175) target = $region12
    $region11: #{report_generation_forward.15} parent=5 // pred_region
      %s179 = ssub.s32 %s10, 1
      // Predicated region
      $region13: #{report_generation_forward.15} parent=11 // pred_check
        %p180 = pneg %p111
      $region14: #{report_generation_forward.15} parent=11 // pred_check_branch
        %182 = sbr.rel (%p180) target = $region16
      $region15: #{report_generation_forward.15} parent=11 // pred_region
        %p183 = scmp.lt.s32.totalorder %s21, 0
        %s184 = scalar_select %p183, %s21, 0
        %s185 = scalar_lea.vmem %s2, %s184
      $region16: #{report_generation_forward.15} parent=11 // pred_fallthru
        _
      // Predicated region
      $region17: #{report_generation_forward.15} parent=11 // pred_check
        %p186 = pneg %p137
      $region18: #{report_generation_forward.15} parent=11 // pred_check_branch
        %188 = sbr.rel (%p186) target = $region20
      $region19: #{report_generation_forward.15} parent=11 // pred_region
        %p189 = scmp.lt.s32.totalorder %s21, 0
        %s190 = scalar_select %p189, %s21, 0
        %s191 = scalar_lea.vmem %s3, %s190
      $region20: #{report_generation_forward.15} parent=11 // pred_fallthru
        _
    $region12: #{report_generation_forward.15} parent=5 // pred_fallthru
      _
    %p192 = scmp.lt.s32.totalorder %s10, 3
    // Predicated region
    $region21: #{report_generation_forward.15} parent=5 // pred_check
      %p193 = pneg %p192
    $region22: #{report_generation_forward.15} parent=5 // pred_check_branch
      %195 = sbr.rel (%p193) target = $region24
    $region23: #{report_generation_forward.15} parent=5 // pred_region
      // Predicated region
      $region25: #{report_generation_forward.15} parent=23 // pred_check
        %p196 = pneg %p51
      $region26: #{report_generation_forward.15} parent=23 // pred_check_branch
        %198 = sbr.rel (%p196) target = $region28
      $region27: #{report_generation_forward.15} parent=23 // pred_region
        %s199 = smul.u32 3, %s19
        %p200 = scmp.lt.s32.totalorder %s17, 0
        %s201 = scalar_select %p200, %s17, 0
        %p202 = scmp.lt.s32.totalorder %s199, 8
        %s203 = scalar_select %p202, %s199, 8
        %s204 = smul.addr %s201, 9
        %s205 = sadd.s32 %s203, %s204
        %s206 = smul.addr %s205, 4
        %s207 = scalar_lea.vmem %s0, %s206
        %s208 = smul.u32 3, %s19
      $region28: #{report_generation_forward.15} parent=23 // pred_fallthru
        _
      // Predicated region
      $region29: #{report_generation_forward.15} parent=23 // pred_check
        %p209 = pneg %p79
      $region30: #{report_generation_forward.15} parent=23 // pred_check_branch
        %211 = sbr.rel (%p209) target = $region32
      $region31: #{report_generation_forward.15} parent=23 // pred_region
        %s212 = smul.u32 48, %s19
        %p213 = scmp.lt.s32.totalorder %s212, 143
        %s214 = scalar_select %p213, %s212, 143
        %p215 = scmp.lt.s32.totalorder %s18, 0
        %s216 = scalar_select %p215, %s18, 0
        %s217 = sadd.s32 %s216, %s214
        %s218 = smul.addr %s217, 4
        %s219 = scalar_lea.vmem %s1, %s218
        %s220 = smul.u32 48, %s19
      $region32: #{report_generation_forward.15} parent=23 // pred_fallthru
        _
    $region24: #{report_generation_forward.15} parent=5 // pred_fallthru
      _
    %p221 = scmp.le.s32.totalorder 1, %s10
    %p222 = scmp.lt.s32.totalorder %s10, 4
    %p223 = pnand %p221, %p222
    %p224 = pneg %p223
    // Predicated region
    $region33: #{report_generation_forward.15} parent=5 // pred_check
      _
    $region34: #{report_generation_forward.15} parent=5 // pred_check_branch
      %226 = sbr.rel (%p223) target = $region36
    $region35: #{report_generation_forward.15} parent=5 // pred_region
      %s227 = ssub.s32 %s10, 1
      %s228 = smul.u32 3, %s22
      %p229 = scmp.lt.s32.totalorder %s20, 0
      %s230 = scalar_select %p229, %s20, 0
      %p231 = scmp.lt.s32.totalorder %s228, 8
      %s232 = scalar_select %p231, %s228, 8
      %s233 = smul.addr %s230, 9
      %s234 = sadd.s32 %s232, %s233
      %s235 = smul.addr %s234, 4
      %s236 = scalar_lea.vmem %s0, %s235
      %p237 = pneg %p57
      %p238 = pneg %p54
      %s239 = smul.u32 48, %s22
      %p240 = scmp.lt.s32.totalorder %s239, 143
      %s241 = scalar_select %p240, %s239, 143
      %p242 = scmp.lt.s32.totalorder %s21, 0
      %s243 = scalar_select %p242, %s21, 0
      %s244 = sadd.s32 %s243, %s241
      %s245 = smul.addr %s244, 4
      %s246 = scalar_lea.vmem %s1, %s245
      %p247 = pneg %p85
      %p248 = pneg %p82
      %p249 = scmp.lt.s32.totalorder %s21, 0
      %s250 = scalar_select %p249, %s21, 0
      %s251 = scalar_lea.vmem %s2, %s250
      %p252 = pneg %p111
      %p253 = pneg %p108
      %p254 = scmp.lt.s32.totalorder %s21, 0
      %s255 = scalar_select %p254, %s21, 0
      %s256 = scalar_lea.vmem %s3, %s255
      %p257 = pneg %p137
      %p258 = pneg %p134
      %p259 = pneg %p165
      %p260 = pneg %p162
      %p261 = scmp.lt.s32.totalorder %s20, 0
      %s262 = scalar_select %p261, %s20, 0
      %p263 = scmp.lt.s32.totalorder %s21, 0
      %s264 = scalar_select %p263, %s21, 0
      %s265 = sadd.s32 %s264, %s262
      %s266 = smul.addr %s265, 8
      %s267 = scalar_lea.vmem %s4, %s266
      %s268 = smul.u32 3, %s22
      %p269 = scmp.lt.s32.totalorder %s20, 0
      %s270 = scalar_select %p269, %s20, 0
      %p271 = scmp.lt.s32.totalorder %s268, 8
      %s272 = scalar_select %p271, %s268, 8
      %s273 = smul.addr %s270, 9
      %s274 = sadd.s32 %s272, %s273
      %s275 = smul.addr %s274, 4
      %s276 = scalar_lea.vmem %s0, %s275
      %s277 = smul.u32 3, %s22
      %s278 = smul.u32 48, %s22
      %p279 = scmp.lt.s32.totalorder %s278, 143
      %s280 = scalar_select %p279, %s278, 143
      %p281 = scmp.lt.s32.totalorder %s21, 0
      %s282 = scalar_select %p281, %s21, 0
      %s283 = sadd.s32 %s282, %s280
      %s284 = smul.addr %s283, 4
      %s285 = scalar_lea.vmem %s1, %s284
      %s286 = smul.u32 48, %s22
      %p287 = scmp.lt.s32.totalorder %s21, 0
      %s288 = scalar_select %p287, %s21, 0
      %s289 = scalar_lea.vmem %s2, %s288
      %p290 = scmp.lt.s32.totalorder %s21, 0
      %s291 = scalar_select %p290, %s21, 0
      %s292 = scalar_lea.vmem %s3, %s291
      %p293 = scmp.lt.s32.totalorder %s20, 0
      %s294 = scalar_select %p293, %s20, 0
      %p295 = scmp.lt.s32.totalorder %s21, 0
      %s296 = scalar_select %p295, %s21, 0
      %s297 = sadd.s32 %s296, %s294
      %s298 = smul.addr %s297, 8
      %s299 = scalar_lea.vmem %s4, %s298
      %p301 = scmp.eq.s32.totalorder %s22, 0
      // Predicated region
      $region37: #{report_generation_forward.15} parent=35 // pred_check
        %p302 = pneg %p301
      $region38: #{report_generation_forward.15} parent=35 // pred_check_branch
        %304 = sbr.rel (%p302) target = $region40
      $region39: #{report_generation_forward.15} parent=35 // pred_region
        %305 = vst [vmem:[#allocation2] sm:$0xff] 0.0
      $region40: #{report_generation_forward.15} parent=35 // pred_fallthru
        _
      %v306 = vld [vmem:[%s276] sm:$0xff]
      %v307 = vld [vmem:[%s276 + $0x8] sm:$0xf]
      %v308 = vld [vmem:[#allocation2] sm:$0xff]
      %v309 = vld [vmem:[%s285] sm:$0xf]
      %v310 = vld [vmem:[%s285 + $0x4] sm:$0xf]
      %v311 = vld [vmem:[%s285 + $0x8] sm:$0xf]
      %v312 = vld [vmem:[%s285 + $0xc] sm:$0xf]
      %v313 = vld [vmem:[%s285 + $0x10] sm:$0xf]
      %v314 = vld [vmem:[%s285 + $0x14] sm:$0xf]
      %v315 = vld [vmem:[%s285 + $0x18] sm:$0xf]
      %v316 = vld [vmem:[%s285 + $0x1c] sm:$0xf]
      %v317 = vld [vmem:[%s285 + $0x20] sm:$0xf]
      %v318 = vld [vmem:[%s285 + $0x24] sm:$0xf]
      %v319 = vld [vmem:[%s285 + $0x28] sm:$0xf]
      %v320 = vld [vmem:[%s285 + $0x2c] sm:$0xf]
      %v321 = vld [vmem:[%s285 + $0x30] sm:$0xf]
      %v322 = vld [vmem:[%s285 + $0x34] sm:$0xf]
      %v323 = vld [vmem:[%s285 + $0x38] sm:$0xf]
      %v324 = vld [vmem:[%s285 + $0x3c] sm:$0xf]
      %v325 = vld [vmem:[%s285 + $0x40] sm:$0xf]
      %v326 = vld [vmem:[%s285 + $0x44] sm:$0xf]
      %v327 = vld [vmem:[%s285 + $0x48] sm:$0xf]
      %v328 = vld [vmem:[%s285 + $0x4c] sm:$0xf]
      %v329 = vld [vmem:[%s285 + $0x50] sm:$0xf]
      %v330 = vld [vmem:[%s285 + $0x54] sm:$0xf]
      %v331 = vld [vmem:[%s285 + $0x58] sm:$0xf]
      %v332 = vld [vmem:[%s285 + $0x5c] sm:$0xf]
      %v333 = vld [vmem:[%s285 + $0x60] sm:$0xf]
      %v334 = vld [vmem:[%s285 + $0x64] sm:$0xf]
      %v335 = vld [vmem:[%s285 + $0x68] sm:$0xf]
      %v336 = vld [vmem:[%s285 + $0x6c] sm:$0xf]
      %v337 = vld [vmem:[%s285 + $0x70] sm:$0xf]
      %v338 = vld [vmem:[%s285 + $0x74] sm:$0xf]
      %v339 = vld [vmem:[%s285 + $0x78] sm:$0xf]
      %v340 = vld [vmem:[%s285 + $0x7c] sm:$0xf]
      %v341 = vld [vmem:[%s285 + $0x80] sm:$0xf]
      %v342 = vld [vmem:[%s285 + $0x84] sm:$0xf]
      %v343 = vld [vmem:[%s285 + $0x88] sm:$0xf]
      %v344 = vld [vmem:[%s285 + $0x8c] sm:$0xf]
      %v345 = vld [vmem:[%s285 + $0x90] sm:$0xf]
      %v346 = vld [vmem:[%s285 + $0x94] sm:$0xf]
      %v347 = vld [vmem:[%s285 + $0x98] sm:$0xf]
      %v348 = vld [vmem:[%s285 + $0x9c] sm:$0xf]
      %v349 = vld [vmem:[%s285 + $0xa0] sm:$0xf]
      %v350 = vld [vmem:[%s285 + $0xa4] sm:$0xf]
      %v351 = vld [vmem:[%s285 + $0xa8] sm:$0xf]
      %v352 = vld [vmem:[%s285 + $0xac] sm:$0xf]
      %v353 = vld [vmem:[%s285 + $0xb0] sm:$0xf]
      %v354 = vld [vmem:[%s285 + $0xb4] sm:$0xf]
      %v355 = vld [vmem:[%s285 + $0xb8] sm:$0xf]
      %v356 = vld [vmem:[%s285 + $0xbc] sm:$0xf]
      %v359 = vunpack.c.l.b16 %v306
      %v360 = vunpack.c.h.b16 %v306
      %v361 = vunpack.c.l.b16 %v307
      %v362 = vpack.c.b16 %v359, %v359
      %v363 = vpack.c.b16 %v360, %v360
      %v364 = vpack.c.b16 %v361, %v361
      %v416 = vunpack.c.l.b16 %v309
      %v417 = vunpack.c.l.b16 %v310
      %v418 = vunpack.c.l.b16 %v311
      %v419 = vunpack.c.l.b16 %v312
      %v420 = vunpack.c.l.b16 %v313
      %v421 = vunpack.c.l.b16 %v314
      %v422 = vunpack.c.l.b16 %v315
      %v423 = vunpack.c.l.b16 %v316
      %v424 = vunpack.c.l.b16 %v317
      %v425 = vunpack.c.l.b16 %v318
      %v426 = vunpack.c.l.b16 %v319
      %v427 = vunpack.c.l.b16 %v320
      %v428 = vunpack.c.l.b16 %v321
      %v429 = vunpack.c.l.b16 %v322
      %v430 = vunpack.c.l.b16 %v323
      %v431 = vunpack.c.l.b16 %v324
      %v432 = vunpack.c.l.b16 %v325
      %v433 = vunpack.c.l.b16 %v326
      %v434 = vunpack.c.l.b16 %v327
      %v435 = vunpack.c.l.b16 %v328
      %v436 = vunpack.c.l.b16 %v329
      %v437 = vunpack.c.l.b16 %v330
      %v438 = vunpack.c.l.b16 %v331
      %v439 = vunpack.c.l.b16 %v332
      %v440 = vunpack.c.l.b16 %v333
      %v441 = vunpack.c.l.b16 %v334
      %v442 = vunpack.c.l.b16 %v335
      %v443 = vunpack.c.l.b16 %v336
      %v444 = vunpack.c.l.b16 %v337
      %v445 = vunpack.c.l.b16 %v338
      %v446 = vunpack.c.l.b16 %v339
      %v447 = vunpack.c.l.b16 %v340
      %v448 = vunpack.c.l.b16 %v341
      %v449 = vunpack.c.l.b16 %v342
      %v450 = vunpack.c.l.b16 %v343
      %v451 = vunpack.c.l.b16 %v344
      %v452 = vunpack.c.l.b16 %v345
      %v453 = vunpack.c.l.b16 %v346
      %v454 = vunpack.c.l.b16 %v347
      %v455 = vunpack.c.l.b16 %v348
      %v456 = vunpack.c.l.b16 %v349
      %v457 = vunpack.c.l.b16 %v350
      %v458 = vunpack.c.l.b16 %v351
      %v459 = vunpack.c.l.b16 %v352
      %v460 = vunpack.c.l.b16 %v353
      %v461 = vunpack.c.l.b16 %v354
      %v462 = vunpack.c.l.b16 %v355
      %v463 = vunpack.c.l.b16 %v356
      %v464 = vpack.c.b16 %v417, %v416
      %v465 = vpack.c.b16 %v419, %v418
      %v466 = vpack.c.b16 %v421, %v420
      %v467 = vpack.c.b16 %v423, %v422
      %v468 = vpack.c.b16 %v425, %v424
      %v469 = vpack.c.b16 %v427, %v426
      %v470 = vpack.c.b16 %v429, %v428
      %v471 = vpack.c.b16 %v431, %v430
      %v472 = vpack.c.b16 %v433, %v432
      %v473 = vpack.c.b16 %v435, %v434
      %v474 = vpack.c.b16 %v437, %v436
      %v475 = vpack.c.b16 %v439, %v438
      %v476 = vpack.c.b16 %v441, %v440
      %v477 = vpack.c.b16 %v443, %v442
      %v478 = vpack.c.b16 %v445, %v444
      %v479 = vpack.c.b16 %v447, %v446
      %v480 = vpack.c.b16 %v449, %v448
      %v481 = vpack.c.b16 %v451, %v450
      %v482 = vpack.c.b16 %v453, %v452
      %v483 = vpack.c.b16 %v455, %v454
      %v484 = vpack.c.b16 %v457, %v456
      %v485 = vpack.c.b16 %v459, %v458
      %v486 = vpack.c.b16 %v461, %v460
      %v487 = vpack.c.b16 %v463, %v462
      %512 = vmatprep.subr.bf16.mxu0 0
      %513 = vmatpush1.bf16.msra.mxu0 %v471
      %514 = vmatprep.subr.bf16.mxu0 0
      %515 = vmatpush1.bf16.msra.mxu0 %v470
      %516 = vmatprep.subr.bf16.mxu0 0
      %517 = vmatpush1.bf16.msra.mxu0 %v469
      %518 = vmatprep.subr.bf16.mxu0 0
      %519 = vmatpush1.bf16.msra.mxu0 %v468
      %520 = vmatprep.subr.bf16.mxu0 0
      %521 = vmatpush1.bf16.msra.mxu0 %v467
      %522 = vmatprep.subr.bf16.mxu0 0
      %523 = vmatpush1.bf16.msra.mxu0 %v466
      %524 = vmatprep.subr.bf16.mxu0 0
      %525 = vmatpush1.bf16.msra.mxu0 %v465
      %526 = vmatprep.subr.bf16.mxu0 0
      %527 = vmatpush1.bf16.msra.mxu0 %v464
      %528 = vmatprep.subr.bf16.mxu0 0
      %529 = vmatpush2.bf16.msra.mxu0 %v479
      %530 = vmatprep.subr.bf16.mxu0 0
      %531 = vmatpush2.bf16.msra.mxu0 %v478
      %532 = vmatprep.subr.bf16.mxu0 0
      %533 = vmatpush2.bf16.msra.mxu0 %v477
      %534 = vmatprep.subr.bf16.mxu0 0
      %535 = vmatpush2.bf16.msra.mxu0 %v476
      %536 = vmatprep.subr.bf16.mxu0 0
      %537 = vmatpush2.bf16.msra.mxu0 %v475
      %538 = vmatprep.subr.bf16.mxu0 0
      %539 = vmatpush2.bf16.msra.mxu0 %v474
      %540 = vmatprep.subr.bf16.mxu0 0
      %541 = vmatpush2.bf16.msra.mxu0 %v473
      %542 = vmatprep.subr.bf16.mxu0 0
      %543 = vmatpush2.bf16.msra.mxu0 %v472
      %544 = vmatprep.mubr.bf16.mxu0 %v363
      %545 = vmatmul.mubr.bf16.gmra.mxu0 %v362
      %v546 = vpop.f32.mrf.mxu0
      %v547 = vadd.f32 0.0, %v546
      %v548 = vpop.f32.mrf.mxu0
      %v549 = vpop.f32.mrf.mxu0
      %v550 = vpop.f32.mrf.mxu0
      %551 = vdwg.mxu0
      %552 = vmatprep.subr.bf16.mxu0 0
      %553 = vmatpush1.bf16.msra.mxu0 %v487
      %554 = vmatprep.subr.bf16.mxu0 0
      %555 = vmatpush1.bf16.msra.mxu0 %v486
      %556 = vmatprep.subr.bf16.mxu0 0
      %557 = vmatpush1.bf16.msra.mxu0 %v485
      %558 = vmatprep.subr.bf16.mxu0 0
      %559 = vmatpush1.bf16.msra.mxu0 %v484
      %560 = vmatprep.subr.bf16.mxu0 0
      %561 = vmatpush1.bf16.msra.mxu0 %v483
      %562 = vmatprep.subr.bf16.mxu0 0
      %563 = vmatpush1.bf16.msra.mxu0 %v482
      %564 = vmatprep.subr.bf16.mxu0 0
      %565 = vmatpush1.bf16.msra.mxu0 %v481
      %566 = vmatprep.subr.bf16.mxu0 0
      %567 = vmatpush1.bf16.msra.mxu0 %v480
      %568 = vmatprep.subr.bf16.mxu0 0
      %569 = vmatpush2.bf16.msra.mxu0 0
      %570 = vmatprep.subr.bf16.mxu0 0
      %571 = vmatpush2.bf16.msra.mxu0 0
      %572 = vmatprep.subr.bf16.mxu0 0
      %573 = vmatpush2.bf16.msra.mxu0 0
      %574 = vmatprep.subr.bf16.mxu0 0
      %575 = vmatpush2.bf16.msra.mxu0 0
      %576 = vmatprep.subr.bf16.mxu0 0
      %577 = vmatpush2.bf16.msra.mxu0 0
      %578 = vmatprep.subr.bf16.mxu0 0
      %579 = vmatpush2.bf16.msra.mxu0 0
      %580 = vmatprep.subr.bf16.mxu0 0
      %581 = vmatpush2.bf16.msra.mxu0 0
      %582 = vmatprep.subr.bf16.mxu0 0
      %583 = vmatpush2.bf16.msra.mxu0 0
      %584 = vmatprep.mubr.bf16.mxu0 0
      %585 = vmatmul.mubr.bf16.gmra.mxu0 %v364
      %v586 = vpop.f32.mrf.mxu0
      %v587 = vadd.f32 %v547, %v586
      %v588 = vpop.f32.mrf.mxu0
      %v589 = vpop.f32.mrf.mxu0
      %v590 = vpop.f32.mrf.mxu0
      %591 = vdwg.mxu0
      %v592 = vadd.f32 %v308, %v587
      %593 = vst [vmem:[#allocation2] sm:$0xff] %v592
      %p594 = scmp.eq.s32.totalorder %s22, 2
      // Predicated region
      $region41: #{report_generation_forward.15} parent=35 // pred_check
        %p595 = pneg %p594
      $region42: #{report_generation_forward.15} parent=35 // pred_check_branch
        %597 = sbr.rel (%p595) target = $region44
      $region43: #{report_generation_forward.15} parent=35 // pred_region
        %v598 = vld [vmem:[#allocation2] sm:$0xff]
        %v599 = vld [vmem:[%s289] sm:$0x1]
        %v601 = vlaneseq
        %v602 = vshrl.u32 %v601, 7
        %v603 = vsub.s32 0, %v602
        %v604 = vrot.slane %v599, %v603
        %v606 = vmul.f32 %v598, %v604
        %v607 = vld [vmem:[%s292] sm:$0x1]
        %v609 = vlaneseq
        %v610 = vshrl.u32 %v609, 7
        %v611 = vsub.s32 0, %v610
        %v612 = vrot.slane %v607, %v611
        %v614 = vadd.f32 %v606, %v612
        %v615 = vmax.f32 %v614, 0.0
        %616 = vst [vmem:[%s299] sm:$0xff] %v615
      $region44: #{report_generation_forward.15} parent=35 // pred_fallthru
        _
      %p617 = scmp.lt.s32.totalorder %s20, 0
      %s618 = scalar_select %p617, %s20, 0
      %p619 = scmp.lt.s32.totalorder %s21, 0
      %s620 = scalar_select %p619, %s21, 0
      %s621 = sadd.s32 %s620, %s618
      %s622 = smul.addr %s621, 8
      %s623 = scalar_lea.vmem %s4, %s622
      // Predicated region
      $region45: #{report_generation_forward.15} parent=35 // pred_check
        %p624 = pneg %p162
      $region46: #{report_generation_forward.15} parent=35 // pred_check_branch
        %626 = sbr.rel (%p624) target = $region48
      $region47: #{report_generation_forward.15} parent=35 // pred_region
        _
      $region48: #{report_generation_forward.15} parent=35 // pred_fallthru
        _
      // Predicated region
      $region49: #{report_generation_forward.15} parent=35 // pred_check
        %p627 = pneg %p162
      $region50: #{report_generation_forward.15} parent=35 // pred_check_branch
        %629 = sbr.rel (%p627) target = $region52
      $region51: #{report_generation_forward.15} parent=35 // pred_region
        %p630 = scmp.lt.s32.totalorder %s20, 0
        %s631 = scalar_select %p630, %s20, 0
        %p632 = scmp.lt.s32.totalorder %s21, 0
        %s633 = scalar_select %p632, %s21, 0
        %s634 = sadd.s32 %s633, %s631
        %s635 = smul.addr %s634, 8
        %s636 = scalar_lea.vmem %s4, %s635
      $region52: #{report_generation_forward.15} parent=35 // pred_fallthru
        _
    $region36: #{report_generation_forward.15} parent=5 // pred_fallthru
      _
    %p637 = scmp.le.s32.totalorder 2, %s10
    // Predicated region
    $region53: #{report_generation_forward.15} parent=5 // pred_check
      %p638 = pneg %p637
    $region54: #{report_generation_forward.15} parent=5 // pred_check_branch
      %640 = sbr.rel (%p638) target = $region56
    $region55: #{report_generation_forward.15} parent=5 // pred_region
      %s641 = ssub.s32 %s10, 2
    $region56: #{report_generation_forward.15} parent=5 // pred_fallthru
      _
  $region6: #{report_generation_forward.15} parent=0 // loop_footer
    %s14 = sadd.s32 1, %s10
  $region7: #{report_generation_forward.15} parent=0 // loop_footer_branch
    %9 = sbr.rel target = $region3
  $region8: #{report_generation_forward.15} parent=0 // loop_exit
    _

// kernel: report_generation_forward.19
$region0: #{report_generation_forward.19}
  #allocation0 [shape = 'u32[]', space=smem, size = 0x4, offset = 0x4, fixed_abs, tag = 'smem constant byte address 0x4 - core index']
  #allocation1 [shape = 'u32[144,128]{1,0:T(1,128)}', space=vmem, size = 0x12000, scoped, tag = 'internal scratch']
  #allocation2 [shape = 'f32[8,256]{1,0:T(8,128)}', space=vmem, size = 0x2000, scoped, tag = 'scratch operand']
  %s0 = inlined_call_operand.vmem [shape: bf16[8,128], index: 0, kind: input, shape index: {}]
  %s1 = inlined_call_operand.vmem [shape: bf16[128,256], index: 1, kind: input, shape index: {}]
  %s2 = inlined_call_operand.vmem [shape: f32[1,256], index: 2, kind: input, shape index: {}]
  %s3 = inlined_call_operand.vmem [shape: f32[1,256], index: 3, kind: input, shape index: {}]
  %s4 = inlined_call_operand.vmem [shape: f32[8,256], index: 4, kind: output, shape index: {}]
  %s5 = sld [smem:[#allocation0]]
  $region34: #{report_generation_forward.19} parent=0
    _
  %s7 = ssub.s32 1, %s5
  %s8 = scalar_select 0, %s7, %s5
  // Predicated region
  $region2: #{report_generation_forward.19} parent=0 // pred_check
    _
  $region3: #{report_generation_forward.19} parent=0 // pred_check_branch
    %10 = sbr.rel (0) target = $region5
  $region4: #{report_generation_forward.19} parent=0 // pred_region
    _
  $region5: #{report_generation_forward.19} parent=0 // pred_fallthru
    _
  // Predicated region
  $region6: #{report_generation_forward.19} parent=0 // pred_check
    _
  $region7: #{report_generation_forward.19} parent=0 // pred_check_branch
    %12 = sbr.rel (0) target = $region9
  $region8: #{report_generation_forward.19} parent=0 // pred_region
    _
  $region9: #{report_generation_forward.19} parent=0 // pred_fallthru
    _
  // Predicated region
  $region10: #{report_generation_forward.19} parent=0 // pred_check
    _
  $region11: #{report_generation_forward.19} parent=0 // pred_check_branch
    %14 = sbr.rel (0) target = $region13
  $region12: #{report_generation_forward.19} parent=0 // pred_region
    _
  $region13: #{report_generation_forward.19} parent=0 // pred_fallthru
    _
  // Predicated region
  $region14: #{report_generation_forward.19} parent=0 // pred_check
    _
  $region15: #{report_generation_forward.19} parent=0 // pred_check_branch
    %16 = sbr.rel (0) target = $region17
  $region16: #{report_generation_forward.19} parent=0 // pred_region
    _
  $region17: #{report_generation_forward.19} parent=0 // pred_fallthru
    _
  %p18 = scmp.eq.s32.totalorder 0, 0
  // Predicated region
  $region18: #{report_generation_forward.19} parent=0 // pred_check
    %p19 = pneg %p18
  $region19: #{report_generation_forward.19} parent=0 // pred_check_branch
    %21 = sbr.rel (%p19) target = $region21
  $region20: #{report_generation_forward.19} parent=0 // pred_region
    %22 = vst [vmem:[#allocation2] sm:$0xff] 0.0
    %23 = vst [vmem:[#allocation2 + $0x8] sm:$0xff] 0.0
  $region21: #{report_generation_forward.19} parent=0 // pred_fallthru
    _
  %v24 = vld [vmem:[%s0] sm:$0xf]
  %v25 = vld [vmem:[#allocation2] sm:$0xff]
  %v26 = vld [vmem:[#allocation2 + $0x8] sm:$0xff]
  %v27 = vld [vmem:[%s1] sm:$0xff]
  %v28 = vld [vmem:[%s1 + $0x8] sm:$0xff]
  %v29 = vld [vmem:[%s1 + $0x10] sm:$0xff]
  %v30 = vld [vmem:[%s1 + $0x18] sm:$0xff]
  %v31 = vld [vmem:[%s1 + $0x20] sm:$0xff]
  %v32 = vld [vmem:[%s1 + $0x28] sm:$0xff]
  %v33 = vld [vmem:[%s1 + $0x30] sm:$0xff]
  %v34 = vld [vmem:[%s1 + $0x38] sm:$0xff]
  %v35 = vld [vmem:[%s1 + $0x40] sm:$0xff]
  %v36 = vld [vmem:[%s1 + $0x48] sm:$0xff]
  %v37 = vld [vmem:[%s1 + $0x50] sm:$0xff]
  %v38 = vld [vmem:[%s1 + $0x58] sm:$0xff]
  %v39 = vld [vmem:[%s1 + $0x60] sm:$0xff]
  %v40 = vld [vmem:[%s1 + $0x68] sm:$0xff]
  %v41 = vld [vmem:[%s1 + $0x70] sm:$0xff]
  %v42 = vld [vmem:[%s1 + $0x78] sm:$0xff]
  %v59 = vunpack.c.l.b16 %v27
  %v60 = vunpack.c.h.b16 %v27
  %v61 = vunpack.c.l.b16 %v28
  %v62 = vunpack.c.h.b16 %v28
  %v63 = vunpack.c.l.b16 %v29
  %v64 = vunpack.c.h.b16 %v29
  %v65 = vunpack.c.l.b16 %v30
  %v66 = vunpack.c.h.b16 %v30
  %v67 = vunpack.c.l.b16 %v31
  %v68 = vunpack.c.h.b16 %v31
  %v69 = vunpack.c.l.b16 %v32
  %v70 = vunpack.c.h.b16 %v32
  %v71 = vunpack.c.l.b16 %v33
  %v72 = vunpack.c.h.b16 %v33
  %v73 = vunpack.c.l.b16 %v34
  %v74 = vunpack.c.h.b16 %v34
  %v75 = vunpack.c.l.b16 %v35
  %v76 = vunpack.c.h.b16 %v35
  %v77 = vunpack.c.l.b16 %v36
  %v78 = vunpack.c.h.b16 %v36
  %v79 = vunpack.c.l.b16 %v37
  %v80 = vunpack.c.h.b16 %v37
  %v81 = vunpack.c.l.b16 %v38
  %v82 = vunpack.c.h.b16 %v38
  %v83 = vunpack.c.l.b16 %v39
  %v84 = vunpack.c.h.b16 %v39
  %v85 = vunpack.c.l.b16 %v40
  %v86 = vunpack.c.h.b16 %v40
  %v87 = vunpack.c.l.b16 %v41
  %v88 = vunpack.c.h.b16 %v41
  %v89 = vunpack.c.l.b16 %v42
  %v90 = vunpack.c.h.b16 %v42
  %v91 = vpack.c.b16 %v61, %v59
  %v92 = vpack.c.b16 %v62, %v60
  %v93 = vpack.c.b16 %v65, %v63
  %v94 = vpack.c.b16 %v66, %v64
  %v95 = vpack.c.b16 %v69, %v67
  %v96 = vpack.c.b16 %v70, %v68
  %v97 = vpack.c.b16 %v73, %v71
  %v98 = vpack.c.b16 %v74, %v72
  %v99 = vpack.c.b16 %v77, %v75
  %v100 = vpack.c.b16 %v78, %v76
  %v101 = vpack.c.b16 %v81, %v79
  %v102 = vpack.c.b16 %v82, %v80
  %v103 = vpack.c.b16 %v85, %v83
  %v104 = vpack.c.b16 %v86, %v84
  %v105 = vpack.c.b16 %v89, %v87
  %v106 = vpack.c.b16 %v90, %v88
  %123 = vmatprep.subr.bf16.mxu0 %v106
  %124 = vmatpush1.bf16.msra.mxu0 %v105
  %125 = vmatprep.subr.bf16.mxu0 %v104
  %126 = vmatpush1.bf16.msra.mxu0 %v103
  %127 = vmatprep.subr.bf16.mxu0 %v102
  %128 = vmatpush1.bf16.msra.mxu0 %v101
  %129 = vmatprep.subr.bf16.mxu0 %v100
  %130 = vmatpush1.bf16.msra.mxu0 %v99
  %131 = vmatprep.subr.bf16.mxu0 %v98
  %132 = vmatpush1.bf16.msra.mxu0 %v97
  %133 = vmatprep.subr.bf16.mxu0 %v96
  %134 = vmatpush1.bf16.msra.mxu0 %v95
  %135 = vmatprep.subr.bf16.mxu0 %v94
  %136 = vmatpush1.bf16.msra.mxu0 %v93
  %137 = vmatprep.subr.bf16.mxu0 %v92
  %138 = vmatpush1.bf16.msra.mxu0 %v91
  %139 = vmatprep.subr.bf16.mxu0 0
  %140 = vmatpush2.bf16.msra.mxu0 0
  %141 = vmatprep.subr.bf16.mxu0 0
  %142 = vmatpush2.bf16.msra.mxu0 0
  %143 = vmatprep.subr.bf16.mxu0 0
  %144 = vmatpush2.bf16.msra.mxu0 0
  %145 = vmatprep.subr.bf16.mxu0 0
  %146 = vmatpush2.bf16.msra.mxu0 0
  %147 = vmatprep.subr.bf16.mxu0 0
  %148 = vmatpush2.bf16.msra.mxu0 0
  %149 = vmatprep.subr.bf16.mxu0 0
  %150 = vmatpush2.bf16.msra.mxu0 0
  %151 = vmatprep.subr.bf16.mxu0 0
  %152 = vmatpush2.bf16.msra.mxu0 0
  %153 = vmatprep.subr.bf16.mxu0 0
  %154 = vmatpush2.bf16.msra.mxu0 0
  %155 = vmatprep.mubr.bf16.mxu0 0
  %156 = vmatmul.mubr.bf16.gmra.mxu0 %v24
  %v157 = vpop.f32.mrf.mxu0
  %v158 = vadd.f32 0.0, %v157
  %v159 = vpop.f32.mrf.mxu0
  %v160 = vadd.f32 0.0, %v159
  %v161 = vpop.f32.mrf.mxu0
  %v162 = vpop.f32.mrf.mxu0
  %163 = vdwg.mxu0
  %v164 = vadd.f32 %v25, %v158
  %v165 = vadd.f32 %v26, %v160
  %166 = vst [vmem:[#allocation2] sm:$0xff] %v164
  %167 = vst [vmem:[#allocation2 + $0x8] sm:$0xff] %v165
  // Predicated region
  $region22: #{report_generation_forward.19} parent=0 // pred_check
    %p168 = pneg %p18
  $region23: #{report_generation_forward.19} parent=0 // pred_check_branch
    %170 = sbr.rel (%p168) target = $region25
  $region24: #{report_generation_forward.19} parent=0 // pred_region
    %v171 = vld [vmem:[#allocation2] sm:$0xff]
    %v172 = vld [vmem:[#allocation2 + $0x8] sm:$0xff]
    %v173 = vld [vmem:[%s2] sm:$0x3]
    %v175 = vlaneseq
    %v176 = vshrl.u32 %v175, 7
    %v177 = vsub.s32 0, %v176
    %v178 = vrot.slane %v173, %v177
    %v179 = vlaneseq
    %v180 = vshrl.u32 %v179, 7
    %v181 = vsub.s32 1, %v180
    %v182 = vrot.slane %v173, %v181
    %v185 = vmul.f32 %v171, %v178
    %v186 = vmul.f32 %v172, %v182
    %v187 = vld [vmem:[%s3] sm:$0x3]
    %v189 = vlaneseq
    %v190 = vshrl.u32 %v189, 7
    %v191 = vsub.s32 0, %v190
    %v192 = vrot.slane %v187, %v191
    %v193 = vlaneseq
    %v194 = vshrl.u32 %v193, 7
    %v195 = vsub.s32 1, %v194
    %v196 = vrot.slane %v187, %v195
    %v199 = vadd.f32 %v185, %v192
    %v200 = vadd.f32 %v186, %v196
    %201 = vst [vmem:[%s4] sm:$0xff] %v199
    %202 = vst [vmem:[%s4 + $0x8] sm:$0xff] %v200
  $region25: #{report_generation_forward.19} parent=0 // pred_fallthru
    _
  // Predicated region
  $region26: #{report_generation_forward.19} parent=0 // pred_check
    _
  $region27: #{report_generation_forward.19} parent=0 // pred_check_branch
    %204 = sbr.rel (0) target = $region29
  $region28: #{report_generation_forward.19} parent=0 // pred_region
    _
  $region29: #{report_generation_forward.19} parent=0 // pred_fallthru
    _
  // Predicated region
  $region30: #{report_generation_forward.19} parent=0 // pred_check
    _
  $region31: #{report_generation_forward.19} parent=0 // pred_check_branch
    %206 = sbr.rel (0) target = $region33
  $region32: #{report_generation_forward.19} parent=0 // pred_region
    _
  $region33: #{report_generation_forward.19} parent=0 // pred_fallthru
    _

// kernel: report_generation_forward.16
$region0: #{report_generation_forward.16}
  #allocation0 [shape = 'u32[]', space=smem, size = 0x4, offset = 0x4, fixed_abs, tag = 'smem constant byte address 0x4 - core index']
  #allocation1 [shape = 'u32[144,128]{1,0:T(1,128)}', space=vmem, size = 0x12000, scoped, tag = 'internal scratch']
  #allocation2 [shape = 'f32[8,128]{1,0:T(8,128)}', space=vmem, size = 0x1000, scoped, tag = 'scratch operand']
  %s0 = inlined_call_operand.vmem [shape: bf16[8,128], index: 0, kind: input, shape index: {}]
  %s1 = inlined_call_operand.vmem [shape: bf16[128,128], index: 1, kind: input, shape index: {}]
  %s2 = inlined_call_operand.vmem [shape: f32[1,128], index: 2, kind: input, shape index: {}]
  %s3 = inlined_call_operand.vmem [shape: f32[1,128], index: 3, kind: input, shape index: {}]
  %s4 = inlined_call_operand.vmem [shape: f32[8,128], index: 4, kind: output, shape index: {}]
  %s5 = sld [smem:[#allocation0]]
  $region34: #{report_generation_forward.16} parent=0
    _
  %s7 = ssub.s32 1, %s5
  %s8 = scalar_select 0, %s7, %s5
  // Predicated region
  $region2: #{report_generation_forward.16} parent=0 // pred_check
    _
  $region3: #{report_generation_forward.16} parent=0 // pred_check_branch
    %10 = sbr.rel (0) target = $region5
  $region4: #{report_generation_forward.16} parent=0 // pred_region
    _
  $region5: #{report_generation_forward.16} parent=0 // pred_fallthru
    _
  // Predicated region
  $region6: #{report_generation_forward.16} parent=0 // pred_check
    _
  $region7: #{report_generation_forward.16} parent=0 // pred_check_branch
    %12 = sbr.rel (0) target = $region9
  $region8: #{report_generation_forward.16} parent=0 // pred_region
    _
  $region9: #{report_generation_forward.16} parent=0 // pred_fallthru
    _
  // Predicated region
  $region10: #{report_generation_forward.16} parent=0 // pred_check
    _
  $region11: #{report_generation_forward.16} parent=0 // pred_check_branch
    %14 = sbr.rel (0) target = $region13
  $region12: #{report_generation_forward.16} parent=0 // pred_region
    _
  $region13: #{report_generation_forward.16} parent=0 // pred_fallthru
    _
  // Predicated region
  $region14: #{report_generation_forward.16} parent=0 // pred_check
    _
  $region15: #{report_generation_forward.16} parent=0 // pred_check_branch
    %16 = sbr.rel (0) target = $region17
  $region16: #{report_generation_forward.16} parent=0 // pred_region
    _
  $region17: #{report_generation_forward.16} parent=0 // pred_fallthru
    _
  %p18 = scmp.eq.s32.totalorder 0, 0
  // Predicated region
  $region18: #{report_generation_forward.16} parent=0 // pred_check
    %p19 = pneg %p18
  $region19: #{report_generation_forward.16} parent=0 // pred_check_branch
    %21 = sbr.rel (%p19) target = $region21
  $region20: #{report_generation_forward.16} parent=0 // pred_region
    %22 = vst [vmem:[#allocation2] sm:$0xff] 0.0
  $region21: #{report_generation_forward.16} parent=0 // pred_fallthru
    _
  %v23 = vld [vmem:[%s0] sm:$0xf]
  %v24 = vld [vmem:[#allocation2] sm:$0xff]
  %v25 = vld [vmem:[%s1] sm:$0xf]
  %v26 = vld [vmem:[%s1 + $0x4] sm:$0xf]
  %v27 = vld [vmem:[%s1 + $0x8] sm:$0xf]
  %v28 = vld [vmem:[%s1 + $0xc] sm:$0xf]
  %v29 = vld [vmem:[%s1 + $0x10] sm:$0xf]
  %v30 = vld [vmem:[%s1 + $0x14] sm:$0xf]
  %v31 = vld [vmem:[%s1 + $0x18] sm:$0xf]
  %v32 = vld [vmem:[%s1 + $0x1c] sm:$0xf]
  %v33 = vld [vmem:[%s1 + $0x20] sm:$0xf]
  %v34 = vld [vmem:[%s1 + $0x24] sm:$0xf]
  %v35 = vld [vmem:[%s1 + $0x28] sm:$0xf]
  %v36 = vld [vmem:[%s1 + $0x2c] sm:$0xf]
  %v37 = vld [vmem:[%s1 + $0x30] sm:$0xf]
  %v38 = vld [vmem:[%s1 + $0x34] sm:$0xf]
  %v39 = vld [vmem:[%s1 + $0x38] sm:$0xf]
  %v40 = vld [vmem:[%s1 + $0x3c] sm:$0xf]
  %v57 = vunpack.c.l.b16 %v25
  %v58 = vunpack.c.l.b16 %v26
  %v59 = vunpack.c.l.b16 %v27
  %v60 = vunpack.c.l.b16 %v28
  %v61 = vunpack.c.l.b16 %v29
  %v62 = vunpack.c.l.b16 %v30
  %v63 = vunpack.c.l.b16 %v31
  %v64 = vunpack.c.l.b16 %v32
  %v65 = vunpack.c.l.b16 %v33
  %v66 = vunpack.c.l.b16 %v34
  %v67 = vunpack.c.l.b16 %v35
  %v68 = vunpack.c.l.b16 %v36
  %v69 = vunpack.c.l.b16 %v37
  %v70 = vunpack.c.l.b16 %v38
  %v71 = vunpack.c.l.b16 %v39
  %v72 = vunpack.c.l.b16 %v40
  %v73 = vpack.c.b16 %v58, %v57
  %v74 = vpack.c.b16 %v60, %v59
  %v75 = vpack.c.b16 %v62, %v61
  %v76 = vpack.c.b16 %v64, %v63
  %v77 = vpack.c.b16 %v66, %v65
  %v78 = vpack.c.b16 %v68, %v67
  %v79 = vpack.c.b16 %v70, %v69
  %v80 = vpack.c.b16 %v72, %v71
  %89 = vmatprep.subr.bf16.mxu0 0
  %90 = vmatpush1.bf16.msra.mxu0 %v80
  %91 = vmatprep.subr.bf16.mxu0 0
  %92 = vmatpush1.bf16.msra.mxu0 %v79
  %93 = vmatprep.subr.bf16.mxu0 0
  %94 = vmatpush1.bf16.msra.mxu0 %v78
  %95 = vmatprep.subr.bf16.mxu0 0
  %96 = vmatpush1.bf16.msra.mxu0 %v77
  %97 = vmatprep.subr.bf16.mxu0 0
  %98 = vmatpush1.bf16.msra.mxu0 %v76
  %99 = vmatprep.subr.bf16.mxu0 0
  %100 = vmatpush1.bf16.msra.mxu0 %v75
  %101 = vmatprep.subr.bf16.mxu0 0
  %102 = vmatpush1.bf16.msra.mxu0 %v74
  %103 = vmatprep.subr.bf16.mxu0 0
  %104 = vmatpush1.bf16.msra.mxu0 %v73
  %105 = vmatprep.subr.bf16.mxu0 0
  %106 = vmatpush2.bf16.msra.mxu0 0
  %107 = vmatprep.subr.bf16.mxu0 0
  %108 = vmatpush2.bf16.msra.mxu0 0
  %109 = vmatprep.subr.bf16.mxu0 0
  %110 = vmatpush2.bf16.msra.mxu0 0
  %111 = vmatprep.subr.bf16.mxu0 0
  %112 = vmatpush2.bf16.msra.mxu0 0
  %113 = vmatprep.subr.bf16.mxu0 0
  %114 = vmatpush2.bf16.msra.mxu0 0
  %115 = vmatprep.subr.bf16.mxu0 0
  %116 = vmatpush2.bf16.msra.mxu0 0
  %117 = vmatprep.subr.bf16.mxu0 0
  %118 = vmatpush2.bf16.msra.mxu0 0
  %119 = vmatprep.subr.bf16.mxu0 0
  %120 = vmatpush2.bf16.msra.mxu0 0
  %121 = vmatprep.mubr.bf16.mxu0 0
  %122 = vmatmul.mubr.bf16.gmra.mxu0 %v23
  %v123 = vpop.f32.mrf.mxu0
  %v124 = vadd.f32 0.0, %v123
  %v125 = vpop.f32.mrf.mxu0
  %v126 = vpop.f32.mrf.mxu0
  %v127 = vpop.f32.mrf.mxu0
  %128 = vdwg.mxu0
  %v129 = vadd.f32 %v24, %v124
  %130 = vst [vmem:[#allocation2] sm:$0xff] %v129
  // Predicated region
  $region22: #{report_generation_forward.16} parent=0 // pred_check
    %p131 = pneg %p18
  $region23: #{report_generation_forward.16} parent=0 // pred_check_branch
    %133 = sbr.rel (%p131) target = $region25
  $region24: #{report_generation_forward.16} parent=0 // pred_region
    %v134 = vld [vmem:[#allocation2] sm:$0xff]
    %v135 = vld [vmem:[%s2] sm:$0x1]
    %v137 = vlaneseq
    %v138 = vshrl.u32 %v137, 7
    %v139 = vsub.s32 0, %v138
    %v140 = vrot.slane %v135, %v139
    %v142 = vmul.f32 %v134, %v140
    %v143 = vld [vmem:[%s3] sm:$0x1]
    %v145 = vlaneseq
    %v146 = vshrl.u32 %v145, 7
    %v147 = vsub.s32 0, %v146
    %v148 = vrot.slane %v143, %v147
    %v150 = vadd.f32 %v142, %v148
    %151 = vst [vmem:[%s4] sm:$0xff] %v150
  $region25: #{report_generation_forward.16} parent=0 // pred_fallthru
    _
  // Predicated region
  $region26: #{report_generation_forward.16} parent=0 // pred_check
    _
  $region27: #{report_generation_forward.16} parent=0 // pred_check_branch
    %153 = sbr.rel (0) target = $region29
  $region28: #{report_generation_forward.16} parent=0 // pred_region
    _
  $region29: #{report_generation_forward.16} parent=0 // pred_fallthru
    _
  // Predicated region
  $region30: #{report_generation_forward.16} parent=0 // pred_check
    _
  $region31: #{report_generation_forward.16} parent=0 // pred_check_branch
    %155 = sbr.rel (0) target = $region33
  $region32: #{report_generation_forward.16} parent=0 // pred_region
    _
  $region33: #{report_generation_forward.16} parent=0 // pred_fallthru
    _

// kernel: report_generation_forward.17
$region0: #{report_generation_forward.17}
  #allocation0 [shape = 'u32[]', space=smem, size = 0x4, offset = 0x4, fixed_abs, tag = 'smem constant byte address 0x4 - core index']
  #allocation1 [shape = 'u32[144,128]{1,0:T(1,128)}', space=vmem, size = 0x12000, scoped, tag = 'internal scratch']
  #allocation2 [shape = 'f32[16,128]{1,0:T(8,128)}', space=vmem, size = 0x2000, scoped, tag = 'scratch operand']
  #allocation3 [shape = 's32[16]{0}', space=sflag, size = 0x40, scoped, tag = 'scratch operand']
  #allocation6 [shape = 's32[]', space=sflag, size = 0x4, offset = 0, fixed_abs, tag = 'sflag constant byte address 0x0 - dummy sync flag']
  #allocation7 [shape = 's32[]', space=sflag, size = 0x4, offset = 0, fixed_abs, tag = 'sflag constant byte address 0x0 - dummy sync flag']
  #allocation8 [shape = 's32[]', space=sflag, size = 0x4, offset = 0, fixed_abs, tag = 'sflag constant byte address 0x0 - dummy sync flag']
  #allocation9 [shape = 's32[]', space=sflag, size = 0x4, offset = 0, fixed_abs, tag = 'sflag constant byte address 0x0 - dummy sync flag']
  #allocation10 [shape = 's32[]', space=sflag, size = 0x4, offset = 0, fixed_abs, tag = 'sflag constant byte address 0x0 - dummy sync flag']
  #allocation11 [shape = 's32[]', space=sflag, size = 0x4, offset = 0, fixed_abs, tag = 'sflag constant byte address 0x0 - dummy sync flag']
  #allocation12 [shape = 's32[]', space=sflag, size = 0x4, offset = 0, fixed_abs, tag = 'sflag constant byte address 0x0 - dummy sync flag']
  #allocation13 [shape = 's32[]', space=sflag, size = 0x4, offset = 0, fixed_abs, tag = 'sflag constant byte address 0x0 - dummy sync flag']
  #allocation14 [shape = 's32[]', space=sflag, size = 0x4, offset = 0, fixed_abs, tag = 'sflag constant byte address 0x0 - dummy sync flag']
  #allocation15 [shape = 's32[]', space=sflag, size = 0x4, offset = 0, fixed_abs, tag = 'sflag constant byte address 0x0 - dummy sync flag']
  #allocation16 [shape = 's32[]', space=sflag, size = 0x4, offset = 0, fixed_abs, tag = 'sflag constant byte address 0x0 - dummy sync flag']
  #allocation17 [shape = 's32[]', space=sflag, size = 0x4, offset = 0, fixed_abs, tag = 'sflag constant byte address 0x0 - dummy sync flag']
  #allocation18 [shape = 's32[]', space=sflag, size = 0x4, offset = 0, fixed_abs, tag = 'sflag constant byte address 0x0 - dummy sync flag']
  #allocation19 [shape = 's32[]', space=sflag, size = 0x4, offset = 0, fixed_abs, tag = 'sflag constant byte address 0x0 - dummy sync flag']
  #allocation20 [shape = 's32[]', space=sflag, size = 0x4, offset = 0, fixed_abs, tag = 'sflag constant byte address 0x0 - dummy sync flag']
  #allocation21 [shape = 's32[]', space=sflag, size = 0x4, offset = 0, fixed_abs, tag = 'sflag constant byte address 0x0 - dummy sync flag']
  %s0 = inlined_call_operand.vmem [shape: s32[16], index: 0, kind: input, shape index: {}]
  %s1 = inlined_call_operand.vmem [shape: f32[256,128], index: 1, kind: input, shape index: {}]
  %s2 = inlined_call_operand.vmem [shape: f32[16,128], index: 2, kind: input, shape index: {}]
  %s3 = inlined_call_operand.vmem [shape: f32[16,128], index: 3, kind: output, shape index: {}]
  %s4 = sld [smem:[#allocation0]]
  $region502: #{report_generation_forward.17} parent=0
    _
  %s6 = ssub.s32 1, %s4
  %s7 = scalar_select 0, %s6, %s4
  $region1: #{report_generation_forward.17} parent=0
    #allocation4 [shape = 'u8[512]{0}', space=smem, size = 0x200, scoped, tag = 'input window, operand 0, single buffered']
    #allocation5 [shape = 's32[1]{0}', space=sflag, size = 0x4, scoped, tag = 'scoped memory for report_generation_forward.17']
    %8 = vsyncpa [#allocation5], 0
    // Predicated region
    $region2: #{report_generation_forward.17} parent=1 // pred_check
      _
    $region3: #{report_generation_forward.17} parent=1 // pred_check_branch
      %10 = sbr.rel (0) target = $region5
    $region4: #{report_generation_forward.17} parent=1 // pred_region
      %s12 = ssub.s32 16, 16
      %13 = vsyncadd [#allocation5], %s12
      %s15 = sshll.u32 %s0, 4
      %s16 = int_to_ptr.vmem [resolvable:$true] %s15
      %18 = dma.vmem_to_smem %s16, 16, [#allocation4], [#allocation5]
    $region5: #{report_generation_forward.17} parent=1 // pred_fallthru
      _
    // Predicated region
    $region6: #{report_generation_forward.17} parent=1 // pred_check
      _
    $region7: #{report_generation_forward.17} parent=1 // pred_check_branch
      %20 = sbr.rel (0) target = $region9
    $region8: #{report_generation_forward.17} parent=1 // pred_region
      _
    $region9: #{report_generation_forward.17} parent=1 // pred_fallthru
      _
    // Predicated region
    $region10: #{report_generation_forward.17} parent=1 // pred_check
      _
    $region11: #{report_generation_forward.17} parent=1 // pred_check_branch
      %22 = sbr.rel (0) target = $region13
    $region12: #{report_generation_forward.17} parent=1 // pred_region
      %23 = dma.done [#allocation5], 16
    $region13: #{report_generation_forward.17} parent=1 // pred_fallthru
      _
    %24 = sfence
    %s25 = sld [smem:[#allocation4]]
    %s26 = scalar_lea.vmem %s1, %s25
    %p28 = scmp.lt.u32.totalorder 1, 8
    %p29 = pneg %p28
    // Predicated region
    $region14: #{report_generation_forward.17} parent=1 // pred_check
      _
    $region15: #{report_generation_forward.17} parent=1 // pred_check_branch
      %31 = sbr.rel (%p28) target = $region17
    $region16: #{report_generation_forward.17} parent=1 // pred_region
      %s47 = sand.u32 1, 7
      %p48 = scmp.eq.s32.totalorder %s47, 0
      %p49 = pneg %p48
      // Predicated region
      $region29: #{report_generation_forward.17} parent=16 // pred_check
        _
      $region30: #{report_generation_forward.17} parent=16 // pred_check_branch
        %51 = sbr.rel (%p48) target = $region32
      $region31: #{report_generation_forward.17} parent=16 // pred_region
        %s52 = sand.u32 1, 7
        %s53 = ssub.s32 1, %s52
        %s54 = scalar_lea.vmem %s26, %s53
        %s55 = ssub.s32 1, %s52
        %s56 = scalar_lea.vmem [#allocation2], %s55
        %s57 = sshll.u32 1, %s52
        %s58 = ssub.s32 %s57, 1
        loop: start=0, step=1, limit=1
        $region33: #{report_generation_forward.17} parent=31 // loop_pre_header
          _
        $region34: #{report_generation_forward.17} parent=31 // loop_header
          %s60 = sphi 0, %s64
          %p61 = scmp.ge.s32.totalorder %s60, 1
          %s65 = sphi %s54, %s54
          %s66 = sphi %s56, %s56
        $region35: #{report_generation_forward.17} parent=31 // loop_header_branch
          %63 = sbr.rel (%p61) target = $region39
        $region36: #{report_generation_forward.17} parent=31 // loop_body
          %v67 = vld [vmem:[%s65] sm:%s58]
          %68 = vst [vmem:[%s66] sm:%s58] %v67
        $region37: #{report_generation_forward.17} parent=31 // loop_footer
          %s64 = sadd.s32 1, %s60
        $region38: #{report_generation_forward.17} parent=31 // loop_footer_branch
          %59 = sbr.rel target = $region34
        $region39: #{report_generation_forward.17} parent=31 // loop_exit
          _
      $region32: #{report_generation_forward.17} parent=16 // pred_fallthru
        _
    $region17: #{report_generation_forward.17} parent=1 // pred_fallthru
      _
    // Predicated region
    $region18: #{report_generation_forward.17} parent=1 // pred_check
      %p32 = pneg %p28
    $region19: #{report_generation_forward.17} parent=1 // pred_check_branch
      %34 = sbr.rel (%p32) target = $region21
    $region20: #{report_generation_forward.17} parent=1 // pred_region
      %s35 = sshll.u32 1, 1
      %s36 = ssub.s32 %s35, 1
      loop: start=0, step=1, limit=1
      $region22: #{report_generation_forward.17} parent=20 // loop_pre_header
        _
      $region23: #{report_generation_forward.17} parent=20 // loop_header
        %s38 = sphi 0, %s42
        %p39 = scmp.ge.s32.totalorder %s38, 1
        %s43 = sphi %s26, %s26
        %s44 = sphi [#allocation2], [#allocation2]
      $region24: #{report_generation_forward.17} parent=20 // loop_header_branch
        %41 = sbr.rel (%p39) target = $region28
      $region25: #{report_generation_forward.17} parent=20 // loop_body
        %v45 = vld [vmem:[%s43] sm:%s36]
        %46 = vst [vmem:[%s44] sm:%s36] %v45
      $region26: #{report_generation_forward.17} parent=20 // loop_footer
        %s42 = sadd.s32 1, %s38
      $region27: #{report_generation_forward.17} parent=20 // loop_footer_branch
        %37 = sbr.rel target = $region23
      $region28: #{report_generation_forward.17} parent=20 // loop_exit
        _
    $region21: #{report_generation_forward.17} parent=1 // pred_fallthru
      _
    // Predicated region
    $region40: #{report_generation_forward.17} parent=1 // pred_check
      _
    $region41: #{report_generation_forward.17} parent=1 // pred_check_branch
      %71 = sbr.rel (0) target = $region43
    $region42: #{report_generation_forward.17} parent=1 // pred_region
      %72 = vsyncadd [#allocation3], 16
    $region43: #{report_generation_forward.17} parent=1 // pred_fallthru
      _
    %s73 = sld [smem:[#allocation4 + $0x1]]
    %s74 = scalar_lea.vmem %s1, %s73
    %s75 = scalar_lea.vmem [#allocation2], 1
    %s76 = scalar_lea.sflag [#allocation3], 1
    %p78 = scmp.lt.u32.totalorder 1, 8
    %p79 = pneg %p78
    // Predicated region
    $region44: #{report_generation_forward.17} parent=1 // pred_check
      _
    $region45: #{report_generation_forward.17} parent=1 // pred_check_branch
      %81 = sbr.rel (%p78) target = $region47
    $region46: #{report_generation_forward.17} parent=1 // pred_region
      %s97 = sand.u32 1, 7
      %p98 = scmp.eq.s32.totalorder %s97, 0
      %p99 = pneg %p98
      // Predicated region
      $region59: #{report_generation_forward.17} parent=46 // pred_check
        _
      $region60: #{report_generation_forward.17} parent=46 // pred_check_branch
        %101 = sbr.rel (%p98) target = $region62
      $region61: #{report_generation_forward.17} parent=46 // pred_region
        %s102 = sand.u32 1, 7
        %s103 = ssub.s32 1, %s102
        %s104 = scalar_lea.vmem %s74, %s103
        %s105 = ssub.s32 1, %s102
        %s106 = scalar_lea.vmem %s75, %s105 [#allocation2]
        %s107 = sshll.u32 1, %s102
        %s108 = ssub.s32 %s107, 1
        loop: start=0, step=1, limit=1
        $region63: #{report_generation_forward.17} parent=61 // loop_pre_header
          _
        $region64: #{report_generation_forward.17} parent=61 // loop_header
          %s110 = sphi 0, %s114
          %p111 = scmp.ge.s32.totalorder %s110, 1
          %s115 = sphi %s104, %s104
          %s116 = sphi %s106, %s106
        $region65: #{report_generation_forward.17} parent=61 // loop_header_branch
          %113 = sbr.rel (%p111) target = $region69
        $region66: #{report_generation_forward.17} parent=61 // loop_body
          %v117 = vld [vmem:[%s115] sm:%s108]
          %118 = vst [vmem:[%s116] sm:%s108] %v117
        $region67: #{report_generation_forward.17} parent=61 // loop_footer
          %s114 = sadd.s32 1, %s110
        $region68: #{report_generation_forward.17} parent=61 // loop_footer_branch
          %109 = sbr.rel target = $region64
        $region69: #{report_generation_forward.17} parent=61 // loop_exit
          _
      $region62: #{report_generation_forward.17} parent=46 // pred_fallthru
        _
    $region47: #{report_generation_forward.17} parent=1 // pred_fallthru
      _
    // Predicated region
    $region48: #{report_generation_forward.17} parent=1 // pred_check
      %p82 = pneg %p78
    $region49: #{report_generation_forward.17} parent=1 // pred_check_branch
      %84 = sbr.rel (%p82) target = $region51
    $region50: #{report_generation_forward.17} parent=1 // pred_region
      %s85 = sshll.u32 1, 1
      %s86 = ssub.s32 %s85, 1
      loop: start=0, step=1, limit=1
      $region52: #{report_generation_forward.17} parent=50 // loop_pre_header
        _
      $region53: #{report_generation_forward.17} parent=50 // loop_header
        %s88 = sphi 0, %s92
        %p89 = scmp.ge.s32.totalorder %s88, 1
        %s93 = sphi %s74, %s74
        %s94 = sphi %s75, %s75
      $region54: #{report_generation_forward.17} parent=50 // loop_header_branch
        %91 = sbr.rel (%p89) target = $region58
      $region55: #{report_generation_forward.17} parent=50 // loop_body
        %v95 = vld [vmem:[%s93] sm:%s86]
        %96 = vst [vmem:[%s94] sm:%s86] %v95
      $region56: #{report_generation_forward.17} parent=50 // loop_footer
        %s92 = sadd.s32 1, %s88
      $region57: #{report_generation_forward.17} parent=50 // loop_footer_branch
        %87 = sbr.rel target = $region53
      $region58: #{report_generation_forward.17} parent=50 // loop_exit
        _
    $region51: #{report_generation_forward.17} parent=1 // pred_fallthru
      _
    // Predicated region
    $region70: #{report_generation_forward.17} parent=1 // pred_check
      _
    $region71: #{report_generation_forward.17} parent=1 // pred_check_branch
      %121 = sbr.rel (0) target = $region73
    $region72: #{report_generation_forward.17} parent=1 // pred_region
      %122 = vsyncadd %s76, 16
    $region73: #{report_generation_forward.17} parent=1 // pred_fallthru
      _
    %s123 = sld [smem:[#allocation4 + $0x2]]
    %s124 = scalar_lea.vmem %s1, %s123
    %s125 = scalar_lea.vmem [#allocation2], 2
    %s126 = scalar_lea.sflag [#allocation3], 2
    %p128 = scmp.lt.u32.totalorder 1, 8
    %p129 = pneg %p128
    // Predicated region
    $region74: #{report_generation_forward.17} parent=1 // pred_check
      _
    $region75: #{report_generation_forward.17} parent=1 // pred_check_branch
      %131 = sbr.rel (%p128) target = $region77
    $region76: #{report_generation_forward.17} parent=1 // pred_region
      %s147 = sand.u32 1, 7
      %p148 = scmp.eq.s32.totalorder %s147, 0
      %p149 = pneg %p148
      // Predicated region
      $region89: #{report_generation_forward.17} parent=76 // pred_check
        _
      $region90: #{report_generation_forward.17} parent=76 // pred_check_branch
        %151 = sbr.rel (%p148) target = $region92
      $region91: #{report_generation_forward.17} parent=76 // pred_region
        %s152 = sand.u32 1, 7
        %s153 = ssub.s32 1, %s152
        %s154 = scalar_lea.vmem %s124, %s153
        %s155 = ssub.s32 1, %s152
        %s156 = scalar_lea.vmem %s125, %s155 [#allocation2]
        %s157 = sshll.u32 1, %s152
        %s158 = ssub.s32 %s157, 1
        loop: start=0, step=1, limit=1
        $region93: #{report_generation_forward.17} parent=91 // loop_pre_header
          _
        $region94: #{report_generation_forward.17} parent=91 // loop_header
          %s160 = sphi 0, %s164
          %p161 = scmp.ge.s32.totalorder %s160, 1
          %s165 = sphi %s154, %s154
          %s166 = sphi %s156, %s156
        $region95: #{report_generation_forward.17} parent=91 // loop_header_branch
          %163 = sbr.rel (%p161) target = $region99
        $region96: #{report_generation_forward.17} parent=91 // loop_body
          %v167 = vld [vmem:[%s165] sm:%s158]
          %168 = vst [vmem:[%s166] sm:%s158] %v167
        $region97: #{report_generation_forward.17} parent=91 // loop_footer
          %s164 = sadd.s32 1, %s160
        $region98: #{report_generation_forward.17} parent=91 // loop_footer_branch
          %159 = sbr.rel target = $region94
        $region99: #{report_generation_forward.17} parent=91 // loop_exit
          _
      $region92: #{report_generation_forward.17} parent=76 // pred_fallthru
        _
    $region77: #{report_generation_forward.17} parent=1 // pred_fallthru
      _
    // Predicated region
    $region78: #{report_generation_forward.17} parent=1 // pred_check
      %p132 = pneg %p128
    $region79: #{report_generation_forward.17} parent=1 // pred_check_branch
      %134 = sbr.rel (%p132) target = $region81
    $region80: #{report_generation_forward.17} parent=1 // pred_region
      %s135 = sshll.u32 1, 1
      %s136 = ssub.s32 %s135, 1
      loop: start=0, step=1, limit=1
      $region82: #{report_generation_forward.17} parent=80 // loop_pre_header
        _
      $region83: #{report_generation_forward.17} parent=80 // loop_header
        %s138 = sphi 0, %s142
        %p139 = scmp.ge.s32.totalorder %s138, 1
        %s143 = sphi %s124, %s124
        %s144 = sphi %s125, %s125
      $region84: #{report_generation_forward.17} parent=80 // loop_header_branch
        %141 = sbr.rel (%p139) target = $region88
      $region85: #{report_generation_forward.17} parent=80 // loop_body
        %v145 = vld [vmem:[%s143] sm:%s136]
        %146 = vst [vmem:[%s144] sm:%s136] %v145
      $region86: #{report_generation_forward.17} parent=80 // loop_footer
        %s142 = sadd.s32 1, %s138
      $region87: #{report_generation_forward.17} parent=80 // loop_footer_branch
        %137 = sbr.rel target = $region83
      $region88: #{report_generation_forward.17} parent=80 // loop_exit
        _
    $region81: #{report_generation_forward.17} parent=1 // pred_fallthru
      _
    // Predicated region
    $region100: #{report_generation_forward.17} parent=1 // pred_check
      _
    $region101: #{report_generation_forward.17} parent=1 // pred_check_branch
      %171 = sbr.rel (0) target = $region103
    $region102: #{report_generation_forward.17} parent=1 // pred_region
      %172 = vsyncadd %s126, 16
    $region103: #{report_generation_forward.17} parent=1 // pred_fallthru
      _
    %s173 = sld [smem:[#allocation4 + $0x3]]
    %s174 = scalar_lea.vmem %s1, %s173
    %s175 = scalar_lea.vmem [#allocation2], 3
    %s176 = scalar_lea.sflag [#allocation3], 3
    %p178 = scmp.lt.u32.totalorder 1, 8
    %p179 = pneg %p178
    // Predicated region
    $region104: #{report_generation_forward.17} parent=1 // pred_check
      _
    $region105: #{report_generation_forward.17} parent=1 // pred_check_branch
      %181 = sbr.rel (%p178) target = $region107
    $region106: #{report_generation_forward.17} parent=1 // pred_region
      %s197 = sand.u32 1, 7
      %p198 = scmp.eq.s32.totalorder %s197, 0
      %p199 = pneg %p198
      // Predicated region
      $region119: #{report_generation_forward.17} parent=106 // pred_check
        _
      $region120: #{report_generation_forward.17} parent=106 // pred_check_branch
        %201 = sbr.rel (%p198) target = $region122
      $region121: #{report_generation_forward.17} parent=106 // pred_region
        %s202 = sand.u32 1, 7
        %s203 = ssub.s32 1, %s202
        %s204 = scalar_lea.vmem %s174, %s203
        %s205 = ssub.s32 1, %s202
        %s206 = scalar_lea.vmem %s175, %s205 [#allocation2]
        %s207 = sshll.u32 1, %s202
        %s208 = ssub.s32 %s207, 1
        loop: start=0, step=1, limit=1
        $region123: #{report_generation_forward.17} parent=121 // loop_pre_header
          _
        $region124: #{report_generation_forward.17} parent=121 // loop_header
          %s210 = sphi 0, %s214
          %p211 = scmp.ge.s32.totalorder %s210, 1
          %s215 = sphi %s204, %s204
          %s216 = sphi %s206, %s206
        $region125: #{report_generation_forward.17} parent=121 // loop_header_branch
          %213 = sbr.rel (%p211) target = $region129
        $region126: #{report_generation_forward.17} parent=121 // loop_body
          %v217 = vld [vmem:[%s215] sm:%s208]
          %218 = vst [vmem:[%s216] sm:%s208] %v217
        $region127: #{report_generation_forward.17} parent=121 // loop_footer
          %s214 = sadd.s32 1, %s210
        $region128: #{report_generation_forward.17} parent=121 // loop_footer_branch
          %209 = sbr.rel target = $region124
        $region129: #{report_generation_forward.17} parent=121 // loop_exit
          _
      $region122: #{report_generation_forward.17} parent=106 // pred_fallthru
        _
    $region107: #{report_generation_forward.17} parent=1 // pred_fallthru
      _
    // Predicated region
    $region108: #{report_generation_forward.17} parent=1 // pred_check
      %p182 = pneg %p178
    $region109: #{report_generation_forward.17} parent=1 // pred_check_branch
      %184 = sbr.rel (%p182) target = $region111
    $region110: #{report_generation_forward.17} parent=1 // pred_region
      %s185 = sshll.u32 1, 1
      %s186 = ssub.s32 %s185, 1
      loop: start=0, step=1, limit=1
      $region112: #{report_generation_forward.17} parent=110 // loop_pre_header
        _
      $region113: #{report_generation_forward.17} parent=110 // loop_header
        %s188 = sphi 0, %s192
        %p189 = scmp.ge.s32.totalorder %s188, 1
        %s193 = sphi %s174, %s174
        %s194 = sphi %s175, %s175
      $region114: #{report_generation_forward.17} parent=110 // loop_header_branch
        %191 = sbr.rel (%p189) target = $region118
      $region115: #{report_generation_forward.17} parent=110 // loop_body
        %v195 = vld [vmem:[%s193] sm:%s186]
        %196 = vst [vmem:[%s194] sm:%s186] %v195
      $region116: #{report_generation_forward.17} parent=110 // loop_footer
        %s192 = sadd.s32 1, %s188
      $region117: #{report_generation_forward.17} parent=110 // loop_footer_branch
        %187 = sbr.rel target = $region113
      $region118: #{report_generation_forward.17} parent=110 // loop_exit
        _
    $region111: #{report_generation_forward.17} parent=1 // pred_fallthru
      _
    // Predicated region
    $region130: #{report_generation_forward.17} parent=1 // pred_check
      _
    $region131: #{report_generation_forward.17} parent=1 // pred_check_branch
      %221 = sbr.rel (0) target = $region133
    $region132: #{report_generation_forward.17} parent=1 // pred_region
      %222 = vsyncadd %s176, 16
    $region133: #{report_generation_forward.17} parent=1 // pred_fallthru
      _
    %s223 = sld [smem:[#allocation4 + $0x4]]
    %s224 = scalar_lea.vmem %s1, %s223
    %s225 = scalar_lea.vmem [#allocation2], 4
    %s226 = scalar_lea.sflag [#allocation3], 4
    %p228 = scmp.lt.u32.totalorder 1, 8
    %p229 = pneg %p228
    // Predicated region
    $region134: #{report_generation_forward.17} parent=1 // pred_check
      _
    $region135: #{report_generation_forward.17} parent=1 // pred_check_branch
      %231 = sbr.rel (%p228) target = $region137
    $region136: #{report_generation_forward.17} parent=1 // pred_region
      %s247 = sand.u32 1, 7
      %p248 = scmp.eq.s32.totalorder %s247, 0
      %p249 = pneg %p248
      // Predicated region
      $region149: #{report_generation_forward.17} parent=136 // pred_check
        _
      $region150: #{report_generation_forward.17} parent=136 // pred_check_branch
        %251 = sbr.rel (%p248) target = $region152
      $region151: #{report_generation_forward.17} parent=136 // pred_region
        %s252 = sand.u32 1, 7
        %s253 = ssub.s32 1, %s252
        %s254 = scalar_lea.vmem %s224, %s253
        %s255 = ssub.s32 1, %s252
        %s256 = scalar_lea.vmem %s225, %s255 [#allocation2]
        %s257 = sshll.u32 1, %s252
        %s258 = ssub.s32 %s257, 1
        loop: start=0, step=1, limit=1
        $region153: #{report_generation_forward.17} parent=151 // loop_pre_header
          _
        $region154: #{report_generation_forward.17} parent=151 // loop_header
          %s260 = sphi 0, %s264
          %p261 = scmp.ge.s32.totalorder %s260, 1
          %s265 = sphi %s254, %s254
          %s266 = sphi %s256, %s256
        $region155: #{report_generation_forward.17} parent=151 // loop_header_branch
          %263 = sbr.rel (%p261) target = $region159
        $region156: #{report_generation_forward.17} parent=151 // loop_body
          %v267 = vld [vmem:[%s265] sm:%s258]
          %268 = vst [vmem:[%s266] sm:%s258] %v267
        $region157: #{report_generation_forward.17} parent=151 // loop_footer
          %s264 = sadd.s32 1, %s260
        $region158: #{report_generation_forward.17} parent=151 // loop_footer_branch
          %259 = sbr.rel target = $region154
        $region159: #{report_generation_forward.17} parent=151 // loop_exit
          _
      $region152: #{report_generation_forward.17} parent=136 // pred_fallthru
        _
    $region137: #{report_generation_forward.17} parent=1 // pred_fallthru
      _
    // Predicated region
    $region138: #{report_generation_forward.17} parent=1 // pred_check
      %p232 = pneg %p228
    $region139: #{report_generation_forward.17} parent=1 // pred_check_branch
      %234 = sbr.rel (%p232) target = $region141
    $region140: #{report_generation_forward.17} parent=1 // pred_region
      %s235 = sshll.u32 1, 1
      %s236 = ssub.s32 %s235, 1
      loop: start=0, step=1, limit=1
      $region142: #{report_generation_forward.17} parent=140 // loop_pre_header
        _
      $region143: #{report_generation_forward.17} parent=140 // loop_header
        %s238 = sphi 0, %s242
        %p239 = scmp.ge.s32.totalorder %s238, 1
        %s243 = sphi %s224, %s224
        %s244 = sphi %s225, %s225
      $region144: #{report_generation_forward.17} parent=140 // loop_header_branch
        %241 = sbr.rel (%p239) target = $region148
      $region145: #{report_generation_forward.17} parent=140 // loop_body
        %v245 = vld [vmem:[%s243] sm:%s236]
        %246 = vst [vmem:[%s244] sm:%s236] %v245
      $region146: #{report_generation_forward.17} parent=140 // loop_footer
        %s242 = sadd.s32 1, %s238
      $region147: #{report_generation_forward.17} parent=140 // loop_footer_branch
        %237 = sbr.rel target = $region143
      $region148: #{report_generation_forward.17} parent=140 // loop_exit
        _
    $region141: #{report_generation_forward.17} parent=1 // pred_fallthru
      _
    // Predicated region
    $region160: #{report_generation_forward.17} parent=1 // pred_check
      _
    $region161: #{report_generation_forward.17} parent=1 // pred_check_branch
      %271 = sbr.rel (0) target = $region163
    $region162: #{report_generation_forward.17} parent=1 // pred_region
      %272 = vsyncadd %s226, 16
    $region163: #{report_generation_forward.17} parent=1 // pred_fallthru
      _
    %s273 = sld [smem:[#allocation4 + $0x5]]
    %s274 = scalar_lea.vmem %s1, %s273
    %s275 = scalar_lea.vmem [#allocation2], 5
    %s276 = scalar_lea.sflag [#allocation3], 5
    %p278 = scmp.lt.u32.totalorder 1, 8
    %p279 = pneg %p278
    // Predicated region
    $region164: #{report_generation_forward.17} parent=1 // pred_check
      _
    $region165: #{report_generation_forward.17} parent=1 // pred_check_branch
      %281 = sbr.rel (%p278) target = $region167
    $region166: #{report_generation_forward.17} parent=1 // pred_region
      %s297 = sand.u32 1, 7
      %p298 = scmp.eq.s32.totalorder %s297, 0
      %p299 = pneg %p298
      // Predicated region
      $region179: #{report_generation_forward.17} parent=166 // pred_check
        _
      $region180: #{report_generation_forward.17} parent=166 // pred_check_branch
        %301 = sbr.rel (%p298) target = $region182
      $region181: #{report_generation_forward.17} parent=166 // pred_region
        %s302 = sand.u32 1, 7
        %s303 = ssub.s32 1, %s302
        %s304 = scalar_lea.vmem %s274, %s303
        %s305 = ssub.s32 1, %s302
        %s306 = scalar_lea.vmem %s275, %s305 [#allocation2]
        %s307 = sshll.u32 1, %s302
        %s308 = ssub.s32 %s307, 1
        loop: start=0, step=1, limit=1
        $region183: #{report_generation_forward.17} parent=181 // loop_pre_header
          _
        $region184: #{report_generation_forward.17} parent=181 // loop_header
          %s310 = sphi 0, %s314
          %p311 = scmp.ge.s32.totalorder %s310, 1
          %s315 = sphi %s304, %s304
          %s316 = sphi %s306, %s306
        $region185: #{report_generation_forward.17} parent=181 // loop_header_branch
          %313 = sbr.rel (%p311) target = $region189
        $region186: #{report_generation_forward.17} parent=181 // loop_body
          %v317 = vld [vmem:[%s315] sm:%s308]
          %318 = vst [vmem:[%s316] sm:%s308] %v317
        $region187: #{report_generation_forward.17} parent=181 // loop_footer
          %s314 = sadd.s32 1, %s310
        $region188: #{report_generation_forward.17} parent=181 // loop_footer_branch
          %309 = sbr.rel target = $region184
        $region189: #{report_generation_forward.17} parent=181 // loop_exit
          _
      $region182: #{report_generation_forward.17} parent=166 // pred_fallthru
        _
    $region167: #{report_generation_forward.17} parent=1 // pred_fallthru
      _
    // Predicated region
    $region168: #{report_generation_forward.17} parent=1 // pred_check
      %p282 = pneg %p278
    $region169: #{report_generation_forward.17} parent=1 // pred_check_branch
      %284 = sbr.rel (%p282) target = $region171
    $region170: #{report_generation_forward.17} parent=1 // pred_region
      %s285 = sshll.u32 1, 1
      %s286 = ssub.s32 %s285, 1
      loop: start=0, step=1, limit=1
      $region172: #{report_generation_forward.17} parent=170 // loop_pre_header
        _
      $region173: #{report_generation_forward.17} parent=170 // loop_header
        %s288 = sphi 0, %s292
        %p289 = scmp.ge.s32.totalorder %s288, 1
        %s293 = sphi %s274, %s274
        %s294 = sphi %s275, %s275
      $region174: #{report_generation_forward.17} parent=170 // loop_header_branch
        %291 = sbr.rel (%p289) target = $region178
      $region175: #{report_generation_forward.17} parent=170 // loop_body
        %v295 = vld [vmem:[%s293] sm:%s286]
        %296 = vst [vmem:[%s294] sm:%s286] %v295
      $region176: #{report_generation_forward.17} parent=170 // loop_footer
        %s292 = sadd.s32 1, %s288
      $region177: #{report_generation_forward.17} parent=170 // loop_footer_branch
        %287 = sbr.rel target = $region173
      $region178: #{report_generation_forward.17} parent=170 // loop_exit
        _
    $region171: #{report_generation_forward.17} parent=1 // pred_fallthru
      _
    // Predicated region
    $region190: #{report_generation_forward.17} parent=1 // pred_check
      _
    $region191: #{report_generation_forward.17} parent=1 // pred_check_branch
      %321 = sbr.rel (0) target = $region193
    $region192: #{report_generation_forward.17} parent=1 // pred_region
      %322 = vsyncadd %s276, 16
    $region193: #{report_generation_forward.17} parent=1 // pred_fallthru
      _
    %s323 = sld [smem:[#allocation4 + $0x6]]
    %s324 = scalar_lea.vmem %s1, %s323
    %s325 = scalar_lea.vmem [#allocation2], 6
    %s326 = scalar_lea.sflag [#allocation3], 6
    %p328 = scmp.lt.u32.totalorder 1, 8
    %p329 = pneg %p328
    // Predicated region
    $region194: #{report_generation_forward.17} parent=1 // pred_check
      _
    $region195: #{report_generation_forward.17} parent=1 // pred_check_branch
      %331 = sbr.rel (%p328) target = $region197
    $region196: #{report_generation_forward.17} parent=1 // pred_region
      %s347 = sand.u32 1, 7
      %p348 = scmp.eq.s32.totalorder %s347, 0
      %p349 = pneg %p348
      // Predicated region
      $region209: #{report_generation_forward.17} parent=196 // pred_check
        _
      $region210: #{report_generation_forward.17} parent=196 // pred_check_branch
        %351 = sbr.rel (%p348) target = $region212
      $region211: #{report_generation_forward.17} parent=196 // pred_region
        %s352 = sand.u32 1, 7
        %s353 = ssub.s32 1, %s352
        %s354 = scalar_lea.vmem %s324, %s353
        %s355 = ssub.s32 1, %s352
        %s356 = scalar_lea.vmem %s325, %s355 [#allocation2]
        %s357 = sshll.u32 1, %s352
        %s358 = ssub.s32 %s357, 1
        loop: start=0, step=1, limit=1
        $region213: #{report_generation_forward.17} parent=211 // loop_pre_header
          _
        $region214: #{report_generation_forward.17} parent=211 // loop_header
          %s360 = sphi 0, %s364
          %p361 = scmp.ge.s32.totalorder %s360, 1
          %s365 = sphi %s354, %s354
          %s366 = sphi %s356, %s356
        $region215: #{report_generation_forward.17} parent=211 // loop_header_branch
          %363 = sbr.rel (%p361) target = $region219
        $region216: #{report_generation_forward.17} parent=211 // loop_body
          %v367 = vld [vmem:[%s365] sm:%s358]
          %368 = vst [vmem:[%s366] sm:%s358] %v367
        $region217: #{report_generation_forward.17} parent=211 // loop_footer
          %s364 = sadd.s32 1, %s360
        $region218: #{report_generation_forward.17} parent=211 // loop_footer_branch
          %359 = sbr.rel target = $region214
        $region219: #{report_generation_forward.17} parent=211 // loop_exit
          _
      $region212: #{report_generation_forward.17} parent=196 // pred_fallthru
        _
    $region197: #{report_generation_forward.17} parent=1 // pred_fallthru
      _
    // Predicated region
    $region198: #{report_generation_forward.17} parent=1 // pred_check
      %p332 = pneg %p328
    $region199: #{report_generation_forward.17} parent=1 // pred_check_branch
      %334 = sbr.rel (%p332) target = $region201
    $region200: #{report_generation_forward.17} parent=1 // pred_region
      %s335 = sshll.u32 1, 1
      %s336 = ssub.s32 %s335, 1
      loop: start=0, step=1, limit=1
      $region202: #{report_generation_forward.17} parent=200 // loop_pre_header
        _
      $region203: #{report_generation_forward.17} parent=200 // loop_header
        %s338 = sphi 0, %s342
        %p339 = scmp.ge.s32.totalorder %s338, 1
        %s343 = sphi %s324, %s324
        %s344 = sphi %s325, %s325
      $region204: #{report_generation_forward.17} parent=200 // loop_header_branch
        %341 = sbr.rel (%p339) target = $region208
      $region205: #{report_generation_forward.17} parent=200 // loop_body
        %v345 = vld [vmem:[%s343] sm:%s336]
        %346 = vst [vmem:[%s344] sm:%s336] %v345
      $region206: #{report_generation_forward.17} parent=200 // loop_footer
        %s342 = sadd.s32 1, %s338
      $region207: #{report_generation_forward.17} parent=200 // loop_footer_branch
        %337 = sbr.rel target = $region203
      $region208: #{report_generation_forward.17} parent=200 // loop_exit
        _
    $region201: #{report_generation_forward.17} parent=1 // pred_fallthru
      _
    // Predicated region
    $region220: #{report_generation_forward.17} parent=1 // pred_check
      _
    $region221: #{report_generation_forward.17} parent=1 // pred_check_branch
      %371 = sbr.rel (0) target = $region223
    $region222: #{report_generation_forward.17} parent=1 // pred_region
      %372 = vsyncadd %s326, 16
    $region223: #{report_generation_forward.17} parent=1 // pred_fallthru
      _
    %s373 = sld [smem:[#allocation4 + $0x7]]
    %s374 = scalar_lea.vmem %s1, %s373
    %s375 = scalar_lea.vmem [#allocation2], 7
    %s376 = scalar_lea.sflag [#allocation3], 7
    %p378 = scmp.lt.u32.totalorder 1, 8
    %p379 = pneg %p378
    // Predicated region
    $region224: #{report_generation_forward.17} parent=1 // pred_check
      _
    $region225: #{report_generation_forward.17} parent=1 // pred_check_branch
      %381 = sbr.rel (%p378) target = $region227
    $region226: #{report_generation_forward.17} parent=1 // pred_region
      %s397 = sand.u32 1, 7
      %p398 = scmp.eq.s32.totalorder %s397, 0
      %p399 = pneg %p398
      // Predicated region
      $region239: #{report_generation_forward.17} parent=226 // pred_check
        _
      $region240: #{report_generation_forward.17} parent=226 // pred_check_branch
        %401 = sbr.rel (%p398) target = $region242
      $region241: #{report_generation_forward.17} parent=226 // pred_region
        %s402 = sand.u32 1, 7
        %s403 = ssub.s32 1, %s402
        %s404 = scalar_lea.vmem %s374, %s403
        %s405 = ssub.s32 1, %s402
        %s406 = scalar_lea.vmem %s375, %s405 [#allocation2]
        %s407 = sshll.u32 1, %s402
        %s408 = ssub.s32 %s407, 1
        loop: start=0, step=1, limit=1
        $region243: #{report_generation_forward.17} parent=241 // loop_pre_header
          _
        $region244: #{report_generation_forward.17} parent=241 // loop_header
          %s410 = sphi 0, %s414
          %p411 = scmp.ge.s32.totalorder %s410, 1
          %s415 = sphi %s404, %s404
          %s416 = sphi %s406, %s406
        $region245: #{report_generation_forward.17} parent=241 // loop_header_branch
          %413 = sbr.rel (%p411) target = $region249
        $region246: #{report_generation_forward.17} parent=241 // loop_body
          %v417 = vld [vmem:[%s415] sm:%s408]
          %418 = vst [vmem:[%s416] sm:%s408] %v417
        $region247: #{report_generation_forward.17} parent=241 // loop_footer
          %s414 = sadd.s32 1, %s410
        $region248: #{report_generation_forward.17} parent=241 // loop_footer_branch
          %409 = sbr.rel target = $region244
        $region249: #{report_generation_forward.17} parent=241 // loop_exit
          _
      $region242: #{report_generation_forward.17} parent=226 // pred_fallthru
        _
    $region227: #{report_generation_forward.17} parent=1 // pred_fallthru
      _
    // Predicated region
    $region228: #{report_generation_forward.17} parent=1 // pred_check
      %p382 = pneg %p378
    $region229: #{report_generation_forward.17} parent=1 // pred_check_branch
      %384 = sbr.rel (%p382) target = $region231
    $region230: #{report_generation_forward.17} parent=1 // pred_region
      %s385 = sshll.u32 1, 1
      %s386 = ssub.s32 %s385, 1
      loop: start=0, step=1, limit=1
      $region232: #{report_generation_forward.17} parent=230 // loop_pre_header
        _
      $region233: #{report_generation_forward.17} parent=230 // loop_header
        %s388 = sphi 0, %s392
        %p389 = scmp.ge.s32.totalorder %s388, 1
        %s393 = sphi %s374, %s374
        %s394 = sphi %s375, %s375
      $region234: #{report_generation_forward.17} parent=230 // loop_header_branch
        %391 = sbr.rel (%p389) target = $region238
      $region235: #{report_generation_forward.17} parent=230 // loop_body
        %v395 = vld [vmem:[%s393] sm:%s386]
        %396 = vst [vmem:[%s394] sm:%s386] %v395
      $region236: #{report_generation_forward.17} parent=230 // loop_footer
        %s392 = sadd.s32 1, %s388
      $region237: #{report_generation_forward.17} parent=230 // loop_footer_branch
        %387 = sbr.rel target = $region233
      $region238: #{report_generation_forward.17} parent=230 // loop_exit
        _
    $region231: #{report_generation_forward.17} parent=1 // pred_fallthru
      _
    // Predicated region
    $region250: #{report_generation_forward.17} parent=1 // pred_check
      _
    $region251: #{report_generation_forward.17} parent=1 // pred_check_branch
      %421 = sbr.rel (0) target = $region253
    $region252: #{report_generation_forward.17} parent=1 // pred_region
      %422 = vsyncadd %s376, 16
    $region253: #{report_generation_forward.17} parent=1 // pred_fallthru
      _
    %s423 = sld [smem:[#allocation4 + $0x8]]
    %s424 = scalar_lea.vmem %s1, %s423
    %s425 = scalar_lea.vmem [#allocation2], 8
    %s426 = scalar_lea.sflag [#allocation3], 8
    %p428 = scmp.lt.u32.totalorder 1, 8
    %p429 = pneg %p428
    // Predicated region
    $region254: #{report_generation_forward.17} parent=1 // pred_check
      _
    $region255: #{report_generation_forward.17} parent=1 // pred_check_branch
      %431 = sbr.rel (%p428) target = $region257
    $region256: #{report_generation_forward.17} parent=1 // pred_region
      %s447 = sand.u32 1, 7
      %p448 = scmp.eq.s32.totalorder %s447, 0
      %p449 = pneg %p448
      // Predicated region
      $region269: #{report_generation_forward.17} parent=256 // pred_check
        _
      $region270: #{report_generation_forward.17} parent=256 // pred_check_branch
        %451 = sbr.rel (%p448) target = $region272
      $region271: #{report_generation_forward.17} parent=256 // pred_region
        %s452 = sand.u32 1, 7
        %s453 = ssub.s32 1, %s452
        %s454 = scalar_lea.vmem %s424, %s453
        %s455 = ssub.s32 1, %s452
        %s456 = scalar_lea.vmem %s425, %s455 [#allocation2]
        %s457 = sshll.u32 1, %s452
        %s458 = ssub.s32 %s457, 1
        loop: start=0, step=1, limit=1
        $region273: #{report_generation_forward.17} parent=271 // loop_pre_header
          _
        $region274: #{report_generation_forward.17} parent=271 // loop_header
          %s460 = sphi 0, %s464
          %p461 = scmp.ge.s32.totalorder %s460, 1
          %s465 = sphi %s454, %s454
          %s466 = sphi %s456, %s456
        $region275: #{report_generation_forward.17} parent=271 // loop_header_branch
          %463 = sbr.rel (%p461) target = $region279
        $region276: #{report_generation_forward.17} parent=271 // loop_body
          %v467 = vld [vmem:[%s465] sm:%s458]
          %468 = vst [vmem:[%s466] sm:%s458] %v467
        $region277: #{report_generation_forward.17} parent=271 // loop_footer
          %s464 = sadd.s32 1, %s460
        $region278: #{report_generation_forward.17} parent=271 // loop_footer_branch
          %459 = sbr.rel target = $region274
        $region279: #{report_generation_forward.17} parent=271 // loop_exit
          _
      $region272: #{report_generation_forward.17} parent=256 // pred_fallthru
        _
    $region257: #{report_generation_forward.17} parent=1 // pred_fallthru
      _
    // Predicated region
    $region258: #{report_generation_forward.17} parent=1 // pred_check
      %p432 = pneg %p428
    $region259: #{report_generation_forward.17} parent=1 // pred_check_branch
      %434 = sbr.rel (%p432) target = $region261
    $region260: #{report_generation_forward.17} parent=1 // pred_region
      %s435 = sshll.u32 1, 1
      %s436 = ssub.s32 %s435, 1
      loop: start=0, step=1, limit=1
      $region262: #{report_generation_forward.17} parent=260 // loop_pre_header
        _
      $region263: #{report_generation_forward.17} parent=260 // loop_header
        %s438 = sphi 0, %s442
        %p439 = scmp.ge.s32.totalorder %s438, 1
        %s443 = sphi %s424, %s424
        %s444 = sphi %s425, %s425
      $region264: #{report_generation_forward.17} parent=260 // loop_header_branch
        %441 = sbr.rel (%p439) target = $region268
      $region265: #{report_generation_forward.17} parent=260 // loop_body
        %v445 = vld [vmem:[%s443] sm:%s436]
        %446 = vst [vmem:[%s444] sm:%s436] %v445
      $region266: #{report_generation_forward.17} parent=260 // loop_footer
        %s442 = sadd.s32 1, %s438
      $region267: #{report_generation_forward.17} parent=260 // loop_footer_branch
        %437 = sbr.rel target = $region263
      $region268: #{report_generation_forward.17} parent=260 // loop_exit
        _
    $region261: #{report_generation_forward.17} parent=1 // pred_fallthru
      _
    // Predicated region
    $region280: #{report_generation_forward.17} parent=1 // pred_check
      _
    $region281: #{report_generation_forward.17} parent=1 // pred_check_branch
      %471 = sbr.rel (0) target = $region283
    $region282: #{report_generation_forward.17} parent=1 // pred_region
      %472 = vsyncadd %s426, 16
    $region283: #{report_generation_forward.17} parent=1 // pred_fallthru
      _
    %s473 = sld [smem:[#allocation4 + $0x9]]
    %s474 = scalar_lea.vmem %s1, %s473
    %s475 = scalar_lea.vmem [#allocation2], 9
    %s476 = scalar_lea.sflag [#allocation3], 9
    %p478 = scmp.lt.u32.totalorder 1, 8
    %p479 = pneg %p478
    // Predicated region
    $region284: #{report_generation_forward.17} parent=1 // pred_check
      _
    $region285: #{report_generation_forward.17} parent=1 // pred_check_branch
      %481 = sbr.rel (%p478) target = $region287
    $region286: #{report_generation_forward.17} parent=1 // pred_region
      %s497 = sand.u32 1, 7
      %p498 = scmp.eq.s32.totalorder %s497, 0
      %p499 = pneg %p498
      // Predicated region
      $region299: #{report_generation_forward.17} parent=286 // pred_check
        _
      $region300: #{report_generation_forward.17} parent=286 // pred_check_branch
        %501 = sbr.rel (%p498) target = $region302
      $region301: #{report_generation_forward.17} parent=286 // pred_region
        %s502 = sand.u32 1, 7
        %s503 = ssub.s32 1, %s502
        %s504 = scalar_lea.vmem %s474, %s503
        %s505 = ssub.s32 1, %s502
        %s506 = scalar_lea.vmem %s475, %s505 [#allocation2]
        %s507 = sshll.u32 1, %s502
        %s508 = ssub.s32 %s507, 1
        loop: start=0, step=1, limit=1
        $region303: #{report_generation_forward.17} parent=301 // loop_pre_header
          _
        $region304: #{report_generation_forward.17} parent=301 // loop_header
          %s510 = sphi 0, %s514
          %p511 = scmp.ge.s32.totalorder %s510, 1
          %s515 = sphi %s504, %s504
          %s516 = sphi %s506, %s506
        $region305: #{report_generation_forward.17} parent=301 // loop_header_branch
          %513 = sbr.rel (%p511) target = $region309
        $region306: #{report_generation_forward.17} parent=301 // loop_body
          %v517 = vld [vmem:[%s515] sm:%s508]
          %518 = vst [vmem:[%s516] sm:%s508] %v517
        $region307: #{report_generation_forward.17} parent=301 // loop_footer
          %s514 = sadd.s32 1, %s510
        $region308: #{report_generation_forward.17} parent=301 // loop_footer_branch
          %509 = sbr.rel target = $region304
        $region309: #{report_generation_forward.17} parent=301 // loop_exit
          _
      $region302: #{report_generation_forward.17} parent=286 // pred_fallthru
        _
    $region287: #{report_generation_forward.17} parent=1 // pred_fallthru
      _
    // Predicated region
    $region288: #{report_generation_forward.17} parent=1 // pred_check
      %p482 = pneg %p478
    $region289: #{report_generation_forward.17} parent=1 // pred_check_branch
      %484 = sbr.rel (%p482) target = $region291
    $region290: #{report_generation_forward.17} parent=1 // pred_region
      %s485 = sshll.u32 1, 1
      %s486 = ssub.s32 %s485, 1
      loop: start=0, step=1, limit=1
      $region292: #{report_generation_forward.17} parent=290 // loop_pre_header
        _
      $region293: #{report_generation_forward.17} parent=290 // loop_header
        %s488 = sphi 0, %s492
        %p489 = scmp.ge.s32.totalorder %s488, 1
        %s493 = sphi %s474, %s474
        %s494 = sphi %s475, %s475
      $region294: #{report_generation_forward.17} parent=290 // loop_header_branch
        %491 = sbr.rel (%p489) target = $region298
      $region295: #{report_generation_forward.17} parent=290 // loop_body
        %v495 = vld [vmem:[%s493] sm:%s486]
        %496 = vst [vmem:[%s494] sm:%s486] %v495
      $region296: #{report_generation_forward.17} parent=290 // loop_footer
        %s492 = sadd.s32 1, %s488
      $region297: #{report_generation_forward.17} parent=290 // loop_footer_branch
        %487 = sbr.rel target = $region293
      $region298: #{report_generation_forward.17} parent=290 // loop_exit
        _
    $region291: #{report_generation_forward.17} parent=1 // pred_fallthru
      _
    // Predicated region
    $region310: #{report_generation_forward.17} parent=1 // pred_check
      _
    $region311: #{report_generation_forward.17} parent=1 // pred_check_branch
      %521 = sbr.rel (0) target = $region313
    $region312: #{report_generation_forward.17} parent=1 // pred_region
      %522 = vsyncadd %s476, 16
    $region313: #{report_generation_forward.17} parent=1 // pred_fallthru
      _
    %s523 = sld [smem:[#allocation4 + $0xa]]
    %s524 = scalar_lea.vmem %s1, %s523
    %s525 = scalar_lea.vmem [#allocation2], 10
    %s526 = scalar_lea.sflag [#allocation3], 10
    %p528 = scmp.lt.u32.totalorder 1, 8
    %p529 = pneg %p528
    // Predicated region
    $region314: #{report_generation_forward.17} parent=1 // pred_check
      _
    $region315: #{report_generation_forward.17} parent=1 // pred_check_branch
      %531 = sbr.rel (%p528) target = $region317
    $region316: #{report_generation_forward.17} parent=1 // pred_region
      %s547 = sand.u32 1, 7
      %p548 = scmp.eq.s32.totalorder %s547, 0
      %p549 = pneg %p548
      // Predicated region
      $region329: #{report_generation_forward.17} parent=316 // pred_check
        _
      $region330: #{report_generation_forward.17} parent=316 // pred_check_branch
        %551 = sbr.rel (%p548) target = $region332
      $region331: #{report_generation_forward.17} parent=316 // pred_region
        %s552 = sand.u32 1, 7
        %s553 = ssub.s32 1, %s552
        %s554 = scalar_lea.vmem %s524, %s553
        %s555 = ssub.s32 1, %s552
        %s556 = scalar_lea.vmem %s525, %s555 [#allocation2]
        %s557 = sshll.u32 1, %s552
        %s558 = ssub.s32 %s557, 1
        loop: start=0, step=1, limit=1
        $region333: #{report_generation_forward.17} parent=331 // loop_pre_header
          _
        $region334: #{report_generation_forward.17} parent=331 // loop_header
          %s560 = sphi 0, %s564
          %p561 = scmp.ge.s32.totalorder %s560, 1
          %s565 = sphi %s554, %s554
          %s566 = sphi %s556, %s556
        $region335: #{report_generation_forward.17} parent=331 // loop_header_branch
          %563 = sbr.rel (%p561) target = $region339
        $region336: #{report_generation_forward.17} parent=331 // loop_body
          %v567 = vld [vmem:[%s565] sm:%s558]
          %568 = vst [vmem:[%s566] sm:%s558] %v567
        $region337: #{report_generation_forward.17} parent=331 // loop_footer
          %s564 = sadd.s32 1, %s560
        $region338: #{report_generation_forward.17} parent=331 // loop_footer_branch
          %559 = sbr.rel target = $region334
        $region339: #{report_generation_forward.17} parent=331 // loop_exit
          _
      $region332: #{report_generation_forward.17} parent=316 // pred_fallthru
        _
    $region317: #{report_generation_forward.17} parent=1 // pred_fallthru
      _
    // Predicated region
    $region318: #{report_generation_forward.17} parent=1 // pred_check
      %p532 = pneg %p528
    $region319: #{report_generation_forward.17} parent=1 // pred_check_branch
      %534 = sbr.rel (%p532) target = $region321
    $region320: #{report_generation_forward.17} parent=1 // pred_region
      %s535 = sshll.u32 1, 1
      %s536 = ssub.s32 %s535, 1
      loop: start=0, step=1, limit=1
      $region322: #{report_generation_forward.17} parent=320 // loop_pre_header
        _
      $region323: #{report_generation_forward.17} parent=320 // loop_header
        %s538 = sphi 0, %s542
        %p539 = scmp.ge.s32.totalorder %s538, 1
        %s543 = sphi %s524, %s524
        %s544 = sphi %s525, %s525
      $region324: #{report_generation_forward.17} parent=320 // loop_header_branch
        %541 = sbr.rel (%p539) target = $region328
      $region325: #{report_generation_forward.17} parent=320 // loop_body
        %v545 = vld [vmem:[%s543] sm:%s536]
        %546 = vst [vmem:[%s544] sm:%s536] %v545
      $region326: #{report_generation_forward.17} parent=320 // loop_footer
        %s542 = sadd.s32 1, %s538
      $region327: #{report_generation_forward.17} parent=320 // loop_footer_branch
        %537 = sbr.rel target = $region323
      $region328: #{report_generation_forward.17} parent=320 // loop_exit
        _
    $region321: #{report_generation_forward.17} parent=1 // pred_fallthru
      _
    // Predicated region
    $region340: #{report_generation_forward.17} parent=1 // pred_check
      _
    $region341: #{report_generation_forward.17} parent=1 // pred_check_branch
      %571 = sbr.rel (0) target = $region343
    $region342: #{report_generation_forward.17} parent=1 // pred_region
      %572 = vsyncadd %s526, 16
    $region343: #{report_generation_forward.17} parent=1 // pred_fallthru
      _
    %s573 = sld [smem:[#allocation4 + $0xb]]
    %s574 = scalar_lea.vmem %s1, %s573
    %s575 = scalar_lea.vmem [#allocation2], 11
    %s576 = scalar_lea.sflag [#allocation3], 11
    %p578 = scmp.lt.u32.totalorder 1, 8
    %p579 = pneg %p578
    // Predicated region
    $region344: #{report_generation_forward.17} parent=1 // pred_check
      _
    $region345: #{report_generation_forward.17} parent=1 // pred_check_branch
      %581 = sbr.rel (%p578) target = $region347
    $region346: #{report_generation_forward.17} parent=1 // pred_region
      %s597 = sand.u32 1, 7
      %p598 = scmp.eq.s32.totalorder %s597, 0
      %p599 = pneg %p598
      // Predicated region
      $region359: #{report_generation_forward.17} parent=346 // pred_check
        _
      $region360: #{report_generation_forward.17} parent=346 // pred_check_branch
        %601 = sbr.rel (%p598) target = $region362
      $region361: #{report_generation_forward.17} parent=346 // pred_region
        %s602 = sand.u32 1, 7
        %s603 = ssub.s32 1, %s602
        %s604 = scalar_lea.vmem %s574, %s603
        %s605 = ssub.s32 1, %s602
        %s606 = scalar_lea.vmem %s575, %s605 [#allocation2]
        %s607 = sshll.u32 1, %s602
        %s608 = ssub.s32 %s607, 1
        loop: start=0, step=1, limit=1
        $region363: #{report_generation_forward.17} parent=361 // loop_pre_header
          _
        $region364: #{report_generation_forward.17} parent=361 // loop_header
          %s610 = sphi 0, %s614
          %p611 = scmp.ge.s32.totalorder %s610, 1
          %s615 = sphi %s604, %s604
          %s616 = sphi %s606, %s606
        $region365: #{report_generation_forward.17} parent=361 // loop_header_branch
          %613 = sbr.rel (%p611) target = $region369
        $region366: #{report_generation_forward.17} parent=361 // loop_body
          %v617 = vld [vmem:[%s615] sm:%s608]
          %618 = vst [vmem:[%s616] sm:%s608] %v617
        $region367: #{report_generation_forward.17} parent=361 // loop_footer
          %s614 = sadd.s32 1, %s610
        $region368: #{report_generation_forward.17} parent=361 // loop_footer_branch
          %609 = sbr.rel target = $region364
        $region369: #{report_generation_forward.17} parent=361 // loop_exit
          _
      $region362: #{report_generation_forward.17} parent=346 // pred_fallthru
        _
    $region347: #{report_generation_forward.17} parent=1 // pred_fallthru
      _
    // Predicated region
    $region348: #{report_generation_forward.17} parent=1 // pred_check
      %p582 = pneg %p578
    $region349: #{report_generation_forward.17} parent=1 // pred_check_branch
      %584 = sbr.rel (%p582) target = $region351
    $region350: #{report_generation_forward.17} parent=1 // pred_region
      %s585 = sshll.u32 1, 1
      %s586 = ssub.s32 %s585, 1
      loop: start=0, step=1, limit=1
      $region352: #{report_generation_forward.17} parent=350 // loop_pre_header
        _
      $region353: #{report_generation_forward.17} parent=350 // loop_header
        %s588 = sphi 0, %s592
        %p589 = scmp.ge.s32.totalorder %s588, 1
        %s593 = sphi %s574, %s574
        %s594 = sphi %s575, %s575
      $region354: #{report_generation_forward.17} parent=350 // loop_header_branch
        %591 = sbr.rel (%p589) target = $region358
      $region355: #{report_generation_forward.17} parent=350 // loop_body
        %v595 = vld [vmem:[%s593] sm:%s586]
        %596 = vst [vmem:[%s594] sm:%s586] %v595
      $region356: #{report_generation_forward.17} parent=350 // loop_footer
        %s592 = sadd.s32 1, %s588
      $region357: #{report_generation_forward.17} parent=350 // loop_footer_branch
        %587 = sbr.rel target = $region353
      $region358: #{report_generation_forward.17} parent=350 // loop_exit
        _
    $region351: #{report_generation_forward.17} parent=1 // pred_fallthru
      _
    // Predicated region
    $region370: #{report_generation_forward.17} parent=1 // pred_check
      _
    $region371: #{report_generation_forward.17} parent=1 // pred_check_branch
      %621 = sbr.rel (0) target = $region373
    $region372: #{report_generation_forward.17} parent=1 // pred_region
      %622 = vsyncadd %s576, 16
    $region373: #{report_generation_forward.17} parent=1 // pred_fallthru
      _
    %s623 = sld [smem:[#allocation4 + $0xc]]
    %s624 = scalar_lea.vmem %s1, %s623
    %s625 = scalar_lea.vmem [#allocation2], 12
    %s626 = scalar_lea.sflag [#allocation3], 12
    %p628 = scmp.lt.u32.totalorder 1, 8
    %p629 = pneg %p628
    // Predicated region
    $region374: #{report_generation_forward.17} parent=1 // pred_check
      _
    $region375: #{report_generation_forward.17} parent=1 // pred_check_branch
      %631 = sbr.rel (%p628) target = $region377
    $region376: #{report_generation_forward.17} parent=1 // pred_region
      %s647 = sand.u32 1, 7
      %p648 = scmp.eq.s32.totalorder %s647, 0
      %p649 = pneg %p648
      // Predicated region
      $region389: #{report_generation_forward.17} parent=376 // pred_check
        _
      $region390: #{report_generation_forward.17} parent=376 // pred_check_branch
        %651 = sbr.rel (%p648) target = $region392
      $region391: #{report_generation_forward.17} parent=376 // pred_region
        %s652 = sand.u32 1, 7
        %s653 = ssub.s32 1, %s652
        %s654 = scalar_lea.vmem %s624, %s653
        %s655 = ssub.s32 1, %s652
        %s656 = scalar_lea.vmem %s625, %s655 [#allocation2]
        %s657 = sshll.u32 1, %s652
        %s658 = ssub.s32 %s657, 1
        loop: start=0, step=1, limit=1
        $region393: #{report_generation_forward.17} parent=391 // loop_pre_header
          _
        $region394: #{report_generation_forward.17} parent=391 // loop_header
          %s660 = sphi 0, %s664
          %p661 = scmp.ge.s32.totalorder %s660, 1
          %s665 = sphi %s654, %s654
          %s666 = sphi %s656, %s656
        $region395: #{report_generation_forward.17} parent=391 // loop_header_branch
          %663 = sbr.rel (%p661) target = $region399
        $region396: #{report_generation_forward.17} parent=391 // loop_body
          %v667 = vld [vmem:[%s665] sm:%s658]
          %668 = vst [vmem:[%s666] sm:%s658] %v667
        $region397: #{report_generation_forward.17} parent=391 // loop_footer
          %s664 = sadd.s32 1, %s660
        $region398: #{report_generation_forward.17} parent=391 // loop_footer_branch
          %659 = sbr.rel target = $region394
        $region399: #{report_generation_forward.17} parent=391 // loop_exit
          _
      $region392: #{report_generation_forward.17} parent=376 // pred_fallthru
        _
    $region377: #{report_generation_forward.17} parent=1 // pred_fallthru
      _
    // Predicated region
    $region378: #{report_generation_forward.17} parent=1 // pred_check
      %p632 = pneg %p628
    $region379: #{report_generation_forward.17} parent=1 // pred_check_branch
      %634 = sbr.rel (%p632) target = $region381
    $region380: #{report_generation_forward.17} parent=1 // pred_region
      %s635 = sshll.u32 1, 1
      %s636 = ssub.s32 %s635, 1
      loop: start=0, step=1, limit=1
      $region382: #{report_generation_forward.17} parent=380 // loop_pre_header
        _
      $region383: #{report_generation_forward.17} parent=380 // loop_header
        %s638 = sphi 0, %s642
        %p639 = scmp.ge.s32.totalorder %s638, 1
        %s643 = sphi %s624, %s624
        %s644 = sphi %s625, %s625
      $region384: #{report_generation_forward.17} parent=380 // loop_header_branch
        %641 = sbr.rel (%p639) target = $region388
      $region385: #{report_generation_forward.17} parent=380 // loop_body
        %v645 = vld [vmem:[%s643] sm:%s636]
        %646 = vst [vmem:[%s644] sm:%s636] %v645
      $region386: #{report_generation_forward.17} parent=380 // loop_footer
        %s642 = sadd.s32 1, %s638
      $region387: #{report_generation_forward.17} parent=380 // loop_footer_branch
        %637 = sbr.rel target = $region383
      $region388: #{report_generation_forward.17} parent=380 // loop_exit
        _
    $region381: #{report_generation_forward.17} parent=1 // pred_fallthru
      _
    // Predicated region
    $region400: #{report_generation_forward.17} parent=1 // pred_check
      _
    $region401: #{report_generation_forward.17} parent=1 // pred_check_branch
      %671 = sbr.rel (0) target = $region403
    $region402: #{report_generation_forward.17} parent=1 // pred_region
      %672 = vsyncadd %s626, 16
    $region403: #{report_generation_forward.17} parent=1 // pred_fallthru
      _
    %s673 = sld [smem:[#allocation4 + $0xd]]
    %s674 = scalar_lea.vmem %s1, %s673
    %s675 = scalar_lea.vmem [#allocation2], 13
    %s676 = scalar_lea.sflag [#allocation3], 13
    %p678 = scmp.lt.u32.totalorder 1, 8
    %p679 = pneg %p678
    // Predicated region
    $region404: #{report_generation_forward.17} parent=1 // pred_check
      _
    $region405: #{report_generation_forward.17} parent=1 // pred_check_branch
      %681 = sbr.rel (%p678) target = $region407
    $region406: #{report_generation_forward.17} parent=1 // pred_region
      %s697 = sand.u32 1, 7
      %p698 = scmp.eq.s32.totalorder %s697, 0
      %p699 = pneg %p698
      // Predicated region
      $region419: #{report_generation_forward.17} parent=406 // pred_check
        _
      $region420: #{report_generation_forward.17} parent=406 // pred_check_branch
        %701 = sbr.rel (%p698) target = $region422
      $region421: #{report_generation_forward.17} parent=406 // pred_region
        %s702 = sand.u32 1, 7
        %s703 = ssub.s32 1, %s702
        %s704 = scalar_lea.vmem %s674, %s703
        %s705 = ssub.s32 1, %s702
        %s706 = scalar_lea.vmem %s675, %s705 [#allocation2]
        %s707 = sshll.u32 1, %s702
        %s708 = ssub.s32 %s707, 1
        loop: start=0, step=1, limit=1
        $region423: #{report_generation_forward.17} parent=421 // loop_pre_header
          _
        $region424: #{report_generation_forward.17} parent=421 // loop_header
          %s710 = sphi 0, %s714
          %p711 = scmp.ge.s32.totalorder %s710, 1
          %s715 = sphi %s704, %s704
          %s716 = sphi %s706, %s706
        $region425: #{report_generation_forward.17} parent=421 // loop_header_branch
          %713 = sbr.rel (%p711) target = $region429
        $region426: #{report_generation_forward.17} parent=421 // loop_body
          %v717 = vld [vmem:[%s715] sm:%s708]
          %718 = vst [vmem:[%s716] sm:%s708] %v717
        $region427: #{report_generation_forward.17} parent=421 // loop_footer
          %s714 = sadd.s32 1, %s710
        $region428: #{report_generation_forward.17} parent=421 // loop_footer_branch
          %709 = sbr.rel target = $region424
        $region429: #{report_generation_forward.17} parent=421 // loop_exit
          _
      $region422: #{report_generation_forward.17} parent=406 // pred_fallthru
        _
    $region407: #{report_generation_forward.17} parent=1 // pred_fallthru
      _
    // Predicated region
    $region408: #{report_generation_forward.17} parent=1 // pred_check
      %p682 = pneg %p678
    $region409: #{report_generation_forward.17} parent=1 // pred_check_branch
      %684 = sbr.rel (%p682) target = $region411
    $region410: #{report_generation_forward.17} parent=1 // pred_region
      %s685 = sshll.u32 1, 1
      %s686 = ssub.s32 %s685, 1
      loop: start=0, step=1, limit=1
      $region412: #{report_generation_forward.17} parent=410 // loop_pre_header
        _
      $region413: #{report_generation_forward.17} parent=410 // loop_header
        %s688 = sphi 0, %s692
        %p689 = scmp.ge.s32.totalorder %s688, 1
        %s693 = sphi %s674, %s674
        %s694 = sphi %s675, %s675
      $region414: #{report_generation_forward.17} parent=410 // loop_header_branch
        %691 = sbr.rel (%p689) target = $region418
      $region415: #{report_generation_forward.17} parent=410 // loop_body
        %v695 = vld [vmem:[%s693] sm:%s686]
        %696 = vst [vmem:[%s694] sm:%s686] %v695
      $region416: #{report_generation_forward.17} parent=410 // loop_footer
        %s692 = sadd.s32 1, %s688
      $region417: #{report_generation_forward.17} parent=410 // loop_footer_branch
        %687 = sbr.rel target = $region413
      $region418: #{report_generation_forward.17} parent=410 // loop_exit
        _
    $region411: #{report_generation_forward.17} parent=1 // pred_fallthru
      _
    // Predicated region
    $region430: #{report_generation_forward.17} parent=1 // pred_check
      _
    $region431: #{report_generation_forward.17} parent=1 // pred_check_branch
      %721 = sbr.rel (0) target = $region433
    $region432: #{report_generation_forward.17} parent=1 // pred_region
      %722 = vsyncadd %s676, 16
    $region433: #{report_generation_forward.17} parent=1 // pred_fallthru
      _
    %s723 = sld [smem:[#allocation4 + $0xe]]
    %s724 = scalar_lea.vmem %s1, %s723
    %s725 = scalar_lea.vmem [#allocation2], 14
    %s726 = scalar_lea.sflag [#allocation3], 14
    %p728 = scmp.lt.u32.totalorder 1, 8
    %p729 = pneg %p728
    // Predicated region
    $region434: #{report_generation_forward.17} parent=1 // pred_check
      _
    $region435: #{report_generation_forward.17} parent=1 // pred_check_branch
      %731 = sbr.rel (%p728) target = $region437
    $region436: #{report_generation_forward.17} parent=1 // pred_region
      %s747 = sand.u32 1, 7
      %p748 = scmp.eq.s32.totalorder %s747, 0
      %p749 = pneg %p748
      // Predicated region
      $region449: #{report_generation_forward.17} parent=436 // pred_check
        _
      $region450: #{report_generation_forward.17} parent=436 // pred_check_branch
        %751 = sbr.rel (%p748) target = $region452
      $region451: #{report_generation_forward.17} parent=436 // pred_region
        %s752 = sand.u32 1, 7
        %s753 = ssub.s32 1, %s752
        %s754 = scalar_lea.vmem %s724, %s753
        %s755 = ssub.s32 1, %s752
        %s756 = scalar_lea.vmem %s725, %s755 [#allocation2]
        %s757 = sshll.u32 1, %s752
        %s758 = ssub.s32 %s757, 1
        loop: start=0, step=1, limit=1
        $region453: #{report_generation_forward.17} parent=451 // loop_pre_header
          _
        $region454: #{report_generation_forward.17} parent=451 // loop_header
          %s760 = sphi 0, %s764
          %p761 = scmp.ge.s32.totalorder %s760, 1
          %s765 = sphi %s754, %s754
          %s766 = sphi %s756, %s756
        $region455: #{report_generation_forward.17} parent=451 // loop_header_branch
          %763 = sbr.rel (%p761) target = $region459
        $region456: #{report_generation_forward.17} parent=451 // loop_body
          %v767 = vld [vmem:[%s765] sm:%s758]
          %768 = vst [vmem:[%s766] sm:%s758] %v767
        $region457: #{report_generation_forward.17} parent=451 // loop_footer
          %s764 = sadd.s32 1, %s760
        $region458: #{report_generation_forward.17} parent=451 // loop_footer_branch
          %759 = sbr.rel target = $region454
        $region459: #{report_generation_forward.17} parent=451 // loop_exit
          _
      $region452: #{report_generation_forward.17} parent=436 // pred_fallthru
        _
    $region437: #{report_generation_forward.17} parent=1 // pred_fallthru
      _
    // Predicated region
    $region438: #{report_generation_forward.17} parent=1 // pred_check
      %p732 = pneg %p728
    $region439: #{report_generation_forward.17} parent=1 // pred_check_branch
      %734 = sbr.rel (%p732) target = $region441
    $region440: #{report_generation_forward.17} parent=1 // pred_region
      %s735 = sshll.u32 1, 1
      %s736 = ssub.s32 %s735, 1
      loop: start=0, step=1, limit=1
      $region442: #{report_generation_forward.17} parent=440 // loop_pre_header
        _
      $region443: #{report_generation_forward.17} parent=440 // loop_header
        %s738 = sphi 0, %s742
        %p739 = scmp.ge.s32.totalorder %s738, 1
        %s743 = sphi %s724, %s724
        %s744 = sphi %s725, %s725
      $region444: #{report_generation_forward.17} parent=440 // loop_header_branch
        %741 = sbr.rel (%p739) target = $region448
      $region445: #{report_generation_forward.17} parent=440 // loop_body
        %v745 = vld [vmem:[%s743] sm:%s736]
        %746 = vst [vmem:[%s744] sm:%s736] %v745
      $region446: #{report_generation_forward.17} parent=440 // loop_footer
        %s742 = sadd.s32 1, %s738
      $region447: #{report_generation_forward.17} parent=440 // loop_footer_branch
        %737 = sbr.rel target = $region443
      $region448: #{report_generation_forward.17} parent=440 // loop_exit
        _
    $region441: #{report_generation_forward.17} parent=1 // pred_fallthru
      _
    // Predicated region
    $region460: #{report_generation_forward.17} parent=1 // pred_check
      _
    $region461: #{report_generation_forward.17} parent=1 // pred_check_branch
      %771 = sbr.rel (0) target = $region463
    $region462: #{report_generation_forward.17} parent=1 // pred_region
      %772 = vsyncadd %s726, 16
    $region463: #{report_generation_forward.17} parent=1 // pred_fallthru
      _
    %s773 = sld [smem:[#allocation4 + $0xf]]
    %s774 = scalar_lea.vmem %s1, %s773
    %s775 = scalar_lea.vmem [#allocation2], 15
    %s776 = scalar_lea.sflag [#allocation3], 15
    %p778 = scmp.lt.u32.totalorder 1, 8
    %p779 = pneg %p778
    // Predicated region
    $region464: #{report_generation_forward.17} parent=1 // pred_check
      _
    $region465: #{report_generation_forward.17} parent=1 // pred_check_branch
      %781 = sbr.rel (%p778) target = $region467
    $region466: #{report_generation_forward.17} parent=1 // pred_region
      %s797 = sand.u32 1, 7
      %p798 = scmp.eq.s32.totalorder %s797, 0
      %p799 = pneg %p798
      // Predicated region
      $region479: #{report_generation_forward.17} parent=466 // pred_check
        _
      $region480: #{report_generation_forward.17} parent=466 // pred_check_branch
        %801 = sbr.rel (%p798) target = $region482
      $region481: #{report_generation_forward.17} parent=466 // pred_region
        %s802 = sand.u32 1, 7
        %s803 = ssub.s32 1, %s802
        %s804 = scalar_lea.vmem %s774, %s803
        %s805 = ssub.s32 1, %s802
        %s806 = scalar_lea.vmem %s775, %s805 [#allocation2]
        %s807 = sshll.u32 1, %s802
        %s808 = ssub.s32 %s807, 1
        loop: start=0, step=1, limit=1
        $region483: #{report_generation_forward.17} parent=481 // loop_pre_header
          _
        $region484: #{report_generation_forward.17} parent=481 // loop_header
          %s810 = sphi 0, %s814
          %p811 = scmp.ge.s32.totalorder %s810, 1
          %s815 = sphi %s804, %s804
          %s816 = sphi %s806, %s806
        $region485: #{report_generation_forward.17} parent=481 // loop_header_branch
          %813 = sbr.rel (%p811) target = $region489
        $region486: #{report_generation_forward.17} parent=481 // loop_body
          %v817 = vld [vmem:[%s815] sm:%s808]
          %818 = vst [vmem:[%s816] sm:%s808] %v817
        $region487: #{report_generation_forward.17} parent=481 // loop_footer
          %s814 = sadd.s32 1, %s810
        $region488: #{report_generation_forward.17} parent=481 // loop_footer_branch
          %809 = sbr.rel target = $region484
        $region489: #{report_generation_forward.17} parent=481 // loop_exit
          _
      $region482: #{report_generation_forward.17} parent=466 // pred_fallthru
        _
    $region467: #{report_generation_forward.17} parent=1 // pred_fallthru
      _
    // Predicated region
    $region468: #{report_generation_forward.17} parent=1 // pred_check
      %p782 = pneg %p778
    $region469: #{report_generation_forward.17} parent=1 // pred_check_branch
      %784 = sbr.rel (%p782) target = $region471
    $region470: #{report_generation_forward.17} parent=1 // pred_region
      %s785 = sshll.u32 1, 1
      %s786 = ssub.s32 %s785, 1
      loop: start=0, step=1, limit=1
      $region472: #{report_generation_forward.17} parent=470 // loop_pre_header
        _
      $region473: #{report_generation_forward.17} parent=470 // loop_header
        %s788 = sphi 0, %s792
        %p789 = scmp.ge.s32.totalorder %s788, 1
        %s793 = sphi %s774, %s774
        %s794 = sphi %s775, %s775
      $region474: #{report_generation_forward.17} parent=470 // loop_header_branch
        %791 = sbr.rel (%p789) target = $region478
      $region475: #{report_generation_forward.17} parent=470 // loop_body
        %v795 = vld [vmem:[%s793] sm:%s786]
        %796 = vst [vmem:[%s794] sm:%s786] %v795
      $region476: #{report_generation_forward.17} parent=470 // loop_footer
        %s792 = sadd.s32 1, %s788
      $region477: #{report_generation_forward.17} parent=470 // loop_footer_branch
        %787 = sbr.rel target = $region473
      $region478: #{report_generation_forward.17} parent=470 // loop_exit
        _
    $region471: #{report_generation_forward.17} parent=1 // pred_fallthru
      _
    // Predicated region
    $region490: #{report_generation_forward.17} parent=1 // pred_check
      _
    $region491: #{report_generation_forward.17} parent=1 // pred_check_branch
      %821 = sbr.rel (0) target = $region493
    $region492: #{report_generation_forward.17} parent=1 // pred_region
      %822 = vsyncadd %s776, 16
    $region493: #{report_generation_forward.17} parent=1 // pred_fallthru
      _
    %s823 = smul.u32 1, 1
    %s824 = sshll.u32 %s823, 4
    %825 = dma.done [#allocation3], %s824
    %s826 = sshll.u32 %s823, 4
    %827 = dma.done %s76, %s826
    %s828 = sshll.u32 %s823, 4
    %829 = dma.done %s126, %s828
    %s830 = sshll.u32 %s823, 4
    %831 = dma.done %s176, %s830
    %s832 = sshll.u32 %s823, 4
    %833 = dma.done %s226, %s832
    %s834 = sshll.u32 %s823, 4
    %835 = dma.done %s276, %s834
    %s836 = sshll.u32 %s823, 4
    %837 = dma.done %s326, %s836
    %s838 = sshll.u32 %s823, 4
    %839 = dma.done %s376, %s838
    %s840 = sshll.u32 %s823, 4
    %841 = dma.done %s426, %s840
    %s842 = sshll.u32 %s823, 4
    %843 = dma.done %s476, %s842
    %s844 = sshll.u32 %s823, 4
    %845 = dma.done %s526, %s844
    %s846 = sshll.u32 %s823, 4
    %847 = dma.done %s576, %s846
    %s848 = sshll.u32 %s823, 4
    %849 = dma.done %s626, %s848
    %s850 = sshll.u32 %s823, 4
    %851 = dma.done %s676, %s850
    %s852 = sshll.u32 %s823, 4
    %853 = dma.done %s726, %s852
    %s854 = sshll.u32 %s823, 4
    %855 = dma.done %s776, %s854
    %v856 = vld [vmem:[#allocation2] sm:$0xff]
    %v857 = vld [vmem:[#allocation2 + $0x8] sm:$0xff]
    %v858 = vld [vmem:[%s2] sm:$0xff]
    %v859 = vld [vmem:[%s2 + $0x8] sm:$0xff]
    %v860 = vadd.f32 %v856, %v858
    %v861 = vadd.f32 %v857, %v859
    %862 = vst [vmem:[%s3] sm:$0xff] %v860
    %863 = vst [vmem:[%s3 + $0x8] sm:$0xff] %v861
    // Predicated region
    $region494: #{report_generation_forward.17} parent=1 // pred_check
      _
    $region495: #{report_generation_forward.17} parent=1 // pred_check_branch
      %865 = sbr.rel (0) target = $region497
    $region496: #{report_generation_forward.17} parent=1 // pred_region
      _
    $region497: #{report_generation_forward.17} parent=1 // pred_fallthru
      _
    // Predicated region
    $region498: #{report_generation_forward.17} parent=1 // pred_check
      _
    $region499: #{report_generation_forward.17} parent=1 // pred_check_branch
      %867 = sbr.rel (0) target = $region501
    $region500: #{report_generation_forward.17} parent=1 // pred_region
      _
    $region501: #{report_generation_forward.17} parent=1 // pred_fallthru
      _
    %868 = vsyncpa [#allocation5], 1
  %869 = vsyncmov [#allocation3]
  %s870 = vpop.sfrf %869
  %p871 = scmp.eq.s32.totalorder %s870, 0
  %p872 = pneg %p871
  %874 = shalt.err (%p872)
  %s875 = scalar_lea.sflag [#allocation3], 1
  %876 = vsyncmov %s875
  %s877 = vpop.sfrf %876
  %p878 = scmp.eq.s32.totalorder %s877, 0
  %p879 = pneg %p878
  %881 = shalt.err (%p879)
  %s882 = scalar_lea.sflag [#allocation3], 2
  %883 = vsyncmov %s882
  %s884 = vpop.sfrf %883
  %p885 = scmp.eq.s32.totalorder %s884, 0
  %p886 = pneg %p885
  %888 = shalt.err (%p886)
  %s889 = scalar_lea.sflag [#allocation3], 3
  %890 = vsyncmov %s889
  %s891 = vpop.sfrf %890
  %p892 = scmp.eq.s32.totalorder %s891, 0
  %p893 = pneg %p892
  %895 = shalt.err (%p893)
  %s896 = scalar_lea.sflag [#allocation3], 4
  %897 = vsyncmov %s896
  %s898 = vpop.sfrf %897
  %p899 = scmp.eq.s32.totalorder %s898, 0
  %p900 = pneg %p899
  %902 = shalt.err (%p900)
  %s903 = scalar_lea.sflag [#allocation3], 5
  %904 = vsyncmov %s903
  %s905 = vpop.sfrf %904
  %p906 = scmp.eq.s32.totalorder %s905, 0
  %p907 = pneg %p906
  %909 = shalt.err (%p907)
  %s910 = scalar_lea.sflag [#allocation3], 6
  %911 = vsyncmov %s910
  %s912 = vpop.sfrf %911
  %p913 = scmp.eq.s32.totalorder %s912, 0
  %p914 = pneg %p913
  %916 = shalt.err (%p914)
  %s917 = scalar_lea.sflag [#allocation3], 7
  %918 = vsyncmov %s917
  %s919 = vpop.sfrf %918
  %p920 = scmp.eq.s32.totalorder %s919, 0
  %p921 = pneg %p920
  %923 = shalt.err (%p921)
  %s924 = scalar_lea.sflag [#allocation3], 8
  %925 = vsyncmov %s924
  %s926 = vpop.sfrf %925
  %p927 = scmp.eq.s32.totalorder %s926, 0
  %p928 = pneg %p927
  %930 = shalt.err (%p928)
  %s931 = scalar_lea.sflag [#allocation3], 9
  %932 = vsyncmov %s931
  %s933 = vpop.sfrf %932
  %p934 = scmp.eq.s32.totalorder %s933, 0
  %p935 = pneg %p934
  %937 = shalt.err (%p935)
  %s938 = scalar_lea.sflag [#allocation3], 10
  %939 = vsyncmov %s938
  %s940 = vpop.sfrf %939
  %p941 = scmp.eq.s32.totalorder %s940, 0
  %p942 = pneg %p941
  %944 = shalt.err (%p942)
  %s945 = scalar_lea.sflag [#allocation3], 11
  %946 = vsyncmov %s945
  %s947 = vpop.sfrf %946
  %p948 = scmp.eq.s32.totalorder %s947, 0
  %p949 = pneg %p948
  %951 = shalt.err (%p949)
  %s952 = scalar_lea.sflag [#allocation3], 12
  %953 = vsyncmov %s952
  %s954 = vpop.sfrf %953
  %p955 = scmp.eq.s32.totalorder %s954, 0
  %p956 = pneg %p955
  %958 = shalt.err (%p956)
  %s959 = scalar_lea.sflag [#allocation3], 13
  %960 = vsyncmov %s959
  %s961 = vpop.sfrf %960
  %p962 = scmp.eq.s32.totalorder %s961, 0
  %p963 = pneg %p962
  %965 = shalt.err (%p963)
  %s966 = scalar_lea.sflag [#allocation3], 14
  %967 = vsyncmov %s966
  %s968 = vpop.sfrf %967
  %p969 = scmp.eq.s32.totalorder %s968, 0
  %p970 = pneg %p969
  %972 = shalt.err (%p970)
  %s973 = scalar_lea.sflag [#allocation3], 15
  %974 = vsyncmov %s973
  %s975 = vpop.sfrf %974
  %p976 = scmp.eq.s32.totalorder %s975, 0
  %p977 = pneg %p976
  %979 = shalt.err (%p977)

// kernel: report_generation_forward.18
$region0: #{report_generation_forward.18}
  #allocation0 [shape = 'u32[]', space=smem, size = 0x4, offset = 0x4, fixed_abs, tag = 'smem constant byte address 0x4 - core index']
  #allocation1 [shape = 'u32[144,128]{1,0:T(1,128)}', space=vmem, size = 0x12000, scoped, tag = 'internal scratch']
  #allocation2 [shape = 'f32[16,128]{1,0:T(8,128)}', space=vmem, size = 0x2000, scoped, tag = 'scratch operand']
  %s0 = inlined_call_operand.vmem [shape: f32[16,128], index: 0, kind: input, shape index: {}]
  %s1 = inlined_call_operand.vmem [shape: f32[1,128], index: 1, kind: input, shape index: {}]
  %s2 = inlined_call_operand.vmem [shape: f32[1,128], index: 2, kind: input, shape index: {}]
  %s3 = inlined_call_operand.vmem [shape: bf16[128,384], index: 3, kind: input, shape index: {}]
  %s4 = inlined_call_operand.vmem [shape: f32[1,384], index: 4, kind: input, shape index: {}]
  %s5 = inlined_call_operand.vmem [shape: f32[1,384], index: 5, kind: input, shape index: {}]
  %s6 = inlined_call_operand.vmem [shape: f32[16,384], index: 6, kind: output, shape index: {}]
  %s7 = sld [smem:[#allocation0]]
  $region140: #{report_generation_forward.18} parent=0
    _
  %s9 = ssub.s32 1, %s7
  %s10 = scalar_select 0, %s9, %s7
  $region1: #{report_generation_forward.18} parent=0
    #allocation3 [shape = 'u8[65536]{0}', space=vmem, size = 0x10000, scoped, tag = 'input window, operand 3']
    #allocation4 [shape = 'u8[16384]{0}', space=vmem, size = 0x4000, scoped, tag = 'output window, operand 0']
    loop: start=0, step=1, limit=5
    $region2: #{report_generation_forward.18} parent=1 // loop_pre_header
      _
    $region3: #{report_generation_forward.18} parent=1 // loop_header
      %s12 = sphi 0, %s16
      %p13 = scmp.ge.s32.totalorder %s12, 5
      %s19 = sphi 0, %s38
      %s20 = sphi 0, %s34
      %s21 = sphi 0, %s30
      %s22 = sphi 0, %s19
      %s23 = sphi 0, %s20
      %s24 = sphi 0, %s21
      %s25 = sphi 0, %s22
      %s26 = sphi 0, %s23
      %s27 = sphi 0, %s24
      %s43 = sphi 0, %s45
      %s46 = sphi 0, %s43
      %s47 = sphi 0, %s46
      %s63 = sphi 0, %s47
      %s69 = sphi 0, %s71
      %s72 = sphi 0, %s69
      %s73 = sphi 0, %s72
      %s89 = sphi 0, %s73
      %s95 = sphi 0, %s97
      %s98 = sphi 0, %s95
      %s99 = sphi 0, %s98
      %s115 = sphi 0, %s99
      %s123 = sphi 0, %s125
      %s126 = sphi 0, %s123
      %s127 = sphi 0, %s126
      %s143 = sphi 0, %s127
      %s149 = sphi 0, %s151
      %s152 = sphi 0, %s149
      %s153 = sphi 0, %s152
      %s169 = sphi 0, %s153
      %s175 = sphi 0, %s177
      %s178 = sphi 0, %s175
      %s179 = sphi 0, %s178
      %s195 = sphi 0, %s179
      %s203 = sphi 0, %s205
      %s206 = sphi 0, %s203
      %s207 = sphi 0, %s206
      %s223 = sphi 0, %s207
    $region4: #{report_generation_forward.18} parent=1 // loop_header_branch
      %15 = sbr.rel (%p13) target = $region8
    $region5: #{report_generation_forward.18} parent=1 // loop_body
      %s17 = ssub.s32 %s12, 1
      %s18 = ssub.s32 %s12, 2
      %s28 = sadd.s32 1, %s21
      %p29 = scmp.ge.s32.totalorder %s28, 1
      %s30 = scalar_select %p29, 0, %s28
      %s31 = sadd.s32 1, %s20
      %s32 = scalar_select %p29, %s31, %s20
      %p33 = scmp.ge.s32.totalorder %s32, 3
      %s34 = scalar_select %p33, 0, %s32
      %s35 = sadd.s32 1, %s19
      %s36 = scalar_select %p33, %s35, %s19
      %p37 = scmp.ge.s32.totalorder %s36, 1
      %s38 = scalar_select %p37, 0, %s36
      %s39 = ssub.s32 %s19, %s38
      %s40 = ssub.s32 %s21, %s30
      %s41 = sor.u32 %s39, %s40
      %p42 = scmp.eq.s32.totalorder %s41, 0
      %s44 = sadd.s32 %s43, 1
      %s45 = scalar_select %p42, %s43, %s44
      %p48 = pneg %p42
      %p49 = scmp.eq.s32.totalorder %s12, 2
      %p50 = por %p48, %p49
      %p51 = scmp.ne.s32.totalorder %s43, %s46
      %p52 = scmp.eq.s32.totalorder %s12, 0
      %p53 = por %p51, %p52
      %p54 = scmp.ne.s32.totalorder %s43, %s46
      %p55 = scmp.eq.s32.totalorder %s17, 2
      %p56 = por %p54, %p55
      %p57 = scmp.ne.s32.totalorder %s46, %s47
      %p58 = scmp.eq.s32.totalorder %s17, 0
      %p59 = por %p57, %p58
      %p60 = scmp.ne.s32.totalorder %s46, %s47
      %p61 = scmp.eq.s32.totalorder %s18, 2
      %p62 = por %p60, %p61
      %p64 = scmp.ne.s32.totalorder %s47, %s63
      %p65 = scmp.eq.s32.totalorder %s18, 0
      %p66 = por %p64, %p65
      %s67 = ssub.s32 %s21, %s30
      %p68 = scmp.eq.s32.totalorder %s67, 0
      %s70 = sadd.s32 %s69, 1
      %s71 = scalar_select %p68, %s69, %s70
      %p74 = pneg %p68
      %p75 = scmp.eq.s32.totalorder %s12, 2
      %p76 = por %p74, %p75
      %p77 = scmp.ne.s32.totalorder %s69, %s72
      %p78 = scmp.eq.s32.totalorder %s12, 0
      %p79 = por %p77, %p78
      %p80 = scmp.ne.s32.totalorder %s69, %s72
      %p81 = scmp.eq.s32.totalorder %s17, 2
      %p82 = por %p80, %p81
      %p83 = scmp.ne.s32.totalorder %s72, %s73
      %p84 = scmp.eq.s32.totalorder %s17, 0
      %p85 = por %p83, %p84
      %p86 = scmp.ne.s32.totalorder %s72, %s73
      %p87 = scmp.eq.s32.totalorder %s18, 2
      %p88 = por %p86, %p87
      %p90 = scmp.ne.s32.totalorder %s73, %s89
      %p91 = scmp.eq.s32.totalorder %s18, 0
      %p92 = por %p90, %p91
      %s93 = ssub.s32 %s21, %s30
      %p94 = scmp.eq.s32.totalorder %s93, 0
      %s96 = sadd.s32 %s95, 1
      %s97 = scalar_select %p94, %s95, %s96
      %p100 = pneg %p94
      %p101 = scmp.eq.s32.totalorder %s12, 2
      %p102 = por %p100, %p101
      %p103 = scmp.ne.s32.totalorder %s95, %s98
      %p104 = scmp.eq.s32.totalorder %s12, 0
      %p105 = por %p103, %p104
      %p106 = scmp.ne.s32.totalorder %s95, %s98
      %p107 = scmp.eq.s32.totalorder %s17, 2
      %p108 = por %p106, %p107
      %p109 = scmp.ne.s32.totalorder %s98, %s99
      %p110 = scmp.eq.s32.totalorder %s17, 0
      %p111 = por %p109, %p110
      %p112 = scmp.ne.s32.totalorder %s98, %s99
      %p113 = scmp.eq.s32.totalorder %s18, 2
      %p114 = por %p112, %p113
      %p116 = scmp.ne.s32.totalorder %s99, %s115
      %p117 = scmp.eq.s32.totalorder %s18, 0
      %p118 = por %p116, %p117
      %s119 = ssub.s32 %s21, %s30
      %s120 = ssub.s32 %s20, %s34
      %s121 = sor.u32 %s119, %s120
      %p122 = scmp.eq.s32.totalorder %s121, 0
      %s124 = sadd.s32 %s123, 1
      %s125 = scalar_select %p122, %s123, %s124
      %p128 = pneg %p122
      %p129 = scmp.eq.s32.totalorder %s12, 2
      %p130 = por %p128, %p129
      %p131 = scmp.ne.s32.totalorder %s123, %s126
      %p132 = scmp.eq.s32.totalorder %s12, 0
      %p133 = por %p131, %p132
      %p134 = scmp.ne.s32.totalorder %s123, %s126
      %p135 = scmp.eq.s32.totalorder %s17, 2
      %p136 = por %p134, %p135
      %p137 = scmp.ne.s32.totalorder %s126, %s127
      %p138 = scmp.eq.s32.totalorder %s17, 0
      %p139 = por %p137, %p138
      %p140 = scmp.ne.s32.totalorder %s126, %s127
      %p141 = scmp.eq.s32.totalorder %s18, 2
      %p142 = por %p140, %p141
      %p144 = scmp.ne.s32.totalorder %s127, %s143
      %p145 = scmp.eq.s32.totalorder %s18, 0
      %p146 = por %p144, %p145
      %s147 = ssub.s32 %s20, %s34
      %p148 = scmp.eq.s32.totalorder %s147, 0
      %s150 = sadd.s32 %s149, 1
      %s151 = scalar_select %p148, %s149, %s150
      %p154 = pneg %p148
      %p155 = scmp.eq.s32.totalorder %s12, 2
      %p156 = por %p154, %p155
      %p157 = scmp.ne.s32.totalorder %s149, %s152
      %p158 = scmp.eq.s32.totalorder %s12, 0
      %p159 = por %p157, %p158
      %p160 = scmp.ne.s32.totalorder %s149, %s152
      %p161 = scmp.eq.s32.totalorder %s17, 2
      %p162 = por %p160, %p161
      %p163 = scmp.ne.s32.totalorder %s152, %s153
      %p164 = scmp.eq.s32.totalorder %s17, 0
      %p165 = por %p163, %p164
      %p166 = scmp.ne.s32.totalorder %s152, %s153
      %p167 = scmp.eq.s32.totalorder %s18, 2
      %p168 = por %p166, %p167
      %p170 = scmp.ne.s32.totalorder %s153, %s169
      %p171 = scmp.eq.s32.totalorder %s18, 0
      %p172 = por %p170, %p171
      %s173 = ssub.s32 %s20, %s34
      %p174 = scmp.eq.s32.totalorder %s173, 0
      %s176 = sadd.s32 %s175, 1
      %s177 = scalar_select %p174, %s175, %s176
      %p180 = pneg %p174
      %p181 = scmp.eq.s32.totalorder %s12, 2
      %p182 = por %p180, %p181
      %p183 = scmp.ne.s32.totalorder %s175, %s178
      %p184 = scmp.eq.s32.totalorder %s12, 0
      %p185 = por %p183, %p184
      %p186 = scmp.ne.s32.totalorder %s175, %s178
      %p187 = scmp.eq.s32.totalorder %s17, 2
      %p188 = por %p186, %p187
      %p189 = scmp.ne.s32.totalorder %s178, %s179
      %p190 = scmp.eq.s32.totalorder %s17, 0
      %p191 = por %p189, %p190
      %p192 = scmp.ne.s32.totalorder %s178, %s179
      %p193 = scmp.eq.s32.totalorder %s18, 2
      %p194 = por %p192, %p193
      %p196 = scmp.ne.s32.totalorder %s179, %s195
      %p197 = scmp.eq.s32.totalorder %s18, 0
      %p198 = por %p196, %p197
      %s199 = ssub.s32 %s19, %s38
      %s200 = ssub.s32 %s20, %s34
      %s201 = sor.u32 %s199, %s200
      %p202 = scmp.eq.s32.totalorder %s201, 0
      %s204 = sadd.s32 %s203, 1
      %s205 = scalar_select %p202, %s203, %s204
      %p208 = pneg %p202
      %p209 = scmp.eq.s32.totalorder %s12, 2
      %p210 = por %p208, %p209
      %p211 = scmp.ne.s32.totalorder %s203, %s206
      %p212 = scmp.eq.s32.totalorder %s12, 0
      %p213 = por %p211, %p212
      %p214 = scmp.ne.s32.totalorder %s203, %s206
      %p215 = scmp.eq.s32.totalorder %s17, 2
      %p216 = por %p214, %p215
      %p217 = scmp.ne.s32.totalorder %s206, %s207
      %p218 = scmp.eq.s32.totalorder %s17, 0
      %p219 = por %p217, %p218
      %p220 = scmp.ne.s32.totalorder %s206, %s207
      %p221 = scmp.eq.s32.totalorder %s18, 2
      %p222 = por %p220, %p221
      %p224 = scmp.ne.s32.totalorder %s207, %s223
      %p225 = scmp.eq.s32.totalorder %s18, 0
      %p226 = por %p224, %p225
      %p227 = scmp.le.s32.totalorder 1, %s12
      %p228 = scmp.lt.s32.totalorder %s12, 4
      %p229 = pnand %p227, %p228
      %p230 = pneg %p229
      // Predicated region
      $region9: #{report_generation_forward.18} parent=5 // pred_check
        _
      $region10: #{report_generation_forward.18} parent=5 // pred_check_branch
        %232 = sbr.rel (%p229) target = $region12
      $region11: #{report_generation_forward.18} parent=5 // pred_region
        %s233 = ssub.s32 %s12, 1
        // Predicated region
        $region13: #{report_generation_forward.18} parent=11 // pred_check
          %p234 = pneg %p59
        $region14: #{report_generation_forward.18} parent=11 // pred_check_branch
          %236 = sbr.rel (%p234) target = $region16
        $region15: #{report_generation_forward.18} parent=11 // pred_region
          %s237 = smul.u32 2, %s22
          %p238 = scmp.lt.s32.totalorder %s237, 1
          %s239 = scalar_select %p238, %s237, 1
          %p240 = scmp.lt.s32.totalorder %s24, 0
          %s241 = scalar_select %p240, %s24, 0
          %s242 = sadd.s32 %s241, %s239
          %s243 = smul.addr %s242, 8
          %s244 = scalar_lea.vmem %s0, %s243
          %s245 = smul.u32 2, %s22
        $region16: #{report_generation_forward.18} parent=11 // pred_fallthru
          _
        // Predicated region
        $region17: #{report_generation_forward.18} parent=11 // pred_check
          %p246 = pneg %p85
        $region18: #{report_generation_forward.18} parent=11 // pred_check_branch
          %248 = sbr.rel (%p246) target = $region20
        $region19: #{report_generation_forward.18} parent=11 // pred_region
          %p249 = scmp.lt.s32.totalorder %s24, 0
          %s250 = scalar_select %p249, %s24, 0
          %s251 = scalar_lea.vmem %s1, %s250
        $region20: #{report_generation_forward.18} parent=11 // pred_fallthru
          _
        // Predicated region
        $region21: #{report_generation_forward.18} parent=11 // pred_check
          %p252 = pneg %p111
        $region22: #{report_generation_forward.18} parent=11 // pred_check_branch
          %254 = sbr.rel (%p252) target = $region24
        $region23: #{report_generation_forward.18} parent=11 // pred_region
          %p255 = scmp.lt.s32.totalorder %s24, 0
          %s256 = scalar_select %p255, %s24, 0
          %s257 = scalar_lea.vmem %s2, %s256
        $region24: #{report_generation_forward.18} parent=11 // pred_fallthru
          _
      $region12: #{report_generation_forward.18} parent=5 // pred_fallthru
        _
      %p258 = scmp.lt.s32.totalorder %s12, 3
      // Predicated region
      $region25: #{report_generation_forward.18} parent=5 // pred_check
        %p259 = pneg %p258
      $region26: #{report_generation_forward.18} parent=5 // pred_check_branch
        %261 = sbr.rel (%p259) target = $region28
      $region27: #{report_generation_forward.18} parent=5 // pred_region
        // Predicated region
        $region29: #{report_generation_forward.18} parent=27 // pred_check
          %p262 = pneg %p133
        $region30: #{report_generation_forward.18} parent=27 // pred_check_branch
          %264 = sbr.rel (%p262) target = $region32
        $region31: #{report_generation_forward.18} parent=27 // pred_region
          %s265 = sand.u32 %s123, 1
          %s266 = sand.u32 %s123, 1
          %s267 = smul.addr %s266, 64
          %s268 = scalar_lea.vmem [#allocation3], %s267
          %s269 = smul.u32 16, %s21
          %s270 = smul.addr %s269, 3
          %s271 = sadd.s32 %s20, %s270
          %s272 = smul.addr %s271, 4
          %s273 = scalar_lea.vmem %s3, %s272
          // Predicated region
          $region33: #{report_generation_forward.18} parent=31 // pred_check
            _
          $region34: #{report_generation_forward.18} parent=31 // pred_check_branch
            %275 = sbr.rel (0) target = $region36
          $region35: #{report_generation_forward.18} parent=31 // pred_region
            // Predicated region
            $region37: #{report_generation_forward.18} parent=35 // pred_check
              _
            $region38: #{report_generation_forward.18} parent=35 // pred_check_branch
              %277 = sbr.rel target = $region40
            $region39: #{report_generation_forward.18} parent=35 // pred_region
              // Predicated region
              $region52: #{report_generation_forward.18} parent=39 // pred_check
                _
              $region53: #{report_generation_forward.18} parent=39 // pred_check_branch
                %323 = sbr.rel (0) target = $region55
              $region54: #{report_generation_forward.18} parent=39 // pred_region
                loop: start=0, step=1, limit=1
                $region56: #{report_generation_forward.18} parent=54 // loop_pre_header
                  _
                $region57: #{report_generation_forward.18} parent=54 // loop_header
                  %s325 = sphi 0, %s329
                  %p326 = scmp.ge.s32.totalorder %s325, 1
                  %s330 = sphi %s273, %s273
                  %s331 = sphi %s268, %s268
                $region58: #{report_generation_forward.18} parent=54 // loop_header_branch
                  %328 = sbr.rel (%p326) target = $region62
                $region59: #{report_generation_forward.18} parent=54 // loop_body
                  _
                $region60: #{report_generation_forward.18} parent=54 // loop_footer
                  %s329 = sadd.s32 1, %s325
                $region61: #{report_generation_forward.18} parent=54 // loop_footer_branch
                  %324 = sbr.rel target = $region57
                $region62: #{report_generation_forward.18} parent=54 // loop_exit
                  _
                %s333 = ssub.s32 16, 1
                loop: start=0, step=1, limit=1
                $region63: #{report_generation_forward.18} parent=54 // loop_pre_header
                  _
                $region64: #{report_generation_forward.18} parent=54 // loop_header
                  %s335 = sphi 0, %s339
                  %p336 = scmp.ge.s32.totalorder %s335, 1
                  %s340 = sphi %s273, %s273
                  %s341 = sphi %s268, %s268
                $region65: #{report_generation_forward.18} parent=54 // loop_header_branch
                  %338 = sbr.rel (%p336) target = $region69
                $region66: #{report_generation_forward.18} parent=54 // loop_body
                  %v342 = vld [vmem:[%s340] sm:%s333]
                  %343 = vst [vmem:[%s341] sm:%s333] %v342
                  %v344 = vld [vmem:[%s340 + $0xc] sm:%s333]
                  %345 = vst [vmem:[%s341 + $0x4] sm:%s333] %v344
                  %v346 = vld [vmem:[%s340 + $0x18] sm:%s333]
                  %347 = vst [vmem:[%s341 + $0x8] sm:%s333] %v346
                  %v348 = vld [vmem:[%s340 + $0x24] sm:%s333]
                  %349 = vst [vmem:[%s341 + $0xc] sm:%s333] %v348
                  %v350 = vld [vmem:[%s340 + $0x30] sm:%s333]
                  %351 = vst [vmem:[%s341 + $0x10] sm:%s333] %v350
                  %v352 = vld [vmem:[%s340 + $0x3c] sm:%s333]
                  %353 = vst [vmem:[%s341 + $0x14] sm:%s333] %v352
                  %v354 = vld [vmem:[%s340 + $0x48] sm:%s333]
                  %355 = vst [vmem:[%s341 + $0x18] sm:%s333] %v354
                  %v356 = vld [vmem:[%s340 + $0x54] sm:%s333]
                  %357 = vst [vmem:[%s341 + $0x1c] sm:%s333] %v356
                  %v358 = vld [vmem:[%s340 + $0x60] sm:%s333]
                  %359 = vst [vmem:[%s341 + $0x20] sm:%s333] %v358
                  %v360 = vld [vmem:[%s340 + $0x6c] sm:%s333]
                  %361 = vst [vmem:[%s341 + $0x24] sm:%s333] %v360
                  %v362 = vld [vmem:[%s340 + $0x78] sm:%s333]
                  %363 = vst [vmem:[%s341 + $0x28] sm:%s333] %v362
                  %v364 = vld [vmem:[%s340 + $0x84] sm:%s333]
                  %365 = vst [vmem:[%s341 + $0x2c] sm:%s333] %v364
                  %v366 = vld [vmem:[%s340 + $0x90] sm:%s333]
                  %367 = vst [vmem:[%s341 + $0x30] sm:%s333] %v366
                  %v368 = vld [vmem:[%s340 + $0x9c] sm:%s333]
                  %369 = vst [vmem:[%s341 + $0x34] sm:%s333] %v368
                  %v370 = vld [vmem:[%s340 + $0xa8] sm:%s333]
                  %371 = vst [vmem:[%s341 + $0x38] sm:%s333] %v370
                  %v372 = vld [vmem:[%s340 + $0xb4] sm:%s333]
                  %373 = vst [vmem:[%s341 + $0x3c] sm:%s333] %v372
                $region67: #{report_generation_forward.18} parent=54 // loop_footer
                  %s339 = sadd.s32 1, %s335
                $region68: #{report_generation_forward.18} parent=54 // loop_footer_branch
                  %334 = sbr.rel target = $region64
                $region69: #{report_generation_forward.18} parent=54 // loop_exit
                  _
              $region55: #{report_generation_forward.18} parent=39 // pred_fallthru
                _
            $region40: #{report_generation_forward.18} parent=35 // pred_fallthru
              _
            // Predicated region
            $region41: #{report_generation_forward.18} parent=35 // pred_check
              _
            $region42: #{report_generation_forward.18} parent=35 // pred_check_branch
              %279 = sbr.rel (0) target = $region44
            $region43: #{report_generation_forward.18} parent=35 // pred_region
              %s281 = ssub.s32 16, 1
              loop: start=0, step=1, limit=1
              $region45: #{report_generation_forward.18} parent=43 // loop_pre_header
                _
              $region46: #{report_generation_forward.18} parent=43 // loop_header
                %s283 = sphi 0, %s287
                %p284 = scmp.ge.s32.totalorder %s283, 1
                %s288 = sphi %s273, %s273
                %s289 = sphi %s268, %s268
              $region47: #{report_generation_forward.18} parent=43 // loop_header_branch
                %286 = sbr.rel (%p284) target = $region51
              $region48: #{report_generation_forward.18} parent=43 // loop_body
                %v290 = vld [vmem:[%s288] sm:%s281]
                %291 = vst [vmem:[%s289] sm:%s281] %v290
                %v292 = vld [vmem:[%s288 + $0xc] sm:%s281]
                %293 = vst [vmem:[%s289 + $0x4] sm:%s281] %v292
                %v294 = vld [vmem:[%s288 + $0x18] sm:%s281]
                %295 = vst [vmem:[%s289 + $0x8] sm:%s281] %v294
                %v296 = vld [vmem:[%s288 + $0x24] sm:%s281]
                %297 = vst [vmem:[%s289 + $0xc] sm:%s281] %v296
                %v298 = vld [vmem:[%s288 + $0x30] sm:%s281]
                %299 = vst [vmem:[%s289 + $0x10] sm:%s281] %v298
                %v300 = vld [vmem:[%s288 + $0x3c] sm:%s281]
                %301 = vst [vmem:[%s289 + $0x14] sm:%s281] %v300
                %v302 = vld [vmem:[%s288 + $0x48] sm:%s281]
                %303 = vst [vmem:[%s289 + $0x18] sm:%s281] %v302
                %v304 = vld [vmem:[%s288 + $0x54] sm:%s281]
                %305 = vst [vmem:[%s289 + $0x1c] sm:%s281] %v304
                %v306 = vld [vmem:[%s288 + $0x60] sm:%s281]
                %307 = vst [vmem:[%s289 + $0x20] sm:%s281] %v306
                %v308 = vld [vmem:[%s288 + $0x6c] sm:%s281]
                %309 = vst [vmem:[%s289 + $0x24] sm:%s281] %v308
                %v310 = vld [vmem:[%s288 + $0x78] sm:%s281]
                %311 = vst [vmem:[%s289 + $0x28] sm:%s281] %v310
                %v312 = vld [vmem:[%s288 + $0x84] sm:%s281]
                %313 = vst [vmem:[%s289 + $0x2c] sm:%s281] %v312
                %v314 = vld [vmem:[%s288 + $0x90] sm:%s281]
                %315 = vst [vmem:[%s289 + $0x30] sm:%s281] %v314
                %v316 = vld [vmem:[%s288 + $0x9c] sm:%s281]
                %317 = vst [vmem:[%s289 + $0x34] sm:%s281] %v316
                %v318 = vld [vmem:[%s288 + $0xa8] sm:%s281]
                %319 = vst [vmem:[%s289 + $0x38] sm:%s281] %v318
                %v320 = vld [vmem:[%s288 + $0xb4] sm:%s281]
                %321 = vst [vmem:[%s289 + $0x3c] sm:%s281] %v320
              $region49: #{report_generation_forward.18} parent=43 // loop_footer
                %s287 = sadd.s32 1, %s283
              $region50: #{report_generation_forward.18} parent=43 // loop_footer_branch
                %282 = sbr.rel target = $region46
              $region51: #{report_generation_forward.18} parent=43 // loop_exit
                _
            $region44: #{report_generation_forward.18} parent=35 // pred_fallthru
              _
          $region36: #{report_generation_forward.18} parent=31 // pred_fallthru
            _
          %374 = vnop
        $region32: #{report_generation_forward.18} parent=27 // pred_fallthru
          _
        // Predicated region
        $region70: #{report_generation_forward.18} parent=27 // pred_check
          %p375 = pneg %p159
        $region71: #{report_generation_forward.18} parent=27 // pred_check_branch
          %377 = sbr.rel (%p375) target = $region73
        $region72: #{report_generation_forward.18} parent=27 // pred_region
          %p378 = scmp.lt.s32.totalorder %s20, 2
          %s379 = scalar_select %p378, %s20, 2
          %s380 = scalar_lea.vmem %s4, %s379
        $region73: #{report_generation_forward.18} parent=27 // pred_fallthru
          _
        // Predicated region
        $region74: #{report_generation_forward.18} parent=27 // pred_check
          %p381 = pneg %p185
        $region75: #{report_generation_forward.18} parent=27 // pred_check_branch
          %383 = sbr.rel (%p381) target = $region77
        $region76: #{report_generation_forward.18} parent=27 // pred_region
          %p384 = scmp.lt.s32.totalorder %s20, 2
          %s385 = scalar_select %p384, %s20, 2
          %s386 = scalar_lea.vmem %s5, %s385
        $region77: #{report_generation_forward.18} parent=27 // pred_fallthru
          _
      $region28: #{report_generation_forward.18} parent=5 // pred_fallthru
        _
      %p387 = scmp.le.s32.totalorder 1, %s12
      %p388 = scmp.lt.s32.totalorder %s12, 4
      %p389 = pnand %p387, %p388
      %p390 = pneg %p389
      // Predicated region
      $region78: #{report_generation_forward.18} parent=5 // pred_check
        _
      $region79: #{report_generation_forward.18} parent=5 // pred_check_branch
        %392 = sbr.rel (%p389) target = $region81
      $region80: #{report_generation_forward.18} parent=5 // pred_region
        %s393 = ssub.s32 %s12, 1
        %s394 = sand.u32 %s126, 1
        %s395 = sand.u32 %s126, 1
        %s396 = smul.addr %s395, 64
        %s397 = scalar_lea.vmem [#allocation3], %s396
        // Predicated region
        $region82: #{report_generation_forward.18} parent=80 // pred_check
          %p398 = pneg %p139
        $region83: #{report_generation_forward.18} parent=80 // pred_check_branch
          %400 = sbr.rel (%p398) target = $region85
        $region84: #{report_generation_forward.18} parent=80 // pred_region
          _
        $region85: #{report_generation_forward.18} parent=80 // pred_fallthru
          _
        %s401 = smul.u32 2, %s22
        %p402 = scmp.lt.s32.totalorder %s401, 1
        %s403 = scalar_select %p402, %s401, 1
        %p404 = scmp.lt.s32.totalorder %s24, 0
        %s405 = scalar_select %p404, %s24, 0
        %s406 = sadd.s32 %s405, %s403
        %s407 = smul.addr %s406, 8
        %s408 = scalar_lea.vmem %s0, %s407
        %p409 = pneg %p59
        %p410 = pneg %p56
        %p411 = scmp.lt.s32.totalorder %s24, 0
        %s412 = scalar_select %p411, %s24, 0
        %s413 = scalar_lea.vmem %s1, %s412
        %p414 = pneg %p85
        %p415 = pneg %p82
        %p416 = scmp.lt.s32.totalorder %s24, 0
        %s417 = scalar_select %p416, %s24, 0
        %s418 = scalar_lea.vmem %s2, %s417
        %p419 = pneg %p111
        %p420 = pneg %p108
        %s421 = sand.u32 %s126, 1
        %s422 = sand.u32 %s126, 1
        %s423 = smul.addr %s422, 64
        %s424 = scalar_lea.vmem [#allocation3], %s423
        %p425 = pneg %p139
        %p426 = pneg %p136
        %p427 = scmp.lt.s32.totalorder %s23, 2
        %s428 = scalar_select %p427, %s23, 2
        %s429 = scalar_lea.vmem %s4, %s428
        %p430 = pneg %p165
        %p431 = pneg %p162
        %p432 = scmp.lt.s32.totalorder %s23, 2
        %s433 = scalar_select %p432, %s23, 2
        %s434 = scalar_lea.vmem %s5, %s433
        %p435 = pneg %p191
        %p436 = pneg %p188
        %p437 = pneg %p219
        %p438 = pneg %p216
        %s439 = sand.u32 %s206, 1
        %s440 = sand.u32 %s206, 1
        %s441 = smul.addr %s440, 16
        %s442 = scalar_lea.vmem [#allocation4], %s441
        %s443 = smul.u32 2, %s22
        %p444 = scmp.lt.s32.totalorder %s443, 1
        %s445 = scalar_select %p444, %s443, 1
        %p446 = scmp.lt.s32.totalorder %s24, 0
        %s447 = scalar_select %p446, %s24, 0
        %s448 = sadd.s32 %s447, %s445
        %s449 = smul.addr %s448, 8
        %s450 = scalar_lea.vmem %s0, %s449
        %s451 = smul.u32 2, %s22
        %p452 = scmp.lt.s32.totalorder %s24, 0
        %s453 = scalar_select %p452, %s24, 0
        %s454 = scalar_lea.vmem %s1, %s453
        %p455 = scmp.lt.s32.totalorder %s24, 0
        %s456 = scalar_select %p455, %s24, 0
        %s457 = scalar_lea.vmem %s2, %s456
        %s458 = smul.u32 16, %s24
        %p459 = scmp.lt.s32.totalorder %s23, 2
        %s460 = scalar_select %p459, %s23, 2
        %s461 = scalar_lea.vmem %s4, %s460
        %p462 = scmp.lt.s32.totalorder %s23, 2
        %s463 = scalar_select %p462, %s23, 2
        %s464 = scalar_lea.vmem %s5, %s463
        %s465 = smul.u32 2, %s22
        %p467 = scmp.eq.s32.totalorder %s24, 0
        // Predicated region
        $region86: #{report_generation_forward.18} parent=80 // pred_check
          %p468 = pneg %p467
        $region87: #{report_generation_forward.18} parent=80 // pred_check_branch
          %470 = sbr.rel (%p468) target = $region89
        $region88: #{report_generation_forward.18} parent=80 // pred_region
          %471 = vst [vmem:[#allocation2] sm:$0xff] 0.0
          %472 = vst [vmem:[#allocation2 + $0x8] sm:$0xff] 0.0
        $region89: #{report_generation_forward.18} parent=80 // pred_fallthru
          _
        %v473 = vld [vmem:[%s450] sm:$0xff]
        %v474 = vld [vmem:[%s450 + $0x8] sm:$0xff]
        %475 = vadd.xlane.f32.xlu0 %v473
        %v476 = vpop.xlane.xlu0 %475
        %477 = vadd.xlane.f32.xlu0 %v474
        %v478 = vpop.xlane.xlu0 %477
        %v479 = vrcp.pop 128.0
        %v480 = vmul.f32 %v476, %v479
        %v481 = vmul.f32 %v478, %v479
        %v482 = vsub.f32 %v473, %v480
        %v483 = vsub.f32 %v474, %v481
        %v484 = vmul.f32 %v482, %v482
        %v485 = vmul.f32 %v483, %v483
        %486 = vadd.xlane.f32.xlu0 %v484
        %v487 = vpop.xlane.xlu0 %486
        %488 = vadd.xlane.f32.xlu0 %v485
        %v489 = vpop.xlane.xlu0 %488
        %v490 = vmul.f32 %v487, %v479
        %v491 = vmul.f32 %v489, %v479
        %v492 = vadd.f32 %v490, 1e-05
        %v493 = vadd.f32 %v491, 1e-05
        %v494 = vrsqrt.pop %v492
        %v495 = vrsqrt.pop %v493
        %v496 = vmul.f32 %v482, %v494
        %v497 = vmul.f32 %v483, %v495
        %v498 = vld [vmem:[%s454] sm:$0x1]
        %v500 = vlaneseq
        %v501 = vshrl.u32 %v500, 7
        %v502 = vsub.s32 0, %v501
        %v503 = vrot.slane %v498, %v502
        %v505 = vmul.f32 %v496, %v503
        %v506 = vmul.f32 %v497, %v503
        %v507 = vld [vmem:[%s457] sm:$0x1]
        %v509 = vlaneseq
        %v510 = vshrl.u32 %v509, 7
        %v511 = vsub.s32 0, %v510
        %v512 = vrot.slane %v507, %v511
        %v514 = vadd.f32 %v505, %v512
        %v515 = vadd.f32 %v506, %v512
        %v516 = vld [vmem:[#allocation2] sm:$0xff]
        %v517 = vld [vmem:[#allocation2 + $0x8] sm:$0xff]
        %v518 = vpack.c.bf16 %v515, %v514
        %v519 = vld [vmem:[%s397] sm:$0xf]
        %v520 = vld [vmem:[%s397 + $0x4] sm:$0xf]
        %v521 = vld [vmem:[%s397 + $0x8] sm:$0xf]
        %v522 = vld [vmem:[%s397 + $0xc] sm:$0xf]
        %v523 = vld [vmem:[%s397 + $0x10] sm:$0xf]
        %v524 = vld [vmem:[%s397 + $0x14] sm:$0xf]
        %v525 = vld [vmem:[%s397 + $0x18] sm:$0xf]
        %v526 = vld [vmem:[%s397 + $0x1c] sm:$0xf]
        %v527 = vld [vmem:[%s397 + $0x20] sm:$0xf]
        %v528 = vld [vmem:[%s397 + $0x24] sm:$0xf]
        %v529 = vld [vmem:[%s397 + $0x28] sm:$0xf]
        %v530 = vld [vmem:[%s397 + $0x2c] sm:$0xf]
        %v531 = vld [vmem:[%s397 + $0x30] sm:$0xf]
        %v532 = vld [vmem:[%s397 + $0x34] sm:$0xf]
        %v533 = vld [vmem:[%s397 + $0x38] sm:$0xf]
        %v534 = vld [vmem:[%s397 + $0x3c] sm:$0xf]
        %v551 = vunpack.c.l.b16 %v519
        %v552 = vunpack.c.l.b16 %v520
        %v553 = vunpack.c.l.b16 %v521
        %v554 = vunpack.c.l.b16 %v522
        %v555 = vunpack.c.l.b16 %v523
        %v556 = vunpack.c.l.b16 %v524
        %v557 = vunpack.c.l.b16 %v525
        %v558 = vunpack.c.l.b16 %v526
        %v559 = vunpack.c.l.b16 %v527
        %v560 = vunpack.c.l.b16 %v528
        %v561 = vunpack.c.l.b16 %v529
        %v562 = vunpack.c.l.b16 %v530
        %v563 = vunpack.c.l.b16 %v531
        %v564 = vunpack.c.l.b16 %v532
        %v565 = vunpack.c.l.b16 %v533
        %v566 = vunpack.c.l.b16 %v534
        %v567 = vpack.c.b16 %v552, %v551
        %v568 = vpack.c.b16 %v554, %v553
        %v569 = vpack.c.b16 %v556, %v555
        %v570 = vpack.c.b16 %v558, %v557
        %v571 = vpack.c.b16 %v560, %v559
        %v572 = vpack.c.b16 %v562, %v561
        %v573 = vpack.c.b16 %v564, %v563
        %v574 = vpack.c.b16 %v566, %v565
        %583 = vmatprep.subr.bf16.mxu0 0
        %584 = vmatpush1.bf16.msra.mxu0 %v574
        %585 = vmatprep.subr.bf16.mxu0 0
        %586 = vmatpush1.bf16.msra.mxu0 %v573
        %587 = vmatprep.subr.bf16.mxu0 0
        %588 = vmatpush1.bf16.msra.mxu0 %v572
        %589 = vmatprep.subr.bf16.mxu0 0
        %590 = vmatpush1.bf16.msra.mxu0 %v571
        %591 = vmatprep.subr.bf16.mxu0 0
        %592 = vmatpush1.bf16.msra.mxu0 %v570
        %593 = vmatprep.subr.bf16.mxu0 0
        %594 = vmatpush1.bf16.msra.mxu0 %v569
        %595 = vmatprep.subr.bf16.mxu0 0
        %596 = vmatpush1.bf16.msra.mxu0 %v568
        %597 = vmatprep.subr.bf16.mxu0 0
        %598 = vmatpush1.bf16.msra.mxu0 %v567
        %599 = vmatprep.subr.bf16.mxu0 0
        %600 = vmatpush2.bf16.msra.mxu0 0
        %601 = vmatprep.subr.bf16.mxu0 0
        %602 = vmatpush2.bf16.msra.mxu0 0
        %603 = vmatprep.subr.bf16.mxu0 0
        %604 = vmatpush2.bf16.msra.mxu0 0
        %605 = vmatprep.subr.bf16.mxu0 0
        %606 = vmatpush2.bf16.msra.mxu0 0
        %607 = vmatprep.subr.bf16.mxu0 0
        %608 = vmatpush2.bf16.msra.mxu0 0
        %609 = vmatprep.subr.bf16.mxu0 0
        %610 = vmatpush2.bf16.msra.mxu0 0
        %611 = vmatprep.subr.bf16.mxu0 0
        %612 = vmatpush2.bf16.msra.mxu0 0
        %613 = vmatprep.subr.bf16.mxu0 0
        %614 = vmatpush2.bf16.msra.mxu0 0
        %615 = vmatprep.mubr.bf16.mxu0 0
        %616 = vmatmul.mubr.bf16.gmra.mxu0 %v518
        %v617 = vpop.f32.mrf.mxu0
        %v618 = vadd.f32 0.0, %v617
        %v619 = vpop.f32.mrf.mxu0
        %v620 = vpop.f32.mrf.mxu0
        %v621 = vadd.f32 0.0, %v620
        %v622 = vpop.f32.mrf.mxu0
        %623 = vdwg.mxu0
        %v624 = vadd.f32 %v516, %v618
        %v625 = vadd.f32 %v517, %v621
        %626 = vst [vmem:[#allocation2] sm:$0xff] %v624
        %627 = vst [vmem:[#allocation2 + $0x8] sm:$0xff] %v625
        // Predicated region
        $region90: #{report_generation_forward.18} parent=80 // pred_check
          %p628 = pneg %p467
        $region91: #{report_generation_forward.18} parent=80 // pred_check_branch
          %630 = sbr.rel (%p628) target = $region93
        $region92: #{report_generation_forward.18} parent=80 // pred_region
          %v631 = vld [vmem:[#allocation2] sm:$0xff]
          %v632 = vld [vmem:[#allocation2 + $0x8] sm:$0xff]
          %v633 = vld [vmem:[%s461] sm:$0x1]
          %v635 = vlaneseq
          %v636 = vshrl.u32 %v635, 7
          %v637 = vsub.s32 0, %v636
          %v638 = vrot.slane %v633, %v637
          %v640 = vmul.f32 %v631, %v638
          %v641 = vmul.f32 %v632, %v638
          %v642 = vld [vmem:[%s464] sm:$0x1]
          %v644 = vlaneseq
          %v645 = vshrl.u32 %v644, 7
          %v646 = vsub.s32 0, %v645
          %v647 = vrot.slane %v642, %v646
          %v649 = vadd.f32 %v640, %v647
          %v650 = vadd.f32 %v641, %v647
          %651 = vst [vmem:[%s442] sm:$0xff] %v649
          %652 = vst [vmem:[%s442 + $0x8] sm:$0xff] %v650
        $region93: #{report_generation_forward.18} parent=80 // pred_fallthru
          _
        %s653 = sand.u32 %s206, 1
        %s654 = sand.u32 %s206, 1
        %s655 = smul.addr %s654, 16
        %s656 = scalar_lea.vmem [#allocation4], %s655
        // Predicated region
        $region94: #{report_generation_forward.18} parent=80 // pred_check
          %p657 = pneg %p216
        $region95: #{report_generation_forward.18} parent=80 // pred_check_branch
          %659 = sbr.rel (%p657) target = $region97
        $region96: #{report_generation_forward.18} parent=80 // pred_region
          %s660 = smul.u32 2, %s22
          %s661 = smul.addr %s660, 3
          %s662 = sadd.s32 %s23, %s661
          %s663 = smul.addr %s662, 8
          %s664 = scalar_lea.vmem %s6, %s663
          // Predicated region
          $region98: #{report_generation_forward.18} parent=96 // pred_check
            _
          $region99: #{report_generation_forward.18} parent=96 // pred_check_branch
            %666 = sbr.rel (0) target = $region101
          $region100: #{report_generation_forward.18} parent=96 // pred_region
            // Predicated region
            $region102: #{report_generation_forward.18} parent=100 // pred_check
              _
            $region103: #{report_generation_forward.18} parent=100 // pred_check_branch
              %668 = sbr.rel (0) target = $region105
            $region104: #{report_generation_forward.18} parent=100 // pred_region
              // Predicated region
              $region117: #{report_generation_forward.18} parent=104 // pred_check
                _
              $region118: #{report_generation_forward.18} parent=104 // pred_check_branch
                %686 = sbr.rel (0) target = $region120
              $region119: #{report_generation_forward.18} parent=104 // pred_region
                loop: start=0, step=1, limit=1
                $region121: #{report_generation_forward.18} parent=119 // loop_pre_header
                  _
                $region122: #{report_generation_forward.18} parent=119 // loop_header
                  %s688 = sphi 0, %s692
                  %p689 = scmp.ge.s32.totalorder %s688, 1
                  %s693 = sphi %s656, %s656
                  %s694 = sphi %s664, %s664
                $region123: #{report_generation_forward.18} parent=119 // loop_header_branch
                  %691 = sbr.rel (%p689) target = $region127
                $region124: #{report_generation_forward.18} parent=119 // loop_body
                  %v695 = vld [vmem:[%s693] sm:$0xff]
                  %696 = vst [vmem:[%s694] sm:$0xff] %v695
                  %v697 = vld [vmem:[%s693 + $0x8] sm:$0xff]
                  %698 = vst [vmem:[%s694 + $0x18] sm:$0xff] %v697
                $region125: #{report_generation_forward.18} parent=119 // loop_footer
                  %s692 = sadd.s32 1, %s688
                $region126: #{report_generation_forward.18} parent=119 // loop_footer_branch
                  %687 = sbr.rel target = $region122
                $region127: #{report_generation_forward.18} parent=119 // loop_exit
                  _
              $region120: #{report_generation_forward.18} parent=104 // pred_fallthru
                _
              // Predicated region
              $region128: #{report_generation_forward.18} parent=104 // pred_check
                _
              $region129: #{report_generation_forward.18} parent=104 // pred_check_branch
                %700 = sbr.rel target = $region131
              $region130: #{report_generation_forward.18} parent=104 // pred_region
                _
              $region131: #{report_generation_forward.18} parent=104 // pred_fallthru
                _
            $region105: #{report_generation_forward.18} parent=100 // pred_fallthru
              _
            // Predicated region
            $region106: #{report_generation_forward.18} parent=100 // pred_check
              _
            $region107: #{report_generation_forward.18} parent=100 // pred_check_branch
              %670 = sbr.rel target = $region109
            $region108: #{report_generation_forward.18} parent=100 // pred_region
              %s672 = ssub.s32 256, 1
              loop: start=0, step=1, limit=1
              $region110: #{report_generation_forward.18} parent=108 // loop_pre_header
                _
              $region111: #{report_generation_forward.18} parent=108 // loop_header
                %s674 = sphi 0, %s678
                %p675 = scmp.ge.s32.totalorder %s674, 1
                %s679 = sphi %s656, %s656
                %s680 = sphi %s664, %s664
              $region112: #{report_generation_forward.18} parent=108 // loop_header_branch
                %677 = sbr.rel (%p675) target = $region116
              $region113: #{report_generation_forward.18} parent=108 // loop_body
                %v681 = vld [vmem:[%s679] sm:%s672]
                %682 = vst [vmem:[%s680] sm:%s672] %v681
                %v683 = vld [vmem:[%s679 + $0x8] sm:%s672]
                %684 = vst [vmem:[%s680 + $0x18] sm:%s672] %v683
              $region114: #{report_generation_forward.18} parent=108 // loop_footer
                %s678 = sadd.s32 1, %s674
              $region115: #{report_generation_forward.18} parent=108 // loop_footer_branch
                %673 = sbr.rel target = $region111
              $region116: #{report_generation_forward.18} parent=108 // loop_exit
                _
            $region109: #{report_generation_forward.18} parent=100 // pred_fallthru
              _
          $region101: #{report_generation_forward.18} parent=96 // pred_fallthru
            _
          %701 = vnop
        $region97: #{report_generation_forward.18} parent=80 // pred_fallthru
          _
      $region81: #{report_generation_forward.18} parent=5 // pred_fallthru
        _
      %p702 = scmp.le.s32.totalorder 2, %s12
      // Predicated region
      $region132: #{report_generation_forward.18} parent=5 // pred_check
        %p703 = pneg %p702
      $region133: #{report_generation_forward.18} parent=5 // pred_check_branch
        %705 = sbr.rel (%p703) target = $region135
      $region134: #{report_generation_forward.18} parent=5 // pred_region
        %s706 = ssub.s32 %s12, 2
        // Predicated region
        $region136: #{report_generation_forward.18} parent=134 // pred_check
          %p707 = pneg %p222
        $region137: #{report_generation_forward.18} parent=134 // pred_check_branch
          %709 = sbr.rel (%p707) target = $region139
        $region138: #{report_generation_forward.18} parent=134 // pred_region
          %s710 = sand.u32 %s207, 1
          %s711 = sand.u32 %s207, 1
          %s712 = smul.addr %s711, 16
          %s713 = scalar_lea.vmem [#allocation4], %s712
        $region139: #{report_generation_forward.18} parent=134 // pred_fallthru
          _
      $region135: #{report_generation_forward.18} parent=5 // pred_fallthru
        _
    $region6: #{report_generation_forward.18} parent=1 // loop_footer
      %s16 = sadd.s32 1, %s12
    $region7: #{report_generation_forward.18} parent=1 // loop_footer_branch
      %11 = sbr.rel target = $region3
    $region8: #{report_generation_forward.18} parent=1 // loop_exit
      _

// kernel: report_generation_forward.21
$region0: #{report_generation_forward.21}
  #allocation0 [shape = 'u32[]', space=smem, size = 0x4, offset = 0x4, fixed_abs, tag = 'smem constant byte address 0x4 - core index']
  #allocation1 [shape = 'u32[144,128]{1,0:T(1,128)}', space=vmem, size = 0x12000, scoped, tag = 'internal scratch']
  #allocation2 [shape = 'f32[16,128]{1,0:T(8,128)}', space=vmem, size = 0x2000, scoped, tag = 'scratch operand']
  %s0 = inlined_call_operand.vmem [shape: bf16[16,128], index: 0, kind: input, shape index: {}]
  %s1 = inlined_call_operand.vmem [shape: bf16[128,128], index: 1, kind: input, shape index: {}]
  %s2 = inlined_call_operand.vmem [shape: f32[1,128], index: 2, kind: input, shape index: {}]
  %s3 = inlined_call_operand.vmem [shape: f32[1,128], index: 3, kind: input, shape index: {}]
  %s4 = inlined_call_operand.vmem [shape: f32[16,128], index: 4, kind: input, shape index: {}]
  %s5 = inlined_call_operand.vmem [shape: f32[16,128], index: 5, kind: output, shape index: {}]
  %s6 = sld [smem:[#allocation0]]
  $region38: #{report_generation_forward.21} parent=0
    _
  %s8 = ssub.s32 1, %s6
  %s9 = scalar_select 0, %s8, %s6
  // Predicated region
  $region2: #{report_generation_forward.21} parent=0 // pred_check
    _
  $region3: #{report_generation_forward.21} parent=0 // pred_check_branch
    %11 = sbr.rel (0) target = $region5
  $region4: #{report_generation_forward.21} parent=0 // pred_region
    _
  $region5: #{report_generation_forward.21} parent=0 // pred_fallthru
    _
  // Predicated region
  $region6: #{report_generation_forward.21} parent=0 // pred_check
    _
  $region7: #{report_generation_forward.21} parent=0 // pred_check_branch
    %13 = sbr.rel (0) target = $region9
  $region8: #{report_generation_forward.21} parent=0 // pred_region
    _
  $region9: #{report_generation_forward.21} parent=0 // pred_fallthru
    _
  // Predicated region
  $region10: #{report_generation_forward.21} parent=0 // pred_check
    _
  $region11: #{report_generation_forward.21} parent=0 // pred_check_branch
    %15 = sbr.rel (0) target = $region13
  $region12: #{report_generation_forward.21} parent=0 // pred_region
    _
  $region13: #{report_generation_forward.21} parent=0 // pred_fallthru
    _
  // Predicated region
  $region14: #{report_generation_forward.21} parent=0 // pred_check
    _
  $region15: #{report_generation_forward.21} parent=0 // pred_check_branch
    %17 = sbr.rel (0) target = $region17
  $region16: #{report_generation_forward.21} parent=0 // pred_region
    _
  $region17: #{report_generation_forward.21} parent=0 // pred_fallthru
    _
  // Predicated region
  $region18: #{report_generation_forward.21} parent=0 // pred_check
    _
  $region19: #{report_generation_forward.21} parent=0 // pred_check_branch
    %19 = sbr.rel (0) target = $region21
  $region20: #{report_generation_forward.21} parent=0 // pred_region
    _
  $region21: #{report_generation_forward.21} parent=0 // pred_fallthru
    _
  %p21 = scmp.eq.s32.totalorder 0, 0
  // Predicated region
  $region22: #{report_generation_forward.21} parent=0 // pred_check
    %p22 = pneg %p21
  $region23: #{report_generation_forward.21} parent=0 // pred_check_branch
    %24 = sbr.rel (%p22) target = $region25
  $region24: #{report_generation_forward.21} parent=0 // pred_region
    %25 = vst [vmem:[#allocation2] sm:$0xff] 0.0
    %26 = vst [vmem:[#allocation2 + $0x8] sm:$0xff] 0.0
  $region25: #{report_generation_forward.21} parent=0 // pred_fallthru
    _
  %v27 = vld [vmem:[%s0] sm:$0xf]
  %v28 = vld [vmem:[%s0 + $0x4] sm:$0xf]
  %v29 = vld [vmem:[#allocation2] sm:$0xff]
  %v30 = vld [vmem:[#allocation2 + $0x8] sm:$0xff]
  %v31 = vld [vmem:[%s1] sm:$0xf]
  %v32 = vld [vmem:[%s1 + $0x4] sm:$0xf]
  %v33 = vld [vmem:[%s1 + $0x8] sm:$0xf]
  %v34 = vld [vmem:[%s1 + $0xc] sm:$0xf]
  %v35 = vld [vmem:[%s1 + $0x10] sm:$0xf]
  %v36 = vld [vmem:[%s1 + $0x14] sm:$0xf]
  %v37 = vld [vmem:[%s1 + $0x18] sm:$0xf]
  %v38 = vld [vmem:[%s1 + $0x1c] sm:$0xf]
  %v39 = vld [vmem:[%s1 + $0x20] sm:$0xf]
  %v40 = vld [vmem:[%s1 + $0x24] sm:$0xf]
  %v41 = vld [vmem:[%s1 + $0x28] sm:$0xf]
  %v42 = vld [vmem:[%s1 + $0x2c] sm:$0xf]
  %v43 = vld [vmem:[%s1 + $0x30] sm:$0xf]
  %v44 = vld [vmem:[%s1 + $0x34] sm:$0xf]
  %v45 = vld [vmem:[%s1 + $0x38] sm:$0xf]
  %v46 = vld [vmem:[%s1 + $0x3c] sm:$0xf]
  %v49 = vunpack.c.l.b16 %v27
  %v50 = vunpack.c.l.b16 %v28
  %v51 = vpack.c.b16 %v50, %v49
  %v69 = vunpack.c.l.b16 %v31
  %v70 = vunpack.c.l.b16 %v32
  %v71 = vunpack.c.l.b16 %v33
  %v72 = vunpack.c.l.b16 %v34
  %v73 = vunpack.c.l.b16 %v35
  %v74 = vunpack.c.l.b16 %v36
  %v75 = vunpack.c.l.b16 %v37
  %v76 = vunpack.c.l.b16 %v38
  %v77 = vunpack.c.l.b16 %v39
  %v78 = vunpack.c.l.b16 %v40
  %v79 = vunpack.c.l.b16 %v41
  %v80 = vunpack.c.l.b16 %v42
  %v81 = vunpack.c.l.b16 %v43
  %v82 = vunpack.c.l.b16 %v44
  %v83 = vunpack.c.l.b16 %v45
  %v84 = vunpack.c.l.b16 %v46
  %v85 = vpack.c.b16 %v70, %v69
  %v86 = vpack.c.b16 %v72, %v71
  %v87 = vpack.c.b16 %v74, %v73
  %v88 = vpack.c.b16 %v76, %v75
  %v89 = vpack.c.b16 %v78, %v77
  %v90 = vpack.c.b16 %v80, %v79
  %v91 = vpack.c.b16 %v82, %v81
  %v92 = vpack.c.b16 %v84, %v83
  %101 = vmatprep.subr.bf16.mxu0 0
  %102 = vmatpush1.bf16.msra.mxu0 %v92
  %103 = vmatprep.subr.bf16.mxu0 0
  %104 = vmatpush1.bf16.msra.mxu0 %v91
  %105 = vmatprep.subr.bf16.mxu0 0
  %106 = vmatpush1.bf16.msra.mxu0 %v90
  %107 = vmatprep.subr.bf16.mxu0 0
  %108 = vmatpush1.bf16.msra.mxu0 %v89
  %109 = vmatprep.subr.bf16.mxu0 0
  %110 = vmatpush1.bf16.msra.mxu0 %v88
  %111 = vmatprep.subr.bf16.mxu0 0
  %112 = vmatpush1.bf16.msra.mxu0 %v87
  %113 = vmatprep.subr.bf16.mxu0 0
  %114 = vmatpush1.bf16.msra.mxu0 %v86
  %115 = vmatprep.subr.bf16.mxu0 0
  %116 = vmatpush1.bf16.msra.mxu0 %v85
  %117 = vmatprep.subr.bf16.mxu0 0
  %118 = vmatpush2.bf16.msra.mxu0 0
  %119 = vmatprep.subr.bf16.mxu0 0
  %120 = vmatpush2.bf16.msra.mxu0 0
  %121 = vmatprep.subr.bf16.mxu0 0
  %122 = vmatpush2.bf16.msra.mxu0 0
  %123 = vmatprep.subr.bf16.mxu0 0
  %124 = vmatpush2.bf16.msra.mxu0 0
  %125 = vmatprep.subr.bf16.mxu0 0
  %126 = vmatpush2.bf16.msra.mxu0 0
  %127 = vmatprep.subr.bf16.mxu0 0
  %128 = vmatpush2.bf16.msra.mxu0 0
  %129 = vmatprep.subr.bf16.mxu0 0
  %130 = vmatpush2.bf16.msra.mxu0 0
  %131 = vmatprep.subr.bf16.mxu0 0
  %132 = vmatpush2.bf16.msra.mxu0 0
  %133 = vmatprep.mubr.bf16.mxu0 0
  %134 = vmatmul.mubr.bf16.gmra.mxu0 %v51
  %v135 = vpop.f32.mrf.mxu0
  %v136 = vadd.f32 0.0, %v135
  %v137 = vpop.f32.mrf.mxu0
  %v138 = vpop.f32.mrf.mxu0
  %v139 = vadd.f32 0.0, %v138
  %v140 = vpop.f32.mrf.mxu0
  %141 = vdwg.mxu0
  %v142 = vadd.f32 %v29, %v136
  %v143 = vadd.f32 %v30, %v139
  %144 = vst [vmem:[#allocation2] sm:$0xff] %v142
  %145 = vst [vmem:[#allocation2 + $0x8] sm:$0xff] %v143
  // Predicated region
  $region26: #{report_generation_forward.21} parent=0 // pred_check
    %p146 = pneg %p21
  $region27: #{report_generation_forward.21} parent=0 // pred_check_branch
    %148 = sbr.rel (%p146) target = $region29
  $region28: #{report_generation_forward.21} parent=0 // pred_region
    %v149 = vld [vmem:[#allocation2] sm:$0xff]
    %v150 = vld [vmem:[#allocation2 + $0x8] sm:$0xff]
    %v151 = vld [vmem:[%s2] sm:$0x1]
    %v153 = vlaneseq
    %v154 = vshrl.u32 %v153, 7
    %v155 = vsub.s32 0, %v154
    %v156 = vrot.slane %v151, %v155
    %v158 = vmul.f32 %v149, %v156
    %v159 = vmul.f32 %v150, %v156
    %v160 = vld [vmem:[%s3] sm:$0x1]
    %v162 = vlaneseq
    %v163 = vshrl.u32 %v162, 7
    %v164 = vsub.s32 0, %v163
    %v165 = vrot.slane %v160, %v164
    %v167 = vadd.f32 %v158, %v165
    %v168 = vadd.f32 %v159, %v165
    %v169 = vld [vmem:[%s4] sm:$0xff]
    %v170 = vld [vmem:[%s4 + $0x8] sm:$0xff]
    %v171 = vadd.f32 %v167, %v169
    %v172 = vadd.f32 %v168, %v170
    %173 = vst [vmem:[%s5] sm:$0xff] %v171
    %174 = vst [vmem:[%s5 + $0x8] sm:$0xff] %v172
  $region29: #{report_generation_forward.21} parent=0 // pred_fallthru
    _
  // Predicated region
  $region30: #{report_generation_forward.21} parent=0 // pred_check
    _
  $region31: #{report_generation_forward.21} parent=0 // pred_check_branch
    %176 = sbr.rel (0) target = $region33
  $region32: #{report_generation_forward.21} parent=0 // pred_region
    _
  $region33: #{report_generation_forward.21} parent=0 // pred_fallthru
    _
  // Predicated region
  $region34: #{report_generation_forward.21} parent=0 // pred_check
    _
  $region35: #{report_generation_forward.21} parent=0 // pred_check_branch
    %178 = sbr.rel (0) target = $region37
  $region36: #{report_generation_forward.21} parent=0 // pred_region
    _
  $region37: #{report_generation_forward.21} parent=0 // pred_fallthru
    _

// kernel: report_generation_forward.20
$region0: #{report_generation_forward.20}
  #allocation0 [shape = 'u32[]', space=smem, size = 0x4, offset = 0x4, fixed_abs, tag = 'smem constant byte address 0x4 - core index']
  #allocation1 [shape = 'u32[144,128]{1,0:T(1,128)}', space=vmem, size = 0x12000, scoped, tag = 'internal scratch']
  %s0 = inlined_call_operand.vmem [shape: bf16[2,2,8,64], index: 0, kind: input, shape index: {}]
  %s1 = inlined_call_operand.vmem [shape: bf16[2,2,12,64], index: 1, kind: input, shape index: {}]
  %s2 = inlined_call_operand.vmem [shape: bf16[2,2,12,64], index: 2, kind: input, shape index: {}]
  %s3 = inlined_call_operand.vmem [shape: f32[2,1,12], index: 3, kind: input, shape index: {}]
  %s4 = inlined_call_operand.vmem [shape: f32[2,2,8,64], index: 4, kind: output, shape index: {}]
  %s5 = sld [smem:[#allocation0]]
  $region49: #{report_generation_forward.20} parent=0
    _
  %s7 = ssub.s32 1, %s5
  %s8 = scalar_select 0, %s7, %s5
  loop: start=0, step=1, limit=4
  $region2: #{report_generation_forward.20} parent=0 // loop_pre_header
    _
  $region3: #{report_generation_forward.20} parent=0 // loop_header
    %s10 = sphi 0, %s14
    %p11 = scmp.ge.s32.totalorder %s10, 4
    %s20 = sphi 0, %s22
    %s23 = sphi 0, %s20
    %s24 = sphi 0, %s23
    %s40 = sphi 0, %s24
    %s46 = sphi 0, %s48
    %s49 = sphi 0, %s46
    %s50 = sphi 0, %s49
    %s66 = sphi 0, %s50
    %s72 = sphi 0, %s74
    %s75 = sphi 0, %s72
    %s76 = sphi 0, %s75
    %s92 = sphi 0, %s76
    %s98 = sphi 0, %s100
    %s101 = sphi 0, %s98
    %s102 = sphi 0, %s101
    %s118 = sphi 0, %s102
    %s124 = sphi 0, %s126
    %s127 = sphi 0, %s124
    %s128 = sphi 0, %s127
    %s144 = sphi 0, %s128
  $region4: #{report_generation_forward.20} parent=0 // loop_header_branch
    %13 = sbr.rel (%p11) target = $region8
  $region5: #{report_generation_forward.20} parent=0 // loop_body
    %s15 = ssub.s32 %s10, 1
    %s16 = ssub.s32 %s10, 2
    %s17 = sadd.s32 %s10, 1
    %s18 = ssub.s32 %s10, %s17
    %p19 = scmp.eq.s32.totalorder %s18, 0
    %s21 = sadd.s32 %s20, 1
    %s22 = scalar_select %p19, %s20, %s21
    %p25 = pneg %p19
    %p26 = scmp.eq.s32.totalorder %s10, 1
    %p27 = por %p25, %p26
    %p28 = scmp.ne.s32.totalorder %s20, %s23
    %p29 = scmp.eq.s32.totalorder %s10, 0
    %p30 = por %p28, %p29
    %p31 = scmp.ne.s32.totalorder %s20, %s23
    %p32 = scmp.eq.s32.totalorder %s15, 1
    %p33 = por %p31, %p32
    %p34 = scmp.ne.s32.totalorder %s23, %s24
    %p35 = scmp.eq.s32.totalorder %s15, 0
    %p36 = por %p34, %p35
    %p37 = scmp.ne.s32.totalorder %s23, %s24
    %p38 = scmp.eq.s32.totalorder %s16, 1
    %p39 = por %p37, %p38
    %p41 = scmp.ne.s32.totalorder %s24, %s40
    %p42 = scmp.eq.s32.totalorder %s16, 0
    %p43 = por %p41, %p42
    %s44 = ssub.s32 %s10, %s17
    %p45 = scmp.eq.s32.totalorder %s44, 0
    %s47 = sadd.s32 %s46, 1
    %s48 = scalar_select %p45, %s46, %s47
    %p51 = pneg %p45
    %p52 = scmp.eq.s32.totalorder %s10, 1
    %p53 = por %p51, %p52
    %p54 = scmp.ne.s32.totalorder %s46, %s49
    %p55 = scmp.eq.s32.totalorder %s10, 0
    %p56 = por %p54, %p55
    %p57 = scmp.ne.s32.totalorder %s46, %s49
    %p58 = scmp.eq.s32.totalorder %s15, 1
    %p59 = por %p57, %p58
    %p60 = scmp.ne.s32.totalorder %s49, %s50
    %p61 = scmp.eq.s32.totalorder %s15, 0
    %p62 = por %p60, %p61
    %p63 = scmp.ne.s32.totalorder %s49, %s50
    %p64 = scmp.eq.s32.totalorder %s16, 1
    %p65 = por %p63, %p64
    %p67 = scmp.ne.s32.totalorder %s50, %s66
    %p68 = scmp.eq.s32.totalorder %s16, 0
    %p69 = por %p67, %p68
    %s70 = ssub.s32 %s10, %s17
    %p71 = scmp.eq.s32.totalorder %s70, 0
    %s73 = sadd.s32 %s72, 1
    %s74 = scalar_select %p71, %s72, %s73
    %p77 = pneg %p71
    %p78 = scmp.eq.s32.totalorder %s10, 1
    %p79 = por %p77, %p78
    %p80 = scmp.ne.s32.totalorder %s72, %s75
    %p81 = scmp.eq.s32.totalorder %s10, 0
    %p82 = por %p80, %p81
    %p83 = scmp.ne.s32.totalorder %s72, %s75
    %p84 = scmp.eq.s32.totalorder %s15, 1
    %p85 = por %p83, %p84
    %p86 = scmp.ne.s32.totalorder %s75, %s76
    %p87 = scmp.eq.s32.totalorder %s15, 0
    %p88 = por %p86, %p87
    %p89 = scmp.ne.s32.totalorder %s75, %s76
    %p90 = scmp.eq.s32.totalorder %s16, 1
    %p91 = por %p89, %p90
    %p93 = scmp.ne.s32.totalorder %s76, %s92
    %p94 = scmp.eq.s32.totalorder %s16, 0
    %p95 = por %p93, %p94
    %s96 = ssub.s32 %s10, %s17
    %p97 = scmp.eq.s32.totalorder %s96, 0
    %s99 = sadd.s32 %s98, 1
    %s100 = scalar_select %p97, %s98, %s99
    %p103 = pneg %p97
    %p104 = scmp.eq.s32.totalorder %s10, 1
    %p105 = por %p103, %p104
    %p106 = scmp.ne.s32.totalorder %s98, %s101
    %p107 = scmp.eq.s32.totalorder %s10, 0
    %p108 = por %p106, %p107
    %p109 = scmp.ne.s32.totalorder %s98, %s101
    %p110 = scmp.eq.s32.totalorder %s15, 1
    %p111 = por %p109, %p110
    %p112 = scmp.ne.s32.totalorder %s101, %s102
    %p113 = scmp.eq.s32.totalorder %s15, 0
    %p114 = por %p112, %p113
    %p115 = scmp.ne.s32.totalorder %s101, %s102
    %p116 = scmp.eq.s32.totalorder %s16, 1
    %p117 = por %p115, %p116
    %p119 = scmp.ne.s32.totalorder %s102, %s118
    %p120 = scmp.eq.s32.totalorder %s16, 0
    %p121 = por %p119, %p120
    %s122 = ssub.s32 %s10, %s17
    %p123 = scmp.eq.s32.totalorder %s122, 0
    %s125 = sadd.s32 %s124, 1
    %s126 = scalar_select %p123, %s124, %s125
    %p129 = pneg %p123
    %p130 = scmp.eq.s32.totalorder %s10, 1
    %p131 = por %p129, %p130
    %p132 = scmp.ne.s32.totalorder %s124, %s127
    %p133 = scmp.eq.s32.totalorder %s10, 0
    %p134 = por %p132, %p133
    %p135 = scmp.ne.s32.totalorder %s124, %s127
    %p136 = scmp.eq.s32.totalorder %s15, 1
    %p137 = por %p135, %p136
    %p138 = scmp.ne.s32.totalorder %s127, %s128
    %p139 = scmp.eq.s32.totalorder %s15, 0
    %p140 = por %p138, %p139
    %p141 = scmp.ne.s32.totalorder %s127, %s128
    %p142 = scmp.eq.s32.totalorder %s16, 1
    %p143 = por %p141, %p142
    %p145 = scmp.ne.s32.totalorder %s128, %s144
    %p146 = scmp.eq.s32.totalorder %s16, 0
    %p147 = por %p145, %p146
    %p148 = scmp.le.s32.totalorder 1, %s10
    %p149 = scmp.lt.s32.totalorder %s10, 3
    %p150 = pnand %p148, %p149
    %p151 = pneg %p150
    // Predicated region
    $region9: #{report_generation_forward.20} parent=5 // pred_check
      _
    $region10: #{report_generation_forward.20} parent=5 // pred_check_branch
      %153 = sbr.rel (%p150) target = $region12
    $region11: #{report_generation_forward.20} parent=5 // pred_region
      %s154 = ssub.s32 %s10, 1
    $region12: #{report_generation_forward.20} parent=5 // pred_fallthru
      _
    %p155 = scmp.lt.s32.totalorder %s10, 2
    // Predicated region
    $region13: #{report_generation_forward.20} parent=5 // pred_check
      %p156 = pneg %p155
    $region14: #{report_generation_forward.20} parent=5 // pred_check_branch
      %158 = sbr.rel (%p156) target = $region16
    $region15: #{report_generation_forward.20} parent=5 // pred_region
      // Predicated region
      $region17: #{report_generation_forward.20} parent=15 // pred_check
        %p159 = pneg %p30
      $region18: #{report_generation_forward.20} parent=15 // pred_check_branch
        %161 = sbr.rel (%p159) target = $region20
      $region19: #{report_generation_forward.20} parent=15 // pred_region
        %p162 = scmp.lt.s32.totalorder %s10, 1
        %s163 = scalar_select %p162, %s10, 1
        %s164 = smul.addr %s163, 2
        %s165 = smul.addr %s164, 4
        %s166 = scalar_lea.vmem %s0, %s165
      $region20: #{report_generation_forward.20} parent=15 // pred_fallthru
        _
      // Predicated region
      $region21: #{report_generation_forward.20} parent=15 // pred_check
        %p167 = pneg %p56
      $region22: #{report_generation_forward.20} parent=15 // pred_check_branch
        %169 = sbr.rel (%p167) target = $region24
      $region23: #{report_generation_forward.20} parent=15 // pred_region
        %p170 = scmp.lt.s32.totalorder %s10, 1
        %s171 = scalar_select %p170, %s10, 1
        %s172 = smul.addr %s171, 4
        %s173 = smul.addr %s172, 4
        %s174 = scalar_lea.vmem %s1, %s173
      $region24: #{report_generation_forward.20} parent=15 // pred_fallthru
        _
      // Predicated region
      $region25: #{report_generation_forward.20} parent=15 // pred_check
        %p175 = pneg %p82
      $region26: #{report_generation_forward.20} parent=15 // pred_check_branch
        %177 = sbr.rel (%p175) target = $region28
      $region27: #{report_generation_forward.20} parent=15 // pred_region
        %p178 = scmp.lt.s32.totalorder %s10, 1
        %s179 = scalar_select %p178, %s10, 1
        %s180 = smul.addr %s179, 4
        %s181 = smul.addr %s180, 4
        %s182 = scalar_lea.vmem %s2, %s181
      $region28: #{report_generation_forward.20} parent=15 // pred_fallthru
        _
      // Predicated region
      $region29: #{report_generation_forward.20} parent=15 // pred_check
        %p183 = pneg %p108
      $region30: #{report_generation_forward.20} parent=15 // pred_check_branch
        %185 = sbr.rel (%p183) target = $region32
      $region31: #{report_generation_forward.20} parent=15 // pred_region
        %p186 = scmp.lt.s32.totalorder %s10, 1
        %s187 = scalar_select %p186, %s10, 1
        %s188 = scalar_lea.vmem %s3, %s187
      $region32: #{report_generation_forward.20} parent=15 // pred_fallthru
        _
    $region16: #{report_generation_forward.20} parent=5 // pred_fallthru
      _
    %p189 = scmp.le.s32.totalorder 1, %s10
    %p190 = scmp.lt.s32.totalorder %s10, 3
    %p191 = pnand %p189, %p190
    %p192 = pneg %p191
    // Predicated region
    $region33: #{report_generation_forward.20} parent=5 // pred_check
      _
    $region34: #{report_generation_forward.20} parent=5 // pred_check_branch
      %194 = sbr.rel (%p191) target = $region36
    $region35: #{report_generation_forward.20} parent=5 // pred_region
      %s195 = ssub.s32 %s10, 1
      %p196 = scmp.lt.s32.totalorder %s15, 1
      %s197 = scalar_select %p196, %s15, 1
      %s198 = smul.addr %s197, 2
      %s199 = smul.addr %s198, 4
      %s200 = scalar_lea.vmem %s0, %s199
      %p201 = pneg %p36
      %p202 = pneg %p33
      %p203 = scmp.lt.s32.totalorder %s15, 1
      %s204 = scalar_select %p203, %s15, 1
      %s205 = smul.addr %s204, 4
      %s206 = smul.addr %s205, 4
      %s207 = scalar_lea.vmem %s1, %s206
      %p208 = pneg %p62
      %p209 = pneg %p59
      %p210 = scmp.lt.s32.totalorder %s15, 1
      %s211 = scalar_select %p210, %s15, 1
      %s212 = smul.addr %s211, 4
      %s213 = smul.addr %s212, 4
      %s214 = scalar_lea.vmem %s2, %s213
      %p215 = pneg %p88
      %p216 = pneg %p85
      %p217 = scmp.lt.s32.totalorder %s15, 1
      %s218 = scalar_select %p217, %s15, 1
      %s219 = scalar_lea.vmem %s3, %s218
      %p220 = pneg %p114
      %p221 = pneg %p111
      %p222 = pneg %p140
      %p223 = pneg %p137
      %p224 = scmp.lt.s32.totalorder %s15, 1
      %s225 = scalar_select %p224, %s15, 1
      %s226 = smul.addr %s225, 2
      %s227 = smul.addr %s226, 8
      %s228 = scalar_lea.vmem %s4, %s227
      %p229 = scmp.lt.s32.totalorder %s15, 1
      %s230 = scalar_select %p229, %s15, 1
      %s231 = smul.addr %s230, 2
      %s232 = smul.addr %s231, 4
      %s233 = scalar_lea.vmem %s0, %s232
      %p234 = scmp.lt.s32.totalorder %s15, 1
      %s235 = scalar_select %p234, %s15, 1
      %s236 = smul.addr %s235, 4
      %s237 = smul.addr %s236, 4
      %s238 = scalar_lea.vmem %s1, %s237
      %p239 = scmp.lt.s32.totalorder %s15, 1
      %s240 = scalar_select %p239, %s15, 1
      %s241 = smul.addr %s240, 4
      %s242 = smul.addr %s241, 4
      %s243 = scalar_lea.vmem %s2, %s242
      %p244 = scmp.lt.s32.totalorder %s15, 1
      %s245 = scalar_select %p244, %s15, 1
      %s246 = scalar_lea.vmem %s3, %s245
      %p247 = scmp.lt.s32.totalorder %s15, 1
      %s248 = scalar_select %p247, %s15, 1
      %s249 = smul.addr %s248, 2
      %s250 = smul.addr %s249, 8
      %s251 = scalar_lea.vmem %s4, %s250
      %v253 = vld [vmem:[%s233] sm:$0xf]
      %v254 = vld [vmem:[%s233 + $0x4] sm:$0xf]
      %v255 = vld [vmem:[%s238] sm:$0xf]
      %v256 = vld [vmem:[%s238 + $0x4] sm:$0x3]
      %v257 = vld [vmem:[%s238 + $0x8] sm:$0xf]
      %v258 = vld [vmem:[%s238 + $0xc] sm:$0x3]
      %v259 = vld [vmem:[%s243] sm:$0xf]
      %v260 = vld [vmem:[%s243 + $0x4] sm:$0x3]
      %v261 = vld [vmem:[%s243 + $0x8] sm:$0xf]
      %v262 = vld [vmem:[%s243 + $0xc] sm:$0x3]
      %v265 = vunpack.c.l.b16 %v255
      %v266 = vunpack.c.l.b16 %v256
      %v267 = vpack.c.b16 %v266, %v265
      %vm268 = vcmask 523264
      %v270 = vsel %vm268, %v253, 0
      %v273 = vsel %vm268, %v267, 0
      %275 = vmatprep.subr.bf16.mxu0 0
      %276 = vmatpush1.bf16.xpose.msra.mxu0 0
      %277 = vmatprep.subr.bf16.mxu0 0
      %278 = vmatpush1.bf16.xpose.msra.mxu0 0
      %279 = vmatprep.subr.bf16.mxu0 0
      %280 = vmatpush1.bf16.xpose.msra.mxu0 0
      %281 = vmatprep.subr.bf16.mxu0 0
      %282 = vmatpush1.bf16.xpose.msra.mxu0 0
      %283 = vmatprep.subr.bf16.mxu0 0
      %284 = vmatpush1.bf16.xpose.msra.mxu0 0
      %285 = vmatprep.subr.bf16.mxu0 0
      %286 = vmatpush1.bf16.xpose.msra.mxu0 0
      %287 = vmatprep.subr.bf16.mxu0 0
      %288 = vmatpush1.bf16.xpose.msra.mxu0 0
      %289 = vmatprep.subr.bf16.mxu0 0
      %290 = vmatpush1.bf16.xpose.msra.mxu0 %v273
      %291 = vmatprep.subr.bf16.mxu0 0
      %292 = vmatpush2.bf16.xpose.msra.mxu0 0
      %293 = vmatprep.subr.bf16.mxu0 0
      %294 = vmatpush2.bf16.xpose.msra.mxu0 0
      %295 = vmatprep.subr.bf16.mxu0 0
      %296 = vmatpush2.bf16.xpose.msra.mxu0 0
      %297 = vmatprep.subr.bf16.mxu0 0
      %298 = vmatpush2.bf16.xpose.msra.mxu0 0
      %299 = vmatprep.subr.bf16.mxu0 0
      %300 = vmatpush2.bf16.xpose.msra.mxu0 0
      %301 = vmatprep.subr.bf16.mxu0 0
      %302 = vmatpush2.bf16.xpose.msra.mxu0 0
      %303 = vmatprep.subr.bf16.mxu0 0
      %304 = vmatpush2.bf16.xpose.msra.mxu0 0
      %305 = vmatprep.subr.bf16.mxu0 0
      %306 = vmatpush2.bf16.xpose.msra.mxu0 0
      %307 = vmatprep.mubr.bf16.mxu0 0
      %308 = vmatmul.mubr.bf16.gmra.mxu0 %v270
      %v309 = vpop.f32.mrf.mxu0
      %v310 = vadd.f32 0.0, %v309
      %v311 = vpop.f32.mrf.mxu0
      %v312 = vpop.f32.mrf.mxu0
      %v313 = vpop.f32.mrf.mxu0
      %314 = vdwg.mxu0
      %v317 = vunpack.c.l.b16 %v257
      %v318 = vunpack.c.l.b16 %v258
      %v319 = vpack.c.b16 %v318, %v317
      %v321 = vsel %vm268, %v254, 0
      %v324 = vsel %vm268, %v319, 0
      %326 = vmatprep.subr.bf16.mxu0 0
      %327 = vmatpush1.bf16.xpose.msra.mxu0 0
      %328 = vmatprep.subr.bf16.mxu0 0
      %329 = vmatpush1.bf16.xpose.msra.mxu0 0
      %330 = vmatprep.subr.bf16.mxu0 0
      %331 = vmatpush1.bf16.xpose.msra.mxu0 0
      %332 = vmatprep.subr.bf16.mxu0 0
      %333 = vmatpush1.bf16.xpose.msra.mxu0 0
      %334 = vmatprep.subr.bf16.mxu0 0
      %335 = vmatpush1.bf16.xpose.msra.mxu0 0
      %336 = vmatprep.subr.bf16.mxu0 0
      %337 = vmatpush1.bf16.xpose.msra.mxu0 0
      %338 = vmatprep.subr.bf16.mxu0 0
      %339 = vmatpush1.bf16.xpose.msra.mxu0 0
      %340 = vmatprep.subr.bf16.mxu0 0
      %341 = vmatpush1.bf16.xpose.msra.mxu0 %v324
      %342 = vmatprep.subr.bf16.mxu0 0
      %343 = vmatpush2.bf16.xpose.msra.mxu0 0
      %344 = vmatprep.subr.bf16.mxu0 0
      %345 = vmatpush2.bf16.xpose.msra.mxu0 0
      %346 = vmatprep.subr.bf16.mxu0 0
      %347 = vmatpush2.bf16.xpose.msra.mxu0 0
      %348 = vmatprep.subr.bf16.mxu0 0
      %349 = vmatpush2.bf16.xpose.msra.mxu0 0
      %350 = vmatprep.subr.bf16.mxu0 0
      %351 = vmatpush2.bf16.xpose.msra.mxu0 0
      %352 = vmatprep.subr.bf16.mxu0 0
      %353 = vmatpush2.bf16.xpose.msra.mxu0 0
      %354 = vmatprep.subr.bf16.mxu0 0
      %355 = vmatpush2.bf16.xpose.msra.mxu0 0
      %356 = vmatprep.subr.bf16.mxu0 0
      %357 = vmatpush2.bf16.xpose.msra.mxu0 0
      %358 = vmatprep.mubr.bf16.mxu0 0
      %359 = vmatmul.mubr.bf16.gmra.mxu0 %v321
      %v360 = vpop.f32.mrf.mxu0
      %v361 = vadd.f32 0.0, %v360
      %v362 = vpop.f32.mrf.mxu0
      %v363 = vpop.f32.mrf.mxu0
      %v364 = vpop.f32.mrf.mxu0
      %365 = vdwg.mxu0
      %v366 = vmul.f32 %v310, 0.125
      %v367 = vmul.f32 %v361, 0.125
      %v368 = vlaneseq
      %v369 = vshrl.u32 %v368, 7
      %v370 = vlaneseq
      %v371 = vand.u32 %v370, 127
      %v372 = vsub.s32 %v371, 4
      %vm373 = vcmp.le.s32.totalorder %v372, %v369
      %v374 = vld [vmem:[%s246] sm:$0x1]
      %vm375 = vcmp.gt.f32.partialorder %v374, 0.5
      %v376 = vsel %vm375, 1, 0
      %v377 = vlaneseq
      %v378 = vshrl.u32 %v377, 7
      %v379 = vsub.s32 0, %v378
      %v380 = vrot.slane %v376, %v379
      %vm381 = vcmp.eq.s32.totalorder %v380, 1
      %vm382 = vmand %vm373, %vm381
      %v383 = vsel %vm382, 1, 0
      %vm384 = vcmp.eq.s32.totalorder %v383, 1
      %v385 = vsel %vm384, %v366, -1e+30
      %v386 = vsel %vm384, %v367, -1e+30
      %vm387 = vcmask 97280
      %v388 = vsel %vm387, %v385, -inf
      %389 = vmax.xlane.f32.xlu0 %v388
      %v390 = vpop.xlane.xlu0 %389
      %v391 = vsel %vm387, %v386, -inf
      %392 = vmax.xlane.f32.xlu0 %v391
      %v393 = vpop.xlane.xlu0 %392
      %v394 = vsub.f32 %v385, %v390
      %v395 = vsub.f32 %v386, %v393
      %v396 = vmul.f32 %v394, 1.442695
      %v397 = vpow.pop %v396
      %v398 = vmul.f32 %v395, 1.442695
      %v399 = vpow.pop %v398
      %v400 = vsel %vm387, %v397, 0.0
      %401 = vadd.xlane.f32.xlu0 %v400
      %v402 = vpop.xlane.xlu0 %401
      %v403 = vsel %vm387, %v399, 0.0
      %404 = vadd.xlane.f32.xlu0 %v403
      %v405 = vpop.xlane.xlu0 %404
      %v406 = vrcp.pop %v402
      %v407 = vrcp.pop %v405
      %v408 = vmul.f32 %v397, %v406
      %v409 = vmul.f32 %v399, %v407
      %v410 = vpack.c.bf16 %v408, %v408
      %v411 = vpack.c.bf16 %v409, %v409
      %v414 = vunpack.c.l.b16 %v259
      %v415 = vunpack.c.l.b16 %v260
      %v416 = vpack.c.b16 %v415, %v414
      %v418 = vsel %vm387, %v410, 0
      %vm420 = vcmask 1045504
      %v422 = vsel %vm420, %v416, 0
      %424 = vmatprep.subr.bf16.mxu0 0
      %425 = vmatpush1.bf16.msra.mxu0 0
      %426 = vmatprep.subr.bf16.mxu0 0
      %427 = vmatpush1.bf16.msra.mxu0 0
      %428 = vmatprep.subr.bf16.mxu0 0
      %429 = vmatpush1.bf16.msra.mxu0 0
      %430 = vmatprep.subr.bf16.mxu0 0
      %431 = vmatpush1.bf16.msra.mxu0 0
      %432 = vmatprep.subr.bf16.mxu0 0
      %433 = vmatpush1.bf16.msra.mxu0 0
      %434 = vmatprep.subr.bf16.mxu0 0
      %435 = vmatpush1.bf16.msra.mxu0 0
      %436 = vmatprep.subr.bf16.mxu0 0
      %437 = vmatpush1.bf16.msra.mxu0 0
      %438 = vmatprep.subr.bf16.mxu0 0
      %439 = vmatpush1.bf16.msra.mxu0 %v422
      %440 = vmatprep.subr.bf16.mxu0 0
      %441 = vmatpush2.bf16.msra.mxu0 0
      %442 = vmatprep.subr.bf16.mxu0 0
      %443 = vmatpush2.bf16.msra.mxu0 0
      %444 = vmatprep.subr.bf16.mxu0 0
      %445 = vmatpush2.bf16.msra.mxu0 0
      %446 = vmatprep.subr.bf16.mxu0 0
      %447 = vmatpush2.bf16.msra.mxu0 0
      %448 = vmatprep.subr.bf16.mxu0 0
      %449 = vmatpush2.bf16.msra.mxu0 0
      %450 = vmatprep.subr.bf16.mxu0 0
      %451 = vmatpush2.bf16.msra.mxu0 0
      %452 = vmatprep.subr.bf16.mxu0 0
      %453 = vmatpush2.bf16.msra.mxu0 0
      %454 = vmatprep.subr.bf16.mxu0 0
      %455 = vmatpush2.bf16.msra.mxu0 0
      %456 = vmatprep.mubr.bf16.mxu0 0
      %457 = vmatmul.mubr.bf16.gmra.mxu0 %v418
      %v458 = vpop.f32.mrf.mxu0
      %v459 = vadd.f32 0.0, %v458
      %v460 = vpop.f32.mrf.mxu0
      %v461 = vpop.f32.mrf.mxu0
      %v462 = vpop.f32.mrf.mxu0
      %463 = vdwg.mxu0
      %v466 = vunpack.c.l.b16 %v261
      %v467 = vunpack.c.l.b16 %v262
      %v468 = vpack.c.b16 %v467, %v466
      %v470 = vsel %vm387, %v411, 0
      %v473 = vsel %vm420, %v468, 0
      %475 = vmatprep.subr.bf16.mxu0 0
      %476 = vmatpush1.bf16.msra.mxu0 0
      %477 = vmatprep.subr.bf16.mxu0 0
      %478 = vmatpush1.bf16.msra.mxu0 0
      %479 = vmatprep.subr.bf16.mxu0 0
      %480 = vmatpush1.bf16.msra.mxu0 0
      %481 = vmatprep.subr.bf16.mxu0 0
      %482 = vmatpush1.bf16.msra.mxu0 0
      %483 = vmatprep.subr.bf16.mxu0 0
      %484 = vmatpush1.bf16.msra.mxu0 0
      %485 = vmatprep.subr.bf16.mxu0 0
      %486 = vmatpush1.bf16.msra.mxu0 0
      %487 = vmatprep.subr.bf16.mxu0 0
      %488 = vmatpush1.bf16.msra.mxu0 0
      %489 = vmatprep.subr.bf16.mxu0 0
      %490 = vmatpush1.bf16.msra.mxu0 %v473
      %491 = vmatprep.subr.bf16.mxu0 0
      %492 = vmatpush2.bf16.msra.mxu0 0
      %493 = vmatprep.subr.bf16.mxu0 0
      %494 = vmatpush2.bf16.msra.mxu0 0
      %495 = vmatprep.subr.bf16.mxu0 0
      %496 = vmatpush2.bf16.msra.mxu0 0
      %497 = vmatprep.subr.bf16.mxu0 0
      %498 = vmatpush2.bf16.msra.mxu0 0
      %499 = vmatprep.subr.bf16.mxu0 0
      %500 = vmatpush2.bf16.msra.mxu0 0
      %501 = vmatprep.subr.bf16.mxu0 0
      %502 = vmatpush2.bf16.msra.mxu0 0
      %503 = vmatprep.subr.bf16.mxu0 0
      %504 = vmatpush2.bf16.msra.mxu0 0
      %505 = vmatprep.subr.bf16.mxu0 0
      %506 = vmatpush2.bf16.msra.mxu0 0
      %507 = vmatprep.mubr.bf16.mxu0 0
      %508 = vmatmul.mubr.bf16.gmra.mxu0 %v470
      %v509 = vpop.f32.mrf.mxu0
      %v510 = vadd.f32 0.0, %v509
      %v511 = vpop.f32.mrf.mxu0
      %v512 = vpop.f32.mrf.mxu0
      %v513 = vpop.f32.mrf.mxu0
      %514 = vdwg.mxu0
      %515 = vst.msk [vmem:[%s251] sm:$0xff] %vm268, %v459
      %516 = vst.msk [vmem:[%s251 + $0x8] sm:$0xff] %vm268, %v510
      %p517 = scmp.lt.s32.totalorder %s15, 1
      %s518 = scalar_select %p517, %s15, 1
      %s519 = smul.addr %s518, 2
      %s520 = smul.addr %s519, 8
      %s521 = scalar_lea.vmem %s4, %s520
      // Predicated region
      $region37: #{report_generation_forward.20} parent=35 // pred_check
        %p522 = pneg %p137
      $region38: #{report_generation_forward.20} parent=35 // pred_check_branch
        %524 = sbr.rel (%p522) target = $region40
      $region39: #{report_generation_forward.20} parent=35 // pred_region
        _
      $region40: #{report_generation_forward.20} parent=35 // pred_fallthru
        _
    $region36: #{report_generation_forward.20} parent=5 // pred_fallthru
      _
    %p525 = scmp.le.s32.totalorder 2, %s10
    // Predicated region
    $region41: #{report_generation_forward.20} parent=5 // pred_check
      %p526 = pneg %p525
    $region42: #{report_generation_forward.20} parent=5 // pred_check_branch
      %528 = sbr.rel (%p526) target = $region44
    $region43: #{report_generation_forward.20} parent=5 // pred_region
      %s529 = ssub.s32 %s10, 2
      // Predicated region
      $region45: #{report_generation_forward.20} parent=43 // pred_check
        %p530 = pneg %p143
      $region46: #{report_generation_forward.20} parent=43 // pred_check_branch
        %532 = sbr.rel (%p530) target = $region48
      $region47: #{report_generation_forward.20} parent=43 // pred_region
        %p533 = scmp.lt.s32.totalorder %s16, 1
        %s534 = scalar_select %p533, %s16, 1
        %s535 = smul.addr %s534, 2
        %s536 = smul.addr %s535, 8
        %s537 = scalar_lea.vmem %s4, %s536
      $region48: #{report_generation_forward.20} parent=43 // pred_fallthru
        _
    $region44: #{report_generation_forward.20} parent=5 // pred_fallthru
      _
  $region6: #{report_generation_forward.20} parent=0 // loop_footer
    %s14 = sadd.s32 1, %s10
  $region7: #{report_generation_forward.20} parent=0 // loop_footer_branch
    %9 = sbr.rel target = $region3
  $region8: #{report_generation_forward.20} parent=0 // loop_exit
    _

// kernel: report_generation_forward.22
$region0: #{report_generation_forward.22}
  #allocation0 [shape = 'u32[]', space=smem, size = 0x4, offset = 0x4, fixed_abs, tag = 'smem constant byte address 0x4 - core index']
  #allocation1 [shape = 'u32[144,128]{1,0:T(1,128)}', space=vmem, size = 0x12000, scoped, tag = 'internal scratch']
  #allocation2 [shape = 'f32[16,256]{1,0:T(8,128)}', space=vmem, size = 0x4000, scoped, tag = 'scratch operand']
  %s0 = inlined_call_operand.vmem [shape: f32[16,128], index: 0, kind: input, shape index: {}]
  %s1 = inlined_call_operand.vmem [shape: f32[1,128], index: 1, kind: input, shape index: {}]
  %s2 = inlined_call_operand.vmem [shape: f32[1,128], index: 2, kind: input, shape index: {}]
  %s3 = inlined_call_operand.vmem [shape: bf16[128,512], index: 3, kind: input, shape index: {}]
  %s4 = inlined_call_operand.vmem [shape: f32[1,512], index: 4, kind: input, shape index: {}]
  %s5 = inlined_call_operand.vmem [shape: f32[1,512], index: 5, kind: input, shape index: {}]
  %s6 = inlined_call_operand.vmem [shape: f32[16,512], index: 6, kind: output, shape index: {}]
  %s7 = sld [smem:[#allocation0]]
  $region122: #{report_generation_forward.22} parent=0
    _
  %s9 = ssub.s32 1, %s7
  %s10 = scalar_select 0, %s9, %s7
  $region1: #{report_generation_forward.22} parent=0
    #allocation3 [shape = 'u8[131072]{0}', space=vmem, size = 0x20000, scoped, tag = 'input window, operand 3']
    #allocation4 [shape = 'u8[32768]{0}', space=vmem, size = 0x8000, scoped, tag = 'output window, operand 0']
    loop: start=0, step=1, limit=4
    $region2: #{report_generation_forward.22} parent=1 // loop_pre_header
      _
    $region3: #{report_generation_forward.22} parent=1 // loop_header
      %s12 = sphi 0, %s16
      %p13 = scmp.ge.s32.totalorder %s12, 4
      %s19 = sphi 0, %s38
      %s20 = sphi 0, %s34
      %s21 = sphi 0, %s30
      %s22 = sphi 0, %s19
      %s23 = sphi 0, %s20
      %s24 = sphi 0, %s21
      %s25 = sphi 0, %s22
      %s26 = sphi 0, %s23
      %s27 = sphi 0, %s24
      %s43 = sphi 0, %s45
      %s46 = sphi 0, %s43
      %s47 = sphi 0, %s46
      %s63 = sphi 0, %s47
      %s69 = sphi 0, %s71
      %s72 = sphi 0, %s69
      %s73 = sphi 0, %s72
      %s89 = sphi 0, %s73
      %s95 = sphi 0, %s97
      %s98 = sphi 0, %s95
      %s99 = sphi 0, %s98
      %s115 = sphi 0, %s99
      %s123 = sphi 0, %s125
      %s126 = sphi 0, %s123
      %s127 = sphi 0, %s126
      %s143 = sphi 0, %s127
      %s149 = sphi 0, %s151
      %s152 = sphi 0, %s149
      %s153 = sphi 0, %s152
      %s169 = sphi 0, %s153
      %s175 = sphi 0, %s177
      %s178 = sphi 0, %s175
      %s179 = sphi 0, %s178
      %s195 = sphi 0, %s179
      %s203 = sphi 0, %s205
      %s206 = sphi 0, %s203
      %s207 = sphi 0, %s206
      %s223 = sphi 0, %s207
    $region4: #{report_generation_forward.22} parent=1 // loop_header_branch
      %15 = sbr.rel (%p13) target = $region8
    $region5: #{report_generation_forward.22} parent=1 // loop_body
      %s17 = ssub.s32 %s12, 1
      %s18 = ssub.s32 %s12, 2
      %s28 = sadd.s32 1, %s21
      %p29 = scmp.ge.s32.totalorder %s28, 1
      %s30 = scalar_select %p29, 0, %s28
      %s31 = sadd.s32 1, %s20
      %s32 = scalar_select %p29, %s31, %s20
      %p33 = scmp.ge.s32.totalorder %s32, 2
      %s34 = scalar_select %p33, 0, %s32
      %s35 = sadd.s32 1, %s19
      %s36 = scalar_select %p33, %s35, %s19
      %p37 = scmp.ge.s32.totalorder %s36, 1
      %s38 = scalar_select %p37, 0, %s36
      %s39 = ssub.s32 %s19, %s38
      %s40 = ssub.s32 %s21, %s30
      %s41 = sor.u32 %s39, %s40
      %p42 = scmp.eq.s32.totalorder %s41, 0
      %s44 = sadd.s32 %s43, 1
      %s45 = scalar_select %p42, %s43, %s44
      %p48 = pneg %p42
      %p49 = scmp.eq.s32.totalorder %s12, 1
      %p50 = por %p48, %p49
      %p51 = scmp.ne.s32.totalorder %s43, %s46
      %p52 = scmp.eq.s32.totalorder %s12, 0
      %p53 = por %p51, %p52
      %p54 = scmp.ne.s32.totalorder %s43, %s46
      %p55 = scmp.eq.s32.totalorder %s17, 1
      %p56 = por %p54, %p55
      %p57 = scmp.ne.s32.totalorder %s46, %s47
      %p58 = scmp.eq.s32.totalorder %s17, 0
      %p59 = por %p57, %p58
      %p60 = scmp.ne.s32.totalorder %s46, %s47
      %p61 = scmp.eq.s32.totalorder %s18, 1
      %p62 = por %p60, %p61
      %p64 = scmp.ne.s32.totalorder %s47, %s63
      %p65 = scmp.eq.s32.totalorder %s18, 0
      %p66 = por %p64, %p65
      %s67 = ssub.s32 %s21, %s30
      %p68 = scmp.eq.s32.totalorder %s67, 0
      %s70 = sadd.s32 %s69, 1
      %s71 = scalar_select %p68, %s69, %s70
      %p74 = pneg %p68
      %p75 = scmp.eq.s32.totalorder %s12, 1
      %p76 = por %p74, %p75
      %p77 = scmp.ne.s32.totalorder %s69, %s72
      %p78 = scmp.eq.s32.totalorder %s12, 0
      %p79 = por %p77, %p78
      %p80 = scmp.ne.s32.totalorder %s69, %s72
      %p81 = scmp.eq.s32.totalorder %s17, 1
      %p82 = por %p80, %p81
      %p83 = scmp.ne.s32.totalorder %s72, %s73
      %p84 = scmp.eq.s32.totalorder %s17, 0
      %p85 = por %p83, %p84
      %p86 = scmp.ne.s32.totalorder %s72, %s73
      %p87 = scmp.eq.s32.totalorder %s18, 1
      %p88 = por %p86, %p87
      %p90 = scmp.ne.s32.totalorder %s73, %s89
      %p91 = scmp.eq.s32.totalorder %s18, 0
      %p92 = por %p90, %p91
      %s93 = ssub.s32 %s21, %s30
      %p94 = scmp.eq.s32.totalorder %s93, 0
      %s96 = sadd.s32 %s95, 1
      %s97 = scalar_select %p94, %s95, %s96
      %p100 = pneg %p94
      %p101 = scmp.eq.s32.totalorder %s12, 1
      %p102 = por %p100, %p101
      %p103 = scmp.ne.s32.totalorder %s95, %s98
      %p104 = scmp.eq.s32.totalorder %s12, 0
      %p105 = por %p103, %p104
      %p106 = scmp.ne.s32.totalorder %s95, %s98
      %p107 = scmp.eq.s32.totalorder %s17, 1
      %p108 = por %p106, %p107
      %p109 = scmp.ne.s32.totalorder %s98, %s99
      %p110 = scmp.eq.s32.totalorder %s17, 0
      %p111 = por %p109, %p110
      %p112 = scmp.ne.s32.totalorder %s98, %s99
      %p113 = scmp.eq.s32.totalorder %s18, 1
      %p114 = por %p112, %p113
      %p116 = scmp.ne.s32.totalorder %s99, %s115
      %p117 = scmp.eq.s32.totalorder %s18, 0
      %p118 = por %p116, %p117
      %s119 = ssub.s32 %s21, %s30
      %s120 = ssub.s32 %s20, %s34
      %s121 = sor.u32 %s119, %s120
      %p122 = scmp.eq.s32.totalorder %s121, 0
      %s124 = sadd.s32 %s123, 1
      %s125 = scalar_select %p122, %s123, %s124
      %p128 = pneg %p122
      %p129 = scmp.eq.s32.totalorder %s12, 1
      %p130 = por %p128, %p129
      %p131 = scmp.ne.s32.totalorder %s123, %s126
      %p132 = scmp.eq.s32.totalorder %s12, 0
      %p133 = por %p131, %p132
      %p134 = scmp.ne.s32.totalorder %s123, %s126
      %p135 = scmp.eq.s32.totalorder %s17, 1
      %p136 = por %p134, %p135
      %p137 = scmp.ne.s32.totalorder %s126, %s127
      %p138 = scmp.eq.s32.totalorder %s17, 0
      %p139 = por %p137, %p138
      %p140 = scmp.ne.s32.totalorder %s126, %s127
      %p141 = scmp.eq.s32.totalorder %s18, 1
      %p142 = por %p140, %p141
      %p144 = scmp.ne.s32.totalorder %s127, %s143
      %p145 = scmp.eq.s32.totalorder %s18, 0
      %p146 = por %p144, %p145
      %s147 = ssub.s32 %s20, %s34
      %p148 = scmp.eq.s32.totalorder %s147, 0
      %s150 = sadd.s32 %s149, 1
      %s151 = scalar_select %p148, %s149, %s150
      %p154 = pneg %p148
      %p155 = scmp.eq.s32.totalorder %s12, 1
      %p156 = por %p154, %p155
      %p157 = scmp.ne.s32.totalorder %s149, %s152
      %p158 = scmp.eq.s32.totalorder %s12, 0
      %p159 = por %p157, %p158
      %p160 = scmp.ne.s32.totalorder %s149, %s152
      %p161 = scmp.eq.s32.totalorder %s17, 1
      %p162 = por %p160, %p161
      %p163 = scmp.ne.s32.totalorder %s152, %s153
      %p164 = scmp.eq.s32.totalorder %s17, 0
      %p165 = por %p163, %p164
      %p166 = scmp.ne.s32.totalorder %s152, %s153
      %p167 = scmp.eq.s32.totalorder %s18, 1
      %p168 = por %p166, %p167
      %p170 = scmp.ne.s32.totalorder %s153, %s169
      %p171 = scmp.eq.s32.totalorder %s18, 0
      %p172 = por %p170, %p171
      %s173 = ssub.s32 %s20, %s34
      %p174 = scmp.eq.s32.totalorder %s173, 0
      %s176 = sadd.s32 %s175, 1
      %s177 = scalar_select %p174, %s175, %s176
      %p180 = pneg %p174
      %p181 = scmp.eq.s32.totalorder %s12, 1
      %p182 = por %p180, %p181
      %p183 = scmp.ne.s32.totalorder %s175, %s178
      %p184 = scmp.eq.s32.totalorder %s12, 0
      %p185 = por %p183, %p184
      %p186 = scmp.ne.s32.totalorder %s175, %s178
      %p187 = scmp.eq.s32.totalorder %s17, 1
      %p188 = por %p186, %p187
      %p189 = scmp.ne.s32.totalorder %s178, %s179
      %p190 = scmp.eq.s32.totalorder %s17, 0
      %p191 = por %p189, %p190
      %p192 = scmp.ne.s32.totalorder %s178, %s179
      %p193 = scmp.eq.s32.totalorder %s18, 1
      %p194 = por %p192, %p193
      %p196 = scmp.ne.s32.totalorder %s179, %s195
      %p197 = scmp.eq.s32.totalorder %s18, 0
      %p198 = por %p196, %p197
      %s199 = ssub.s32 %s19, %s38
      %s200 = ssub.s32 %s20, %s34
      %s201 = sor.u32 %s199, %s200
      %p202 = scmp.eq.s32.totalorder %s201, 0
      %s204 = sadd.s32 %s203, 1
      %s205 = scalar_select %p202, %s203, %s204
      %p208 = pneg %p202
      %p209 = scmp.eq.s32.totalorder %s12, 1
      %p210 = por %p208, %p209
      %p211 = scmp.ne.s32.totalorder %s203, %s206
      %p212 = scmp.eq.s32.totalorder %s12, 0
      %p213 = por %p211, %p212
      %p214 = scmp.ne.s32.totalorder %s203, %s206
      %p215 = scmp.eq.s32.totalorder %s17, 1
      %p216 = por %p214, %p215
      %p217 = scmp.ne.s32.totalorder %s206, %s207
      %p218 = scmp.eq.s32.totalorder %s17, 0
      %p219 = por %p217, %p218
      %p220 = scmp.ne.s32.totalorder %s206, %s207
      %p221 = scmp.eq.s32.totalorder %s18, 1
      %p222 = por %p220, %p221
      %p224 = scmp.ne.s32.totalorder %s207, %s223
      %p225 = scmp.eq.s32.totalorder %s18, 0
      %p226 = por %p224, %p225
      %p227 = scmp.le.s32.totalorder 1, %s12
      %p228 = scmp.lt.s32.totalorder %s12, 3
      %p229 = pnand %p227, %p228
      %p230 = pneg %p229
      // Predicated region
      $region9: #{report_generation_forward.22} parent=5 // pred_check
        _
      $region10: #{report_generation_forward.22} parent=5 // pred_check_branch
        %232 = sbr.rel (%p229) target = $region12
      $region11: #{report_generation_forward.22} parent=5 // pred_region
        %s233 = ssub.s32 %s12, 1
        // Predicated region
        $region13: #{report_generation_forward.22} parent=11 // pred_check
          %p234 = pneg %p59
        $region14: #{report_generation_forward.22} parent=11 // pred_check_branch
          %236 = sbr.rel (%p234) target = $region16
        $region15: #{report_generation_forward.22} parent=11 // pred_region
          %s237 = smul.u32 2, %s22
          %p238 = scmp.lt.s32.totalorder %s237, 1
          %s239 = scalar_select %p238, %s237, 1
          %p240 = scmp.lt.s32.totalorder %s24, 0
          %s241 = scalar_select %p240, %s24, 0
          %s242 = sadd.s32 %s241, %s239
          %s243 = smul.addr %s242, 8
          %s244 = scalar_lea.vmem %s0, %s243
          %s245 = smul.u32 2, %s22
        $region16: #{report_generation_forward.22} parent=11 // pred_fallthru
          _
        // Predicated region
        $region17: #{report_generation_forward.22} parent=11 // pred_check
          %p246 = pneg %p85
        $region18: #{report_generation_forward.22} parent=11 // pred_check_branch
          %248 = sbr.rel (%p246) target = $region20
        $region19: #{report_generation_forward.22} parent=11 // pred_region
          %p249 = scmp.lt.s32.totalorder %s24, 0
          %s250 = scalar_select %p249, %s24, 0
          %s251 = scalar_lea.vmem %s1, %s250
        $region20: #{report_generation_forward.22} parent=11 // pred_fallthru
          _
        // Predicated region
        $region21: #{report_generation_forward.22} parent=11 // pred_check
          %p252 = pneg %p111
        $region22: #{report_generation_forward.22} parent=11 // pred_check_branch
          %254 = sbr.rel (%p252) target = $region24
        $region23: #{report_generation_forward.22} parent=11 // pred_region
          %p255 = scmp.lt.s32.totalorder %s24, 0
          %s256 = scalar_select %p255, %s24, 0
          %s257 = scalar_lea.vmem %s2, %s256
        $region24: #{report_generation_forward.22} parent=11 // pred_fallthru
          _
      $region12: #{report_generation_forward.22} parent=5 // pred_fallthru
        _
      %p258 = scmp.lt.s32.totalorder %s12, 2
      // Predicated region
      $region25: #{report_generation_forward.22} parent=5 // pred_check
        %p259 = pneg %p258
      $region26: #{report_generation_forward.22} parent=5 // pred_check_branch
        %261 = sbr.rel (%p259) target = $region28
      $region27: #{report_generation_forward.22} parent=5 // pred_region
        // Predicated region
        $region29: #{report_generation_forward.22} parent=27 // pred_check
          %p262 = pneg %p133
        $region30: #{report_generation_forward.22} parent=27 // pred_check_branch
          %264 = sbr.rel (%p262) target = $region32
        $region31: #{report_generation_forward.22} parent=27 // pred_region
          %s265 = sand.u32 %s123, 1
          %s266 = sand.u32 %s123, 1
          %s267 = smul.addr %s266, 128
          %s268 = scalar_lea.vmem [#allocation3], %s267
          %s269 = smul.u32 16, %s21
          %s270 = smul.u32 2, %s20
          %s271 = smul.addr %s269, 4
          %s272 = sadd.s32 %s270, %s271
          %s273 = smul.addr %s272, 4
          %s274 = scalar_lea.vmem %s3, %s273
          // Predicated region
          $region33: #{report_generation_forward.22} parent=31 // pred_check
            _
          $region34: #{report_generation_forward.22} parent=31 // pred_check_branch
            %276 = sbr.rel (0) target = $region36
          $region35: #{report_generation_forward.22} parent=31 // pred_region
            // Predicated region
            $region37: #{report_generation_forward.22} parent=35 // pred_check
              _
            $region38: #{report_generation_forward.22} parent=35 // pred_check_branch
              %278 = sbr.rel (0) target = $region40
            $region39: #{report_generation_forward.22} parent=35 // pred_region
              // Predicated region
              $region52: #{report_generation_forward.22} parent=39 // pred_check
                _
              $region53: #{report_generation_forward.22} parent=39 // pred_check_branch
                %324 = sbr.rel (0) target = $region55
              $region54: #{report_generation_forward.22} parent=39 // pred_region
                loop: start=0, step=1, limit=1
                $region56: #{report_generation_forward.22} parent=54 // loop_pre_header
                  _
                $region57: #{report_generation_forward.22} parent=54 // loop_header
                  %s326 = sphi 0, %s330
                  %p327 = scmp.ge.s32.totalorder %s326, 1
                  %s331 = sphi %s274, %s274
                  %s332 = sphi %s268, %s268
                $region58: #{report_generation_forward.22} parent=54 // loop_header_branch
                  %329 = sbr.rel (%p327) target = $region62
                $region59: #{report_generation_forward.22} parent=54 // loop_body
                  %v333 = vld [vmem:[%s331] sm:$0xff]
                  %334 = vst [vmem:[%s332] sm:$0xff] %v333
                  %v335 = vld [vmem:[%s331 + $0x10] sm:$0xff]
                  %336 = vst [vmem:[%s332 + $0x8] sm:$0xff] %v335
                  %v337 = vld [vmem:[%s331 + $0x20] sm:$0xff]
                  %338 = vst [vmem:[%s332 + $0x10] sm:$0xff] %v337
                  %v339 = vld [vmem:[%s331 + $0x30] sm:$0xff]
                  %340 = vst [vmem:[%s332 + $0x18] sm:$0xff] %v339
                  %v341 = vld [vmem:[%s331 + $0x40] sm:$0xff]
                  %342 = vst [vmem:[%s332 + $0x20] sm:$0xff] %v341
                  %v343 = vld [vmem:[%s331 + $0x50] sm:$0xff]
                  %344 = vst [vmem:[%s332 + $0x28] sm:$0xff] %v343
                  %v345 = vld [vmem:[%s331 + $0x60] sm:$0xff]
                  %346 = vst [vmem:[%s332 + $0x30] sm:$0xff] %v345
                  %v347 = vld [vmem:[%s331 + $0x70] sm:$0xff]
                  %348 = vst [vmem:[%s332 + $0x38] sm:$0xff] %v347
                  %v349 = vld [vmem:[%s331 + $0x80] sm:$0xff]
                  %350 = vst [vmem:[%s332 + $0x40] sm:$0xff] %v349
                  %v351 = vld [vmem:[%s331 + $0x90] sm:$0xff]
                  %352 = vst [vmem:[%s332 + $0x48] sm:$0xff] %v351
                  %v353 = vld [vmem:[%s331 + $0xa0] sm:$0xff]
                  %354 = vst [vmem:[%s332 + $0x50] sm:$0xff] %v353
                  %v355 = vld [vmem:[%s331 + $0xb0] sm:$0xff]
                  %356 = vst [vmem:[%s332 + $0x58] sm:$0xff] %v355
                  %v357 = vld [vmem:[%s331 + $0xc0] sm:$0xff]
                  %358 = vst [vmem:[%s332 + $0x60] sm:$0xff] %v357
                  %v359 = vld [vmem:[%s331 + $0xd0] sm:$0xff]
                  %360 = vst [vmem:[%s332 + $0x68] sm:$0xff] %v359
                  %v361 = vld [vmem:[%s331 + $0xe0] sm:$0xff]
                  %362 = vst [vmem:[%s332 + $0x70] sm:$0xff] %v361
                  %v363 = vld [vmem:[%s331 + $0xf0] sm:$0xff]
                  %364 = vst [vmem:[%s332 + $0x78] sm:$0xff] %v363
                $region60: #{report_generation_forward.22} parent=54 // loop_footer
                  %s330 = sadd.s32 1, %s326
                $region61: #{report_generation_forward.22} parent=54 // loop_footer_branch
                  %325 = sbr.rel target = $region57
                $region62: #{report_generation_forward.22} parent=54 // loop_exit
                  _
              $region55: #{report_generation_forward.22} parent=39 // pred_fallthru
                _
              // Predicated region
              $region63: #{report_generation_forward.22} parent=39 // pred_check
                _
              $region64: #{report_generation_forward.22} parent=39 // pred_check_branch
                %366 = sbr.rel target = $region66
              $region65: #{report_generation_forward.22} parent=39 // pred_region
                _
              $region66: #{report_generation_forward.22} parent=39 // pred_fallthru
                _
            $region40: #{report_generation_forward.22} parent=35 // pred_fallthru
              _
            // Predicated region
            $region41: #{report_generation_forward.22} parent=35 // pred_check
              _
            $region42: #{report_generation_forward.22} parent=35 // pred_check_branch
              %280 = sbr.rel target = $region44
            $region43: #{report_generation_forward.22} parent=35 // pred_region
              %s282 = ssub.s32 256, 1
              loop: start=0, step=1, limit=1
              $region45: #{report_generation_forward.22} parent=43 // loop_pre_header
                _
              $region46: #{report_generation_forward.22} parent=43 // loop_header
                %s284 = sphi 0, %s288
                %p285 = scmp.ge.s32.totalorder %s284, 1
                %s289 = sphi %s274, %s274
                %s290 = sphi %s268, %s268
              $region47: #{report_generation_forward.22} parent=43 // loop_header_branch
                %287 = sbr.rel (%p285) target = $region51
              $region48: #{report_generation_forward.22} parent=43 // loop_body
                %v291 = vld [vmem:[%s289] sm:%s282]
                %292 = vst [vmem:[%s290] sm:%s282] %v291
                %v293 = vld [vmem:[%s289 + $0x10] sm:%s282]
                %294 = vst [vmem:[%s290 + $0x8] sm:%s282] %v293
                %v295 = vld [vmem:[%s289 + $0x20] sm:%s282]
                %296 = vst [vmem:[%s290 + $0x10] sm:%s282] %v295
                %v297 = vld [vmem:[%s289 + $0x30] sm:%s282]
                %298 = vst [vmem:[%s290 + $0x18] sm:%s282] %v297
                %v299 = vld [vmem:[%s289 + $0x40] sm:%s282]
                %300 = vst [vmem:[%s290 + $0x20] sm:%s282] %v299
                %v301 = vld [vmem:[%s289 + $0x50] sm:%s282]
                %302 = vst [vmem:[%s290 + $0x28] sm:%s282] %v301
                %v303 = vld [vmem:[%s289 + $0x60] sm:%s282]
                %304 = vst [vmem:[%s290 + $0x30] sm:%s282] %v303
                %v305 = vld [vmem:[%s289 + $0x70] sm:%s282]
                %306 = vst [vmem:[%s290 + $0x38] sm:%s282] %v305
                %v307 = vld [vmem:[%s289 + $0x80] sm:%s282]
                %308 = vst [vmem:[%s290 + $0x40] sm:%s282] %v307
                %v309 = vld [vmem:[%s289 + $0x90] sm:%s282]
                %310 = vst [vmem:[%s290 + $0x48] sm:%s282] %v309
                %v311 = vld [vmem:[%s289 + $0xa0] sm:%s282]
                %312 = vst [vmem:[%s290 + $0x50] sm:%s282] %v311
                %v313 = vld [vmem:[%s289 + $0xb0] sm:%s282]
                %314 = vst [vmem:[%s290 + $0x58] sm:%s282] %v313
                %v315 = vld [vmem:[%s289 + $0xc0] sm:%s282]
                %316 = vst [vmem:[%s290 + $0x60] sm:%s282] %v315
                %v317 = vld [vmem:[%s289 + $0xd0] sm:%s282]
                %318 = vst [vmem:[%s290 + $0x68] sm:%s282] %v317
                %v319 = vld [vmem:[%s289 + $0xe0] sm:%s282]
                %320 = vst [vmem:[%s290 + $0x70] sm:%s282] %v319
                %v321 = vld [vmem:[%s289 + $0xf0] sm:%s282]
                %322 = vst [vmem:[%s290 + $0x78] sm:%s282] %v321
              $region49: #{report_generation_forward.22} parent=43 // loop_footer
                %s288 = sadd.s32 1, %s284
              $region50: #{report_generation_forward.22} parent=43 // loop_footer_branch
                %283 = sbr.rel target = $region46
              $region51: #{report_generation_forward.22} parent=43 // loop_exit
                _
            $region44: #{report_generation_forward.22} parent=35 // pred_fallthru
              _
          $region36: #{report_generation_forward.22} parent=31 // pred_fallthru
            _
          %367 = vnop
        $region32: #{report_generation_forward.22} parent=27 // pred_fallthru
          _
        // Predicated region
        $region67: #{report_generation_forward.22} parent=27 // pred_check
          %p368 = pneg %p159
        $region68: #{report_generation_forward.22} parent=27 // pred_check_branch
          %370 = sbr.rel (%p368) target = $region70
        $region69: #{report_generation_forward.22} parent=27 // pred_region
          %s371 = smul.u32 2, %s20
          %p372 = scmp.lt.s32.totalorder %s371, 3
          %s373 = scalar_select %p372, %s371, 3
          %s374 = scalar_lea.vmem %s4, %s373
          %s375 = smul.u32 2, %s20
        $region70: #{report_generation_forward.22} parent=27 // pred_fallthru
          _
        // Predicated region
        $region71: #{report_generation_forward.22} parent=27 // pred_check
          %p376 = pneg %p185
        $region72: #{report_generation_forward.22} parent=27 // pred_check_branch
          %378 = sbr.rel (%p376) target = $region74
        $region73: #{report_generation_forward.22} parent=27 // pred_region
          %s379 = smul.u32 2, %s20
          %p380 = scmp.lt.s32.totalorder %s379, 3
          %s381 = scalar_select %p380, %s379, 3
          %s382 = scalar_lea.vmem %s5, %s381
          %s383 = smul.u32 2, %s20
        $region74: #{report_generation_forward.22} parent=27 // pred_fallthru
          _
      $region28: #{report_generation_forward.22} parent=5 // pred_fallthru
        _
      %p384 = scmp.le.s32.totalorder 1, %s12
      %p385 = scmp.lt.s32.totalorder %s12, 3
      %p386 = pnand %p384, %p385
      %p387 = pneg %p386
      // Predicated region
      $region75: #{report_generation_forward.22} parent=5 // pred_check
        _
      $region76: #{report_generation_forward.22} parent=5 // pred_check_branch
        %389 = sbr.rel (%p386) target = $region78
      $region77: #{report_generation_forward.22} parent=5 // pred_region
        %s390 = ssub.s32 %s12, 1
        %s391 = sand.u32 %s126, 1
        %s392 = sand.u32 %s126, 1
        %s393 = smul.addr %s392, 128
        %s394 = scalar_lea.vmem [#allocation3], %s393
        // Predicated region
        $region79: #{report_generation_forward.22} parent=77 // pred_check
          %p395 = pneg %p139
        $region80: #{report_generation_forward.22} parent=77 // pred_check_branch
          %397 = sbr.rel (%p395) target = $region82
        $region81: #{report_generation_forward.22} parent=77 // pred_region
          _
        $region82: #{report_generation_forward.22} parent=77 // pred_fallthru
          _
        %s398 = smul.u32 2, %s22
        %p399 = scmp.lt.s32.totalorder %s398, 1
        %s400 = scalar_select %p399, %s398, 1
        %p401 = scmp.lt.s32.totalorder %s24, 0
        %s402 = scalar_select %p401, %s24, 0
        %s403 = sadd.s32 %s402, %s400
        %s404 = smul.addr %s403, 8
        %s405 = scalar_lea.vmem %s0, %s404
        %p406 = pneg %p59
        %p407 = pneg %p56
        %p408 = scmp.lt.s32.totalorder %s24, 0
        %s409 = scalar_select %p408, %s24, 0
        %s410 = scalar_lea.vmem %s1, %s409
        %p411 = pneg %p85
        %p412 = pneg %p82
        %p413 = scmp.lt.s32.totalorder %s24, 0
        %s414 = scalar_select %p413, %s24, 0
        %s415 = scalar_lea.vmem %s2, %s414
        %p416 = pneg %p111
        %p417 = pneg %p108
        %s418 = sand.u32 %s126, 1
        %s419 = sand.u32 %s126, 1
        %s420 = smul.addr %s419, 128
        %s421 = scalar_lea.vmem [#allocation3], %s420
        %p422 = pneg %p139
        %p423 = pneg %p136
        %s424 = smul.u32 2, %s23
        %p425 = scmp.lt.s32.totalorder %s424, 3
        %s426 = scalar_select %p425, %s424, 3
        %s427 = scalar_lea.vmem %s4, %s426
        %p428 = pneg %p165
        %p429 = pneg %p162
        %s430 = smul.u32 2, %s23
        %p431 = scmp.lt.s32.totalorder %s430, 3
        %s432 = scalar_select %p431, %s430, 3
        %s433 = scalar_lea.vmem %s5, %s432
        %p434 = pneg %p191
        %p435 = pneg %p188
        %p436 = pneg %p219
        %p437 = pneg %p216
        %s438 = sand.u32 %s206, 1
        %s439 = sand.u32 %s206, 1
        %s440 = smul.addr %s439, 32
        %s441 = scalar_lea.vmem [#allocation4], %s440
        %s442 = smul.u32 2, %s22
        %p443 = scmp.lt.s32.totalorder %s442, 1
        %s444 = scalar_select %p443, %s442, 1
        %p445 = scmp.lt.s32.totalorder %s24, 0
        %s446 = scalar_select %p445, %s24, 0
        %s447 = sadd.s32 %s446, %s444
        %s448 = smul.addr %s447, 8
        %s449 = scalar_lea.vmem %s0, %s448
        %s450 = smul.u32 2, %s22
        %p451 = scmp.lt.s32.totalorder %s24, 0
        %s452 = scalar_select %p451, %s24, 0
        %s453 = scalar_lea.vmem %s1, %s452
        %p454 = scmp.lt.s32.totalorder %s24, 0
        %s455 = scalar_select %p454, %s24, 0
        %s456 = scalar_lea.vmem %s2, %s455
        %s457 = smul.u32 16, %s24
        %s458 = smul.u32 2, %s23
        %s459 = smul.u32 2, %s23
        %p460 = scmp.lt.s32.totalorder %s459, 3
        %s461 = scalar_select %p460, %s459, 3
        %s462 = scalar_lea.vmem %s4, %s461
        %s463 = smul.u32 2, %s23
        %s464 = smul.u32 2, %s23
        %p465 = scmp.lt.s32.totalorder %s464, 3
        %s466 = scalar_select %p465, %s464, 3
        %s467 = scalar_lea.vmem %s5, %s466
        %s468 = smul.u32 2, %s23
        %s469 = smul.u32 2, %s22
        %s470 = smul.u32 2, %s23
        %p472 = scmp.eq.s32.totalorder %s24, 0
        // Predicated region
        $region83: #{report_generation_forward.22} parent=77 // pred_check
          %p473 = pneg %p472
        $region84: #{report_generation_forward.22} parent=77 // pred_check_branch
          %475 = sbr.rel (%p473) target = $region86
        $region85: #{report_generation_forward.22} parent=77 // pred_region
          %476 = vst [vmem:[#allocation2] sm:$0xff] 0.0
          %477 = vst [vmem:[#allocation2 + $0x8] sm:$0xff] 0.0
          %478 = vst [vmem:[#allocation2 + $0x10] sm:$0xff] 0.0
          %479 = vst [vmem:[#allocation2 + $0x18] sm:$0xff] 0.0
        $region86: #{report_generation_forward.22} parent=77 // pred_fallthru
          _
        %v480 = vld [vmem:[%s449] sm:$0xff]
        %v481 = vld [vmem:[%s449 + $0x8] sm:$0xff]
        %482 = vadd.xlane.f32.xlu0 %v480
        %v483 = vpop.xlane.xlu0 %482
        %484 = vadd.xlane.f32.xlu0 %v481
        %v485 = vpop.xlane.xlu0 %484
        %v486 = vrcp.pop 128.0
        %v487 = vmul.f32 %v483, %v486
        %v488 = vmul.f32 %v485, %v486
        %v489 = vsub.f32 %v480, %v487
        %v490 = vsub.f32 %v481, %v488
        %v491 = vmul.f32 %v489, %v489
        %v492 = vmul.f32 %v490, %v490
        %493 = vadd.xlane.f32.xlu0 %v491
        %v494 = vpop.xlane.xlu0 %493
        %495 = vadd.xlane.f32.xlu0 %v492
        %v496 = vpop.xlane.xlu0 %495
        %v497 = vmul.f32 %v494, %v486
        %v498 = vmul.f32 %v496, %v486
        %v499 = vadd.f32 %v497, 1e-05
        %v500 = vadd.f32 %v498, 1e-05
        %v501 = vrsqrt.pop %v499
        %v502 = vrsqrt.pop %v500
        %v503 = vmul.f32 %v489, %v501
        %v504 = vmul.f32 %v490, %v502
        %v505 = vld [vmem:[%s453] sm:$0x1]
        %v507 = vlaneseq
        %v508 = vshrl.u32 %v507, 7
        %v509 = vsub.s32 0, %v508
        %v510 = vrot.slane %v505, %v509
        %v512 = vmul.f32 %v503, %v510
        %v513 = vmul.f32 %v504, %v510
        %v514 = vld [vmem:[%s456] sm:$0x1]
        %v516 = vlaneseq
        %v517 = vshrl.u32 %v516, 7
        %v518 = vsub.s32 0, %v517
        %v519 = vrot.slane %v514, %v518
        %v521 = vadd.f32 %v512, %v519
        %v522 = vadd.f32 %v513, %v519
        %v523 = vld [vmem:[#allocation2] sm:$0xff]
        %v524 = vld [vmem:[#allocation2 + $0x8] sm:$0xff]
        %v525 = vld [vmem:[#allocation2 + $0x10] sm:$0xff]
        %v526 = vld [vmem:[#allocation2 + $0x18] sm:$0xff]
        %v527 = vpack.c.bf16 %v522, %v521
        %v528 = vld [vmem:[%s394] sm:$0xff]
        %v529 = vld [vmem:[%s394 + $0x8] sm:$0xff]
        %v530 = vld [vmem:[%s394 + $0x10] sm:$0xff]
        %v531 = vld [vmem:[%s394 + $0x18] sm:$0xff]
        %v532 = vld [vmem:[%s394 + $0x20] sm:$0xff]
        %v533 = vld [vmem:[%s394 + $0x28] sm:$0xff]
        %v534 = vld [vmem:[%s394 + $0x30] sm:$0xff]
        %v535 = vld [vmem:[%s394 + $0x38] sm:$0xff]
        %v536 = vld [vmem:[%s394 + $0x40] sm:$0xff]
        %v537 = vld [vmem:[%s394 + $0x48] sm:$0xff]
        %v538 = vld [vmem:[%s394 + $0x50] sm:$0xff]
        %v539 = vld [vmem:[%s394 + $0x58] sm:$0xff]
        %v540 = vld [vmem:[%s394 + $0x60] sm:$0xff]
        %v541 = vld [vmem:[%s394 + $0x68] sm:$0xff]
        %v542 = vld [vmem:[%s394 + $0x70] sm:$0xff]
        %v543 = vld [vmem:[%s394 + $0x78] sm:$0xff]
        %v560 = vunpack.c.l.b16 %v528
        %v561 = vunpack.c.h.b16 %v528
        %v562 = vunpack.c.l.b16 %v529
        %v563 = vunpack.c.h.b16 %v529
        %v564 = vunpack.c.l.b16 %v530
        %v565 = vunpack.c.h.b16 %v530
        %v566 = vunpack.c.l.b16 %v531
        %v567 = vunpack.c.h.b16 %v531
        %v568 = vunpack.c.l.b16 %v532
        %v569 = vunpack.c.h.b16 %v532
        %v570 = vunpack.c.l.b16 %v533
        %v571 = vunpack.c.h.b16 %v533
        %v572 = vunpack.c.l.b16 %v534
        %v573 = vunpack.c.h.b16 %v534
        %v574 = vunpack.c.l.b16 %v535
        %v575 = vunpack.c.h.b16 %v535
        %v576 = vunpack.c.l.b16 %v536
        %v577 = vunpack.c.h.b16 %v536
        %v578 = vunpack.c.l.b16 %v537
        %v579 = vunpack.c.h.b16 %v537
        %v580 = vunpack.c.l.b16 %v538
        %v581 = vunpack.c.h.b16 %v538
        %v582 = vunpack.c.l.b16 %v539
        %v583 = vunpack.c.h.b16 %v539
        %v584 = vunpack.c.l.b16 %v540
        %v585 = vunpack.c.h.b16 %v540
        %v586 = vunpack.c.l.b16 %v541
        %v587 = vunpack.c.h.b16 %v541
        %v588 = vunpack.c.l.b16 %v542
        %v589 = vunpack.c.h.b16 %v542
        %v590 = vunpack.c.l.b16 %v543
        %v591 = vunpack.c.h.b16 %v543
        %v592 = vpack.c.b16 %v562, %v560
        %v593 = vpack.c.b16 %v563, %v561
        %v594 = vpack.c.b16 %v566, %v564
        %v595 = vpack.c.b16 %v567, %v565
        %v596 = vpack.c.b16 %v570, %v568
        %v597 = vpack.c.b16 %v571, %v569
        %v598 = vpack.c.b16 %v574, %v572
        %v599 = vpack.c.b16 %v575, %v573
        %v600 = vpack.c.b16 %v578, %v576
        %v601 = vpack.c.b16 %v579, %v577
        %v602 = vpack.c.b16 %v582, %v580
        %v603 = vpack.c.b16 %v583, %v581
        %v604 = vpack.c.b16 %v586, %v584
        %v605 = vpack.c.b16 %v587, %v585
        %v606 = vpack.c.b16 %v590, %v588
        %v607 = vpack.c.b16 %v591, %v589
        %624 = vmatprep.subr.bf16.mxu0 %v607
        %625 = vmatpush1.bf16.msra.mxu0 %v606
        %626 = vmatprep.subr.bf16.mxu0 %v605
        %627 = vmatpush1.bf16.msra.mxu0 %v604
        %628 = vmatprep.subr.bf16.mxu0 %v603
        %629 = vmatpush1.bf16.msra.mxu0 %v602
        %630 = vmatprep.subr.bf16.mxu0 %v601
        %631 = vmatpush1.bf16.msra.mxu0 %v600
        %632 = vmatprep.subr.bf16.mxu0 %v599
        %633 = vmatpush1.bf16.msra.mxu0 %v598
        %634 = vmatprep.subr.bf16.mxu0 %v597
        %635 = vmatpush1.bf16.msra.mxu0 %v596
        %636 = vmatprep.subr.bf16.mxu0 %v595
        %637 = vmatpush1.bf16.msra.mxu0 %v594
        %638 = vmatprep.subr.bf16.mxu0 %v593
        %639 = vmatpush1.bf16.msra.mxu0 %v592
        %640 = vmatprep.subr.bf16.mxu0 0
        %641 = vmatpush2.bf16.msra.mxu0 0
        %642 = vmatprep.subr.bf16.mxu0 0
        %643 = vmatpush2.bf16.msra.mxu0 0
        %644 = vmatprep.subr.bf16.mxu0 0
        %645 = vmatpush2.bf16.msra.mxu0 0
        %646 = vmatprep.subr.bf16.mxu0 0
        %647 = vmatpush2.bf16.msra.mxu0 0
        %648 = vmatprep.subr.bf16.mxu0 0
        %649 = vmatpush2.bf16.msra.mxu0 0
        %650 = vmatprep.subr.bf16.mxu0 0
        %651 = vmatpush2.bf16.msra.mxu0 0
        %652 = vmatprep.subr.bf16.mxu0 0
        %653 = vmatpush2.bf16.msra.mxu0 0
        %654 = vmatprep.subr.bf16.mxu0 0
        %655 = vmatpush2.bf16.msra.mxu0 0
        %656 = vmatprep.mubr.bf16.mxu0 0
        %657 = vmatmul.mubr.bf16.gmra.mxu0 %v527
        %v658 = vpop.f32.mrf.mxu0
        %v659 = vadd.f32 0.0, %v658
        %v660 = vpop.f32.mrf.mxu0
        %v661 = vadd.f32 0.0, %v660
        %v662 = vpop.f32.mrf.mxu0
        %v663 = vadd.f32 0.0, %v662
        %v664 = vpop.f32.mrf.mxu0
        %v665 = vadd.f32 0.0, %v664
        %666 = vdwg.mxu0
        %v667 = vadd.f32 %v523, %v659
        %v668 = vadd.f32 %v524, %v661
        %v669 = vadd.f32 %v525, %v663
        %v670 = vadd.f32 %v526, %v665
        %671 = vst [vmem:[#allocation2] sm:$0xff] %v667
        %672 = vst [vmem:[#allocation2 + $0x8] sm:$0xff] %v668
        %673 = vst [vmem:[#allocation2 + $0x10] sm:$0xff] %v669
        %674 = vst [vmem:[#allocation2 + $0x18] sm:$0xff] %v670
        // Predicated region
        $region87: #{report_generation_forward.22} parent=77 // pred_check
          %p675 = pneg %p472
        $region88: #{report_generation_forward.22} parent=77 // pred_check_branch
          %677 = sbr.rel (%p675) target = $region90
        $region89: #{report_generation_forward.22} parent=77 // pred_region
          %v678 = vld [vmem:[#allocation2] sm:$0xff]
          %v679 = vld [vmem:[#allocation2 + $0x8] sm:$0xff]
          %v680 = vld [vmem:[#allocation2 + $0x10] sm:$0xff]
          %v681 = vld [vmem:[#allocation2 + $0x18] sm:$0xff]
          %v682 = vld [vmem:[%s462] sm:$0x3]
          %v684 = vlaneseq
          %v685 = vshrl.u32 %v684, 7
          %v686 = vsub.s32 0, %v685
          %v687 = vrot.slane %v682, %v686
          %v688 = vlaneseq
          %v689 = vshrl.u32 %v688, 7
          %v690 = vsub.s32 1, %v689
          %v691 = vrot.slane %v682, %v690
          %v694 = vmul.f32 %v678, %v687
          %v695 = vmul.f32 %v679, %v691
          %v696 = vmul.f32 %v680, %v687
          %v697 = vmul.f32 %v681, %v691
          %v698 = vld [vmem:[%s467] sm:$0x3]
          %v700 = vlaneseq
          %v701 = vshrl.u32 %v700, 7
          %v702 = vsub.s32 0, %v701
          %v703 = vrot.slane %v698, %v702
          %v704 = vlaneseq
          %v705 = vshrl.u32 %v704, 7
          %v706 = vsub.s32 1, %v705
          %v707 = vrot.slane %v698, %v706
          %v710 = vadd.f32 %v694, %v703
          %v711 = vadd.f32 %v695, %v707
          %v712 = vadd.f32 %v696, %v703
          %v713 = vadd.f32 %v697, %v707
          %v714 = vmul.f32 %v710, %v710
          %v715 = vmul.f32 %v711, %v711
          %v716 = vmul.f32 %v712, %v712
          %v717 = vmul.f32 %v713, %v713
          %v718 = vmul.f32 %v710, %v714
          %v719 = vmul.f32 %v711, %v715
          %v720 = vmul.f32 %v712, %v716
          %v721 = vmul.f32 %v713, %v717
          %v722 = vmul.f32 %v718, 0.044715
          %v723 = vmul.f32 %v719, 0.044715
          %v724 = vmul.f32 %v720, 0.044715
          %v725 = vmul.f32 %v721, 0.044715
          %v726 = vadd.f32 %v710, %v722
          %v727 = vadd.f32 %v711, %v723
          %v728 = vadd.f32 %v712, %v724
          %v729 = vadd.f32 %v713, %v725
          %v730 = vmul.f32 %v726, 0.7978846
          %v731 = vmul.f32 %v727, 0.7978846
          %v732 = vmul.f32 %v728, 0.7978846
          %v733 = vmul.f32 %v729, 0.7978846
          %v734 = vtanh.pop %v730
          %v735 = vtanh.pop %v731
          %v736 = vtanh.pop %v732
          %v737 = vtanh.pop %v733
          %v738 = vadd.f32 %v734, 1.0
          %v739 = vadd.f32 %v735, 1.0
          %v740 = vadd.f32 %v736, 1.0
          %v741 = vadd.f32 %v737, 1.0
          %v742 = vmul.f32 %v738, 0.5
          %v743 = vmul.f32 %v739, 0.5
          %v744 = vmul.f32 %v740, 0.5
          %v745 = vmul.f32 %v741, 0.5
          %v746 = vmul.f32 %v710, %v742
          %v747 = vmul.f32 %v711, %v743
          %v748 = vmul.f32 %v712, %v744
          %v749 = vmul.f32 %v713, %v745
          %750 = vst [vmem:[%s441] sm:$0xff] %v746
          %751 = vst [vmem:[%s441 + $0x8] sm:$0xff] %v747
          %752 = vst [vmem:[%s441 + $0x10] sm:$0xff] %v748
          %753 = vst [vmem:[%s441 + $0x18] sm:$0xff] %v749
        $region90: #{report_generation_forward.22} parent=77 // pred_fallthru
          _
        %s754 = sand.u32 %s206, 1
        %s755 = sand.u32 %s206, 1
        %s756 = smul.addr %s755, 32
        %s757 = scalar_lea.vmem [#allocation4], %s756
        // Predicated region
        $region91: #{report_generation_forward.22} parent=77 // pred_check
          %p758 = pneg %p216
        $region92: #{report_generation_forward.22} parent=77 // pred_check_branch
          %760 = sbr.rel (%p758) target = $region94
        $region93: #{report_generation_forward.22} parent=77 // pred_region
          %s761 = smul.u32 2, %s22
          %s762 = smul.u32 2, %s23
          %s763 = smul.addr %s761, 4
          %s764 = sadd.s32 %s762, %s763
          %s765 = smul.addr %s764, 8
          %s766 = scalar_lea.vmem %s6, %s765
          // Predicated region
          $region95: #{report_generation_forward.22} parent=93 // pred_check
            _
          $region96: #{report_generation_forward.22} parent=93 // pred_check_branch
            %768 = sbr.rel (0) target = $region98
          $region97: #{report_generation_forward.22} parent=93 // pred_region
            // Predicated region
            $region99: #{report_generation_forward.22} parent=97 // pred_check
              _
            $region100: #{report_generation_forward.22} parent=97 // pred_check_branch
              %770 = sbr.rel (0) target = $region102
            $region101: #{report_generation_forward.22} parent=97 // pred_region
              loop: start=0, step=1, limit=1
              $region103: #{report_generation_forward.22} parent=101 // loop_pre_header
                _
              $region104: #{report_generation_forward.22} parent=101 // loop_header
                %s772 = sphi 0, %s776
                %p773 = scmp.ge.s32.totalorder %s772, 1
                %s777 = sphi %s757, %s757
                %s778 = sphi %s766, %s766
              $region105: #{report_generation_forward.22} parent=101 // loop_header_branch
                %775 = sbr.rel (%p773) target = $region109
              $region106: #{report_generation_forward.22} parent=101 // loop_body
                %v779 = vld [vmem:[%s777] sm:$0xff]
                %780 = vst [vmem:[%s778] sm:$0xff] %v779
                %v781 = vld [vmem:[%s777 + $0x8] sm:$0xff]
                %782 = vst [vmem:[%s778 + $0x8] sm:$0xff] %v781
                %v783 = vld [vmem:[%s777 + $0x10] sm:$0xff]
                %784 = vst [vmem:[%s778 + $0x20] sm:$0xff] %v783
                %v785 = vld [vmem:[%s777 + $0x18] sm:$0xff]
                %786 = vst [vmem:[%s778 + $0x28] sm:$0xff] %v785
              $region107: #{report_generation_forward.22} parent=101 // loop_footer
                %s776 = sadd.s32 1, %s772
              $region108: #{report_generation_forward.22} parent=101 // loop_footer_branch
                %771 = sbr.rel target = $region104
              $region109: #{report_generation_forward.22} parent=101 // loop_exit
                _
            $region102: #{report_generation_forward.22} parent=97 // pred_fallthru
              _
            // Predicated region
            $region110: #{report_generation_forward.22} parent=97 // pred_check
              _
            $region111: #{report_generation_forward.22} parent=97 // pred_check_branch
              %788 = sbr.rel target = $region113
            $region112: #{report_generation_forward.22} parent=97 // pred_region
              _
            $region113: #{report_generation_forward.22} parent=97 // pred_fallthru
              _
          $region98: #{report_generation_forward.22} parent=93 // pred_fallthru
            _
          %789 = vnop
        $region94: #{report_generation_forward.22} parent=77 // pred_fallthru
          _
      $region78: #{report_generation_forward.22} parent=5 // pred_fallthru
        _
      %p790 = scmp.le.s32.totalorder 2, %s12
      // Predicated region
      $region114: #{report_generation_forward.22} parent=5 // pred_check
        %p791 = pneg %p790
      $region115: #{report_generation_forward.22} parent=5 // pred_check_branch
        %793 = sbr.rel (%p791) target = $region117
      $region116: #{report_generation_forward.22} parent=5 // pred_region
        %s794 = ssub.s32 %s12, 2
        // Predicated region
        $region118: #{report_generation_forward.22} parent=116 // pred_check
          %p795 = pneg %p222
        $region119: #{report_generation_forward.22} parent=116 // pred_check_branch
          %797 = sbr.rel (%p795) target = $region121
        $region120: #{report_generation_forward.22} parent=116 // pred_region
          %s798 = sand.u32 %s207, 1
          %s799 = sand.u32 %s207, 1
          %s800 = smul.addr %s799, 32
          %s801 = scalar_lea.vmem [#allocation4], %s800
        $region121: #{report_generation_forward.22} parent=116 // pred_fallthru
          _
      $region117: #{report_generation_forward.22} parent=5 // pred_fallthru
        _
    $region6: #{report_generation_forward.22} parent=1 // loop_footer
      %s16 = sadd.s32 1, %s12
    $region7: #{report_generation_forward.22} parent=1 // loop_footer_branch
      %11 = sbr.rel target = $region3
    $region8: #{report_generation_forward.22} parent=1 // loop_exit
      _

// kernel: report_generation_forward.24
$region0: #{report_generation_forward.24}
  #allocation0 [shape = 'u32[]', space=smem, size = 0x4, offset = 0x4, fixed_abs, tag = 'smem constant byte address 0x4 - core index']
  #allocation1 [shape = 'u32[144,128]{1,0:T(1,128)}', space=vmem, size = 0x12000, scoped, tag = 'internal scratch']
  #allocation2 [shape = 'f32[16,256]{1,0:T(8,128)}', space=vmem, size = 0x4000, scoped, tag = 'scratch operand']
  %s0 = inlined_call_operand.vmem [shape: f32[16,128], index: 0, kind: input, shape index: {}]
  %s1 = inlined_call_operand.vmem [shape: f32[1,128], index: 1, kind: input, shape index: {}]
  %s2 = inlined_call_operand.vmem [shape: f32[1,128], index: 2, kind: input, shape index: {}]
  %s3 = inlined_call_operand.vmem [shape: bf16[128,256], index: 3, kind: input, shape index: {}]
  %s4 = inlined_call_operand.vmem [shape: f32[1,256], index: 4, kind: input, shape index: {}]
  %s5 = inlined_call_operand.vmem [shape: f32[1,256], index: 5, kind: input, shape index: {}]
  %s6 = inlined_call_operand.vmem [shape: f32[16,256], index: 6, kind: output, shape index: {}]
  %s7 = sld [smem:[#allocation0]]
  $region42: #{report_generation_forward.24} parent=0
    _
  %s9 = ssub.s32 1, %s7
  %s10 = scalar_select 0, %s9, %s7
  // Predicated region
  $region2: #{report_generation_forward.24} parent=0 // pred_check
    _
  $region3: #{report_generation_forward.24} parent=0 // pred_check_branch
    %12 = sbr.rel (0) target = $region5
  $region4: #{report_generation_forward.24} parent=0 // pred_region
    _
  $region5: #{report_generation_forward.24} parent=0 // pred_fallthru
    _
  // Predicated region
  $region6: #{report_generation_forward.24} parent=0 // pred_check
    _
  $region7: #{report_generation_forward.24} parent=0 // pred_check_branch
    %14 = sbr.rel (0) target = $region9
  $region8: #{report_generation_forward.24} parent=0 // pred_region
    _
  $region9: #{report_generation_forward.24} parent=0 // pred_fallthru
    _
  // Predicated region
  $region10: #{report_generation_forward.24} parent=0 // pred_check
    _
  $region11: #{report_generation_forward.24} parent=0 // pred_check_branch
    %16 = sbr.rel (0) target = $region13
  $region12: #{report_generation_forward.24} parent=0 // pred_region
    _
  $region13: #{report_generation_forward.24} parent=0 // pred_fallthru
    _
  // Predicated region
  $region14: #{report_generation_forward.24} parent=0 // pred_check
    _
  $region15: #{report_generation_forward.24} parent=0 // pred_check_branch
    %18 = sbr.rel (0) target = $region17
  $region16: #{report_generation_forward.24} parent=0 // pred_region
    _
  $region17: #{report_generation_forward.24} parent=0 // pred_fallthru
    _
  // Predicated region
  $region18: #{report_generation_forward.24} parent=0 // pred_check
    _
  $region19: #{report_generation_forward.24} parent=0 // pred_check_branch
    %20 = sbr.rel (0) target = $region21
  $region20: #{report_generation_forward.24} parent=0 // pred_region
    _
  $region21: #{report_generation_forward.24} parent=0 // pred_fallthru
    _
  // Predicated region
  $region22: #{report_generation_forward.24} parent=0 // pred_check
    _
  $region23: #{report_generation_forward.24} parent=0 // pred_check_branch
    %22 = sbr.rel (0) target = $region25
  $region24: #{report_generation_forward.24} parent=0 // pred_region
    _
  $region25: #{report_generation_forward.24} parent=0 // pred_fallthru
    _
  %p24 = scmp.eq.s32.totalorder 0, 0
  // Predicated region
  $region26: #{report_generation_forward.24} parent=0 // pred_check
    %p25 = pneg %p24
  $region27: #{report_generation_forward.24} parent=0 // pred_check_branch
    %27 = sbr.rel (%p25) target = $region29
  $region28: #{report_generation_forward.24} parent=0 // pred_region
    %28 = vst [vmem:[#allocation2] sm:$0xff] 0.0
    %29 = vst [vmem:[#allocation2 + $0x8] sm:$0xff] 0.0
    %30 = vst [vmem:[#allocation2 + $0x10] sm:$0xff] 0.0
    %31 = vst [vmem:[#allocation2 + $0x18] sm:$0xff] 0.0
  $region29: #{report_generation_forward.24} parent=0 // pred_fallthru
    _
  %v32 = vld [vmem:[%s0] sm:$0xff]
  %v33 = vld [vmem:[%s0 + $0x8] sm:$0xff]
  %34 = vadd.xlane.f32.xlu0 %v32
  %v35 = vpop.xlane.xlu0 %34
  %36 = vadd.xlane.f32.xlu0 %v33
  %v37 = vpop.xlane.xlu0 %36
  %v38 = vrcp.pop 128.0
  %v39 = vmul.f32 %v35, %v38
  %v40 = vmul.f32 %v37, %v38
  %v41 = vsub.f32 %v32, %v39
  %v42 = vsub.f32 %v33, %v40
  %v43 = vmul.f32 %v41, %v41
  %v44 = vmul.f32 %v42, %v42
  %45 = vadd.xlane.f32.xlu0 %v43
  %v46 = vpop.xlane.xlu0 %45
  %47 = vadd.xlane.f32.xlu0 %v44
  %v48 = vpop.xlane.xlu0 %47
  %v49 = vmul.f32 %v46, %v38
  %v50 = vmul.f32 %v48, %v38
  %v51 = vadd.f32 %v49, 1e-05
  %v52 = vadd.f32 %v50, 1e-05
  %v53 = vrsqrt.pop %v51
  %v54 = vrsqrt.pop %v52
  %v55 = vmul.f32 %v41, %v53
  %v56 = vmul.f32 %v42, %v54
  %v57 = vld [vmem:[%s1] sm:$0x1]
  %v59 = vlaneseq
  %v60 = vshrl.u32 %v59, 7
  %v61 = vsub.s32 0, %v60
  %v62 = vrot.slane %v57, %v61
  %v64 = vmul.f32 %v55, %v62
  %v65 = vmul.f32 %v56, %v62
  %v66 = vld [vmem:[%s2] sm:$0x1]
  %v68 = vlaneseq
  %v69 = vshrl.u32 %v68, 7
  %v70 = vsub.s32 0, %v69
  %v71 = vrot.slane %v66, %v70
  %v73 = vadd.f32 %v64, %v71
  %v74 = vadd.f32 %v65, %v71
  %v75 = vld [vmem:[#allocation2] sm:$0xff]
  %v76 = vld [vmem:[#allocation2 + $0x8] sm:$0xff]
  %v77 = vld [vmem:[#allocation2 + $0x10] sm:$0xff]
  %v78 = vld [vmem:[#allocation2 + $0x18] sm:$0xff]
  %v79 = vpack.c.bf16 %v74, %v73
  %v80 = vld [vmem:[%s3] sm:$0xff]
  %v81 = vld [vmem:[%s3 + $0x8] sm:$0xff]
  %v82 = vld [vmem:[%s3 + $0x10] sm:$0xff]
  %v83 = vld [vmem:[%s3 + $0x18] sm:$0xff]
  %v84 = vld [vmem:[%s3 + $0x20] sm:$0xff]
  %v85 = vld [vmem:[%s3 + $0x28] sm:$0xff]
  %v86 = vld [vmem:[%s3 + $0x30] sm:$0xff]
  %v87 = vld [vmem:[%s3 + $0x38] sm:$0xff]
  %v88 = vld [vmem:[%s3 + $0x40] sm:$0xff]
  %v89 = vld [vmem:[%s3 + $0x48] sm:$0xff]
  %v90 = vld [vmem:[%s3 + $0x50] sm:$0xff]
  %v91 = vld [vmem:[%s3 + $0x58] sm:$0xff]
  %v92 = vld [vmem:[%s3 + $0x60] sm:$0xff]
  %v93 = vld [vmem:[%s3 + $0x68] sm:$0xff]
  %v94 = vld [vmem:[%s3 + $0x70] sm:$0xff]
  %v95 = vld [vmem:[%s3 + $0x78] sm:$0xff]
  %v112 = vunpack.c.l.b16 %v80
  %v113 = vunpack.c.h.b16 %v80
  %v114 = vunpack.c.l.b16 %v81
  %v115 = vunpack.c.h.b16 %v81
  %v116 = vunpack.c.l.b16 %v82
  %v117 = vunpack.c.h.b16 %v82
  %v118 = vunpack.c.l.b16 %v83
  %v119 = vunpack.c.h.b16 %v83
  %v120 = vunpack.c.l.b16 %v84
  %v121 = vunpack.c.h.b16 %v84
  %v122 = vunpack.c.l.b16 %v85
  %v123 = vunpack.c.h.b16 %v85
  %v124 = vunpack.c.l.b16 %v86
  %v125 = vunpack.c.h.b16 %v86
  %v126 = vunpack.c.l.b16 %v87
  %v127 = vunpack.c.h.b16 %v87
  %v128 = vunpack.c.l.b16 %v88
  %v129 = vunpack.c.h.b16 %v88
  %v130 = vunpack.c.l.b16 %v89
  %v131 = vunpack.c.h.b16 %v89
  %v132 = vunpack.c.l.b16 %v90
  %v133 = vunpack.c.h.b16 %v90
  %v134 = vunpack.c.l.b16 %v91
  %v135 = vunpack.c.h.b16 %v91
  %v136 = vunpack.c.l.b16 %v92
  %v137 = vunpack.c.h.b16 %v92
  %v138 = vunpack.c.l.b16 %v93
  %v139 = vunpack.c.h.b16 %v93
  %v140 = vunpack.c.l.b16 %v94
  %v141 = vunpack.c.h.b16 %v94
  %v142 = vunpack.c.l.b16 %v95
  %v143 = vunpack.c.h.b16 %v95
  %v144 = vpack.c.b16 %v114, %v112
  %v145 = vpack.c.b16 %v115, %v113
  %v146 = vpack.c.b16 %v118, %v116
  %v147 = vpack.c.b16 %v119, %v117
  %v148 = vpack.c.b16 %v122, %v120
  %v149 = vpack.c.b16 %v123, %v121
  %v150 = vpack.c.b16 %v126, %v124
  %v151 = vpack.c.b16 %v127, %v125
  %v152 = vpack.c.b16 %v130, %v128
  %v153 = vpack.c.b16 %v131, %v129
  %v154 = vpack.c.b16 %v134, %v132
  %v155 = vpack.c.b16 %v135, %v133
  %v156 = vpack.c.b16 %v138, %v136
  %v157 = vpack.c.b16 %v139, %v137
  %v158 = vpack.c.b16 %v142, %v140
  %v159 = vpack.c.b16 %v143, %v141
  %176 = vmatprep.subr.bf16.mxu0 %v159
  %177 = vmatpush1.bf16.msra.mxu0 %v158
  %178 = vmatprep.subr.bf16.mxu0 %v157
  %179 = vmatpush1.bf16.msra.mxu0 %v156
  %180 = vmatprep.subr.bf16.mxu0 %v155
  %181 = vmatpush1.bf16.msra.mxu0 %v154
  %182 = vmatprep.subr.bf16.mxu0 %v153
  %183 = vmatpush1.bf16.msra.mxu0 %v152
  %184 = vmatprep.subr.bf16.mxu0 %v151
  %185 = vmatpush1.bf16.msra.mxu0 %v150
  %186 = vmatprep.subr.bf16.mxu0 %v149
  %187 = vmatpush1.bf16.msra.mxu0 %v148
  %188 = vmatprep.subr.bf16.mxu0 %v147
  %189 = vmatpush1.bf16.msra.mxu0 %v146
  %190 = vmatprep.subr.bf16.mxu0 %v145
  %191 = vmatpush1.bf16.msra.mxu0 %v144
  %192 = vmatprep.subr.bf16.mxu0 0
  %193 = vmatpush2.bf16.msra.mxu0 0
  %194 = vmatprep.subr.bf16.mxu0 0
  %195 = vmatpush2.bf16.msra.mxu0 0
  %196 = vmatprep.subr.bf16.mxu0 0
  %197 = vmatpush2.bf16.msra.mxu0 0
  %198 = vmatprep.subr.bf16.mxu0 0
  %199 = vmatpush2.bf16.msra.mxu0 0
  %200 = vmatprep.subr.bf16.mxu0 0
  %201 = vmatpush2.bf16.msra.mxu0 0
  %202 = vmatprep.subr.bf16.mxu0 0
  %203 = vmatpush2.bf16.msra.mxu0 0
  %204 = vmatprep.subr.bf16.mxu0 0
  %205 = vmatpush2.bf16.msra.mxu0 0
  %206 = vmatprep.subr.bf16.mxu0 0
  %207 = vmatpush2.bf16.msra.mxu0 0
  %208 = vmatprep.mubr.bf16.mxu0 0
  %209 = vmatmul.mubr.bf16.gmra.mxu0 %v79
  %v210 = vpop.f32.mrf.mxu0
  %v211 = vadd.f32 0.0, %v210
  %v212 = vpop.f32.mrf.mxu0
  %v213 = vadd.f32 0.0, %v212
  %v214 = vpop.f32.mrf.mxu0
  %v215 = vadd.f32 0.0, %v214
  %v216 = vpop.f32.mrf.mxu0
  %v217 = vadd.f32 0.0, %v216
  %218 = vdwg.mxu0
  %v219 = vadd.f32 %v75, %v211
  %v220 = vadd.f32 %v76, %v213
  %v221 = vadd.f32 %v77, %v215
  %v222 = vadd.f32 %v78, %v217
  %223 = vst [vmem:[#allocation2] sm:$0xff] %v219
  %224 = vst [vmem:[#allocation2 + $0x8] sm:$0xff] %v220
  %225 = vst [vmem:[#allocation2 + $0x10] sm:$0xff] %v221
  %226 = vst [vmem:[#allocation2 + $0x18] sm:$0xff] %v222
  // Predicated region
  $region30: #{report_generation_forward.24} parent=0 // pred_check
    %p227 = pneg %p24
  $region31: #{report_generation_forward.24} parent=0 // pred_check_branch
    %229 = sbr.rel (%p227) target = $region33
  $region32: #{report_generation_forward.24} parent=0 // pred_region
    %v230 = vld [vmem:[#allocation2] sm:$0xff]
    %v231 = vld [vmem:[#allocation2 + $0x8] sm:$0xff]
    %v232 = vld [vmem:[#allocation2 + $0x10] sm:$0xff]
    %v233 = vld [vmem:[#allocation2 + $0x18] sm:$0xff]
    %v234 = vld [vmem:[%s4] sm:$0x3]
    %v236 = vlaneseq
    %v237 = vshrl.u32 %v236, 7
    %v238 = vsub.s32 0, %v237
    %v239 = vrot.slane %v234, %v238
    %v240 = vlaneseq
    %v241 = vshrl.u32 %v240, 7
    %v242 = vsub.s32 1, %v241
    %v243 = vrot.slane %v234, %v242
    %v246 = vmul.f32 %v230, %v239
    %v247 = vmul.f32 %v231, %v243
    %v248 = vmul.f32 %v232, %v239
    %v249 = vmul.f32 %v233, %v243
    %v250 = vld [vmem:[%s5] sm:$0x3]
    %v252 = vlaneseq
    %v253 = vshrl.u32 %v252, 7
    %v254 = vsub.s32 0, %v253
    %v255 = vrot.slane %v250, %v254
    %v256 = vlaneseq
    %v257 = vshrl.u32 %v256, 7
    %v258 = vsub.s32 1, %v257
    %v259 = vrot.slane %v250, %v258
    %v262 = vadd.f32 %v246, %v255
    %v263 = vadd.f32 %v247, %v259
    %v264 = vadd.f32 %v248, %v255
    %v265 = vadd.f32 %v249, %v259
    %266 = vst [vmem:[%s6] sm:$0xff] %v262
    %267 = vst [vmem:[%s6 + $0x8] sm:$0xff] %v263
    %268 = vst [vmem:[%s6 + $0x10] sm:$0xff] %v264
    %269 = vst [vmem:[%s6 + $0x18] sm:$0xff] %v265
  $region33: #{report_generation_forward.24} parent=0 // pred_fallthru
    _
  // Predicated region
  $region34: #{report_generation_forward.24} parent=0 // pred_check
    _
  $region35: #{report_generation_forward.24} parent=0 // pred_check_branch
    %271 = sbr.rel (0) target = $region37
  $region36: #{report_generation_forward.24} parent=0 // pred_region
    _
  $region37: #{report_generation_forward.24} parent=0 // pred_fallthru
    _
  // Predicated region
  $region38: #{report_generation_forward.24} parent=0 // pred_check
    _
  $region39: #{report_generation_forward.24} parent=0 // pred_check_branch
    %273 = sbr.rel (0) target = $region41
  $region40: #{report_generation_forward.24} parent=0 // pred_region
    _
  $region41: #{report_generation_forward.24} parent=0 // pred_fallthru
    _

// kernel: report_generation_forward.23
$region0: #{report_generation_forward.23}
  #allocation0 [shape = 'u32[]', space=smem, size = 0x4, offset = 0x4, fixed_abs, tag = 'smem constant byte address 0x4 - core index']
  #allocation1 [shape = 'u32[144,128]{1,0:T(1,128)}', space=vmem, size = 0x12000, scoped, tag = 'internal scratch']
  #allocation2 [shape = 'f32[16,128]{1,0:T(8,128)}', space=vmem, size = 0x2000, scoped, tag = 'scratch operand']
  %s0 = inlined_call_operand.vmem [shape: bf16[16,512], index: 0, kind: input, shape index: {}]
  %s1 = inlined_call_operand.vmem [shape: bf16[512,128], index: 1, kind: input, shape index: {}]
  %s2 = inlined_call_operand.vmem [shape: f32[1,128], index: 2, kind: input, shape index: {}]
  %s3 = inlined_call_operand.vmem [shape: f32[1,128], index: 3, kind: input, shape index: {}]
  %s4 = inlined_call_operand.vmem [shape: f32[16,128], index: 4, kind: input, shape index: {}]
  %s5 = inlined_call_operand.vmem [shape: f32[16,128], index: 5, kind: output, shape index: {}]
  %s6 = sld [smem:[#allocation0]]
  $region38: #{report_generation_forward.23} parent=0
    _
  %s8 = ssub.s32 1, %s6
  %s9 = scalar_select 0, %s8, %s6
  // Predicated region
  $region2: #{report_generation_forward.23} parent=0 // pred_check
    _
  $region3: #{report_generation_forward.23} parent=0 // pred_check_branch
    %11 = sbr.rel (0) target = $region5
  $region4: #{report_generation_forward.23} parent=0 // pred_region
    _
  $region5: #{report_generation_forward.23} parent=0 // pred_fallthru
    _
  // Predicated region
  $region6: #{report_generation_forward.23} parent=0 // pred_check
    _
  $region7: #{report_generation_forward.23} parent=0 // pred_check_branch
    %13 = sbr.rel (0) target = $region9
  $region8: #{report_generation_forward.23} parent=0 // pred_region
    _
  $region9: #{report_generation_forward.23} parent=0 // pred_fallthru
    _
  // Predicated region
  $region10: #{report_generation_forward.23} parent=0 // pred_check
    _
  $region11: #{report_generation_forward.23} parent=0 // pred_check_branch
    %15 = sbr.rel (0) target = $region13
  $region12: #{report_generation_forward.23} parent=0 // pred_region
    _
  $region13: #{report_generation_forward.23} parent=0 // pred_fallthru
    _
  // Predicated region
  $region14: #{report_generation_forward.23} parent=0 // pred_check
    _
  $region15: #{report_generation_forward.23} parent=0 // pred_check_branch
    %17 = sbr.rel (0) target = $region17
  $region16: #{report_generation_forward.23} parent=0 // pred_region
    _
  $region17: #{report_generation_forward.23} parent=0 // pred_fallthru
    _
  // Predicated region
  $region18: #{report_generation_forward.23} parent=0 // pred_check
    _
  $region19: #{report_generation_forward.23} parent=0 // pred_check_branch
    %19 = sbr.rel (0) target = $region21
  $region20: #{report_generation_forward.23} parent=0 // pred_region
    _
  $region21: #{report_generation_forward.23} parent=0 // pred_fallthru
    _
  %p21 = scmp.eq.s32.totalorder 0, 0
  // Predicated region
  $region22: #{report_generation_forward.23} parent=0 // pred_check
    %p22 = pneg %p21
  $region23: #{report_generation_forward.23} parent=0 // pred_check_branch
    %24 = sbr.rel (%p22) target = $region25
  $region24: #{report_generation_forward.23} parent=0 // pred_region
    %25 = vst [vmem:[#allocation2] sm:$0xff] 0.0
    %26 = vst [vmem:[#allocation2 + $0x8] sm:$0xff] 0.0
  $region25: #{report_generation_forward.23} parent=0 // pred_fallthru
    _
  %v27 = vld [vmem:[%s0] sm:$0xff]
  %v28 = vld [vmem:[%s0 + $0x8] sm:$0xff]
  %v29 = vld [vmem:[%s0 + $0x10] sm:$0xff]
  %v30 = vld [vmem:[%s0 + $0x18] sm:$0xff]
  %v31 = vld [vmem:[#allocation2] sm:$0xff]
  %v32 = vld [vmem:[#allocation2 + $0x8] sm:$0xff]
  %v33 = vld [vmem:[%s1] sm:$0xf]
  %v34 = vld [vmem:[%s1 + $0x4] sm:$0xf]
  %v35 = vld [vmem:[%s1 + $0x8] sm:$0xf]
  %v36 = vld [vmem:[%s1 + $0xc] sm:$0xf]
  %v37 = vld [vmem:[%s1 + $0x10] sm:$0xf]
  %v38 = vld [vmem:[%s1 + $0x14] sm:$0xf]
  %v39 = vld [vmem:[%s1 + $0x18] sm:$0xf]
  %v40 = vld [vmem:[%s1 + $0x1c] sm:$0xf]
  %v41 = vld [vmem:[%s1 + $0x20] sm:$0xf]
  %v42 = vld [vmem:[%s1 + $0x24] sm:$0xf]
  %v43 = vld [vmem:[%s1 + $0x28] sm:$0xf]
  %v44 = vld [vmem:[%s1 + $0x2c] sm:$0xf]
  %v45 = vld [vmem:[%s1 + $0x30] sm:$0xf]
  %v46 = vld [vmem:[%s1 + $0x34] sm:$0xf]
  %v47 = vld [vmem:[%s1 + $0x38] sm:$0xf]
  %v48 = vld [vmem:[%s1 + $0x3c] sm:$0xf]
  %v49 = vld [vmem:[%s1 + $0x40] sm:$0xf]
  %v50 = vld [vmem:[%s1 + $0x44] sm:$0xf]
  %v51 = vld [vmem:[%s1 + $0x48] sm:$0xf]
  %v52 = vld [vmem:[%s1 + $0x4c] sm:$0xf]
  %v53 = vld [vmem:[%s1 + $0x50] sm:$0xf]
  %v54 = vld [vmem:[%s1 + $0x54] sm:$0xf]
  %v55 = vld [vmem:[%s1 + $0x58] sm:$0xf]
  %v56 = vld [vmem:[%s1 + $0x5c] sm:$0xf]
  %v57 = vld [vmem:[%s1 + $0x60] sm:$0xf]
  %v58 = vld [vmem:[%s1 + $0x64] sm:$0xf]
  %v59 = vld [vmem:[%s1 + $0x68] sm:$0xf]
  %v60 = vld [vmem:[%s1 + $0x6c] sm:$0xf]
  %v61 = vld [vmem:[%s1 + $0x70] sm:$0xf]
  %v62 = vld [vmem:[%s1 + $0x74] sm:$0xf]
  %v63 = vld [vmem:[%s1 + $0x78] sm:$0xf]
  %v64 = vld [vmem:[%s1 + $0x7c] sm:$0xf]
  %v65 = vld [vmem:[%s1 + $0x80] sm:$0xf]
  %v66 = vld [vmem:[%s1 + $0x84] sm:$0xf]
  %v67 = vld [vmem:[%s1 + $0x88] sm:$0xf]
  %v68 = vld [vmem:[%s1 + $0x8c] sm:$0xf]
  %v69 = vld [vmem:[%s1 + $0x90] sm:$0xf]
  %v70 = vld [vmem:[%s1 + $0x94] sm:$0xf]
  %v71 = vld [vmem:[%s1 + $0x98] sm:$0xf]
  %v72 = vld [vmem:[%s1 + $0x9c] sm:$0xf]
  %v73 = vld [vmem:[%s1 + $0xa0] sm:$0xf]
  %v74 = vld [vmem:[%s1 + $0xa4] sm:$0xf]
  %v75 = vld [vmem:[%s1 + $0xa8] sm:$0xf]
  %v76 = vld [vmem:[%s1 + $0xac] sm:$0xf]
  %v77 = vld [vmem:[%s1 + $0xb0] sm:$0xf]
  %v78 = vld [vmem:[%s1 + $0xb4] sm:$0xf]
  %v79 = vld [vmem:[%s1 + $0xb8] sm:$0xf]
  %v80 = vld [vmem:[%s1 + $0xbc] sm:$0xf]
  %v81 = vld [vmem:[%s1 + $0xc0] sm:$0xf]
  %v82 = vld [vmem:[%s1 + $0xc4] sm:$0xf]
  %v83 = vld [vmem:[%s1 + $0xc8] sm:$0xf]
  %v84 = vld [vmem:[%s1 + $0xcc] sm:$0xf]
  %v85 = vld [vmem:[%s1 + $0xd0] sm:$0xf]
  %v86 = vld [vmem:[%s1 + $0xd4] sm:$0xf]
  %v87 = vld [vmem:[%s1 + $0xd8] sm:$0xf]
  %v88 = vld [vmem:[%s1 + $0xdc] sm:$0xf]
  %v89 = vld [vmem:[%s1 + $0xe0] sm:$0xf]
  %v90 = vld [vmem:[%s1 + $0xe4] sm:$0xf]
  %v91 = vld [vmem:[%s1 + $0xe8] sm:$0xf]
  %v92 = vld [vmem:[%s1 + $0xec] sm:$0xf]
  %v93 = vld [vmem:[%s1 + $0xf0] sm:$0xf]
  %v94 = vld [vmem:[%s1 + $0xf4] sm:$0xf]
  %v95 = vld [vmem:[%s1 + $0xf8] sm:$0xf]
  %v96 = vld [vmem:[%s1 + $0xfc] sm:$0xf]
  %v101 = vunpack.c.l.b16 %v27
  %v102 = vunpack.c.h.b16 %v27
  %v103 = vunpack.c.l.b16 %v28
  %v104 = vunpack.c.h.b16 %v28
  %v105 = vunpack.c.l.b16 %v29
  %v106 = vunpack.c.h.b16 %v29
  %v107 = vunpack.c.l.b16 %v30
  %v108 = vunpack.c.h.b16 %v30
  %v109 = vpack.c.b16 %v105, %v101
  %v110 = vpack.c.b16 %v106, %v102
  %v111 = vpack.c.b16 %v107, %v103
  %v112 = vpack.c.b16 %v108, %v104
  %v181 = vunpack.c.l.b16 %v33
  %v182 = vunpack.c.l.b16 %v34
  %v183 = vunpack.c.l.b16 %v35
  %v184 = vunpack.c.l.b16 %v36
  %v185 = vunpack.c.l.b16 %v37
  %v186 = vunpack.c.l.b16 %v38
  %v187 = vunpack.c.l.b16 %v39
  %v188 = vunpack.c.l.b16 %v40
  %v189 = vunpack.c.l.b16 %v41
  %v190 = vunpack.c.l.b16 %v42
  %v191 = vunpack.c.l.b16 %v43
  %v192 = vunpack.c.l.b16 %v44
  %v193 = vunpack.c.l.b16 %v45
  %v194 = vunpack.c.l.b16 %v46
  %v195 = vunpack.c.l.b16 %v47
  %v196 = vunpack.c.l.b16 %v48
  %v197 = vunpack.c.l.b16 %v49
  %v198 = vunpack.c.l.b16 %v50
  %v199 = vunpack.c.l.b16 %v51
  %v200 = vunpack.c.l.b16 %v52
  %v201 = vunpack.c.l.b16 %v53
  %v202 = vunpack.c.l.b16 %v54
  %v203 = vunpack.c.l.b16 %v55
  %v204 = vunpack.c.l.b16 %v56
  %v205 = vunpack.c.l.b16 %v57
  %v206 = vunpack.c.l.b16 %v58
  %v207 = vunpack.c.l.b16 %v59
  %v208 = vunpack.c.l.b16 %v60
  %v209 = vunpack.c.l.b16 %v61
  %v210 = vunpack.c.l.b16 %v62
  %v211 = vunpack.c.l.b16 %v63
  %v212 = vunpack.c.l.b16 %v64
  %v213 = vunpack.c.l.b16 %v65
  %v214 = vunpack.c.l.b16 %v66
  %v215 = vunpack.c.l.b16 %v67
  %v216 = vunpack.c.l.b16 %v68
  %v217 = vunpack.c.l.b16 %v69
  %v218 = vunpack.c.l.b16 %v70
  %v219 = vunpack.c.l.b16 %v71
  %v220 = vunpack.c.l.b16 %v72
  %v221 = vunpack.c.l.b16 %v73
  %v222 = vunpack.c.l.b16 %v74
  %v223 = vunpack.c.l.b16 %v75
  %v224 = vunpack.c.l.b16 %v76
  %v225 = vunpack.c.l.b16 %v77
  %v226 = vunpack.c.l.b16 %v78
  %v227 = vunpack.c.l.b16 %v79
  %v228 = vunpack.c.l.b16 %v80
  %v229 = vunpack.c.l.b16 %v81
  %v230 = vunpack.c.l.b16 %v82
  %v231 = vunpack.c.l.b16 %v83
  %v232 = vunpack.c.l.b16 %v84
  %v233 = vunpack.c.l.b16 %v85
  %v234 = vunpack.c.l.b16 %v86
  %v235 = vunpack.c.l.b16 %v87
  %v236 = vunpack.c.l.b16 %v88
  %v237 = vunpack.c.l.b16 %v89
  %v238 = vunpack.c.l.b16 %v90
  %v239 = vunpack.c.l.b16 %v91
  %v240 = vunpack.c.l.b16 %v92
  %v241 = vunpack.c.l.b16 %v93
  %v242 = vunpack.c.l.b16 %v94
  %v243 = vunpack.c.l.b16 %v95
  %v244 = vunpack.c.l.b16 %v96
  %v245 = vpack.c.b16 %v182, %v181
  %v246 = vpack.c.b16 %v184, %v183
  %v247 = vpack.c.b16 %v186, %v185
  %v248 = vpack.c.b16 %v188, %v187
  %v249 = vpack.c.b16 %v190, %v189
  %v250 = vpack.c.b16 %v192, %v191
  %v251 = vpack.c.b16 %v194, %v193
  %v252 = vpack.c.b16 %v196, %v195
  %v253 = vpack.c.b16 %v198, %v197
  %v254 = vpack.c.b16 %v200, %v199
  %v255 = vpack.c.b16 %v202, %v201
  %v256 = vpack.c.b16 %v204, %v203
  %v257 = vpack.c.b16 %v206, %v205
  %v258 = vpack.c.b16 %v208, %v207
  %v259 = vpack.c.b16 %v210, %v209
  %v260 = vpack.c.b16 %v212, %v211
  %v261 = vpack.c.b16 %v214, %v213
  %v262 = vpack.c.b16 %v216, %v215
  %v263 = vpack.c.b16 %v218, %v217
  %v264 = vpack.c.b16 %v220, %v219
  %v265 = vpack.c.b16 %v222, %v221
  %v266 = vpack.c.b16 %v224, %v223
  %v267 = vpack.c.b16 %v226, %v225
  %v268 = vpack.c.b16 %v228, %v227
  %v269 = vpack.c.b16 %v230, %v229
  %v270 = vpack.c.b16 %v232, %v231
  %v271 = vpack.c.b16 %v234, %v233
  %v272 = vpack.c.b16 %v236, %v235
  %v273 = vpack.c.b16 %v238, %v237
  %v274 = vpack.c.b16 %v240, %v239
  %v275 = vpack.c.b16 %v242, %v241
  %v276 = vpack.c.b16 %v244, %v243
  %309 = vmatprep.subr.bf16.mxu0 0
  %310 = vmatpush1.bf16.msra.mxu0 %v252
  %311 = vmatprep.subr.bf16.mxu0 0
  %312 = vmatpush1.bf16.msra.mxu0 %v251
  %313 = vmatprep.subr.bf16.mxu0 0
  %314 = vmatpush1.bf16.msra.mxu0 %v250
  %315 = vmatprep.subr.bf16.mxu0 0
  %316 = vmatpush1.bf16.msra.mxu0 %v249
  %317 = vmatprep.subr.bf16.mxu0 0
  %318 = vmatpush1.bf16.msra.mxu0 %v248
  %319 = vmatprep.subr.bf16.mxu0 0
  %320 = vmatpush1.bf16.msra.mxu0 %v247
  %321 = vmatprep.subr.bf16.mxu0 0
  %322 = vmatpush1.bf16.msra.mxu0 %v246
  %323 = vmatprep.subr.bf16.mxu0 0
  %324 = vmatpush1.bf16.msra.mxu0 %v245
  %325 = vmatprep.subr.bf16.mxu0 0
  %326 = vmatpush2.bf16.msra.mxu0 %v260
  %327 = vmatprep.subr.bf16.mxu0 0
  %328 = vmatpush2.bf16.msra.mxu0 %v259
  %329 = vmatprep.subr.bf16.mxu0 0
  %330 = vmatpush2.bf16.msra.mxu0 %v258
  %331 = vmatprep.subr.bf16.mxu0 0
  %332 = vmatpush2.bf16.msra.mxu0 %v257
  %333 = vmatprep.subr.bf16.mxu0 0
  %334 = vmatpush2.bf16.msra.mxu0 %v256
  %335 = vmatprep.subr.bf16.mxu0 0
  %336 = vmatpush2.bf16.msra.mxu0 %v255
  %337 = vmatprep.subr.bf16.mxu0 0
  %338 = vmatpush2.bf16.msra.mxu0 %v254
  %339 = vmatprep.subr.bf16.mxu0 0
  %340 = vmatpush2.bf16.msra.mxu0 %v253
  %341 = vmatprep.mubr.bf16.mxu0 %v110
  %342 = vmatmul.mubr.bf16.gmra.mxu0 %v109
  %v343 = vpop.f32.mrf.mxu0
  %v344 = vadd.f32 0.0, %v343
  %v345 = vpop.f32.mrf.mxu0
  %v346 = vpop.f32.mrf.mxu0
  %v347 = vadd.f32 0.0, %v346
  %v348 = vpop.f32.mrf.mxu0
  %349 = vdwg.mxu0
  %350 = vmatprep.subr.bf16.mxu0 0
  %351 = vmatpush1.bf16.msra.mxu0 %v268
  %352 = vmatprep.subr.bf16.mxu0 0
  %353 = vmatpush1.bf16.msra.mxu0 %v267
  %354 = vmatprep.subr.bf16.mxu0 0
  %355 = vmatpush1.bf16.msra.mxu0 %v266
  %356 = vmatprep.subr.bf16.mxu0 0
  %357 = vmatpush1.bf16.msra.mxu0 %v265
  %358 = vmatprep.subr.bf16.mxu0 0
  %359 = vmatpush1.bf16.msra.mxu0 %v264
  %360 = vmatprep.subr.bf16.mxu0 0
  %361 = vmatpush1.bf16.msra.mxu0 %v263
  %362 = vmatprep.subr.bf16.mxu0 0
  %363 = vmatpush1.bf16.msra.mxu0 %v262
  %364 = vmatprep.subr.bf16.mxu0 0
  %365 = vmatpush1.bf16.msra.mxu0 %v261
  %366 = vmatprep.subr.bf16.mxu0 0
  %367 = vmatpush2.bf16.msra.mxu0 %v276
  %368 = vmatprep.subr.bf16.mxu0 0
  %369 = vmatpush2.bf16.msra.mxu0 %v275
  %370 = vmatprep.subr.bf16.mxu0 0
  %371 = vmatpush2.bf16.msra.mxu0 %v274
  %372 = vmatprep.subr.bf16.mxu0 0
  %373 = vmatpush2.bf16.msra.mxu0 %v273
  %374 = vmatprep.subr.bf16.mxu0 0
  %375 = vmatpush2.bf16.msra.mxu0 %v272
  %376 = vmatprep.subr.bf16.mxu0 0
  %377 = vmatpush2.bf16.msra.mxu0 %v271
  %378 = vmatprep.subr.bf16.mxu0 0
  %379 = vmatpush2.bf16.msra.mxu0 %v270
  %380 = vmatprep.subr.bf16.mxu0 0
  %381 = vmatpush2.bf16.msra.mxu0 %v269
  %382 = vmatprep.mubr.bf16.mxu0 %v112
  %383 = vmatmul.mubr.bf16.gmra.mxu0 %v111
  %v384 = vpop.f32.mrf.mxu0
  %v385 = vadd.f32 %v344, %v384
  %v386 = vpop.f32.mrf.mxu0
  %v387 = vpop.f32.mrf.mxu0
  %v388 = vadd.f32 %v347, %v387
  %v389 = vpop.f32.mrf.mxu0
  %390 = vdwg.mxu0
  %v391 = vadd.f32 %v31, %v385
  %v392 = vadd.f32 %v32, %v388
  %393 = vst [vmem:[#allocation2] sm:$0xff] %v391
  %394 = vst [vmem:[#allocation2 + $0x8] sm:$0xff] %v392
  // Predicated region
  $region26: #{report_generation_forward.23} parent=0 // pred_check
    %p395 = pneg %p21
  $region27: #{report_generation_forward.23} parent=0 // pred_check_branch
    %397 = sbr.rel (%p395) target = $region29
  $region28: #{report_generation_forward.23} parent=0 // pred_region
    %v398 = vld [vmem:[#allocation2] sm:$0xff]
    %v399 = vld [vmem:[#allocation2 + $0x8] sm:$0xff]
    %v400 = vld [vmem:[%s2] sm:$0x1]
    %v402 = vlaneseq
    %v403 = vshrl.u32 %v402, 7
    %v404 = vsub.s32 0, %v403
    %v405 = vrot.slane %v400, %v404
    %v407 = vmul.f32 %v398, %v405
    %v408 = vmul.f32 %v399, %v405
    %v409 = vld [vmem:[%s3] sm:$0x1]
    %v411 = vlaneseq
    %v412 = vshrl.u32 %v411, 7
    %v413 = vsub.s32 0, %v412
    %v414 = vrot.slane %v409, %v413
    %v416 = vadd.f32 %v407, %v414
    %v417 = vadd.f32 %v408, %v414
    %v418 = vld [vmem:[%s4] sm:$0xff]
    %v419 = vld [vmem:[%s4 + $0x8] sm:$0xff]
    %v420 = vadd.f32 %v416, %v418
    %v421 = vadd.f32 %v417, %v419
    %422 = vst [vmem:[%s5] sm:$0xff] %v420
    %423 = vst [vmem:[%s5 + $0x8] sm:$0xff] %v421
  $region29: #{report_generation_forward.23} parent=0 // pred_fallthru
    _
  // Predicated region
  $region30: #{report_generation_forward.23} parent=0 // pred_check
    _
  $region31: #{report_generation_forward.23} parent=0 // pred_check_branch
    %425 = sbr.rel (0) target = $region33
  $region32: #{report_generation_forward.23} parent=0 // pred_region
    _
  $region33: #{report_generation_forward.23} parent=0 // pred_fallthru
    _
  // Predicated region
  $region34: #{report_generation_forward.23} parent=0 // pred_check
    _
  $region35: #{report_generation_forward.23} parent=0 // pred_check_branch
    %427 = sbr.rel (0) target = $region37
  $region36: #{report_generation_forward.23} parent=0 // pred_region
    _
  $region37: #{report_generation_forward.23} parent=0 // pred_fallthru
    _

// kernel: report_generation_forward.25
$region0: #{report_generation_forward.25}
  #allocation0 [shape = 'u32[]', space=smem, size = 0x4, offset = 0x4, fixed_abs, tag = 'smem constant byte address 0x4 - core index']
  #allocation1 [shape = 'u32[144,128]{1,0:T(1,128)}', space=vmem, size = 0x12000, scoped, tag = 'internal scratch']
  %s0 = inlined_call_operand.vmem [shape: f32[14,256], index: 0, kind: input, shape index: {}]
  %s1 = inlined_call_operand.vmem [shape: s32[14,1], index: 1, kind: input, shape index: {}]
  %s2 = inlined_call_operand.vmem [shape: f32[14,1], index: 2, kind: input, shape index: {}]
  %s3 = inlined_call_operand.hbm [shape: f32[1,128], index: 3, kind: output, shape index: {}]
  %s4 = sld [smem:[#allocation0]]
  $region22: #{report_generation_forward.25} parent=0
    _
  %s6 = ssub.s32 1, %s4
  %s7 = scalar_select 0, %s6, %s4
  $region1: #{report_generation_forward.25} parent=0
    #allocation2 [shape = 'u8[512]{0}', space=vmem, size = 0x400, scoped, tag = 'output window, operand 0, single buffered']
    #allocation3 [shape = 's32[1]{0}', space=sflag, size = 0x4, scoped, tag = 'scoped memory for report_generation_forward.25']
    %8 = vsyncpa [#allocation3], 0
    // Predicated region
    $region2: #{report_generation_forward.25} parent=1 // pred_check
      _
    $region3: #{report_generation_forward.25} parent=1 // pred_check_branch
      %10 = sbr.rel (0) target = $region5
    $region4: #{report_generation_forward.25} parent=1 // pred_region
      _
    $region5: #{report_generation_forward.25} parent=1 // pred_fallthru
      _
    // Predicated region
    $region6: #{report_generation_forward.25} parent=1 // pred_check
      _
    $region7: #{report_generation_forward.25} parent=1 // pred_check_branch
      %12 = sbr.rel (0) target = $region9
    $region8: #{report_generation_forward.25} parent=1 // pred_region
      _
    $region9: #{report_generation_forward.25} parent=1 // pred_fallthru
      _
    // Predicated region
    $region10: #{report_generation_forward.25} parent=1 // pred_check
      _
    $region11: #{report_generation_forward.25} parent=1 // pred_check_branch
      %14 = sbr.rel (0) target = $region13
    $region12: #{report_generation_forward.25} parent=1 // pred_region
      _
    $region13: #{report_generation_forward.25} parent=1 // pred_fallthru
      _
    %v15 = vld [vmem:[%s0] sm:$0xff]
    %v16 = vld [vmem:[%s0 + $0x8] sm:$0xff]
    %v17 = vld [vmem:[%s0 + $0x10] sm:$0x3f]
    %v18 = vld [vmem:[%s0 + $0x18] sm:$0x3f]
    %v19 = vmax.f32 %v15, %v16
    %20 = vmax.xlane.f32.xlu0 %v19
    %v21 = vpop.xlane.xlu0 %20
    %vm22 = vcmask 1045504
    %v23 = vsel %vm22, %v17, -inf
    %v24 = vsel %vm22, %v18, -inf
    %v25 = vmax.f32 %v23, %v24
    %26 = vmax.xlane.f32.xlu0 %v25
    %v27 = vpop.xlane.xlu0 %26
    %v28 = vsub.f32 %v15, %v21
    %v29 = vsub.f32 %v16, %v21
    %v30 = vsub.f32 %v17, %v27
    %v31 = vsub.f32 %v18, %v27
    %v32 = vmul.f32 %v28, 1.442695
    %v33 = vpow.pop %v32
    %v34 = vmul.f32 %v29, 1.442695
    %v35 = vpow.pop %v34
    %v36 = vmul.f32 %v30, 1.442695
    %v37 = vpow.pop %v36
    %v38 = vmul.f32 %v31, 1.442695
    %v39 = vpow.pop %v38
    %v40 = vadd.f32 %v33, %v35
    %41 = vadd.xlane.f32.xlu0 %v40
    %v42 = vpop.xlane.xlu0 %41
    %v43 = vsel %vm22, %v37, 0.0
    %v44 = vsel %vm22, %v39, 0.0
    %v45 = vadd.f32 %v43, %v44
    %46 = vadd.xlane.f32.xlu0 %v45
    %v47 = vpop.xlane.xlu0 %46
    %v48 = vlog2.pop %v42
    %v49 = vmul.f32 %v48, 0.6931472
    %v50 = vlog2.pop %v47
    %v51 = vmul.f32 %v50, 0.6931472
    %v52 = vadd.f32 %v21, %v49
    %v53 = vadd.f32 %v27, %v51
    %v54 = vlaneseq
    %v55 = vand.u32 %v54, 127
    %v56 = vadd.s32 %v55, 128
    %v57 = vld [vmem:[%s1] sm:$0xff]
    %v58 = vld [vmem:[%s1 + $0x8] sm:$0x3f]
    %59 = vset.pattern.permute.xlu0 0
    %60 = vperm.xlu0 %59, %v57
    %v61 = vpop.permute.xlu0 %60
    %62 = vset.pattern.permute.xlu0 0
    %63 = vperm.xlu0 %62, %v58
    %v64 = vpop.permute.xlu0 %63
    %vm65 = vcmp.eq.s32.totalorder %v55, %v61
    %vm66 = vcmp.eq.s32.totalorder %v56, %v61
    %vm67 = vcmp.eq.s32.totalorder %v55, %v64
    %vm68 = vcmp.eq.s32.totalorder %v56, %v64
    %v69 = vsel %vm65, %v15, 0.0
    %v70 = vsel %vm66, %v16, 0.0
    %v71 = vsel %vm67, %v17, 0.0
    %v72 = vsel %vm68, %v18, 0.0
    %v73 = vadd.f32 %v69, %v70
    %74 = vadd.xlane.f32.xlu0 %v73
    %v75 = vpop.xlane.xlu0 %74
    %v76 = vsel %vm22, %v71, 0.0
    %v77 = vsel %vm22, %v72, 0.0
    %v78 = vadd.f32 %v76, %v77
    %79 = vadd.xlane.f32.xlu0 %v78
    %v80 = vpop.xlane.xlu0 %79
    %v81 = vsub.f32 %v52, %v75
    %v82 = vsub.f32 %v53, %v80
    %v83 = vld [vmem:[%s2] sm:$0xff]
    %v84 = vld [vmem:[%s2 + $0x8] sm:$0x3f]
    %v85 = vmul.f32 %v81, %v83
    %v86 = vmul.f32 %v82, %v84
    %vm87 = vcmask 7168
    %v88 = vsel %vm87, %v85, 0.0
    %vm89 = vcmask 5120
    %v90 = vsel %vm89, %v86, 0.0
    %v91 = vadd.f32 %v88, %v90
    %92 = vadd.xlane.f32.xlu0 %v91
    %v93 = vpop.xlane.xlu0 %92
    %v94 = vrot.slane %v93, 4
    %v95 = vadd.f32 %v93, %v94
    %v96 = vrot.slane %v95, 2
    %v97 = vadd.f32 %v95, %v96
    %v98 = vrot.slane %v97, 1
    %v99 = vadd.f32 %v97, %v98
    %s100 = vtos %v99
    %v101 = vstv %s100
    %v102 = vsel %vm87, %v83, 0.0
    %v103 = vsel %vm89, %v84, 0.0
    %v104 = vadd.f32 %v102, %v103
    %105 = vadd.xlane.f32.xlu0 %v104
    %v106 = vpop.xlane.xlu0 %105
    %v107 = vrot.slane %v106, 4
    %v108 = vadd.f32 %v106, %v107
    %v109 = vrot.slane %v108, 2
    %v110 = vadd.f32 %v108, %v109
    %v111 = vrot.slane %v110, 1
    %v112 = vadd.f32 %v110, %v111
    %s113 = vtos %v112
    %v114 = vstv %s113
    %v115 = vmax.f32 %v114, 1.0
    %v116 = vrcp.pop %v115
    %v117 = vmul.f32 %v101, %v116
    %118 = vst [vmem:[#allocation2] sm:$0x1] %v117
    // Predicated region
    $region14: #{report_generation_forward.25} parent=1 // pred_check
      _
    $region15: #{report_generation_forward.25} parent=1 // pred_check_branch
      %120 = sbr.rel (0) target = $region17
    $region16: #{report_generation_forward.25} parent=1 // pred_region
      %s122 = ssub.s32 16, 16
      %123 = vsyncadd [#allocation3], %s122
      %s125 = sshll.u32 [#allocation2], 4
      %s126 = int_to_ptr.vmem [resolvable:$true] %s125
      %128 = dma.vmem_to_hbm [thread:$0]  %s126, 16, %s3, [#allocation3]
    $region17: #{report_generation_forward.25} parent=1 // pred_fallthru
      _
    // Predicated region
    $region18: #{report_generation_forward.25} parent=1 // pred_check
      _
    $region19: #{report_generation_forward.25} parent=1 // pred_check_branch
      %130 = sbr.rel (0) target = $region21
    $region20: #{report_generation_forward.25} parent=1 // pred_region
      %131 = dma.done [#allocation3], 16
    $region21: #{report_generation_forward.25} parent=1 // pred_fallthru
      _
    %132 = vsyncpa [#allocation3], 1

</llo_original>
